<compile_context>
chip_gen: v5e
topology: v5e:2x2
jax: 0.10.0
libtpu: 0.0.40
codegen_flags: <defaults>
</compile_context>

<pallas_src>
import functools

import numpy as np

import jax
import jax.numpy as jnp
from jax import lax
from jax.experimental import pallas as pl
from jax.experimental.pallas import tpu as pltpu


MM_DTYPE = jnp.bfloat16   # MXU operand dtype; accumulation is always f32.


# ----------------------------- in-kernel helpers -----------------------------

def _conv3x3_relu(x, w_ref, b_ref):
    """Valid 3x3 conv + bias + relu on lane-dense activations.

    x:     (Hin, Bt, Win*Cin)  MM_DTYPE  (w-major / c-minor lane layout)
    w_ref: (3, Win*Cin, Wout*Cout) ref   (banded weight, one slab per ky row)
    b_ref: (1, Wout*Cout) ref, f32       (bias tiled Wout times)
    returns (Hin-2, Bt, Wout*Cout) f32.
    """
    Hin, Bt, K = x.shape
    N = w_ref.shape[-1]
    Ho = Hin - 2
    # (Hin, Bt) -> Hin*Bt is layout-preserving: Bt % 8 == 0 keeps sublane tiles intact.
    x2 = x.reshape(Hin * Bt, K)
    ys = [jnp.dot(x2, w_ref[ky], preferred_element_type=jnp.float32)
              .reshape(Hin, Bt, N)
          for ky in range(3)]
    # ky-shift sum: leading-axis slices, (8,128)-tile aligned (sublanes/lanes untouched).
    acc = ys[0][0:Ho] + ys[1][1:Ho + 1] + ys[2][2:Ho + 2]
    return jnp.maximum(acc + b_ref[...], 0.0)


def _maxpool2x2_s1(h, c):
    """MaxPool2d(kernel=2, stride=1): (Hc, Bt, Wc*c) f32 -> (Hc-1, Bt, (Wc-1)*c) f32."""
    Hc, _, L = h.shape
    # W direction: one lane-offset slice on a lane-dense array.
    wmax = jnp.maximum(h[:, :, :L - c], h[:, :, c:])
    # H direction: leading-axis (tile-aligned) slices.
    return jnp.maximum(wmax[0:Hc - 1], wmax[1:Hc])


# --------------------------------- kernel ------------------------------------

def _fe_elev_kernel(x_ref, w1_ref, b1_ref, w2_ref, b2_ref, w3_ref, b3_ref,
                    wfc_ref, bfc_ref, o_ref):
    x = x_ref[...].astype(MM_DTYPE)                          # (H, Bt, W*4)

    h = _conv3x3_relu(x, w1_ref, b1_ref)                     # (H-2, Bt, (W-2)*8)  f32
    h = _maxpool2x2_s1(h, 8)                                 # (H-3, Bt, (W-3)*8)
    h = _conv3x3_relu(h.astype(MM_DTYPE), w2_ref, b2_ref)    # (H-5, Bt, (W-5)*16)
    h = _maxpool2x2_s1(h, 16)                                # (H-6, Bt, (W-6)*16)
    h = _conv3x3_relu(h.astype(MM_DTYPE), w3_ref, b3_ref)    # (H-8, Bt, (W-8)*32)
    h = _maxpool2x2_s1(h, 32)                                # (Hf,  Bt, Wf*32)

    # fc: out[b, n] = sum_hf h[hf, b, :] @ Wfc[hf, :, n]  (K-blocked along Hf).
    hb = h.astype(MM_DTYPE)
    Hf = hb.shape[0]
    acc = jnp.dot(hb[0], wfc_ref[0], preferred_element_type=jnp.float32)
    for hf in range(1, Hf):
        acc = acc + jnp.dot(hb[hf], wfc_ref[hf], preferred_element_type=jnp.float32)
    o_ref[...] = acc + bfc_ref[...]                          # (Bt, 256) lane-dense store


# ----------------------------- host-side weight prep -------------------------

def _banded_conv_w(w_oihw, w_in):
    """OIHW 3x3 conv weight -> (3, w_in*Cin, w_out*Cout) banded matmul weights.

    banded[ky, wi*Cin + ci, wo*Cout + co] = w[co, ci, ky, wi - wo]  for 0 <= wi-wo <= 2.
    """
    w = np.asarray(w_oihw, np.float32)
    cout, cin, kh, kw = w.shape
    w_out = w_in - kw + 1
    out = np.zeros((kh, w_in * cin, w_out * cout), np.float32)
    for ky in range(kh):
        for kx in range(kw):
            tap = w[:, :, ky, kx].T                              # (Cin, Cout)
            for wo in range(w_out):
                wi = wo + kx
                out[ky, wi * cin:(wi + 1) * cin, wo * cout:(wo + 1) * cout] = tap
    return out


def prepare_kernel_params(w1, b1, w2, b2, w3, b3, wfc, bfc, H, W):
    """Repack PyTorch-layout params into the kernel's lane-dense layouts (host-side)."""
    Hf, Wf = H - 9, W - 9
    w1k = _banded_conv_w(w1, W)          # conv1 input width = W
    w2k = _banded_conv_w(w2, W - 3)      # after conv1 + pool1
    w3k = _banded_conv_w(w3, W - 6)      # after conv2 + pool2
    b1k = np.tile(np.asarray(b1, np.float32), W - 2)[None, :]
    b2k = np.tile(np.asarray(b2, np.float32), W - 5)[None, :]
    b3k = np.tile(np.asarray(b3, np.float32), W - 8)[None, :]
    # fc weight: PyTorch flattens CHW; kernel consumes (hf, wf*32 + c) -> permute.
    wfck = (np.asarray(wfc, np.float32)
              .reshape(256, 32, Hf, Wf)
              .transpose(2, 3, 1, 0)                             # (Hf, Wf, 32, 256)
              .reshape(Hf, Wf * 32, 256))
    bfck = np.asarray(bfc, np.float32)[None, :]
    mm = lambda a: jnp.asarray(a, MM_DTYPE)
    f32 = lambda a: jnp.asarray(a, jnp.float32)
    return (mm(w1k), f32(b1k), mm(w2k), f32(b2k), mm(w3k), f32(b3k),
            mm(wfck), f32(bfck))


# --------------------------------- wrapper -----------------------------------

@functools.partial(jax.jit, static_argnames=("bt",))
def feature_extractor_elevation(x_nchw, params, *, bt):
    """x_nchw: (B, 4, H, W) f32; params from prepare_kernel_params. Returns (B, 256)."""
    w1k, b1k, w2k, b2k, w3k, b3k, wfck, bfck = params
    B, Cin, H, W = x_nchw.shape
    assert B % bt == 0 and bt % 8 == 0, (B, bt)

    # NCHW -> (H, B, W*Cin): W*Cin on lanes, batch on sublanes.
    x = jnp.transpose(x_nchw, (2, 0, 3, 1)).reshape(H, B, W * Cin).astype(jnp.float32)

    full = lambda a: pl.BlockSpec(a.shape, lambda i: (0,) * a.ndim)

    return pl.pallas_call(
        _fe_elev_kernel,
        out_shape=jax.ShapeDtypeStruct((B, 256), jnp.float32),
        grid=(B // bt,),
        in_specs=[
            pl.BlockSpec((H, bt, W * Cin), lambda i: (0, i, 0)),
            full(w1k), full(b1k),
            full(w2k), full(b2k),
            full(w3k), full(b3k),
            full(wfck), full(bfck),
        ],
        out_specs=pl.BlockSpec((bt, 256), lambda i: (i, 0)),
        compiler_params=pltpu.CompilerParams(
            dimension_semantics=("parallel",),
            vmem_limit_bytes=48 * 1024 * 1024),
    )(x, w1k, b1k, w2k, b2k, w3k, b3k, wfck, bfck)


# ----------------------------- pure-JAX reference ----------------------------

def _reference(x_nchw, w1, b1, w2, b2, w3, b3, wfc_pt, bfc):
    dn = ("NCHW", "OIHW", "NCHW")

    def conv_relu(x, w, b):
        y = lax.conv_general_dilated(x, w, (1, 1), "VALID", dimension_numbers=dn)
        return jnp.maximum(y + b[None, :, None, None], 0.0)

    def maxpool(x):
        return lax.reduce_window(x, -jnp.inf, lax.max,
                                 (1, 1, 2, 2), (1, 1, 1, 1), "VALID")

    h = maxpool(conv_relu(x_nchw, w1, b1))
    h = maxpool(conv_relu(h, w2, b2))
    h = maxpool(conv_relu(h, w3, b3))
    h = h.reshape(h.shape[0], -1)                   # CHW flatten, matches torch view()
    return h @ wfc_pt.T + bfc


# ----------------------------------- main ------------------------------------

if __name__ == "__main__":
    # Toy-scale stand-in for the real module: 17x17 input -> (H-9)*(W-9)*32 = 2048
    # flat features (the real fc has in_features=161024; see TODO at top of file).
    B, Cin, H, W = 32, 4, 17, 17
    Hf, Wf = H - 9, W - 9
    Cflat = 32 * Hf * Wf

    key = jax.random.PRNGKey(0)
    ks = jax.random.split(key, 9)
    x = jax.random.normal(ks[0], (B, Cin, H, W), jnp.float32)
    w1 = 0.1 * jax.random.normal(ks[1], (8, 4, 3, 3), jnp.float32)
    b1 = 0.1 * jax.random.normal(ks[2], (8,), jnp.float32)
    w2 = 0.1 * jax.random.normal(ks[3], (16, 8, 3, 3), jnp.float32)
    b2 = 0.1 * jax.random.normal(ks[4], (16,), jnp.float32)
    w3 = 0.1 * jax.random.normal(ks[5], (32, 16, 3, 3), jnp.float32)
    b3 = 0.1 * jax.random.normal(ks[6], (32,), jnp.float32)
    wfc = 0.02 * jax.random.normal(ks[7], (256, Cflat), jnp.float32)
    bfc = 0.02 * jax.random.normal(ks[8], (256,), jnp.float32)

    params = prepare_kernel_params(w1, b1, w2, b2, w3, b3, wfc, bfc, H, W)
    out = feature_extractor_elevation(x, params, bt=16)   # 2 "parallel" grid steps
    out = jax.block_until_ready(out)

    ref = _reference(x, w1, b1, w2, b2, w3, b3, wfc, bfc)
    assert out.shape == (B, 256), out.shape
    err = float(jnp.max(jnp.abs(out - ref)))
    # bf16 MXU operands with f32 accumulation: tolerance loosened vs the pure-f32 path.
    assert jnp.allclose(out, ref, atol=5e-2, rtol=5e-2), err
    print("KERNEL_OK")
</pallas_src>

<mosaic_0001>
module attributes {stable_mosaic.version = 11 : i64} {
  func.func @_fe_elev_kernel(%arg0: i32, %arg1: memref<17x16x68xf32, #tpu.memory_space<vmem>>, %arg2: memref<3x68x120xbf16, #tpu.memory_space<vmem>>, %arg3: memref<1x120xf32, #tpu.memory_space<vmem>>, %arg4: memref<3x112x192xbf16, #tpu.memory_space<vmem>>, %arg5: memref<1x192xf32, #tpu.memory_space<vmem>>, %arg6: memref<3x176x288xbf16, #tpu.memory_space<vmem>>, %arg7: memref<1x288xf32, #tpu.memory_space<vmem>>, %arg8: memref<8x256x256xbf16, #tpu.memory_space<vmem>>, %arg9: memref<1x256xf32, #tpu.memory_space<vmem>>, %arg10: memref<16x256xf32, #tpu.memory_space<vmem>>) attributes {dimension_semantics = [#tpu.dimension_semantics<parallel>], iteration_bounds = array<i64: 2>, scalar_prefetch = 0 : i64, scratch_operands = 0 : i64, tpu.core_type = #tpu.core_type<tc>, window_params = [{transform_indices = @transform_0, window_bounds = array<i64: 17, 16, 68>}, {pipeline_mode = #tpu.pipeline_mode<synchronous>, transform_indices = @transform_1, window_bounds = array<i64: 3, 68, 120>}, {pipeline_mode = #tpu.pipeline_mode<synchronous>, transform_indices = @transform_2, window_bounds = array<i64: 1, 120>}, {pipeline_mode = #tpu.pipeline_mode<synchronous>, transform_indices = @transform_3, window_bounds = array<i64: 3, 112, 192>}, {pipeline_mode = #tpu.pipeline_mode<synchronous>, transform_indices = @transform_4, window_bounds = array<i64: 1, 192>}, {pipeline_mode = #tpu.pipeline_mode<synchronous>, transform_indices = @transform_5, window_bounds = array<i64: 3, 176, 288>}, {pipeline_mode = #tpu.pipeline_mode<synchronous>, transform_indices = @transform_6, window_bounds = array<i64: 1, 288>}, {pipeline_mode = #tpu.pipeline_mode<synchronous>, transform_indices = @transform_7, window_bounds = array<i64: 8, 256, 256>}, {pipeline_mode = #tpu.pipeline_mode<synchronous>, transform_indices = @transform_8, window_bounds = array<i64: 1, 256>}, {transform_indices = @transform_9, window_bounds = array<i64: 16, 256>}]} {
    %c0 = arith.constant 0 : index
    %c0_0 = arith.constant 0 : index
    %c0_1 = arith.constant 0 : index
    %0 = vector.load %arg1[%c0, %c0_0, %c0_1] : memref<17x16x68xf32, #tpu.memory_space<vmem>>, vector<17x16x68xf32>
    %1 = arith.truncf %0 : vector<17x16x68xf32> to vector<17x16x68xbf16>
    %2 = vector.shape_cast %1 : vector<17x16x68xbf16> to vector<272x68xbf16>
    %c0_2 = arith.constant 0 : index
    %c0_3 = arith.constant 0 : index
    %c0_4 = arith.constant 0 : index
    %3 = vector.load %arg2[%c0_2, %c0_3, %c0_4] : memref<3x68x120xbf16, #tpu.memory_space<vmem>>, vector<1x68x120xbf16>
    %4 = vector.shape_cast %3 : vector<1x68x120xbf16> to vector<68x120xbf16>
    %cst = arith.constant dense<0.000000e+00> : vector<272x120xf32>
    %5 = tpu.matmul %2, %4, %cst {dimension_numbers = #tpu.dot_dimension_numbers<[1], [0], [0], [1], [0, 0, 1, 1], [], []>} : vector<272x68xbf16>, vector<68x120xbf16>, vector<272x120xf32> -> vector<272x120xf32>
    %6 = vector.shape_cast %5 : vector<272x120xf32> to vector<17x16x120xf32>
    %c1 = arith.constant 1 : index
    %c0_5 = arith.constant 0 : index
    %c0_6 = arith.constant 0 : index
    %7 = vector.load %arg2[%c1, %c0_5, %c0_6] : memref<3x68x120xbf16, #tpu.memory_space<vmem>>, vector<1x68x120xbf16>
    %8 = vector.shape_cast %7 : vector<1x68x120xbf16> to vector<68x120xbf16>
    %cst_7 = arith.constant dense<0.000000e+00> : vector<272x120xf32>
    %9 = tpu.matmul %2, %8, %cst_7 {dimension_numbers = #tpu.dot_dimension_numbers<[1], [0], [0], [1], [0, 0, 1, 1], [], []>} : vector<272x68xbf16>, vector<68x120xbf16>, vector<272x120xf32> -> vector<272x120xf32>
    %10 = vector.shape_cast %9 : vector<272x120xf32> to vector<17x16x120xf32>
    %c2 = arith.constant 2 : index
    %c0_8 = arith.constant 0 : index
    %c0_9 = arith.constant 0 : index
    %11 = vector.load %arg2[%c2, %c0_8, %c0_9] : memref<3x68x120xbf16, #tpu.memory_space<vmem>>, vector<1x68x120xbf16>
    %12 = vector.shape_cast %11 : vector<1x68x120xbf16> to vector<68x120xbf16>
    %cst_10 = arith.constant dense<0.000000e+00> : vector<272x120xf32>
    %13 = tpu.matmul %2, %12, %cst_10 {dimension_numbers = #tpu.dot_dimension_numbers<[1], [0], [0], [1], [0, 0, 1, 1], [], []>} : vector<272x68xbf16>, vector<68x120xbf16>, vector<272x120xf32> -> vector<272x120xf32>
    %14 = vector.shape_cast %13 : vector<272x120xf32> to vector<17x16x120xf32>
    %15 = vector.extract_strided_slice %6 {offsets = [0, 0, 0], sizes = [15, 16, 120], strides = [1, 1, 1]} : vector<17x16x120xf32> to vector<15x16x120xf32>
    %16 = vector.extract_strided_slice %10 {offsets = [1, 0, 0], sizes = [15, 16, 120], strides = [1, 1, 1]} : vector<17x16x120xf32> to vector<15x16x120xf32>
    %17 = arith.addf %15, %16 : vector<15x16x120xf32>
    %18 = vector.extract_strided_slice %14 {offsets = [2, 0, 0], sizes = [15, 16, 120], strides = [1, 1, 1]} : vector<17x16x120xf32> to vector<15x16x120xf32>
    %19 = arith.addf %17, %18 : vector<15x16x120xf32>
    %c0_11 = arith.constant 0 : index
    %c0_12 = arith.constant 0 : index
    %20 = vector.load %arg3[%c0_11, %c0_12] : memref<1x120xf32, #tpu.memory_space<vmem>>, vector<1x120xf32>
    %21 = vector.shape_cast %20 : vector<1x120xf32> to vector<1x1x120xf32>
    %22 = vector.broadcast %21 : vector<1x1x120xf32> to vector<15x16x120xf32>
    %23 = arith.addf %19, %22 : vector<15x16x120xf32>
    %cst_13 = arith.constant 0.000000e+00 : f32
    %24 = vector.broadcast %cst_13 : f32 to vector<15x16x120xf32>
    %25 = arith.maximumf %23, %24 : vector<15x16x120xf32>
    %26 = vector.extract_strided_slice %25 {offsets = [0, 0, 0], sizes = [15, 16, 112], strides = [1, 1, 1]} : vector<15x16x120xf32> to vector<15x16x112xf32>
    %27 = vector.extract_strided_slice %25 {offsets = [0, 0, 8], sizes = [15, 16, 112], strides = [1, 1, 1]} : vector<15x16x120xf32> to vector<15x16x112xf32>
    %28 = arith.maximumf %26, %27 : vector<15x16x112xf32>
    %29 = vector.extract_strided_slice %28 {offsets = [0, 0, 0], sizes = [14, 16, 112], strides = [1, 1, 1]} : vector<15x16x112xf32> to vector<14x16x112xf32>
    %30 = vector.extract_strided_slice %28 {offsets = [1, 0, 0], sizes = [14, 16, 112], strides = [1, 1, 1]} : vector<15x16x112xf32> to vector<14x16x112xf32>
    %31 = arith.maximumf %29, %30 : vector<14x16x112xf32>
    %32 = arith.truncf %31 : vector<14x16x112xf32> to vector<14x16x112xbf16>
    %33 = vector.shape_cast %32 : vector<14x16x112xbf16> to vector<224x112xbf16>
    %c0_14 = arith.constant 0 : index
    %c0_15 = arith.constant 0 : index
    %c0_16 = arith.constant 0 : index
    %34 = vector.load %arg4[%c0_14, %c0_15, %c0_16] : memref<3x112x192xbf16, #tpu.memory_space<vmem>>, vector<1x112x192xbf16>
    %35 = vector.shape_cast %34 : vector<1x112x192xbf16> to vector<112x192xbf16>
    %cst_17 = arith.constant dense<0.000000e+00> : vector<224x192xf32>
    %36 = tpu.matmul %33, %35, %cst_17 {dimension_numbers = #tpu.dot_dimension_numbers<[1], [0], [0], [1], [0, 0, 1, 1], [], []>} : vector<224x112xbf16>, vector<112x192xbf16>, vector<224x192xf32> -> vector<224x192xf32>
    %37 = vector.shape_cast %36 : vector<224x192xf32> to vector<14x16x192xf32>
    %c1_18 = arith.constant 1 : index
    %c0_19 = arith.constant 0 : index
    %c0_20 = arith.constant 0 : index
    %38 = vector.load %arg4[%c1_18, %c0_19, %c0_20] : memref<3x112x192xbf16, #tpu.memory_space<vmem>>, vector<1x112x192xbf16>
    %39 = vector.shape_cast %38 : vector<1x112x192xbf16> to vector<112x192xbf16>
    %cst_21 = arith.constant dense<0.000000e+00> : vector<224x192xf32>
    %40 = tpu.matmul %33, %39, %cst_21 {dimension_numbers = #tpu.dot_dimension_numbers<[1], [0], [0], [1], [0, 0, 1, 1], [], []>} : vector<224x112xbf16>, vector<112x192xbf16>, vector<224x192xf32> -> vector<224x192xf32>
    %41 = vector.shape_cast %40 : vector<224x192xf32> to vector<14x16x192xf32>
    %c2_22 = arith.constant 2 : index
    %c0_23 = arith.constant 0 : index
    %c0_24 = arith.constant 0 : index
    %42 = vector.load %arg4[%c2_22, %c0_23, %c0_24] : memref<3x112x192xbf16, #tpu.memory_space<vmem>>, vector<1x112x192xbf16>
    %43 = vector.shape_cast %42 : vector<1x112x192xbf16> to vector<112x192xbf16>
    %cst_25 = arith.constant dense<0.000000e+00> : vector<224x192xf32>
    %44 = tpu.matmul %33, %43, %cst_25 {dimension_numbers = #tpu.dot_dimension_numbers<[1], [0], [0], [1], [0, 0, 1, 1], [], []>} : vector<224x112xbf16>, vector<112x192xbf16>, vector<224x192xf32> -> vector<224x192xf32>
    %45 = vector.shape_cast %44 : vector<224x192xf32> to vector<14x16x192xf32>
    %46 = vector.extract_strided_slice %37 {offsets = [0, 0, 0], sizes = [12, 16, 192], strides = [1, 1, 1]} : vector<14x16x192xf32> to vector<12x16x192xf32>
    %47 = vector.extract_strided_slice %41 {offsets = [1, 0, 0], sizes = [12, 16, 192], strides = [1, 1, 1]} : vector<14x16x192xf32> to vector<12x16x192xf32>
    %48 = arith.addf %46, %47 : vector<12x16x192xf32>
    %49 = vector.extract_strided_slice %45 {offsets = [2, 0, 0], sizes = [12, 16, 192], strides = [1, 1, 1]} : vector<14x16x192xf32> to vector<12x16x192xf32>
    %50 = arith.addf %48, %49 : vector<12x16x192xf32>
    %c0_26 = arith.constant 0 : index
    %c0_27 = arith.constant 0 : index
    %51 = vector.load %arg5[%c0_26, %c0_27] : memref<1x192xf32, #tpu.memory_space<vmem>>, vector<1x192xf32>
    %52 = vector.shape_cast %51 : vector<1x192xf32> to vector<1x1x192xf32>
    %53 = vector.broadcast %52 : vector<1x1x192xf32> to vector<12x16x192xf32>
    %54 = arith.addf %50, %53 : vector<12x16x192xf32>
    %cst_28 = arith.constant 0.000000e+00 : f32
    %55 = vector.broadcast %cst_28 : f32 to vector<12x16x192xf32>
    %56 = arith.maximumf %54, %55 : vector<12x16x192xf32>
    %57 = vector.extract_strided_slice %56 {offsets = [0, 0, 0], sizes = [12, 16, 176], strides = [1, 1, 1]} : vector<12x16x192xf32> to vector<12x16x176xf32>
    %58 = vector.extract_strided_slice %56 {offsets = [0, 0, 16], sizes = [12, 16, 176], strides = [1, 1, 1]} : vector<12x16x192xf32> to vector<12x16x176xf32>
    %59 = arith.maximumf %57, %58 : vector<12x16x176xf32>
    %60 = vector.extract_strided_slice %59 {offsets = [0, 0, 0], sizes = [11, 16, 176], strides = [1, 1, 1]} : vector<12x16x176xf32> to vector<11x16x176xf32>
    %61 = vector.extract_strided_slice %59 {offsets = [1, 0, 0], sizes = [11, 16, 176], strides = [1, 1, 1]} : vector<12x16x176xf32> to vector<11x16x176xf32>
    %62 = arith.maximumf %60, %61 : vector<11x16x176xf32>
    %63 = arith.truncf %62 : vector<11x16x176xf32> to vector<11x16x176xbf16>
    %64 = vector.shape_cast %63 : vector<11x16x176xbf16> to vector<176x176xbf16>
    %c0_29 = arith.constant 0 : index
    %c0_30 = arith.constant 0 : index
    %c0_31 = arith.constant 0 : index
    %65 = vector.load %arg6[%c0_29, %c0_30, %c0_31] : memref<3x176x288xbf16, #tpu.memory_space<vmem>>, vector<1x176x288xbf16>
    %66 = vector.shape_cast %65 : vector<1x176x288xbf16> to vector<176x288xbf16>
    %cst_32 = arith.constant dense<0.000000e+00> : vector<176x288xf32>
    %67 = tpu.matmul %64, %66, %cst_32 {dimension_numbers = #tpu.dot_dimension_numbers<[1], [0], [0], [1], [0, 0, 1, 1], [], []>} : vector<176x176xbf16>, vector<176x288xbf16>, vector<176x288xf32> -> vector<176x288xf32>
    %68 = vector.shape_cast %67 : vector<176x288xf32> to vector<11x16x288xf32>
    %c1_33 = arith.constant 1 : index
    %c0_34 = arith.constant 0 : index
    %c0_35 = arith.constant 0 : index
    %69 = vector.load %arg6[%c1_33, %c0_34, %c0_35] : memref<3x176x288xbf16, #tpu.memory_space<vmem>>, vector<1x176x288xbf16>
    %70 = vector.shape_cast %69 : vector<1x176x288xbf16> to vector<176x288xbf16>
    %cst_36 = arith.constant dense<0.000000e+00> : vector<176x288xf32>
    %71 = tpu.matmul %64, %70, %cst_36 {dimension_numbers = #tpu.dot_dimension_numbers<[1], [0], [0], [1], [0, 0, 1, 1], [], []>} : vector<176x176xbf16>, vector<176x288xbf16>, vector<176x288xf32> -> vector<176x288xf32>
    %72 = vector.shape_cast %71 : vector<176x288xf32> to vector<11x16x288xf32>
    %c2_37 = arith.constant 2 : index
    %c0_38 = arith.constant 0 : index
    %c0_39 = arith.constant 0 : index
    %73 = vector.load %arg6[%c2_37, %c0_38, %c0_39] : memref<3x176x288xbf16, #tpu.memory_space<vmem>>, vector<1x176x288xbf16>
    %74 = vector.shape_cast %73 : vector<1x176x288xbf16> to vector<176x288xbf16>
    %cst_40 = arith.constant dense<0.000000e+00> : vector<176x288xf32>
    %75 = tpu.matmul %64, %74, %cst_40 {dimension_numbers = #tpu.dot_dimension_numbers<[1], [0], [0], [1], [0, 0, 1, 1], [], []>} : vector<176x176xbf16>, vector<176x288xbf16>, vector<176x288xf32> -> vector<176x288xf32>
    %76 = vector.shape_cast %75 : vector<176x288xf32> to vector<11x16x288xf32>
    %77 = vector.extract_strided_slice %68 {offsets = [0, 0, 0], sizes = [9, 16, 288], strides = [1, 1, 1]} : vector<11x16x288xf32> to vector<9x16x288xf32>
    %78 = vector.extract_strided_slice %72 {offsets = [1, 0, 0], sizes = [9, 16, 288], strides = [1, 1, 1]} : vector<11x16x288xf32> to vector<9x16x288xf32>
    %79 = arith.addf %77, %78 : vector<9x16x288xf32>
    %80 = vector.extract_strided_slice %76 {offsets = [2, 0, 0], sizes = [9, 16, 288], strides = [1, 1, 1]} : vector<11x16x288xf32> to vector<9x16x288xf32>
    %81 = arith.addf %79, %80 : vector<9x16x288xf32>
    %c0_41 = arith.constant 0 : index
    %c0_42 = arith.constant 0 : index
    %82 = vector.load %arg7[%c0_41, %c0_42] : memref<1x288xf32, #tpu.memory_space<vmem>>, vector<1x288xf32>
    %83 = vector.shape_cast %82 : vector<1x288xf32> to vector<1x1x288xf32>
    %84 = vector.broadcast %83 : vector<1x1x288xf32> to vector<9x16x288xf32>
    %85 = arith.addf %81, %84 : vector<9x16x288xf32>
    %cst_43 = arith.constant 0.000000e+00 : f32
    %86 = vector.broadcast %cst_43 : f32 to vector<9x16x288xf32>
    %87 = arith.maximumf %85, %86 : vector<9x16x288xf32>
    %88 = vector.extract_strided_slice %87 {offsets = [0, 0, 0], sizes = [9, 16, 256], strides = [1, 1, 1]} : vector<9x16x288xf32> to vector<9x16x256xf32>
    %89 = vector.extract_strided_slice %87 {offsets = [0, 0, 32], sizes = [9, 16, 256], strides = [1, 1, 1]} : vector<9x16x288xf32> to vector<9x16x256xf32>
    %90 = arith.maximumf %88, %89 : vector<9x16x256xf32>
    %91 = vector.extract_strided_slice %90 {offsets = [0, 0, 0], sizes = [8, 16, 256], strides = [1, 1, 1]} : vector<9x16x256xf32> to vector<8x16x256xf32>
    %92 = vector.extract_strided_slice %90 {offsets = [1, 0, 0], sizes = [8, 16, 256], strides = [1, 1, 1]} : vector<9x16x256xf32> to vector<8x16x256xf32>
    %93 = arith.maximumf %91, %92 : vector<8x16x256xf32>
    %94 = arith.truncf %93 : vector<8x16x256xf32> to vector<8x16x256xbf16>
    %95 = vector.extract_strided_slice %94 {offsets = [0, 0, 0], sizes = [1, 16, 256], strides = [1, 1, 1]} : vector<8x16x256xbf16> to vector<1x16x256xbf16>
    %96 = vector.shape_cast %95 : vector<1x16x256xbf16> to vector<16x256xbf16>
    %c0_44 = arith.constant 0 : index
    %c0_45 = arith.constant 0 : index
    %c0_46 = arith.constant 0 : index
    %97 = vector.load %arg8[%c0_44, %c0_45, %c0_46] : memref<8x256x256xbf16, #tpu.memory_space<vmem>>, vector<1x256x256xbf16>
    %98 = vector.shape_cast %97 : vector<1x256x256xbf16> to vector<256x256xbf16>
    %cst_47 = arith.constant dense<0.000000e+00> : vector<16x256xf32>
    %99 = tpu.matmul %96, %98, %cst_47 {dimension_numbers = #tpu.dot_dimension_numbers<[1], [0], [0], [1], [0, 0, 1, 1], [], []>} : vector<16x256xbf16>, vector<256x256xbf16>, vector<16x256xf32> -> vector<16x256xf32>
    %100 = vector.extract_strided_slice %94 {offsets = [1, 0, 0], sizes = [1, 16, 256], strides = [1, 1, 1]} : vector<8x16x256xbf16> to vector<1x16x256xbf16>
    %101 = vector.shape_cast %100 : vector<1x16x256xbf16> to vector<16x256xbf16>
    %c1_48 = arith.constant 1 : index
    %c0_49 = arith.constant 0 : index
    %c0_50 = arith.constant 0 : index
    %102 = vector.load %arg8[%c1_48, %c0_49, %c0_50] : memref<8x256x256xbf16, #tpu.memory_space<vmem>>, vector<1x256x256xbf16>
    %103 = vector.shape_cast %102 : vector<1x256x256xbf16> to vector<256x256xbf16>
    %cst_51 = arith.constant dense<0.000000e+00> : vector<16x256xf32>
    %104 = tpu.matmul %101, %103, %cst_51 {dimension_numbers = #tpu.dot_dimension_numbers<[1], [0], [0], [1], [0, 0, 1, 1], [], []>} : vector<16x256xbf16>, vector<256x256xbf16>, vector<16x256xf32> -> vector<16x256xf32>
    %105 = arith.addf %99, %104 : vector<16x256xf32>
    %106 = vector.extract_strided_slice %94 {offsets = [2, 0, 0], sizes = [1, 16, 256], strides = [1, 1, 1]} : vector<8x16x256xbf16> to vector<1x16x256xbf16>
    %107 = vector.shape_cast %106 : vector<1x16x256xbf16> to vector<16x256xbf16>
    %c2_52 = arith.constant 2 : index
    %c0_53 = arith.constant 0 : index
    %c0_54 = arith.constant 0 : index
    %108 = vector.load %arg8[%c2_52, %c0_53, %c0_54] : memref<8x256x256xbf16, #tpu.memory_space<vmem>>, vector<1x256x256xbf16>
    %109 = vector.shape_cast %108 : vector<1x256x256xbf16> to vector<256x256xbf16>
    %cst_55 = arith.constant dense<0.000000e+00> : vector<16x256xf32>
    %110 = tpu.matmul %107, %109, %cst_55 {dimension_numbers = #tpu.dot_dimension_numbers<[1], [0], [0], [1], [0, 0, 1, 1], [], []>} : vector<16x256xbf16>, vector<256x256xbf16>, vector<16x256xf32> -> vector<16x256xf32>
    %111 = arith.addf %105, %110 : vector<16x256xf32>
    %112 = vector.extract_strided_slice %94 {offsets = [3, 0, 0], sizes = [1, 16, 256], strides = [1, 1, 1]} : vector<8x16x256xbf16> to vector<1x16x256xbf16>
    %113 = vector.shape_cast %112 : vector<1x16x256xbf16> to vector<16x256xbf16>
    %c3 = arith.constant 3 : index
    %c0_56 = arith.constant 0 : index
    %c0_57 = arith.constant 0 : index
    %114 = vector.load %arg8[%c3, %c0_56, %c0_57] : memref<8x256x256xbf16, #tpu.memory_space<vmem>>, vector<1x256x256xbf16>
    %115 = vector.shape_cast %114 : vector<1x256x256xbf16> to vector<256x256xbf16>
    %cst_58 = arith.constant dense<0.000000e+00> : vector<16x256xf32>
    %116 = tpu.matmul %113, %115, %cst_58 {dimension_numbers = #tpu.dot_dimension_numbers<[1], [0], [0], [1], [0, 0, 1, 1], [], []>} : vector<16x256xbf16>, vector<256x256xbf16>, vector<16x256xf32> -> vector<16x256xf32>
    %117 = arith.addf %111, %116 : vector<16x256xf32>
    %118 = vector.extract_strided_slice %94 {offsets = [4, 0, 0], sizes = [1, 16, 256], strides = [1, 1, 1]} : vector<8x16x256xbf16> to vector<1x16x256xbf16>
    %119 = vector.shape_cast %118 : vector<1x16x256xbf16> to vector<16x256xbf16>
    %c4 = arith.constant 4 : index
    %c0_59 = arith.constant 0 : index
    %c0_60 = arith.constant 0 : index
    %120 = vector.load %arg8[%c4, %c0_59, %c0_60] : memref<8x256x256xbf16, #tpu.memory_space<vmem>>, vector<1x256x256xbf16>
    %121 = vector.shape_cast %120 : vector<1x256x256xbf16> to vector<256x256xbf16>
    %cst_61 = arith.constant dense<0.000000e+00> : vector<16x256xf32>
    %122 = tpu.matmul %119, %121, %cst_61 {dimension_numbers = #tpu.dot_dimension_numbers<[1], [0], [0], [1], [0, 0, 1, 1], [], []>} : vector<16x256xbf16>, vector<256x256xbf16>, vector<16x256xf32> -> vector<16x256xf32>
    %123 = arith.addf %117, %122 : vector<16x256xf32>
    %124 = vector.extract_strided_slice %94 {offsets = [5, 0, 0], sizes = [1, 16, 256], strides = [1, 1, 1]} : vector<8x16x256xbf16> to vector<1x16x256xbf16>
    %125 = vector.shape_cast %124 : vector<1x16x256xbf16> to vector<16x256xbf16>
    %c5 = arith.constant 5 : index
    %c0_62 = arith.constant 0 : index
    %c0_63 = arith.constant 0 : index
    %126 = vector.load %arg8[%c5, %c0_62, %c0_63] : memref<8x256x256xbf16, #tpu.memory_space<vmem>>, vector<1x256x256xbf16>
    %127 = vector.shape_cast %126 : vector<1x256x256xbf16> to vector<256x256xbf16>
    %cst_64 = arith.constant dense<0.000000e+00> : vector<16x256xf32>
    %128 = tpu.matmul %125, %127, %cst_64 {dimension_numbers = #tpu.dot_dimension_numbers<[1], [0], [0], [1], [0, 0, 1, 1], [], []>} : vector<16x256xbf16>, vector<256x256xbf16>, vector<16x256xf32> -> vector<16x256xf32>
    %129 = arith.addf %123, %128 : vector<16x256xf32>
    %130 = vector.extract_strided_slice %94 {offsets = [6, 0, 0], sizes = [1, 16, 256], strides = [1, 1, 1]} : vector<8x16x256xbf16> to vector<1x16x256xbf16>
    %131 = vector.shape_cast %130 : vector<1x16x256xbf16> to vector<16x256xbf16>
    %c6 = arith.constant 6 : index
    %c0_65 = arith.constant 0 : index
    %c0_66 = arith.constant 0 : index
    %132 = vector.load %arg8[%c6, %c0_65, %c0_66] : memref<8x256x256xbf16, #tpu.memory_space<vmem>>, vector<1x256x256xbf16>
    %133 = vector.shape_cast %132 : vector<1x256x256xbf16> to vector<256x256xbf16>
    %cst_67 = arith.constant dense<0.000000e+00> : vector<16x256xf32>
    %134 = tpu.matmul %131, %133, %cst_67 {dimension_numbers = #tpu.dot_dimension_numbers<[1], [0], [0], [1], [0, 0, 1, 1], [], []>} : vector<16x256xbf16>, vector<256x256xbf16>, vector<16x256xf32> -> vector<16x256xf32>
    %135 = arith.addf %129, %134 : vector<16x256xf32>
    %136 = vector.extract_strided_slice %94 {offsets = [7, 0, 0], sizes = [1, 16, 256], strides = [1, 1, 1]} : vector<8x16x256xbf16> to vector<1x16x256xbf16>
    %137 = vector.shape_cast %136 : vector<1x16x256xbf16> to vector<16x256xbf16>
    %c7 = arith.constant 7 : index
    %c0_68 = arith.constant 0 : index
    %c0_69 = arith.constant 0 : index
    %138 = vector.load %arg8[%c7, %c0_68, %c0_69] : memref<8x256x256xbf16, #tpu.memory_space<vmem>>, vector<1x256x256xbf16>
    %139 = vector.shape_cast %138 : vector<1x256x256xbf16> to vector<256x256xbf16>
    %cst_70 = arith.constant dense<0.000000e+00> : vector<16x256xf32>
    %140 = tpu.matmul %137, %139, %cst_70 {dimension_numbers = #tpu.dot_dimension_numbers<[1], [0], [0], [1], [0, 0, 1, 1], [], []>} : vector<16x256xbf16>, vector<256x256xbf16>, vector<16x256xf32> -> vector<16x256xf32>
    %141 = arith.addf %135, %140 : vector<16x256xf32>
    %c0_71 = arith.constant 0 : index
    %c0_72 = arith.constant 0 : index
    %142 = vector.load %arg9[%c0_71, %c0_72] : memref<1x256xf32, #tpu.memory_space<vmem>>, vector<1x256xf32>
    %143 = vector.broadcast %142 : vector<1x256xf32> to vector<16x256xf32>
    %144 = arith.addf %141, %143 : vector<16x256xf32>
    %c0_73 = arith.constant 0 : index
    %c0_74 = arith.constant 0 : index
    %145 = vector.load %arg10[%c0_73, %c0_74] : memref<16x256xf32, #tpu.memory_space<vmem>>, vector<16x256xf32>
    tpu.vector_store %arg10[%c0_73, %c0_74], %144 {strides = array<i32>} : memref<16x256xf32, #tpu.memory_space<vmem>>, vector<16x256xf32>,
    return
  }
  func.func @transform_0(%arg0: i32) -> (i32, i32, i32) {
    %c0_i32 = arith.constant 0 : i32
    %c0_i32_0 = arith.constant 0 : i32
    %c0_i32_1 = arith.constant 0 : i32
    return %c0_i32, %arg0, %c0_i32_0 : i32, i32, i32
  }
  func.func @transform_1(%arg0: i32) -> (i32, i32, i32) {
    %c0_i32 = arith.constant 0 : i32
    %c0_i32_0 = arith.constant 0 : i32
    %c0_i32_1 = arith.constant 0 : i32
    %c0_i32_2 = arith.constant 0 : i32
    return %c0_i32, %c0_i32_0, %c0_i32_1 : i32, i32, i32
  }
  func.func @transform_2(%arg0: i32) -> (i32, i32) {
    %c0_i32 = arith.constant 0 : i32
    %c0_i32_0 = arith.constant 0 : i32
    %c0_i32_1 = arith.constant 0 : i32
    return %c0_i32, %c0_i32_0 : i32, i32
  }
  func.func @transform_3(%arg0: i32) -> (i32, i32, i32) {
    %c0_i32 = arith.constant 0 : i32
    %c0_i32_0 = arith.constant 0 : i32
    %c0_i32_1 = arith.constant 0 : i32
    %c0_i32_2 = arith.constant 0 : i32
    return %c0_i32, %c0_i32_0, %c0_i32_1 : i32, i32, i32
  }
  func.func @transform_4(%arg0: i32) -> (i32, i32) {
    %c0_i32 = arith.constant 0 : i32
    %c0_i32_0 = arith.constant 0 : i32
    %c0_i32_1 = arith.constant 0 : i32
    return %c0_i32, %c0_i32_0 : i32, i32
  }
  func.func @transform_5(%arg0: i32) -> (i32, i32, i32) {
    %c0_i32 = arith.constant 0 : i32
    %c0_i32_0 = arith.constant 0 : i32
    %c0_i32_1 = arith.constant 0 : i32
    %c0_i32_2 = arith.constant 0 : i32
    return %c0_i32, %c0_i32_0, %c0_i32_1 : i32, i32, i32
  }
  func.func @transform_6(%arg0: i32) -> (i32, i32) {
    %c0_i32 = arith.constant 0 : i32
    %c0_i32_0 = arith.constant 0 : i32
    %c0_i32_1 = arith.constant 0 : i32
    return %c0_i32, %c0_i32_0 : i32, i32
  }
  func.func @transform_7(%arg0: i32) -> (i32, i32, i32) {
    %c0_i32 = arith.constant 0 : i32
    %c0_i32_0 = arith.constant 0 : i32
    %c0_i32_1 = arith.constant 0 : i32
    %c0_i32_2 = arith.constant 0 : i32
    return %c0_i32, %c0_i32_0, %c0_i32_1 : i32, i32, i32
  }
  func.func @transform_8(%arg0: i32) -> (i32, i32) {
    %c0_i32 = arith.constant 0 : i32
    %c0_i32_0 = arith.constant 0 : i32
    %c0_i32_1 = arith.constant 0 : i32
    return %c0_i32, %c0_i32_0 : i32, i32
  }
  func.func @transform_9(%arg0: i32) -> (i32, i32) {
    %c0_i32 = arith.constant 0 : i32
    %c0_i32_0 = arith.constant 0 : i32
    return %arg0, %c0_i32 : i32, i32
  }
}

</mosaic_0001>

<llo_original>
// kernel: feature_extractor_elevation.1
$region0: #{feature_extractor_elevation.1}
  #allocation0 [shape = 'u32[]', space=smem, size = 0x4, offset = 0x4, fixed_abs, tag = 'smem constant byte address 0x4 - core index']
  #allocation1 [shape = 'u32[72,128]{1,0:T(1,128)}', space=vmem, size = 0x9000, scoped, tag = 'internal scratch']
  %s0 = inlined_call_operand.vmem [shape: f32[17,32,68], index: 0, kind: input, shape index: {}]
  %s1 = inlined_call_operand.vmem [shape: bf16[3,68,120], index: 1, kind: input, shape index: {}]
  %s2 = inlined_call_operand.vmem [shape: f32[1,120], index: 2, kind: input, shape index: {}]
  %s3 = inlined_call_operand.vmem [shape: bf16[3,112,192], index: 3, kind: input, shape index: {}]
  %s4 = inlined_call_operand.vmem [shape: f32[1,192], index: 4, kind: input, shape index: {}]
  %s5 = inlined_call_operand.vmem [shape: bf16[3,176,288], index: 5, kind: input, shape index: {}]
  %s6 = inlined_call_operand.vmem [shape: f32[1,288], index: 6, kind: input, shape index: {}]
  %s7 = inlined_call_operand.vmem [shape: bf16[8,256,256], index: 7, kind: input, shape index: {}]
  %s8 = inlined_call_operand.vmem [shape: f32[1,256], index: 8, kind: input, shape index: {}]
  %s9 = inlined_call_operand.hbm [shape: f32[32,256], index: 9, kind: output, shape index: {}]
  %s10 = sld [smem:[#allocation0]]
  $region107: #{feature_extractor_elevation.1} parent=0
    _
  %s12 = ssub.s32 1, %s10
  %s13 = scalar_select 0, %s12, %s10
  $region1: #{feature_extractor_elevation.1} parent=0
    #allocation2 [shape = 'u8[278528]{0}', space=vmem, size = 0x44000, scoped, tag = 'input window, operand 0']
    #allocation3 [shape = 'u8[32768]{0}', space=vmem, size = 0x8000, scoped, tag = 'output window, operand 0']
    #allocation4 [shape = 's32[2]{0}', space=sflag, size = 0x8, scoped, tag = 'scoped memory for feature_extractor_elevation.1']
    %14 = vsyncpa [#allocation4], 0
    %s15 = scalar_lea.sflag [#allocation4], 1
    %16 = vsyncpa %s15, 0
    loop: start=0, step=1, limit=4
    $region2: #{feature_extractor_elevation.1} parent=1 // loop_pre_header
      _
    $region3: #{feature_extractor_elevation.1} parent=1 // loop_header
      %s18 = sphi 0, %s22
      %p19 = scmp.ge.s32.totalorder %s18, 4
      %s28 = sphi 0, %s30
      %s31 = sphi 0, %s28
      %s32 = sphi 0, %s31
      %s48 = sphi 0, %s32
      %s52 = sphi 0, %s52
      %s54 = sphi 0, %s52
      %s55 = sphi 0, %s54
      %s69 = sphi 0, %s55
      %s73 = sphi 0, %s73
      %s75 = sphi 0, %s73
      %s76 = sphi 0, %s75
      %s90 = sphi 0, %s76
      %s94 = sphi 0, %s94
      %s96 = sphi 0, %s94
      %s97 = sphi 0, %s96
      %s111 = sphi 0, %s97
      %s115 = sphi 0, %s115
      %s117 = sphi 0, %s115
      %s118 = sphi 0, %s117
      %s132 = sphi 0, %s118
      %s136 = sphi 0, %s136
      %s138 = sphi 0, %s136
      %s139 = sphi 0, %s138
      %s153 = sphi 0, %s139
      %s157 = sphi 0, %s157
      %s159 = sphi 0, %s157
      %s160 = sphi 0, %s159
      %s174 = sphi 0, %s160
      %s178 = sphi 0, %s178
      %s180 = sphi 0, %s178
      %s181 = sphi 0, %s180
      %s195 = sphi 0, %s181
      %s199 = sphi 0, %s199
      %s201 = sphi 0, %s199
      %s202 = sphi 0, %s201
      %s216 = sphi 0, %s202
      %s222 = sphi 0, %s224
      %s225 = sphi 0, %s222
      %s226 = sphi 0, %s225
      %s242 = sphi 0, %s226
    $region4: #{feature_extractor_elevation.1} parent=1 // loop_header_branch
      %21 = sbr.rel (%p19) target = $region8
    $region5: #{feature_extractor_elevation.1} parent=1 // loop_body
      %s23 = ssub.s32 %s18, 1
      %s24 = ssub.s32 %s18, 2
      %s25 = sadd.s32 %s18, 1
      %s26 = ssub.s32 %s18, %s25
      %p27 = scmp.eq.s32.totalorder %s26, 0
      %s29 = sadd.s32 %s28, 1
      %s30 = scalar_select %p27, %s28, %s29
      %p33 = pneg %p27
      %p34 = scmp.eq.s32.totalorder %s18, 1
      %p35 = por %p33, %p34
      %p36 = scmp.ne.s32.totalorder %s28, %s31
      %p37 = scmp.eq.s32.totalorder %s18, 0
      %p38 = por %p36, %p37
      %p39 = scmp.ne.s32.totalorder %s28, %s31
      %p40 = scmp.eq.s32.totalorder %s23, 1
      %p41 = por %p39, %p40
      %p42 = scmp.ne.s32.totalorder %s31, %s32
      %p43 = scmp.eq.s32.totalorder %s23, 0
      %p44 = por %p42, %p43
      %p45 = scmp.ne.s32.totalorder %s31, %s32
      %p46 = scmp.eq.s32.totalorder %s24, 1
      %p47 = por %p45, %p46
      %p49 = scmp.ne.s32.totalorder %s32, %s48
      %p50 = scmp.eq.s32.totalorder %s24, 0
      %p51 = por %p49, %p50
      %s53 = sadd.s32 %s52, 1
      %p56 = scmp.eq.s32.totalorder %s18, 1
      %p57 = scmp.ne.s32.totalorder %s52, %s54
      %p58 = scmp.eq.s32.totalorder %s18, 0
      %p59 = por %p57, %p58
      %p60 = scmp.ne.s32.totalorder %s52, %s54
      %p61 = scmp.eq.s32.totalorder %s23, 1
      %p62 = por %p60, %p61
      %p63 = scmp.ne.s32.totalorder %s54, %s55
      %p64 = scmp.eq.s32.totalorder %s23, 0
      %p65 = por %p63, %p64
      %p66 = scmp.ne.s32.totalorder %s54, %s55
      %p67 = scmp.eq.s32.totalorder %s24, 1
      %p68 = por %p66, %p67
      %p70 = scmp.ne.s32.totalorder %s55, %s69
      %p71 = scmp.eq.s32.totalorder %s24, 0
      %p72 = por %p70, %p71
      %s74 = sadd.s32 %s73, 1
      %p77 = scmp.eq.s32.totalorder %s18, 1
      %p78 = scmp.ne.s32.totalorder %s73, %s75
      %p79 = scmp.eq.s32.totalorder %s18, 0
      %p80 = por %p78, %p79
      %p81 = scmp.ne.s32.totalorder %s73, %s75
      %p82 = scmp.eq.s32.totalorder %s23, 1
      %p83 = por %p81, %p82
      %p84 = scmp.ne.s32.totalorder %s75, %s76
      %p85 = scmp.eq.s32.totalorder %s23, 0
      %p86 = por %p84, %p85
      %p87 = scmp.ne.s32.totalorder %s75, %s76
      %p88 = scmp.eq.s32.totalorder %s24, 1
      %p89 = por %p87, %p88
      %p91 = scmp.ne.s32.totalorder %s76, %s90
      %p92 = scmp.eq.s32.totalorder %s24, 0
      %p93 = por %p91, %p92
      %s95 = sadd.s32 %s94, 1
      %p98 = scmp.eq.s32.totalorder %s18, 1
      %p99 = scmp.ne.s32.totalorder %s94, %s96
      %p100 = scmp.eq.s32.totalorder %s18, 0
      %p101 = por %p99, %p100
      %p102 = scmp.ne.s32.totalorder %s94, %s96
      %p103 = scmp.eq.s32.totalorder %s23, 1
      %p104 = por %p102, %p103
      %p105 = scmp.ne.s32.totalorder %s96, %s97
      %p106 = scmp.eq.s32.totalorder %s23, 0
      %p107 = por %p105, %p106
      %p108 = scmp.ne.s32.totalorder %s96, %s97
      %p109 = scmp.eq.s32.totalorder %s24, 1
      %p110 = por %p108, %p109
      %p112 = scmp.ne.s32.totalorder %s97, %s111
      %p113 = scmp.eq.s32.totalorder %s24, 0
      %p114 = por %p112, %p113
      %s116 = sadd.s32 %s115, 1
      %p119 = scmp.eq.s32.totalorder %s18, 1
      %p120 = scmp.ne.s32.totalorder %s115, %s117
      %p121 = scmp.eq.s32.totalorder %s18, 0
      %p122 = por %p120, %p121
      %p123 = scmp.ne.s32.totalorder %s115, %s117
      %p124 = scmp.eq.s32.totalorder %s23, 1
      %p125 = por %p123, %p124
      %p126 = scmp.ne.s32.totalorder %s117, %s118
      %p127 = scmp.eq.s32.totalorder %s23, 0
      %p128 = por %p126, %p127
      %p129 = scmp.ne.s32.totalorder %s117, %s118
      %p130 = scmp.eq.s32.totalorder %s24, 1
      %p131 = por %p129, %p130
      %p133 = scmp.ne.s32.totalorder %s118, %s132
      %p134 = scmp.eq.s32.totalorder %s24, 0
      %p135 = por %p133, %p134
      %s137 = sadd.s32 %s136, 1
      %p140 = scmp.eq.s32.totalorder %s18, 1
      %p141 = scmp.ne.s32.totalorder %s136, %s138
      %p142 = scmp.eq.s32.totalorder %s18, 0
      %p143 = por %p141, %p142
      %p144 = scmp.ne.s32.totalorder %s136, %s138
      %p145 = scmp.eq.s32.totalorder %s23, 1
      %p146 = por %p144, %p145
      %p147 = scmp.ne.s32.totalorder %s138, %s139
      %p148 = scmp.eq.s32.totalorder %s23, 0
      %p149 = por %p147, %p148
      %p150 = scmp.ne.s32.totalorder %s138, %s139
      %p151 = scmp.eq.s32.totalorder %s24, 1
      %p152 = por %p150, %p151
      %p154 = scmp.ne.s32.totalorder %s139, %s153
      %p155 = scmp.eq.s32.totalorder %s24, 0
      %p156 = por %p154, %p155
      %s158 = sadd.s32 %s157, 1
      %p161 = scmp.eq.s32.totalorder %s18, 1
      %p162 = scmp.ne.s32.totalorder %s157, %s159
      %p163 = scmp.eq.s32.totalorder %s18, 0
      %p164 = por %p162, %p163
      %p165 = scmp.ne.s32.totalorder %s157, %s159
      %p166 = scmp.eq.s32.totalorder %s23, 1
      %p167 = por %p165, %p166
      %p168 = scmp.ne.s32.totalorder %s159, %s160
      %p169 = scmp.eq.s32.totalorder %s23, 0
      %p170 = por %p168, %p169
      %p171 = scmp.ne.s32.totalorder %s159, %s160
      %p172 = scmp.eq.s32.totalorder %s24, 1
      %p173 = por %p171, %p172
      %p175 = scmp.ne.s32.totalorder %s160, %s174
      %p176 = scmp.eq.s32.totalorder %s24, 0
      %p177 = por %p175, %p176
      %s179 = sadd.s32 %s178, 1
      %p182 = scmp.eq.s32.totalorder %s18, 1
      %p183 = scmp.ne.s32.totalorder %s178, %s180
      %p184 = scmp.eq.s32.totalorder %s18, 0
      %p185 = por %p183, %p184
      %p186 = scmp.ne.s32.totalorder %s178, %s180
      %p187 = scmp.eq.s32.totalorder %s23, 1
      %p188 = por %p186, %p187
      %p189 = scmp.ne.s32.totalorder %s180, %s181
      %p190 = scmp.eq.s32.totalorder %s23, 0
      %p191 = por %p189, %p190
      %p192 = scmp.ne.s32.totalorder %s180, %s181
      %p193 = scmp.eq.s32.totalorder %s24, 1
      %p194 = por %p192, %p193
      %p196 = scmp.ne.s32.totalorder %s181, %s195
      %p197 = scmp.eq.s32.totalorder %s24, 0
      %p198 = por %p196, %p197
      %s200 = sadd.s32 %s199, 1
      %p203 = scmp.eq.s32.totalorder %s18, 1
      %p204 = scmp.ne.s32.totalorder %s199, %s201
      %p205 = scmp.eq.s32.totalorder %s18, 0
      %p206 = por %p204, %p205
      %p207 = scmp.ne.s32.totalorder %s199, %s201
      %p208 = scmp.eq.s32.totalorder %s23, 1
      %p209 = por %p207, %p208
      %p210 = scmp.ne.s32.totalorder %s201, %s202
      %p211 = scmp.eq.s32.totalorder %s23, 0
      %p212 = por %p210, %p211
      %p213 = scmp.ne.s32.totalorder %s201, %s202
      %p214 = scmp.eq.s32.totalorder %s24, 1
      %p215 = por %p213, %p214
      %p217 = scmp.ne.s32.totalorder %s202, %s216
      %p218 = scmp.eq.s32.totalorder %s24, 0
      %p219 = por %p217, %p218
      %s220 = ssub.s32 %s18, %s25
      %p221 = scmp.eq.s32.totalorder %s220, 0
      %s223 = sadd.s32 %s222, 1
      %s224 = scalar_select %p221, %s222, %s223
      %p227 = pneg %p221
      %p228 = scmp.eq.s32.totalorder %s18, 1
      %p229 = por %p227, %p228
      %p230 = scmp.ne.s32.totalorder %s222, %s225
      %p231 = scmp.eq.s32.totalorder %s18, 0
      %p232 = por %p230, %p231
      %p233 = scmp.ne.s32.totalorder %s222, %s225
      %p234 = scmp.eq.s32.totalorder %s23, 1
      %p235 = por %p233, %p234
      %p236 = scmp.ne.s32.totalorder %s225, %s226
      %p237 = scmp.eq.s32.totalorder %s23, 0
      %p238 = por %p236, %p237
      %p239 = scmp.ne.s32.totalorder %s225, %s226
      %p240 = scmp.eq.s32.totalorder %s24, 1
      %p241 = por %p239, %p240
      %p243 = scmp.ne.s32.totalorder %s226, %s242
      %p244 = scmp.eq.s32.totalorder %s24, 0
      %p245 = por %p243, %p244
      %p246 = scmp.le.s32.totalorder 1, %s18
      %p247 = scmp.lt.s32.totalorder %s18, 3
      %p248 = pnand %p246, %p247
      %p249 = pneg %p248
      // Predicated region
      $region9: #{feature_extractor_elevation.1} parent=5 // pred_check
        _
      $region10: #{feature_extractor_elevation.1} parent=5 // pred_check_branch
        %251 = sbr.rel (%p248) target = $region12
      $region11: #{feature_extractor_elevation.1} parent=5 // pred_region
        %s252 = ssub.s32 %s18, 1
        // Predicated region
        $region13: #{feature_extractor_elevation.1} parent=11 // pred_check
          %p253 = pneg %p65
        $region14: #{feature_extractor_elevation.1} parent=11 // pred_check_branch
          %255 = sbr.rel (%p253) target = $region16
        $region15: #{feature_extractor_elevation.1} parent=11 // pred_region
          _
        $region16: #{feature_extractor_elevation.1} parent=11 // pred_fallthru
          _
        // Predicated region
        $region17: #{feature_extractor_elevation.1} parent=11 // pred_check
          %p256 = pneg %p86
        $region18: #{feature_extractor_elevation.1} parent=11 // pred_check_branch
          %258 = sbr.rel (%p256) target = $region20
        $region19: #{feature_extractor_elevation.1} parent=11 // pred_region
          _
        $region20: #{feature_extractor_elevation.1} parent=11 // pred_fallthru
          _
        // Predicated region
        $region21: #{feature_extractor_elevation.1} parent=11 // pred_check
          %p259 = pneg %p107
        $region22: #{feature_extractor_elevation.1} parent=11 // pred_check_branch
          %261 = sbr.rel (%p259) target = $region24
        $region23: #{feature_extractor_elevation.1} parent=11 // pred_region
          _
        $region24: #{feature_extractor_elevation.1} parent=11 // pred_fallthru
          _
        // Predicated region
        $region25: #{feature_extractor_elevation.1} parent=11 // pred_check
          %p262 = pneg %p128
        $region26: #{feature_extractor_elevation.1} parent=11 // pred_check_branch
          %264 = sbr.rel (%p262) target = $region28
        $region27: #{feature_extractor_elevation.1} parent=11 // pred_region
          _
        $region28: #{feature_extractor_elevation.1} parent=11 // pred_fallthru
          _
        // Predicated region
        $region29: #{feature_extractor_elevation.1} parent=11 // pred_check
          %p265 = pneg %p149
        $region30: #{feature_extractor_elevation.1} parent=11 // pred_check_branch
          %267 = sbr.rel (%p265) target = $region32
        $region31: #{feature_extractor_elevation.1} parent=11 // pred_region
          _
        $region32: #{feature_extractor_elevation.1} parent=11 // pred_fallthru
          _
        // Predicated region
        $region33: #{feature_extractor_elevation.1} parent=11 // pred_check
          %p268 = pneg %p170
        $region34: #{feature_extractor_elevation.1} parent=11 // pred_check_branch
          %270 = sbr.rel (%p268) target = $region36
        $region35: #{feature_extractor_elevation.1} parent=11 // pred_region
          _
        $region36: #{feature_extractor_elevation.1} parent=11 // pred_fallthru
          _
        // Predicated region
        $region37: #{feature_extractor_elevation.1} parent=11 // pred_check
          %p271 = pneg %p191
        $region38: #{feature_extractor_elevation.1} parent=11 // pred_check_branch
          %273 = sbr.rel (%p271) target = $region40
        $region39: #{feature_extractor_elevation.1} parent=11 // pred_region
          _
        $region40: #{feature_extractor_elevation.1} parent=11 // pred_fallthru
          _
        // Predicated region
        $region41: #{feature_extractor_elevation.1} parent=11 // pred_check
          %p274 = pneg %p212
        $region42: #{feature_extractor_elevation.1} parent=11 // pred_check_branch
          %276 = sbr.rel (%p274) target = $region44
        $region43: #{feature_extractor_elevation.1} parent=11 // pred_region
          _
        $region44: #{feature_extractor_elevation.1} parent=11 // pred_fallthru
          _
      $region12: #{feature_extractor_elevation.1} parent=5 // pred_fallthru
        _
      %p277 = scmp.lt.s32.totalorder %s18, 2
      // Predicated region
      $region45: #{feature_extractor_elevation.1} parent=5 // pred_check
        %p278 = pneg %p277
      $region46: #{feature_extractor_elevation.1} parent=5 // pred_check_branch
        %280 = sbr.rel (%p278) target = $region48
      $region47: #{feature_extractor_elevation.1} parent=5 // pred_region
        // Predicated region
        $region49: #{feature_extractor_elevation.1} parent=47 // pred_check
          %p281 = pneg %p38
        $region50: #{feature_extractor_elevation.1} parent=47 // pred_check_branch
          %283 = sbr.rel (%p281) target = $region52
        $region51: #{feature_extractor_elevation.1} parent=47 // pred_region
          %s284 = sand.u32 %s28, 1
          %s285 = sand.u32 %s28, 1
          %s286 = smul.addr %s285, 272
          %s287 = scalar_lea.vmem [#allocation2], %s286
          %s288 = smul.u32 2, %s18
          %s289 = smul.addr %s288, 8
          %s290 = scalar_lea.vmem %s0, %s289
          // Predicated region
          $region53: #{feature_extractor_elevation.1} parent=51 // pred_check
            _
          $region54: #{feature_extractor_elevation.1} parent=51 // pred_check_branch
            %292 = sbr.rel (0) target = $region56
          $region55: #{feature_extractor_elevation.1} parent=51 // pred_region
            // Predicated region
            $region57: #{feature_extractor_elevation.1} parent=55 // pred_check
              _
            $region58: #{feature_extractor_elevation.1} parent=55 // pred_check_branch
              %294 = sbr.rel (0) target = $region60
            $region59: #{feature_extractor_elevation.1} parent=55 // pred_region
              // Predicated region
              $region72: #{feature_extractor_elevation.1} parent=59 // pred_check
                _
              $region73: #{feature_extractor_elevation.1} parent=59 // pred_check_branch
                %376 = sbr.rel (0) target = $region75
              $region74: #{feature_extractor_elevation.1} parent=59 // pred_region
                loop: start=0, step=1, limit=1
                $region76: #{feature_extractor_elevation.1} parent=74 // loop_pre_header
                  _
                $region77: #{feature_extractor_elevation.1} parent=74 // loop_header
                  %s378 = sphi 0, %s382
                  %p379 = scmp.ge.s32.totalorder %s378, 1
                  %s383 = sphi %s290, %s290
                  %s384 = sphi %s287, %s287
                $region78: #{feature_extractor_elevation.1} parent=74 // loop_header_branch
                  %381 = sbr.rel (%p379) target = $region82
                $region79: #{feature_extractor_elevation.1} parent=74 // loop_body
                  %v385 = vld [vmem:[%s383] sm:$0xff]
                  %386 = vst [vmem:[%s384] sm:$0xff] %v385
                  %v387 = vld [vmem:[%s383 + $0x8] sm:$0xff]
                  %388 = vst [vmem:[%s384 + $0x8] sm:$0xff] %v387
                  %v389 = vld [vmem:[%s383 + $0x20] sm:$0xff]
                  %390 = vst [vmem:[%s384 + $0x10] sm:$0xff] %v389
                  %v391 = vld [vmem:[%s383 + $0x28] sm:$0xff]
                  %392 = vst [vmem:[%s384 + $0x18] sm:$0xff] %v391
                  %v393 = vld [vmem:[%s383 + $0x40] sm:$0xff]
                  %394 = vst [vmem:[%s384 + $0x20] sm:$0xff] %v393
                  %v395 = vld [vmem:[%s383 + $0x48] sm:$0xff]
                  %396 = vst [vmem:[%s384 + $0x28] sm:$0xff] %v395
                  %v397 = vld [vmem:[%s383 + $0x60] sm:$0xff]
                  %398 = vst [vmem:[%s384 + $0x30] sm:$0xff] %v397
                  %v399 = vld [vmem:[%s383 + $0x68] sm:$0xff]
                  %400 = vst [vmem:[%s384 + $0x38] sm:$0xff] %v399
                  %v401 = vld [vmem:[%s383 + $0x80] sm:$0xff]
                  %402 = vst [vmem:[%s384 + $0x40] sm:$0xff] %v401
                  %v403 = vld [vmem:[%s383 + $0x88] sm:$0xff]
                  %404 = vst [vmem:[%s384 + $0x48] sm:$0xff] %v403
                  %v405 = vld [vmem:[%s383 + $0xa0] sm:$0xff]
                  %406 = vst [vmem:[%s384 + $0x50] sm:$0xff] %v405
                  %v407 = vld [vmem:[%s383 + $0xa8] sm:$0xff]
                  %408 = vst [vmem:[%s384 + $0x58] sm:$0xff] %v407
                  %v409 = vld [vmem:[%s383 + $0xc0] sm:$0xff]
                  %410 = vst [vmem:[%s384 + $0x60] sm:$0xff] %v409
                  %v411 = vld [vmem:[%s383 + $0xc8] sm:$0xff]
                  %412 = vst [vmem:[%s384 + $0x68] sm:$0xff] %v411
                  %v413 = vld [vmem:[%s383 + $0xe0] sm:$0xff]
                  %414 = vst [vmem:[%s384 + $0x70] sm:$0xff] %v413
                  %v415 = vld [vmem:[%s383 + $0xe8] sm:$0xff]
                  %416 = vst [vmem:[%s384 + $0x78] sm:$0xff] %v415
                  %v417 = vld [vmem:[%s383 + $0x100] sm:$0xff]
                  %418 = vst [vmem:[%s384 + $0x80] sm:$0xff] %v417
                  %v419 = vld [vmem:[%s383 + $0x108] sm:$0xff]
                  %420 = vst [vmem:[%s384 + $0x88] sm:$0xff] %v419
                  %v421 = vld [vmem:[%s383 + $0x120] sm:$0xff]
                  %422 = vst [vmem:[%s384 + $0x90] sm:$0xff] %v421
                  %v423 = vld [vmem:[%s383 + $0x128] sm:$0xff]
                  %424 = vst [vmem:[%s384 + $0x98] sm:$0xff] %v423
                  %v425 = vld [vmem:[%s383 + $0x140] sm:$0xff]
                  %426 = vst [vmem:[%s384 + $0xa0] sm:$0xff] %v425
                  %v427 = vld [vmem:[%s383 + $0x148] sm:$0xff]
                  %428 = vst [vmem:[%s384 + $0xa8] sm:$0xff] %v427
                  %v429 = vld [vmem:[%s383 + $0x160] sm:$0xff]
                  %430 = vst [vmem:[%s384 + $0xb0] sm:$0xff] %v429
                  %v431 = vld [vmem:[%s383 + $0x168] sm:$0xff]
                  %432 = vst [vmem:[%s384 + $0xb8] sm:$0xff] %v431
                  %v433 = vld [vmem:[%s383 + $0x180] sm:$0xff]
                  %434 = vst [vmem:[%s384 + $0xc0] sm:$0xff] %v433
                  %v435 = vld [vmem:[%s383 + $0x188] sm:$0xff]
                  %436 = vst [vmem:[%s384 + $0xc8] sm:$0xff] %v435
                  %v437 = vld [vmem:[%s383 + $0x1a0] sm:$0xff]
                  %438 = vst [vmem:[%s384 + $0xd0] sm:$0xff] %v437
                  %v439 = vld [vmem:[%s383 + $0x1a8] sm:$0xff]
                  %440 = vst [vmem:[%s384 + $0xd8] sm:$0xff] %v439
                  %v441 = vld [vmem:[%s383 + $0x1c0] sm:$0xff]
                  %442 = vst [vmem:[%s384 + $0xe0] sm:$0xff] %v441
                  %v443 = vld [vmem:[%s383 + $0x1c8] sm:$0xff]
                  %444 = vst [vmem:[%s384 + $0xe8] sm:$0xff] %v443
                  %v445 = vld [vmem:[%s383 + $0x1e0] sm:$0xff]
                  %446 = vst [vmem:[%s384 + $0xf0] sm:$0xff] %v445
                  %v447 = vld [vmem:[%s383 + $0x1e8] sm:$0xff]
                  %448 = vst [vmem:[%s384 + $0xf8] sm:$0xff] %v447
                  %v449 = vld [vmem:[%s383 + $0x200] sm:$0xff]
                  %450 = vst [vmem:[%s384 + $0x100] sm:$0xff] %v449
                  %v451 = vld [vmem:[%s383 + $0x208] sm:$0xff]
                  %452 = vst [vmem:[%s384 + $0x108] sm:$0xff] %v451
                $region80: #{feature_extractor_elevation.1} parent=74 // loop_footer
                  %s382 = sadd.s32 1, %s378
                $region81: #{feature_extractor_elevation.1} parent=74 // loop_footer_branch
                  %377 = sbr.rel target = $region77
                $region82: #{feature_extractor_elevation.1} parent=74 // loop_exit
                  _
              $region75: #{feature_extractor_elevation.1} parent=59 // pred_fallthru
                _
              // Predicated region
              $region83: #{feature_extractor_elevation.1} parent=59 // pred_check
                _
              $region84: #{feature_extractor_elevation.1} parent=59 // pred_check_branch
                %454 = sbr.rel target = $region86
              $region85: #{feature_extractor_elevation.1} parent=59 // pred_region
                _
              $region86: #{feature_extractor_elevation.1} parent=59 // pred_fallthru
                _
            $region60: #{feature_extractor_elevation.1} parent=55 // pred_fallthru
              _
            // Predicated region
            $region61: #{feature_extractor_elevation.1} parent=55 // pred_check
              _
            $region62: #{feature_extractor_elevation.1} parent=55 // pred_check_branch
              %296 = sbr.rel target = $region64
            $region63: #{feature_extractor_elevation.1} parent=55 // pred_region
              %s298 = ssub.s32 256, 1
              loop: start=0, step=1, limit=1
              $region65: #{feature_extractor_elevation.1} parent=63 // loop_pre_header
                _
              $region66: #{feature_extractor_elevation.1} parent=63 // loop_header
                %s300 = sphi 0, %s304
                %p301 = scmp.ge.s32.totalorder %s300, 1
                %s305 = sphi %s290, %s290
                %s306 = sphi %s287, %s287
              $region67: #{feature_extractor_elevation.1} parent=63 // loop_header_branch
                %303 = sbr.rel (%p301) target = $region71
              $region68: #{feature_extractor_elevation.1} parent=63 // loop_body
                %v307 = vld [vmem:[%s305] sm:%s298]
                %308 = vst [vmem:[%s306] sm:%s298] %v307
                %v309 = vld [vmem:[%s305 + $0x8] sm:%s298]
                %310 = vst [vmem:[%s306 + $0x8] sm:%s298] %v309
                %v311 = vld [vmem:[%s305 + $0x20] sm:%s298]
                %312 = vst [vmem:[%s306 + $0x10] sm:%s298] %v311
                %v313 = vld [vmem:[%s305 + $0x28] sm:%s298]
                %314 = vst [vmem:[%s306 + $0x18] sm:%s298] %v313
                %v315 = vld [vmem:[%s305 + $0x40] sm:%s298]
                %316 = vst [vmem:[%s306 + $0x20] sm:%s298] %v315
                %v317 = vld [vmem:[%s305 + $0x48] sm:%s298]
                %318 = vst [vmem:[%s306 + $0x28] sm:%s298] %v317
                %v319 = vld [vmem:[%s305 + $0x60] sm:%s298]
                %320 = vst [vmem:[%s306 + $0x30] sm:%s298] %v319
                %v321 = vld [vmem:[%s305 + $0x68] sm:%s298]
                %322 = vst [vmem:[%s306 + $0x38] sm:%s298] %v321
                %v323 = vld [vmem:[%s305 + $0x80] sm:%s298]
                %324 = vst [vmem:[%s306 + $0x40] sm:%s298] %v323
                %v325 = vld [vmem:[%s305 + $0x88] sm:%s298]
                %326 = vst [vmem:[%s306 + $0x48] sm:%s298] %v325
                %v327 = vld [vmem:[%s305 + $0xa0] sm:%s298]
                %328 = vst [vmem:[%s306 + $0x50] sm:%s298] %v327
                %v329 = vld [vmem:[%s305 + $0xa8] sm:%s298]
                %330 = vst [vmem:[%s306 + $0x58] sm:%s298] %v329
                %v331 = vld [vmem:[%s305 + $0xc0] sm:%s298]
                %332 = vst [vmem:[%s306 + $0x60] sm:%s298] %v331
                %v333 = vld [vmem:[%s305 + $0xc8] sm:%s298]
                %334 = vst [vmem:[%s306 + $0x68] sm:%s298] %v333
                %v335 = vld [vmem:[%s305 + $0xe0] sm:%s298]
                %336 = vst [vmem:[%s306 + $0x70] sm:%s298] %v335
                %v337 = vld [vmem:[%s305 + $0xe8] sm:%s298]
                %338 = vst [vmem:[%s306 + $0x78] sm:%s298] %v337
                %v339 = vld [vmem:[%s305 + $0x100] sm:%s298]
                %340 = vst [vmem:[%s306 + $0x80] sm:%s298] %v339
                %v341 = vld [vmem:[%s305 + $0x108] sm:%s298]
                %342 = vst [vmem:[%s306 + $0x88] sm:%s298] %v341
                %v343 = vld [vmem:[%s305 + $0x120] sm:%s298]
                %344 = vst [vmem:[%s306 + $0x90] sm:%s298] %v343
                %v345 = vld [vmem:[%s305 + $0x128] sm:%s298]
                %346 = vst [vmem:[%s306 + $0x98] sm:%s298] %v345
                %v347 = vld [vmem:[%s305 + $0x140] sm:%s298]
                %348 = vst [vmem:[%s306 + $0xa0] sm:%s298] %v347
                %v349 = vld [vmem:[%s305 + $0x148] sm:%s298]
                %350 = vst [vmem:[%s306 + $0xa8] sm:%s298] %v349
                %v351 = vld [vmem:[%s305 + $0x160] sm:%s298]
                %352 = vst [vmem:[%s306 + $0xb0] sm:%s298] %v351
                %v353 = vld [vmem:[%s305 + $0x168] sm:%s298]
                %354 = vst [vmem:[%s306 + $0xb8] sm:%s298] %v353
                %v355 = vld [vmem:[%s305 + $0x180] sm:%s298]
                %356 = vst [vmem:[%s306 + $0xc0] sm:%s298] %v355
                %v357 = vld [vmem:[%s305 + $0x188] sm:%s298]
                %358 = vst [vmem:[%s306 + $0xc8] sm:%s298] %v357
                %v359 = vld [vmem:[%s305 + $0x1a0] sm:%s298]
                %360 = vst [vmem:[%s306 + $0xd0] sm:%s298] %v359
                %v361 = vld [vmem:[%s305 + $0x1a8] sm:%s298]
                %362 = vst [vmem:[%s306 + $0xd8] sm:%s298] %v361
                %v363 = vld [vmem:[%s305 + $0x1c0] sm:%s298]
                %364 = vst [vmem:[%s306 + $0xe0] sm:%s298] %v363
                %v365 = vld [vmem:[%s305 + $0x1c8] sm:%s298]
                %366 = vst [vmem:[%s306 + $0xe8] sm:%s298] %v365
                %v367 = vld [vmem:[%s305 + $0x1e0] sm:%s298]
                %368 = vst [vmem:[%s306 + $0xf0] sm:%s298] %v367
                %v369 = vld [vmem:[%s305 + $0x1e8] sm:%s298]
                %370 = vst [vmem:[%s306 + $0xf8] sm:%s298] %v369
                %v371 = vld [vmem:[%s305 + $0x200] sm:%s298]
                %372 = vst [vmem:[%s306 + $0x100] sm:%s298] %v371
                %v373 = vld [vmem:[%s305 + $0x208] sm:%s298]
                %374 = vst [vmem:[%s306 + $0x108] sm:%s298] %v373
              $region69: #{feature_extractor_elevation.1} parent=63 // loop_footer
                %s304 = sadd.s32 1, %s300
              $region70: #{feature_extractor_elevation.1} parent=63 // loop_footer_branch
                %299 = sbr.rel target = $region66
              $region71: #{feature_extractor_elevation.1} parent=63 // loop_exit
                _
            $region64: #{feature_extractor_elevation.1} parent=55 // pred_fallthru
              _
          $region56: #{feature_extractor_elevation.1} parent=51 // pred_fallthru
            _
          %455 = vnop
        $region52: #{feature_extractor_elevation.1} parent=47 // pred_fallthru
          _
      $region48: #{feature_extractor_elevation.1} parent=5 // pred_fallthru
        _
      %p456 = scmp.le.s32.totalorder 1, %s18
      %p457 = scmp.lt.s32.totalorder %s18, 3
      %p458 = pnand %p456, %p457
      %p459 = pneg %p458
      // Predicated region
      $region87: #{feature_extractor_elevation.1} parent=5 // pred_check
        _
      $region88: #{feature_extractor_elevation.1} parent=5 // pred_check_branch
        %461 = sbr.rel (%p458) target = $region90
      $region89: #{feature_extractor_elevation.1} parent=5 // pred_region
        %s462 = ssub.s32 %s18, 1
        %s463 = sand.u32 %s31, 1
        %s464 = sand.u32 %s31, 1
        %s465 = smul.addr %s464, 272
        %s466 = scalar_lea.vmem [#allocation2], %s465
        // Predicated region
        $region91: #{feature_extractor_elevation.1} parent=89 // pred_check
          %p467 = pneg %p44
        $region92: #{feature_extractor_elevation.1} parent=89 // pred_check_branch
          %469 = sbr.rel (%p467) target = $region94
        $region93: #{feature_extractor_elevation.1} parent=89 // pred_region
          _
        $region94: #{feature_extractor_elevation.1} parent=89 // pred_fallthru
          _
        %s470 = sand.u32 %s31, 1
        %s471 = sand.u32 %s31, 1
        %s472 = smul.addr %s471, 272
        %s473 = scalar_lea.vmem [#allocation2], %s472
        %p474 = pneg %p44
        %p475 = pneg %p41
        %p476 = pneg %p65
        %p477 = pneg %p62
        %p478 = pneg %p86
        %p479 = pneg %p83
        %p480 = pneg %p107
        %p481 = pneg %p104
        %p482 = pneg %p128
        %p483 = pneg %p125
        %p484 = pneg %p149
        %p485 = pneg %p146
        %p486 = pneg %p170
        %p487 = pneg %p167
        %p488 = pneg %p191
        %p489 = pneg %p188
        %p490 = pneg %p212
        %p491 = pneg %p209
        %p492 = pneg %p238
        %p493 = pneg %p235
        %s494 = sand.u32 %s225, 1
        %s495 = scalar_lea.sflag [#allocation4], %s494
        %s496 = sand.u32 %s225, 1
        %s497 = smul.addr %s496, 32
        %s498 = scalar_lea.vmem [#allocation3], %s497
        %s499 = smul.u32 2, %s23
        %s500 = smul.u32 2, %s23
        %v502 = vld [vmem:[%s466] sm:$0xff]
        %v503 = vld [vmem:[%s466 + $0x8] sm:$0xff]
        %v504 = vld [vmem:[%s466 + $0x10] sm:$0xff]
        %v505 = vld [vmem:[%s466 + $0x18] sm:$0xff]
        %v506 = vld [vmem:[%s466 + $0x20] sm:$0xff]
        %v507 = vld [vmem:[%s466 + $0x28] sm:$0xff]
        %v508 = vld [vmem:[%s466 + $0x30] sm:$0xff]
        %v509 = vld [vmem:[%s466 + $0x38] sm:$0xff]
        %v510 = vld [vmem:[%s466 + $0x40] sm:$0xff]
        %v511 = vld [vmem:[%s466 + $0x48] sm:$0xff]
        %v512 = vld [vmem:[%s466 + $0x50] sm:$0xff]
        %v513 = vld [vmem:[%s466 + $0x58] sm:$0xff]
        %v514 = vld [vmem:[%s466 + $0x60] sm:$0xff]
        %v515 = vld [vmem:[%s466 + $0x68] sm:$0xff]
        %v516 = vld [vmem:[%s466 + $0x70] sm:$0xff]
        %v517 = vld [vmem:[%s466 + $0x78] sm:$0xff]
        %v518 = vld [vmem:[%s466 + $0x80] sm:$0xff]
        %v519 = vld [vmem:[%s466 + $0x88] sm:$0xff]
        %v520 = vld [vmem:[%s466 + $0x90] sm:$0xff]
        %v521 = vld [vmem:[%s466 + $0x98] sm:$0xff]
        %v522 = vld [vmem:[%s466 + $0xa0] sm:$0xff]
        %v523 = vld [vmem:[%s466 + $0xa8] sm:$0xff]
        %v524 = vld [vmem:[%s466 + $0xb0] sm:$0xff]
        %v525 = vld [vmem:[%s466 + $0xb8] sm:$0xff]
        %v526 = vld [vmem:[%s466 + $0xc0] sm:$0xff]
        %v527 = vld [vmem:[%s466 + $0xc8] sm:$0xff]
        %v528 = vld [vmem:[%s466 + $0xd0] sm:$0xff]
        %v529 = vld [vmem:[%s466 + $0xd8] sm:$0xff]
        %v530 = vld [vmem:[%s466 + $0xe0] sm:$0xff]
        %v531 = vld [vmem:[%s466 + $0xe8] sm:$0xff]
        %v532 = vld [vmem:[%s466 + $0xf0] sm:$0xff]
        %v533 = vld [vmem:[%s466 + $0xf8] sm:$0xff]
        %v534 = vld [vmem:[%s466 + $0x100] sm:$0xff]
        %v535 = vld [vmem:[%s466 + $0x108] sm:$0xff]
        %v536 = vpack.c.bf16 %v502, %v502
        %v537 = vpack.c.bf16 %v503, %v503
        %v538 = vpack.c.bf16 %v504, %v504
        %v539 = vpack.c.bf16 %v505, %v505
        %v540 = vpack.c.bf16 %v506, %v506
        %v541 = vpack.c.bf16 %v507, %v507
        %v542 = vpack.c.bf16 %v508, %v508
        %v543 = vpack.c.bf16 %v509, %v509
        %v544 = vpack.c.bf16 %v510, %v510
        %v545 = vpack.c.bf16 %v511, %v511
        %v546 = vpack.c.bf16 %v512, %v512
        %v547 = vpack.c.bf16 %v513, %v513
        %v548 = vpack.c.bf16 %v514, %v514
        %v549 = vpack.c.bf16 %v515, %v515
        %v550 = vpack.c.bf16 %v516, %v516
        %v551 = vpack.c.bf16 %v517, %v517
        %v552 = vpack.c.bf16 %v518, %v518
        %v553 = vpack.c.bf16 %v519, %v519
        %v554 = vpack.c.bf16 %v520, %v520
        %v555 = vpack.c.bf16 %v521, %v521
        %v556 = vpack.c.bf16 %v522, %v522
        %v557 = vpack.c.bf16 %v523, %v523
        %v558 = vpack.c.bf16 %v524, %v524
        %v559 = vpack.c.bf16 %v525, %v525
        %v560 = vpack.c.bf16 %v526, %v526
        %v561 = vpack.c.bf16 %v527, %v527
        %v562 = vpack.c.bf16 %v528, %v528
        %v563 = vpack.c.bf16 %v529, %v529
        %v564 = vpack.c.bf16 %v530, %v530
        %v565 = vpack.c.bf16 %v531, %v531
        %v566 = vpack.c.bf16 %v532, %v532
        %v567 = vpack.c.bf16 %v533, %v533
        %v568 = vpack.c.bf16 %v534, %v534
        %v569 = vpack.c.bf16 %v535, %v535
        %v570 = vld [vmem:[%s1] sm:$0xf]
        %v571 = vld [vmem:[%s1 + $0x4] sm:$0xf]
        %v572 = vld [vmem:[%s1 + $0x8] sm:$0xf]
        %v573 = vld [vmem:[%s1 + $0xc] sm:$0xf]
        %v574 = vld [vmem:[%s1 + $0x10] sm:$0xf]
        %v575 = vld [vmem:[%s1 + $0x14] sm:$0xf]
        %v576 = vld [vmem:[%s1 + $0x18] sm:$0xf]
        %v577 = vld [vmem:[%s1 + $0x1c] sm:$0xf]
        %v578 = vld [vmem:[%s1 + $0x20] sm:$0x3]
        %v613 = vunpack.c.l.b16 %v536
        %v614 = vunpack.c.l.b16 %v537
        %v615 = vunpack.c.l.b16 %v538
        %v616 = vunpack.c.l.b16 %v539
        %v617 = vunpack.c.l.b16 %v540
        %v618 = vunpack.c.l.b16 %v541
        %v619 = vunpack.c.l.b16 %v542
        %v620 = vunpack.c.l.b16 %v543
        %v621 = vunpack.c.l.b16 %v544
        %v622 = vunpack.c.l.b16 %v545
        %v623 = vunpack.c.l.b16 %v546
        %v624 = vunpack.c.l.b16 %v547
        %v625 = vunpack.c.l.b16 %v548
        %v626 = vunpack.c.l.b16 %v549
        %v627 = vunpack.c.l.b16 %v550
        %v628 = vunpack.c.l.b16 %v551
        %v629 = vunpack.c.l.b16 %v552
        %v630 = vunpack.c.l.b16 %v553
        %v631 = vunpack.c.l.b16 %v554
        %v632 = vunpack.c.l.b16 %v555
        %v633 = vunpack.c.l.b16 %v556
        %v634 = vunpack.c.l.b16 %v557
        %v635 = vunpack.c.l.b16 %v558
        %v636 = vunpack.c.l.b16 %v559
        %v637 = vunpack.c.l.b16 %v560
        %v638 = vunpack.c.l.b16 %v561
        %v639 = vunpack.c.l.b16 %v562
        %v640 = vunpack.c.l.b16 %v563
        %v641 = vunpack.c.l.b16 %v564
        %v642 = vunpack.c.l.b16 %v565
        %v643 = vunpack.c.l.b16 %v566
        %v644 = vunpack.c.l.b16 %v567
        %v645 = vunpack.c.l.b16 %v568
        %v646 = vunpack.c.l.b16 %v569
        %v647 = vpack.c.b16 %v614, %v613
        %v648 = vpack.c.b16 %v616, %v615
        %v649 = vpack.c.b16 %v618, %v617
        %v650 = vpack.c.b16 %v620, %v619
        %v651 = vpack.c.b16 %v622, %v621
        %v652 = vpack.c.b16 %v624, %v623
        %v653 = vpack.c.b16 %v626, %v625
        %v654 = vpack.c.b16 %v628, %v627
        %v655 = vpack.c.b16 %v630, %v629
        %v656 = vpack.c.b16 %v632, %v631
        %v657 = vpack.c.b16 %v634, %v633
        %v658 = vpack.c.b16 %v636, %v635
        %v659 = vpack.c.b16 %v638, %v637
        %v660 = vpack.c.b16 %v640, %v639
        %v661 = vpack.c.b16 %v642, %v641
        %v662 = vpack.c.b16 %v644, %v643
        %v663 = vpack.c.b16 %v646, %v645
        %v673 = vunpack.c.l.b16 %v570
        %v674 = vunpack.c.l.b16 %v571
        %v675 = vunpack.c.l.b16 %v572
        %v676 = vunpack.c.l.b16 %v573
        %v677 = vunpack.c.l.b16 %v574
        %v678 = vunpack.c.l.b16 %v575
        %v679 = vunpack.c.l.b16 %v576
        %v680 = vunpack.c.l.b16 %v577
        %v681 = vunpack.c.l.b16 %v578
        %v682 = vpack.c.b16 %v674, %v673
        %v683 = vpack.c.b16 %v676, %v675
        %v684 = vpack.c.b16 %v678, %v677
        %v685 = vpack.c.b16 %v680, %v679
        %v686 = vpack.c.b16 %v681, %v681
        %vm691 = vcmask 556032
        %v693 = vsel %vm691, %v647, 0
        %v696 = vsel %vm691, %v648, 0
        %v699 = vsel %vm691, %v649, 0
        %v702 = vsel %vm691, %v650, 0
        %v705 = vsel %vm691, %v651, 0
        %v708 = vsel %vm691, %v652, 0
        %v711 = vsel %vm691, %v653, 0
        %v714 = vsel %vm691, %v654, 0
        %v717 = vsel %vm691, %v655, 0
        %v720 = vsel %vm691, %v656, 0
        %v723 = vsel %vm691, %v657, 0
        %v726 = vsel %vm691, %v658, 0
        %v729 = vsel %vm691, %v659, 0
        %v732 = vsel %vm691, %v660, 0
        %v735 = vsel %vm691, %v661, 0
        %v738 = vsel %vm691, %v662, 0
        %v741 = vsel %vm691, %v663, 0
        %vm743 = vcmask 1041408
        %v745 = vsel %vm743, %v686, 0
        %747 = vmatpush.bf16.msra.mxu0 0
        %748 = vmatpush.bf16.msra.mxu0 0
        %749 = vmatpush.bf16.msra.mxu0 0
        %750 = vmatpush.bf16.msra.mxu0 %v745
        %751 = vmatpush.bf16.msra.mxu0 %v685
        %752 = vmatpush.bf16.msra.mxu0 %v684
        %753 = vmatpush.bf16.msra.mxu0 %v683
        %754 = vmatpush.bf16.msra.mxu0 %v682
        %755 = vmatmul.bf16.gmra.mxu0 %v693
        %v756 = vpop.f32.mrf.mxu0
        %v757 = vadd.f32 0.0, %v756
        %v758 = vpop.f32.mrf.mxu0
        %v759 = vadd.f32 0.0, %v758
        %760 = vmatmul.bf16.gmra.mxu0 %v696
        %v761 = vpop.f32.mrf.mxu0
        %v762 = vadd.f32 0.0, %v761
        %v763 = vpop.f32.mrf.mxu0
        %v764 = vadd.f32 0.0, %v763
        %765 = vmatmul.bf16.gmra.mxu0 %v699
        %v766 = vpop.f32.mrf.mxu0
        %v767 = vadd.f32 0.0, %v766
        %v768 = vpop.f32.mrf.mxu0
        %v769 = vadd.f32 0.0, %v768
        %770 = vmatmul.bf16.gmra.mxu0 %v702
        %v771 = vpop.f32.mrf.mxu0
        %v772 = vadd.f32 0.0, %v771
        %v773 = vpop.f32.mrf.mxu0
        %v774 = vadd.f32 0.0, %v773
        %775 = vmatmul.bf16.gmra.mxu0 %v705
        %v776 = vpop.f32.mrf.mxu0
        %v777 = vadd.f32 0.0, %v776
        %v778 = vpop.f32.mrf.mxu0
        %v779 = vadd.f32 0.0, %v778
        %780 = vmatmul.bf16.gmra.mxu0 %v708
        %v781 = vpop.f32.mrf.mxu0
        %v782 = vadd.f32 0.0, %v781
        %v783 = vpop.f32.mrf.mxu0
        %v784 = vadd.f32 0.0, %v783
        %785 = vmatmul.bf16.gmra.mxu0 %v711
        %v786 = vpop.f32.mrf.mxu0
        %v787 = vadd.f32 0.0, %v786
        %v788 = vpop.f32.mrf.mxu0
        %v789 = vadd.f32 0.0, %v788
        %790 = vmatmul.bf16.gmra.mxu0 %v714
        %v791 = vpop.f32.mrf.mxu0
        %v792 = vadd.f32 0.0, %v791
        %v793 = vpop.f32.mrf.mxu0
        %v794 = vadd.f32 0.0, %v793
        %795 = vmatmul.bf16.gmra.mxu0 %v717
        %v796 = vpop.f32.mrf.mxu0
        %v797 = vadd.f32 0.0, %v796
        %v798 = vpop.f32.mrf.mxu0
        %v799 = vadd.f32 0.0, %v798
        %800 = vmatmul.bf16.gmra.mxu0 %v720
        %v801 = vpop.f32.mrf.mxu0
        %v802 = vadd.f32 0.0, %v801
        %v803 = vpop.f32.mrf.mxu0
        %v804 = vadd.f32 0.0, %v803
        %805 = vmatmul.bf16.gmra.mxu0 %v723
        %v806 = vpop.f32.mrf.mxu0
        %v807 = vadd.f32 0.0, %v806
        %v808 = vpop.f32.mrf.mxu0
        %v809 = vadd.f32 0.0, %v808
        %810 = vmatmul.bf16.gmra.mxu0 %v726
        %v811 = vpop.f32.mrf.mxu0
        %v812 = vadd.f32 0.0, %v811
        %v813 = vpop.f32.mrf.mxu0
        %v814 = vadd.f32 0.0, %v813
        %815 = vmatmul.bf16.gmra.mxu0 %v729
        %v816 = vpop.f32.mrf.mxu0
        %v817 = vadd.f32 0.0, %v816
        %v818 = vpop.f32.mrf.mxu0
        %v819 = vadd.f32 0.0, %v818
        %820 = vmatmul.bf16.gmra.mxu0 %v732
        %v821 = vpop.f32.mrf.mxu0
        %v822 = vadd.f32 0.0, %v821
        %v823 = vpop.f32.mrf.mxu0
        %v824 = vadd.f32 0.0, %v823
        %825 = vmatmul.bf16.gmra.mxu0 %v735
        %v826 = vpop.f32.mrf.mxu0
        %v827 = vadd.f32 0.0, %v826
        %v828 = vpop.f32.mrf.mxu0
        %v829 = vadd.f32 0.0, %v828
        %830 = vmatmul.bf16.gmra.mxu0 %v738
        %v831 = vpop.f32.mrf.mxu0
        %v832 = vpop.f32.mrf.mxu0
        %833 = vmatmul.bf16.gmra.mxu0 %v741
        %v834 = vpop.f32.mrf.mxu0
        %v835 = vpop.f32.mrf.mxu0
        %836 = vdwg.mxu0
        %s837 = scalar_lea.vmem %s1, 36
        %v838 = vld [vmem:[%s837] sm:$0xf]
        %v839 = vld [vmem:[%s837 + $0x4] sm:$0xf]
        %v840 = vld [vmem:[%s837 + $0x8] sm:$0xf]
        %v841 = vld [vmem:[%s837 + $0xc] sm:$0xf]
        %v842 = vld [vmem:[%s837 + $0x10] sm:$0xf]
        %v843 = vld [vmem:[%s837 + $0x14] sm:$0xf]
        %v844 = vld [vmem:[%s837 + $0x18] sm:$0xf]
        %v845 = vld [vmem:[%s837 + $0x1c] sm:$0xf]
        %v846 = vld [vmem:[%s837 + $0x20] sm:$0x3]
        %v856 = vunpack.c.l.b16 %v838
        %v857 = vunpack.c.l.b16 %v839
        %v858 = vunpack.c.l.b16 %v840
        %v859 = vunpack.c.l.b16 %v841
        %v860 = vunpack.c.l.b16 %v842
        %v861 = vunpack.c.l.b16 %v843
        %v862 = vunpack.c.l.b16 %v844
        %v863 = vunpack.c.l.b16 %v845
        %v864 = vunpack.c.l.b16 %v846
        %v865 = vpack.c.b16 %v857, %v856
        %v866 = vpack.c.b16 %v859, %v858
        %v867 = vpack.c.b16 %v861, %v860
        %v868 = vpack.c.b16 %v863, %v862
        %v869 = vpack.c.b16 %v864, %v864
        %v875 = vsel %vm743, %v869, 0
        %877 = vmatpush.bf16.msra.mxu0 0
        %878 = vmatpush.bf16.msra.mxu0 0
        %879 = vmatpush.bf16.msra.mxu0 0
        %880 = vmatpush.bf16.msra.mxu0 %v875
        %881 = vmatpush.bf16.msra.mxu0 %v868
        %882 = vmatpush.bf16.msra.mxu0 %v867
        %883 = vmatpush.bf16.msra.mxu0 %v866
        %884 = vmatpush.bf16.msra.mxu0 %v865
        %885 = vmatmul.bf16.gmra.mxu0 %v693
        %v886 = vpop.f32.mrf.mxu0
        %v887 = vpop.f32.mrf.mxu0
        %888 = vmatmul.bf16.gmra.mxu0 %v696
        %v889 = vpop.f32.mrf.mxu0
        %v890 = vadd.f32 0.0, %v889
        %v891 = vpop.f32.mrf.mxu0
        %v892 = vadd.f32 0.0, %v891
        %893 = vmatmul.bf16.gmra.mxu0 %v699
        %v894 = vpop.f32.mrf.mxu0
        %v895 = vadd.f32 0.0, %v894
        %v896 = vpop.f32.mrf.mxu0
        %v897 = vadd.f32 0.0, %v896
        %898 = vmatmul.bf16.gmra.mxu0 %v702
        %v899 = vpop.f32.mrf.mxu0
        %v900 = vadd.f32 0.0, %v899
        %v901 = vpop.f32.mrf.mxu0
        %v902 = vadd.f32 0.0, %v901
        %903 = vmatmul.bf16.gmra.mxu0 %v705
        %v904 = vpop.f32.mrf.mxu0
        %v905 = vadd.f32 0.0, %v904
        %v906 = vpop.f32.mrf.mxu0
        %v907 = vadd.f32 0.0, %v906
        %908 = vmatmul.bf16.gmra.mxu0 %v708
        %v909 = vpop.f32.mrf.mxu0
        %v910 = vadd.f32 0.0, %v909
        %v911 = vpop.f32.mrf.mxu0
        %v912 = vadd.f32 0.0, %v911
        %913 = vmatmul.bf16.gmra.mxu0 %v711
        %v914 = vpop.f32.mrf.mxu0
        %v915 = vadd.f32 0.0, %v914
        %v916 = vpop.f32.mrf.mxu0
        %v917 = vadd.f32 0.0, %v916
        %918 = vmatmul.bf16.gmra.mxu0 %v714
        %v919 = vpop.f32.mrf.mxu0
        %v920 = vadd.f32 0.0, %v919
        %v921 = vpop.f32.mrf.mxu0
        %v922 = vadd.f32 0.0, %v921
        %923 = vmatmul.bf16.gmra.mxu0 %v717
        %v924 = vpop.f32.mrf.mxu0
        %v925 = vadd.f32 0.0, %v924
        %v926 = vpop.f32.mrf.mxu0
        %v927 = vadd.f32 0.0, %v926
        %928 = vmatmul.bf16.gmra.mxu0 %v720
        %v929 = vpop.f32.mrf.mxu0
        %v930 = vadd.f32 0.0, %v929
        %v931 = vpop.f32.mrf.mxu0
        %v932 = vadd.f32 0.0, %v931
        %933 = vmatmul.bf16.gmra.mxu0 %v723
        %v934 = vpop.f32.mrf.mxu0
        %v935 = vadd.f32 0.0, %v934
        %v936 = vpop.f32.mrf.mxu0
        %v937 = vadd.f32 0.0, %v936
        %938 = vmatmul.bf16.gmra.mxu0 %v726
        %v939 = vpop.f32.mrf.mxu0
        %v940 = vadd.f32 0.0, %v939
        %v941 = vpop.f32.mrf.mxu0
        %v942 = vadd.f32 0.0, %v941
        %943 = vmatmul.bf16.gmra.mxu0 %v729
        %v944 = vpop.f32.mrf.mxu0
        %v945 = vadd.f32 0.0, %v944
        %v946 = vpop.f32.mrf.mxu0
        %v947 = vadd.f32 0.0, %v946
        %948 = vmatmul.bf16.gmra.mxu0 %v732
        %v949 = vpop.f32.mrf.mxu0
        %v950 = vadd.f32 0.0, %v949
        %v951 = vpop.f32.mrf.mxu0
        %v952 = vadd.f32 0.0, %v951
        %953 = vmatmul.bf16.gmra.mxu0 %v735
        %v954 = vpop.f32.mrf.mxu0
        %v955 = vadd.f32 0.0, %v954
        %v956 = vpop.f32.mrf.mxu0
        %v957 = vadd.f32 0.0, %v956
        %958 = vmatmul.bf16.gmra.mxu0 %v738
        %v959 = vpop.f32.mrf.mxu0
        %v960 = vadd.f32 0.0, %v959
        %v961 = vpop.f32.mrf.mxu0
        %v962 = vadd.f32 0.0, %v961
        %963 = vmatmul.bf16.gmra.mxu0 %v741
        %v964 = vpop.f32.mrf.mxu0
        %v965 = vpop.f32.mrf.mxu0
        %966 = vdwg.mxu0
        %s967 = scalar_lea.vmem %s1, 72
        %v968 = vld [vmem:[%s967] sm:$0xf]
        %v969 = vld [vmem:[%s967 + $0x4] sm:$0xf]
        %v970 = vld [vmem:[%s967 + $0x8] sm:$0xf]
        %v971 = vld [vmem:[%s967 + $0xc] sm:$0xf]
        %v972 = vld [vmem:[%s967 + $0x10] sm:$0xf]
        %v973 = vld [vmem:[%s967 + $0x14] sm:$0xf]
        %v974 = vld [vmem:[%s967 + $0x18] sm:$0xf]
        %v975 = vld [vmem:[%s967 + $0x1c] sm:$0xf]
        %v976 = vld [vmem:[%s967 + $0x20] sm:$0x3]
        %v986 = vunpack.c.l.b16 %v968
        %v987 = vunpack.c.l.b16 %v969
        %v988 = vunpack.c.l.b16 %v970
        %v989 = vunpack.c.l.b16 %v971
        %v990 = vunpack.c.l.b16 %v972
        %v991 = vunpack.c.l.b16 %v973
        %v992 = vunpack.c.l.b16 %v974
        %v993 = vunpack.c.l.b16 %v975
        %v994 = vunpack.c.l.b16 %v976
        %v995 = vpack.c.b16 %v987, %v986
        %v996 = vpack.c.b16 %v989, %v988
        %v997 = vpack.c.b16 %v991, %v990
        %v998 = vpack.c.b16 %v993, %v992
        %v999 = vpack.c.b16 %v994, %v994
        %v1005 = vsel %vm743, %v999, 0
        %1007 = vmatpush.bf16.msra.mxu0 0
        %1008 = vmatpush.bf16.msra.mxu0 0
        %1009 = vmatpush.bf16.msra.mxu0 0
        %1010 = vmatpush.bf16.msra.mxu0 %v1005
        %1011 = vmatpush.bf16.msra.mxu0 %v998
        %1012 = vmatpush.bf16.msra.mxu0 %v997
        %1013 = vmatpush.bf16.msra.mxu0 %v996
        %1014 = vmatpush.bf16.msra.mxu0 %v995
        %1015 = vmatmul.bf16.gmra.mxu0 %v693
        %v1016 = vpop.f32.mrf.mxu0
        %v1017 = vpop.f32.mrf.mxu0
        %1018 = vmatmul.bf16.gmra.mxu0 %v696
        %v1019 = vpop.f32.mrf.mxu0
        %v1020 = vpop.f32.mrf.mxu0
        %1021 = vmatmul.bf16.gmra.mxu0 %v699
        %v1022 = vpop.f32.mrf.mxu0
        %v1023 = vadd.f32 0.0, %v1022
        %v1024 = vpop.f32.mrf.mxu0
        %v1025 = vadd.f32 0.0, %v1024
        %1026 = vmatmul.bf16.gmra.mxu0 %v702
        %v1027 = vpop.f32.mrf.mxu0
        %v1028 = vadd.f32 0.0, %v1027
        %v1029 = vpop.f32.mrf.mxu0
        %v1030 = vadd.f32 0.0, %v1029
        %1031 = vmatmul.bf16.gmra.mxu0 %v705
        %v1032 = vpop.f32.mrf.mxu0
        %v1033 = vadd.f32 0.0, %v1032
        %v1034 = vpop.f32.mrf.mxu0
        %v1035 = vadd.f32 0.0, %v1034
        %1036 = vmatmul.bf16.gmra.mxu0 %v708
        %v1037 = vpop.f32.mrf.mxu0
        %v1038 = vadd.f32 0.0, %v1037
        %v1039 = vpop.f32.mrf.mxu0
        %v1040 = vadd.f32 0.0, %v1039
        %1041 = vmatmul.bf16.gmra.mxu0 %v711
        %v1042 = vpop.f32.mrf.mxu0
        %v1043 = vadd.f32 0.0, %v1042
        %v1044 = vpop.f32.mrf.mxu0
        %v1045 = vadd.f32 0.0, %v1044
        %1046 = vmatmul.bf16.gmra.mxu0 %v714
        %v1047 = vpop.f32.mrf.mxu0
        %v1048 = vadd.f32 0.0, %v1047
        %v1049 = vpop.f32.mrf.mxu0
        %v1050 = vadd.f32 0.0, %v1049
        %1051 = vmatmul.bf16.gmra.mxu0 %v717
        %v1052 = vpop.f32.mrf.mxu0
        %v1053 = vadd.f32 0.0, %v1052
        %v1054 = vpop.f32.mrf.mxu0
        %v1055 = vadd.f32 0.0, %v1054
        %1056 = vmatmul.bf16.gmra.mxu0 %v720
        %v1057 = vpop.f32.mrf.mxu0
        %v1058 = vadd.f32 0.0, %v1057
        %v1059 = vpop.f32.mrf.mxu0
        %v1060 = vadd.f32 0.0, %v1059
        %1061 = vmatmul.bf16.gmra.mxu0 %v723
        %v1062 = vpop.f32.mrf.mxu0
        %v1063 = vadd.f32 0.0, %v1062
        %v1064 = vpop.f32.mrf.mxu0
        %v1065 = vadd.f32 0.0, %v1064
        %1066 = vmatmul.bf16.gmra.mxu0 %v726
        %v1067 = vpop.f32.mrf.mxu0
        %v1068 = vadd.f32 0.0, %v1067
        %v1069 = vpop.f32.mrf.mxu0
        %v1070 = vadd.f32 0.0, %v1069
        %1071 = vmatmul.bf16.gmra.mxu0 %v729
        %v1072 = vpop.f32.mrf.mxu0
        %v1073 = vadd.f32 0.0, %v1072
        %v1074 = vpop.f32.mrf.mxu0
        %v1075 = vadd.f32 0.0, %v1074
        %1076 = vmatmul.bf16.gmra.mxu0 %v732
        %v1077 = vpop.f32.mrf.mxu0
        %v1078 = vadd.f32 0.0, %v1077
        %v1079 = vpop.f32.mrf.mxu0
        %v1080 = vadd.f32 0.0, %v1079
        %1081 = vmatmul.bf16.gmra.mxu0 %v735
        %v1082 = vpop.f32.mrf.mxu0
        %v1083 = vadd.f32 0.0, %v1082
        %v1084 = vpop.f32.mrf.mxu0
        %v1085 = vadd.f32 0.0, %v1084
        %1086 = vmatmul.bf16.gmra.mxu0 %v738
        %v1087 = vpop.f32.mrf.mxu0
        %v1088 = vadd.f32 0.0, %v1087
        %v1089 = vpop.f32.mrf.mxu0
        %v1090 = vadd.f32 0.0, %v1089
        %1091 = vmatmul.bf16.gmra.mxu0 %v741
        %v1092 = vpop.f32.mrf.mxu0
        %v1093 = vadd.f32 0.0, %v1092
        %v1094 = vpop.f32.mrf.mxu0
        %v1095 = vadd.f32 0.0, %v1094
        %1096 = vdwg.mxu0
        %v1097 = vadd.f32 %v757, %v890
        %v1098 = vadd.f32 %v759, %v892
        %v1099 = vadd.f32 %v762, %v895
        %v1100 = vadd.f32 %v764, %v897
        %v1101 = vadd.f32 %v767, %v900
        %v1102 = vadd.f32 %v769, %v902
        %v1103 = vadd.f32 %v772, %v905
        %v1104 = vadd.f32 %v774, %v907
        %v1105 = vadd.f32 %v777, %v910
        %v1106 = vadd.f32 %v779, %v912
        %v1107 = vadd.f32 %v782, %v915
        %v1108 = vadd.f32 %v784, %v917
        %v1109 = vadd.f32 %v787, %v920
        %v1110 = vadd.f32 %v789, %v922
        %v1111 = vadd.f32 %v792, %v925
        %v1112 = vadd.f32 %v794, %v927
        %v1113 = vadd.f32 %v797, %v930
        %v1114 = vadd.f32 %v799, %v932
        %v1115 = vadd.f32 %v802, %v935
        %v1116 = vadd.f32 %v804, %v937
        %v1117 = vadd.f32 %v807, %v940
        %v1118 = vadd.f32 %v809, %v942
        %v1119 = vadd.f32 %v812, %v945
        %v1120 = vadd.f32 %v814, %v947
        %v1121 = vadd.f32 %v817, %v950
        %v1122 = vadd.f32 %v819, %v952
        %v1123 = vadd.f32 %v822, %v955
        %v1124 = vadd.f32 %v824, %v957
        %v1125 = vadd.f32 %v827, %v960
        %v1126 = vadd.f32 %v829, %v962
        %v1127 = vadd.f32 %v1097, %v1023
        %v1128 = vadd.f32 %v1098, %v1025
        %v1129 = vadd.f32 %v1099, %v1028
        %v1130 = vadd.f32 %v1100, %v1030
        %v1131 = vadd.f32 %v1101, %v1033
        %v1132 = vadd.f32 %v1102, %v1035
        %v1133 = vadd.f32 %v1103, %v1038
        %v1134 = vadd.f32 %v1104, %v1040
        %v1135 = vadd.f32 %v1105, %v1043
        %v1136 = vadd.f32 %v1106, %v1045
        %v1137 = vadd.f32 %v1107, %v1048
        %v1138 = vadd.f32 %v1108, %v1050
        %v1139 = vadd.f32 %v1109, %v1053
        %v1140 = vadd.f32 %v1110, %v1055
        %v1141 = vadd.f32 %v1111, %v1058
        %v1142 = vadd.f32 %v1112, %v1060
        %v1143 = vadd.f32 %v1113, %v1063
        %v1144 = vadd.f32 %v1114, %v1065
        %v1145 = vadd.f32 %v1115, %v1068
        %v1146 = vadd.f32 %v1116, %v1070
        %v1147 = vadd.f32 %v1117, %v1073
        %v1148 = vadd.f32 %v1118, %v1075
        %v1149 = vadd.f32 %v1119, %v1078
        %v1150 = vadd.f32 %v1120, %v1080
        %v1151 = vadd.f32 %v1121, %v1083
        %v1152 = vadd.f32 %v1122, %v1085
        %v1153 = vadd.f32 %v1123, %v1088
        %v1154 = vadd.f32 %v1124, %v1090
        %v1155 = vadd.f32 %v1125, %v1093
        %v1156 = vadd.f32 %v1126, %v1095
        %v1157 = vld [vmem:[%s2] sm:$0x1]
        %v1159 = vperm.slane %v1157, 0
        %v1161 = vadd.f32 %v1127, %v1159
        %v1162 = vadd.f32 %v1128, %v1159
        %v1163 = vadd.f32 %v1129, %v1159
        %v1164 = vadd.f32 %v1130, %v1159
        %v1165 = vadd.f32 %v1131, %v1159
        %v1166 = vadd.f32 %v1132, %v1159
        %v1167 = vadd.f32 %v1133, %v1159
        %v1168 = vadd.f32 %v1134, %v1159
        %v1169 = vadd.f32 %v1135, %v1159
        %v1170 = vadd.f32 %v1136, %v1159
        %v1171 = vadd.f32 %v1137, %v1159
        %v1172 = vadd.f32 %v1138, %v1159
        %v1173 = vadd.f32 %v1139, %v1159
        %v1174 = vadd.f32 %v1140, %v1159
        %v1175 = vadd.f32 %v1141, %v1159
        %v1176 = vadd.f32 %v1142, %v1159
        %v1177 = vadd.f32 %v1143, %v1159
        %v1178 = vadd.f32 %v1144, %v1159
        %v1179 = vadd.f32 %v1145, %v1159
        %v1180 = vadd.f32 %v1146, %v1159
        %v1181 = vadd.f32 %v1147, %v1159
        %v1182 = vadd.f32 %v1148, %v1159
        %v1183 = vadd.f32 %v1149, %v1159
        %v1184 = vadd.f32 %v1150, %v1159
        %v1185 = vadd.f32 %v1151, %v1159
        %v1186 = vadd.f32 %v1152, %v1159
        %v1187 = vadd.f32 %v1153, %v1159
        %v1188 = vadd.f32 %v1154, %v1159
        %v1189 = vadd.f32 %v1155, %v1159
        %v1190 = vadd.f32 %v1156, %v1159
        %v1191 = vmax.f32 %v1161, 0.0
        %v1192 = vmax.f32 %v1162, 0.0
        %v1193 = vmax.f32 %v1163, 0.0
        %v1194 = vmax.f32 %v1164, 0.0
        %v1195 = vmax.f32 %v1165, 0.0
        %v1196 = vmax.f32 %v1166, 0.0
        %v1197 = vmax.f32 %v1167, 0.0
        %v1198 = vmax.f32 %v1168, 0.0
        %v1199 = vmax.f32 %v1169, 0.0
        %v1200 = vmax.f32 %v1170, 0.0
        %v1201 = vmax.f32 %v1171, 0.0
        %v1202 = vmax.f32 %v1172, 0.0
        %v1203 = vmax.f32 %v1173, 0.0
        %v1204 = vmax.f32 %v1174, 0.0
        %v1205 = vmax.f32 %v1175, 0.0
        %v1206 = vmax.f32 %v1176, 0.0
        %v1207 = vmax.f32 %v1177, 0.0
        %v1208 = vmax.f32 %v1178, 0.0
        %v1209 = vmax.f32 %v1179, 0.0
        %v1210 = vmax.f32 %v1180, 0.0
        %v1211 = vmax.f32 %v1181, 0.0
        %v1212 = vmax.f32 %v1182, 0.0
        %v1213 = vmax.f32 %v1183, 0.0
        %v1214 = vmax.f32 %v1184, 0.0
        %v1215 = vmax.f32 %v1185, 0.0
        %v1216 = vmax.f32 %v1186, 0.0
        %v1217 = vmax.f32 %v1187, 0.0
        %v1218 = vmax.f32 %v1188, 0.0
        %v1219 = vmax.f32 %v1189, 0.0
        %v1220 = vmax.f32 %v1190, 0.0
        %1251 = vrot.lane.b32.xlu0 %v1191, 120
        %v1252 = vpop.permute.xlu0 %1251
        %1253 = vrot.lane.b32.xlu0 %v1192, 120
        %v1254 = vpop.permute.xlu0 %1253
        %1255 = vrot.lane.b32.xlu0 %v1193, 120
        %v1256 = vpop.permute.xlu0 %1255
        %1257 = vrot.lane.b32.xlu0 %v1194, 120
        %v1258 = vpop.permute.xlu0 %1257
        %1259 = vrot.lane.b32.xlu0 %v1195, 120
        %v1260 = vpop.permute.xlu0 %1259
        %1261 = vrot.lane.b32.xlu0 %v1196, 120
        %v1262 = vpop.permute.xlu0 %1261
        %1263 = vrot.lane.b32.xlu0 %v1197, 120
        %v1264 = vpop.permute.xlu0 %1263
        %1265 = vrot.lane.b32.xlu0 %v1198, 120
        %v1266 = vpop.permute.xlu0 %1265
        %1267 = vrot.lane.b32.xlu0 %v1199, 120
        %v1268 = vpop.permute.xlu0 %1267
        %1269 = vrot.lane.b32.xlu0 %v1200, 120
        %v1270 = vpop.permute.xlu0 %1269
        %1271 = vrot.lane.b32.xlu0 %v1201, 120
        %v1272 = vpop.permute.xlu0 %1271
        %1273 = vrot.lane.b32.xlu0 %v1202, 120
        %v1274 = vpop.permute.xlu0 %1273
        %1275 = vrot.lane.b32.xlu0 %v1203, 120
        %v1276 = vpop.permute.xlu0 %1275
        %1277 = vrot.lane.b32.xlu0 %v1204, 120
        %v1278 = vpop.permute.xlu0 %1277
        %1279 = vrot.lane.b32.xlu0 %v1205, 120
        %v1280 = vpop.permute.xlu0 %1279
        %1281 = vrot.lane.b32.xlu0 %v1206, 120
        %v1282 = vpop.permute.xlu0 %1281
        %1283 = vrot.lane.b32.xlu0 %v1207, 120
        %v1284 = vpop.permute.xlu0 %1283
        %1285 = vrot.lane.b32.xlu0 %v1208, 120
        %v1286 = vpop.permute.xlu0 %1285
        %1287 = vrot.lane.b32.xlu0 %v1209, 120
        %v1288 = vpop.permute.xlu0 %1287
        %1289 = vrot.lane.b32.xlu0 %v1210, 120
        %v1290 = vpop.permute.xlu0 %1289
        %1291 = vrot.lane.b32.xlu0 %v1211, 120
        %v1292 = vpop.permute.xlu0 %1291
        %1293 = vrot.lane.b32.xlu0 %v1212, 120
        %v1294 = vpop.permute.xlu0 %1293
        %1295 = vrot.lane.b32.xlu0 %v1213, 120
        %v1296 = vpop.permute.xlu0 %1295
        %1297 = vrot.lane.b32.xlu0 %v1214, 120
        %v1298 = vpop.permute.xlu0 %1297
        %1299 = vrot.lane.b32.xlu0 %v1215, 120
        %v1300 = vpop.permute.xlu0 %1299
        %1301 = vrot.lane.b32.xlu0 %v1216, 120
        %v1302 = vpop.permute.xlu0 %1301
        %1303 = vrot.lane.b32.xlu0 %v1217, 120
        %v1304 = vpop.permute.xlu0 %1303
        %1305 = vrot.lane.b32.xlu0 %v1218, 120
        %v1306 = vpop.permute.xlu0 %1305
        %1307 = vrot.lane.b32.xlu0 %v1219, 120
        %v1308 = vpop.permute.xlu0 %1307
        %1309 = vrot.lane.b32.xlu0 %v1220, 120
        %v1310 = vpop.permute.xlu0 %1309
        %v1341 = vmax.f32 %v1191, %v1252
        %v1342 = vmax.f32 %v1192, %v1254
        %v1343 = vmax.f32 %v1193, %v1256
        %v1344 = vmax.f32 %v1194, %v1258
        %v1345 = vmax.f32 %v1195, %v1260
        %v1346 = vmax.f32 %v1196, %v1262
        %v1347 = vmax.f32 %v1197, %v1264
        %v1348 = vmax.f32 %v1198, %v1266
        %v1349 = vmax.f32 %v1199, %v1268
        %v1350 = vmax.f32 %v1200, %v1270
        %v1351 = vmax.f32 %v1201, %v1272
        %v1352 = vmax.f32 %v1202, %v1274
        %v1353 = vmax.f32 %v1203, %v1276
        %v1354 = vmax.f32 %v1204, %v1278
        %v1355 = vmax.f32 %v1205, %v1280
        %v1356 = vmax.f32 %v1206, %v1282
        %v1357 = vmax.f32 %v1207, %v1284
        %v1358 = vmax.f32 %v1208, %v1286
        %v1359 = vmax.f32 %v1209, %v1288
        %v1360 = vmax.f32 %v1210, %v1290
        %v1361 = vmax.f32 %v1211, %v1292
        %v1362 = vmax.f32 %v1212, %v1294
        %v1363 = vmax.f32 %v1213, %v1296
        %v1364 = vmax.f32 %v1214, %v1298
        %v1365 = vmax.f32 %v1215, %v1300
        %v1366 = vmax.f32 %v1216, %v1302
        %v1367 = vmax.f32 %v1217, %v1304
        %v1368 = vmax.f32 %v1218, %v1306
        %v1369 = vmax.f32 %v1219, %v1308
        %v1370 = vmax.f32 %v1220, %v1310
        %v1371 = vmax.f32 %v1341, %v1343
        %v1372 = vmax.f32 %v1342, %v1344
        %v1373 = vmax.f32 %v1343, %v1345
        %v1374 = vmax.f32 %v1344, %v1346
        %v1375 = vmax.f32 %v1345, %v1347
        %v1376 = vmax.f32 %v1346, %v1348
        %v1377 = vmax.f32 %v1347, %v1349
        %v1378 = vmax.f32 %v1348, %v1350
        %v1379 = vmax.f32 %v1349, %v1351
        %v1380 = vmax.f32 %v1350, %v1352
        %v1381 = vmax.f32 %v1351, %v1353
        %v1382 = vmax.f32 %v1352, %v1354
        %v1383 = vmax.f32 %v1353, %v1355
        %v1384 = vmax.f32 %v1354, %v1356
        %v1385 = vmax.f32 %v1355, %v1357
        %v1386 = vmax.f32 %v1356, %v1358
        %v1387 = vmax.f32 %v1357, %v1359
        %v1388 = vmax.f32 %v1358, %v1360
        %v1389 = vmax.f32 %v1359, %v1361
        %v1390 = vmax.f32 %v1360, %v1362
        %v1391 = vmax.f32 %v1361, %v1363
        %v1392 = vmax.f32 %v1362, %v1364
        %v1393 = vmax.f32 %v1363, %v1365
        %v1394 = vmax.f32 %v1364, %v1366
        %v1395 = vmax.f32 %v1365, %v1367
        %v1396 = vmax.f32 %v1366, %v1368
        %v1397 = vmax.f32 %v1367, %v1369
        %v1398 = vmax.f32 %v1368, %v1370
        %v1399 = vpack.c.bf16 %v1371, %v1371
        %v1400 = vpack.c.bf16 %v1372, %v1372
        %v1401 = vpack.c.bf16 %v1373, %v1373
        %v1402 = vpack.c.bf16 %v1374, %v1374
        %v1403 = vpack.c.bf16 %v1375, %v1375
        %v1404 = vpack.c.bf16 %v1376, %v1376
        %v1405 = vpack.c.bf16 %v1377, %v1377
        %v1406 = vpack.c.bf16 %v1378, %v1378
        %v1407 = vpack.c.bf16 %v1379, %v1379
        %v1408 = vpack.c.bf16 %v1380, %v1380
        %v1409 = vpack.c.bf16 %v1381, %v1381
        %v1410 = vpack.c.bf16 %v1382, %v1382
        %v1411 = vpack.c.bf16 %v1383, %v1383
        %v1412 = vpack.c.bf16 %v1384, %v1384
        %v1413 = vpack.c.bf16 %v1385, %v1385
        %v1414 = vpack.c.bf16 %v1386, %v1386
        %v1415 = vpack.c.bf16 %v1387, %v1387
        %v1416 = vpack.c.bf16 %v1388, %v1388
        %v1417 = vpack.c.bf16 %v1389, %v1389
        %v1418 = vpack.c.bf16 %v1390, %v1390
        %v1419 = vpack.c.bf16 %v1391, %v1391
        %v1420 = vpack.c.bf16 %v1392, %v1392
        %v1421 = vpack.c.bf16 %v1393, %v1393
        %v1422 = vpack.c.bf16 %v1394, %v1394
        %v1423 = vpack.c.bf16 %v1395, %v1395
        %v1424 = vpack.c.bf16 %v1396, %v1396
        %v1425 = vpack.c.bf16 %v1397, %v1397
        %v1426 = vpack.c.bf16 %v1398, %v1398
        %v1427 = vld [vmem:[%s3] sm:$0xff]
        %v1428 = vld [vmem:[%s3 + $0x8] sm:$0xff]
        %v1429 = vld [vmem:[%s3 + $0x10] sm:$0xff]
        %v1430 = vld [vmem:[%s3 + $0x18] sm:$0xff]
        %v1431 = vld [vmem:[%s3 + $0x20] sm:$0xff]
        %v1432 = vld [vmem:[%s3 + $0x28] sm:$0xff]
        %v1433 = vld [vmem:[%s3 + $0x30] sm:$0xff]
        %v1434 = vld [vmem:[%s3 + $0x38] sm:$0xff]
        %v1435 = vld [vmem:[%s3 + $0x40] sm:$0xff]
        %v1436 = vld [vmem:[%s3 + $0x48] sm:$0xff]
        %v1437 = vld [vmem:[%s3 + $0x50] sm:$0xff]
        %v1438 = vld [vmem:[%s3 + $0x58] sm:$0xff]
        %v1439 = vld [vmem:[%s3 + $0x60] sm:$0xff]
        %v1440 = vld [vmem:[%s3 + $0x68] sm:$0xff]
        %v1469 = vunpack.c.l.b16 %v1399
        %v1470 = vunpack.c.l.b16 %v1400
        %v1471 = vunpack.c.l.b16 %v1401
        %v1472 = vunpack.c.l.b16 %v1402
        %v1473 = vunpack.c.l.b16 %v1403
        %v1474 = vunpack.c.l.b16 %v1404
        %v1475 = vunpack.c.l.b16 %v1405
        %v1476 = vunpack.c.l.b16 %v1406
        %v1477 = vunpack.c.l.b16 %v1407
        %v1478 = vunpack.c.l.b16 %v1408
        %v1479 = vunpack.c.l.b16 %v1409
        %v1480 = vunpack.c.l.b16 %v1410
        %v1481 = vunpack.c.l.b16 %v1411
        %v1482 = vunpack.c.l.b16 %v1412
        %v1483 = vunpack.c.l.b16 %v1413
        %v1484 = vunpack.c.l.b16 %v1414
        %v1485 = vunpack.c.l.b16 %v1415
        %v1486 = vunpack.c.l.b16 %v1416
        %v1487 = vunpack.c.l.b16 %v1417
        %v1488 = vunpack.c.l.b16 %v1418
        %v1489 = vunpack.c.l.b16 %v1419
        %v1490 = vunpack.c.l.b16 %v1420
        %v1491 = vunpack.c.l.b16 %v1421
        %v1492 = vunpack.c.l.b16 %v1422
        %v1493 = vunpack.c.l.b16 %v1423
        %v1494 = vunpack.c.l.b16 %v1424
        %v1495 = vunpack.c.l.b16 %v1425
        %v1496 = vunpack.c.l.b16 %v1426
        %v1497 = vpack.c.b16 %v1470, %v1469
        %v1498 = vpack.c.b16 %v1472, %v1471
        %v1499 = vpack.c.b16 %v1474, %v1473
        %v1500 = vpack.c.b16 %v1476, %v1475
        %v1501 = vpack.c.b16 %v1478, %v1477
        %v1502 = vpack.c.b16 %v1480, %v1479
        %v1503 = vpack.c.b16 %v1482, %v1481
        %v1504 = vpack.c.b16 %v1484, %v1483
        %v1505 = vpack.c.b16 %v1486, %v1485
        %v1506 = vpack.c.b16 %v1488, %v1487
        %v1507 = vpack.c.b16 %v1490, %v1489
        %v1508 = vpack.c.b16 %v1492, %v1491
        %v1509 = vpack.c.b16 %v1494, %v1493
        %v1510 = vpack.c.b16 %v1496, %v1495
        %v1525 = vunpack.c.l.b16 %v1427
        %v1526 = vunpack.c.h.b16 %v1427
        %v1527 = vunpack.c.l.b16 %v1428
        %v1528 = vunpack.c.h.b16 %v1428
        %v1529 = vunpack.c.l.b16 %v1429
        %v1530 = vunpack.c.h.b16 %v1429
        %v1531 = vunpack.c.l.b16 %v1430
        %v1532 = vunpack.c.h.b16 %v1430
        %v1533 = vunpack.c.l.b16 %v1431
        %v1534 = vunpack.c.h.b16 %v1431
        %v1535 = vunpack.c.l.b16 %v1432
        %v1536 = vunpack.c.h.b16 %v1432
        %v1537 = vunpack.c.l.b16 %v1433
        %v1538 = vunpack.c.h.b16 %v1433
        %v1539 = vunpack.c.l.b16 %v1434
        %v1540 = vunpack.c.h.b16 %v1434
        %v1541 = vunpack.c.l.b16 %v1435
        %v1542 = vunpack.c.h.b16 %v1435
        %v1543 = vunpack.c.l.b16 %v1436
        %v1544 = vunpack.c.h.b16 %v1436
        %v1545 = vunpack.c.l.b16 %v1437
        %v1546 = vunpack.c.h.b16 %v1437
        %v1547 = vunpack.c.l.b16 %v1438
        %v1548 = vunpack.c.h.b16 %v1438
        %v1549 = vunpack.c.l.b16 %v1439
        %v1550 = vunpack.c.h.b16 %v1439
        %v1551 = vunpack.c.l.b16 %v1440
        %v1552 = vunpack.c.h.b16 %v1440
        %v1553 = vpack.c.b16 %v1527, %v1525
        %v1554 = vpack.c.b16 %v1528, %v1526
        %v1555 = vpack.c.b16 %v1531, %v1529
        %v1556 = vpack.c.b16 %v1532, %v1530
        %v1557 = vpack.c.b16 %v1535, %v1533
        %v1558 = vpack.c.b16 %v1536, %v1534
        %v1559 = vpack.c.b16 %v1539, %v1537
        %v1560 = vpack.c.b16 %v1540, %v1538
        %v1561 = vpack.c.b16 %v1543, %v1541
        %v1562 = vpack.c.b16 %v1544, %v1542
        %v1563 = vpack.c.b16 %v1547, %v1545
        %v1564 = vpack.c.b16 %v1548, %v1546
        %v1565 = vpack.c.b16 %v1551, %v1549
        %v1566 = vpack.c.b16 %v1552, %v1550
        %vm1581 = vcmask 916480
        %v1583 = vsel %vm1581, %v1497, 0
        %v1586 = vsel %vm1581, %v1498, 0
        %v1589 = vsel %vm1581, %v1499, 0
        %v1592 = vsel %vm1581, %v1500, 0
        %v1595 = vsel %vm1581, %v1501, 0
        %v1598 = vsel %vm1581, %v1502, 0
        %v1601 = vsel %vm1581, %v1503, 0
        %v1604 = vsel %vm1581, %v1504, 0
        %v1607 = vsel %vm1581, %v1505, 0
        %v1610 = vsel %vm1581, %v1506, 0
        %v1613 = vsel %vm1581, %v1507, 0
        %v1616 = vsel %vm1581, %v1508, 0
        %v1619 = vsel %vm1581, %v1509, 0
        %v1622 = vsel %vm1581, %v1510, 0
        %1624 = vmatpush.bf16.msra.mxu0 0
        %1625 = vmatpush.bf16.msra.mxu0 %v1565
        %1626 = vmatpush.bf16.msra.mxu0 %v1563
        %1627 = vmatpush.bf16.msra.mxu0 %v1561
        %1628 = vmatpush.bf16.msra.mxu0 %v1559
        %1629 = vmatpush.bf16.msra.mxu0 %v1557
        %1630 = vmatpush.bf16.msra.mxu0 %v1555
        %1631 = vmatpush.bf16.msra.mxu0 %v1553
        %1632 = vmatmul.bf16.gmra.mxu0 %v1583
        %v1633 = vpop.f32.mrf.mxu0
        %v1634 = vadd.f32 0.0, %v1633
        %v1635 = vpop.f32.mrf.mxu0
        %v1636 = vadd.f32 0.0, %v1635
        %1637 = vmatmul.bf16.gmra.mxu0 %v1586
        %v1638 = vpop.f32.mrf.mxu0
        %v1639 = vadd.f32 0.0, %v1638
        %v1640 = vpop.f32.mrf.mxu0
        %v1641 = vadd.f32 0.0, %v1640
        %1642 = vmatmul.bf16.gmra.mxu0 %v1589
        %v1643 = vpop.f32.mrf.mxu0
        %v1644 = vadd.f32 0.0, %v1643
        %v1645 = vpop.f32.mrf.mxu0
        %v1646 = vadd.f32 0.0, %v1645
        %1647 = vmatmul.bf16.gmra.mxu0 %v1592
        %v1648 = vpop.f32.mrf.mxu0
        %v1649 = vadd.f32 0.0, %v1648
        %v1650 = vpop.f32.mrf.mxu0
        %v1651 = vadd.f32 0.0, %v1650
        %1652 = vmatmul.bf16.gmra.mxu0 %v1595
        %v1653 = vpop.f32.mrf.mxu0
        %v1654 = vadd.f32 0.0, %v1653
        %v1655 = vpop.f32.mrf.mxu0
        %v1656 = vadd.f32 0.0, %v1655
        %1657 = vmatmul.bf16.gmra.mxu0 %v1598
        %v1658 = vpop.f32.mrf.mxu0
        %v1659 = vadd.f32 0.0, %v1658
        %v1660 = vpop.f32.mrf.mxu0
        %v1661 = vadd.f32 0.0, %v1660
        %1662 = vmatmul.bf16.gmra.mxu0 %v1601
        %v1663 = vpop.f32.mrf.mxu0
        %v1664 = vadd.f32 0.0, %v1663
        %v1665 = vpop.f32.mrf.mxu0
        %v1666 = vadd.f32 0.0, %v1665
        %1667 = vmatmul.bf16.gmra.mxu0 %v1604
        %v1668 = vpop.f32.mrf.mxu0
        %v1669 = vadd.f32 0.0, %v1668
        %v1670 = vpop.f32.mrf.mxu0
        %v1671 = vadd.f32 0.0, %v1670
        %1672 = vmatmul.bf16.gmra.mxu0 %v1607
        %v1673 = vpop.f32.mrf.mxu0
        %v1674 = vadd.f32 0.0, %v1673
        %v1675 = vpop.f32.mrf.mxu0
        %v1676 = vadd.f32 0.0, %v1675
        %1677 = vmatmul.bf16.gmra.mxu0 %v1610
        %v1678 = vpop.f32.mrf.mxu0
        %v1679 = vadd.f32 0.0, %v1678
        %v1680 = vpop.f32.mrf.mxu0
        %v1681 = vadd.f32 0.0, %v1680
        %1682 = vmatmul.bf16.gmra.mxu0 %v1613
        %v1683 = vpop.f32.mrf.mxu0
        %v1684 = vadd.f32 0.0, %v1683
        %v1685 = vpop.f32.mrf.mxu0
        %v1686 = vadd.f32 0.0, %v1685
        %1687 = vmatmul.bf16.gmra.mxu0 %v1616
        %v1688 = vpop.f32.mrf.mxu0
        %v1689 = vadd.f32 0.0, %v1688
        %v1690 = vpop.f32.mrf.mxu0
        %v1691 = vadd.f32 0.0, %v1690
        %1692 = vmatmul.bf16.gmra.mxu0 %v1619
        %v1693 = vpop.f32.mrf.mxu0
        %v1694 = vpop.f32.mrf.mxu0
        %1695 = vmatmul.bf16.gmra.mxu0 %v1622
        %v1696 = vpop.f32.mrf.mxu0
        %v1697 = vpop.f32.mrf.mxu0
        %1698 = vdwg.mxu0
        %1699 = vmatpush.bf16.msra.mxu0 0
        %1700 = vmatpush.bf16.msra.mxu0 %v1566
        %1701 = vmatpush.bf16.msra.mxu0 %v1564
        %1702 = vmatpush.bf16.msra.mxu0 %v1562
        %1703 = vmatpush.bf16.msra.mxu0 %v1560
        %1704 = vmatpush.bf16.msra.mxu0 %v1558
        %1705 = vmatpush.bf16.msra.mxu0 %v1556
        %1706 = vmatpush.bf16.msra.mxu0 %v1554
        %1707 = vmatmul.bf16.gmra.mxu0 %v1583
        %v1708 = vpop.f32.mrf.mxu0
        %v1709 = vadd.f32 0.0, %v1708
        %v1710 = vpop.f32.mrf.mxu0
        %v1711 = vadd.f32 0.0, %v1710
        %1712 = vmatmul.bf16.gmra.mxu0 %v1586
        %v1713 = vpop.f32.mrf.mxu0
        %v1714 = vadd.f32 0.0, %v1713
        %v1715 = vpop.f32.mrf.mxu0
        %v1716 = vadd.f32 0.0, %v1715
        %1717 = vmatmul.bf16.gmra.mxu0 %v1589
        %v1718 = vpop.f32.mrf.mxu0
        %v1719 = vadd.f32 0.0, %v1718
        %v1720 = vpop.f32.mrf.mxu0
        %v1721 = vadd.f32 0.0, %v1720
        %1722 = vmatmul.bf16.gmra.mxu0 %v1592
        %v1723 = vpop.f32.mrf.mxu0
        %v1724 = vadd.f32 0.0, %v1723
        %v1725 = vpop.f32.mrf.mxu0
        %v1726 = vadd.f32 0.0, %v1725
        %1727 = vmatmul.bf16.gmra.mxu0 %v1595
        %v1728 = vpop.f32.mrf.mxu0
        %v1729 = vadd.f32 0.0, %v1728
        %v1730 = vpop.f32.mrf.mxu0
        %v1731 = vadd.f32 0.0, %v1730
        %1732 = vmatmul.bf16.gmra.mxu0 %v1598
        %v1733 = vpop.f32.mrf.mxu0
        %v1734 = vadd.f32 0.0, %v1733
        %v1735 = vpop.f32.mrf.mxu0
        %v1736 = vadd.f32 0.0, %v1735
        %1737 = vmatmul.bf16.gmra.mxu0 %v1601
        %v1738 = vpop.f32.mrf.mxu0
        %v1739 = vadd.f32 0.0, %v1738
        %v1740 = vpop.f32.mrf.mxu0
        %v1741 = vadd.f32 0.0, %v1740
        %1742 = vmatmul.bf16.gmra.mxu0 %v1604
        %v1743 = vpop.f32.mrf.mxu0
        %v1744 = vadd.f32 0.0, %v1743
        %v1745 = vpop.f32.mrf.mxu0
        %v1746 = vadd.f32 0.0, %v1745
        %1747 = vmatmul.bf16.gmra.mxu0 %v1607
        %v1748 = vpop.f32.mrf.mxu0
        %v1749 = vadd.f32 0.0, %v1748
        %v1750 = vpop.f32.mrf.mxu0
        %v1751 = vadd.f32 0.0, %v1750
        %1752 = vmatmul.bf16.gmra.mxu0 %v1610
        %v1753 = vpop.f32.mrf.mxu0
        %v1754 = vadd.f32 0.0, %v1753
        %v1755 = vpop.f32.mrf.mxu0
        %v1756 = vadd.f32 0.0, %v1755
        %1757 = vmatmul.bf16.gmra.mxu0 %v1613
        %v1758 = vpop.f32.mrf.mxu0
        %v1759 = vadd.f32 0.0, %v1758
        %v1760 = vpop.f32.mrf.mxu0
        %v1761 = vadd.f32 0.0, %v1760
        %1762 = vmatmul.bf16.gmra.mxu0 %v1616
        %v1763 = vpop.f32.mrf.mxu0
        %v1764 = vadd.f32 0.0, %v1763
        %v1765 = vpop.f32.mrf.mxu0
        %v1766 = vadd.f32 0.0, %v1765
        %1767 = vmatmul.bf16.gmra.mxu0 %v1619
        %v1768 = vpop.f32.mrf.mxu0
        %v1769 = vpop.f32.mrf.mxu0
        %1770 = vmatmul.bf16.gmra.mxu0 %v1622
        %v1771 = vpop.f32.mrf.mxu0
        %v1772 = vpop.f32.mrf.mxu0
        %1773 = vdwg.mxu0
        %s1774 = scalar_lea.vmem %s3, 112
        %v1775 = vld [vmem:[%s1774] sm:$0xff]
        %v1776 = vld [vmem:[%s1774 + $0x8] sm:$0xff]
        %v1777 = vld [vmem:[%s1774 + $0x10] sm:$0xff]
        %v1778 = vld [vmem:[%s1774 + $0x18] sm:$0xff]
        %v1779 = vld [vmem:[%s1774 + $0x20] sm:$0xff]
        %v1780 = vld [vmem:[%s1774 + $0x28] sm:$0xff]
        %v1781 = vld [vmem:[%s1774 + $0x30] sm:$0xff]
        %v1782 = vld [vmem:[%s1774 + $0x38] sm:$0xff]
        %v1783 = vld [vmem:[%s1774 + $0x40] sm:$0xff]
        %v1784 = vld [vmem:[%s1774 + $0x48] sm:$0xff]
        %v1785 = vld [vmem:[%s1774 + $0x50] sm:$0xff]
        %v1786 = vld [vmem:[%s1774 + $0x58] sm:$0xff]
        %v1787 = vld [vmem:[%s1774 + $0x60] sm:$0xff]
        %v1788 = vld [vmem:[%s1774 + $0x68] sm:$0xff]
        %v1803 = vunpack.c.l.b16 %v1775
        %v1804 = vunpack.c.h.b16 %v1775
        %v1805 = vunpack.c.l.b16 %v1776
        %v1806 = vunpack.c.h.b16 %v1776
        %v1807 = vunpack.c.l.b16 %v1777
        %v1808 = vunpack.c.h.b16 %v1777
        %v1809 = vunpack.c.l.b16 %v1778
        %v1810 = vunpack.c.h.b16 %v1778
        %v1811 = vunpack.c.l.b16 %v1779
        %v1812 = vunpack.c.h.b16 %v1779
        %v1813 = vunpack.c.l.b16 %v1780
        %v1814 = vunpack.c.h.b16 %v1780
        %v1815 = vunpack.c.l.b16 %v1781
        %v1816 = vunpack.c.h.b16 %v1781
        %v1817 = vunpack.c.l.b16 %v1782
        %v1818 = vunpack.c.h.b16 %v1782
        %v1819 = vunpack.c.l.b16 %v1783
        %v1820 = vunpack.c.h.b16 %v1783
        %v1821 = vunpack.c.l.b16 %v1784
        %v1822 = vunpack.c.h.b16 %v1784
        %v1823 = vunpack.c.l.b16 %v1785
        %v1824 = vunpack.c.h.b16 %v1785
        %v1825 = vunpack.c.l.b16 %v1786
        %v1826 = vunpack.c.h.b16 %v1786
        %v1827 = vunpack.c.l.b16 %v1787
        %v1828 = vunpack.c.h.b16 %v1787
        %v1829 = vunpack.c.l.b16 %v1788
        %v1830 = vunpack.c.h.b16 %v1788
        %v1831 = vpack.c.b16 %v1805, %v1803
        %v1832 = vpack.c.b16 %v1806, %v1804
        %v1833 = vpack.c.b16 %v1809, %v1807
        %v1834 = vpack.c.b16 %v1810, %v1808
        %v1835 = vpack.c.b16 %v1813, %v1811
        %v1836 = vpack.c.b16 %v1814, %v1812
        %v1837 = vpack.c.b16 %v1817, %v1815
        %v1838 = vpack.c.b16 %v1818, %v1816
        %v1839 = vpack.c.b16 %v1821, %v1819
        %v1840 = vpack.c.b16 %v1822, %v1820
        %v1841 = vpack.c.b16 %v1825, %v1823
        %v1842 = vpack.c.b16 %v1826, %v1824
        %v1843 = vpack.c.b16 %v1829, %v1827
        %v1844 = vpack.c.b16 %v1830, %v1828
        %1859 = vmatpush.bf16.msra.mxu0 0
        %1860 = vmatpush.bf16.msra.mxu0 %v1843
        %1861 = vmatpush.bf16.msra.mxu0 %v1841
        %1862 = vmatpush.bf16.msra.mxu0 %v1839
        %1863 = vmatpush.bf16.msra.mxu0 %v1837
        %1864 = vmatpush.bf16.msra.mxu0 %v1835
        %1865 = vmatpush.bf16.msra.mxu0 %v1833
        %1866 = vmatpush.bf16.msra.mxu0 %v1831
        %1867 = vmatmul.bf16.gmra.mxu0 %v1583
        %v1868 = vpop.f32.mrf.mxu0
        %v1869 = vpop.f32.mrf.mxu0
        %1870 = vmatmul.bf16.gmra.mxu0 %v1586
        %v1871 = vpop.f32.mrf.mxu0
        %v1872 = vadd.f32 0.0, %v1871
        %v1873 = vpop.f32.mrf.mxu0
        %v1874 = vadd.f32 0.0, %v1873
        %1875 = vmatmul.bf16.gmra.mxu0 %v1589
        %v1876 = vpop.f32.mrf.mxu0
        %v1877 = vadd.f32 0.0, %v1876
        %v1878 = vpop.f32.mrf.mxu0
        %v1879 = vadd.f32 0.0, %v1878
        %1880 = vmatmul.bf16.gmra.mxu0 %v1592
        %v1881 = vpop.f32.mrf.mxu0
        %v1882 = vadd.f32 0.0, %v1881
        %v1883 = vpop.f32.mrf.mxu0
        %v1884 = vadd.f32 0.0, %v1883
        %1885 = vmatmul.bf16.gmra.mxu0 %v1595
        %v1886 = vpop.f32.mrf.mxu0
        %v1887 = vadd.f32 0.0, %v1886
        %v1888 = vpop.f32.mrf.mxu0
        %v1889 = vadd.f32 0.0, %v1888
        %1890 = vmatmul.bf16.gmra.mxu0 %v1598
        %v1891 = vpop.f32.mrf.mxu0
        %v1892 = vadd.f32 0.0, %v1891
        %v1893 = vpop.f32.mrf.mxu0
        %v1894 = vadd.f32 0.0, %v1893
        %1895 = vmatmul.bf16.gmra.mxu0 %v1601
        %v1896 = vpop.f32.mrf.mxu0
        %v1897 = vadd.f32 0.0, %v1896
        %v1898 = vpop.f32.mrf.mxu0
        %v1899 = vadd.f32 0.0, %v1898
        %1900 = vmatmul.bf16.gmra.mxu0 %v1604
        %v1901 = vpop.f32.mrf.mxu0
        %v1902 = vadd.f32 0.0, %v1901
        %v1903 = vpop.f32.mrf.mxu0
        %v1904 = vadd.f32 0.0, %v1903
        %1905 = vmatmul.bf16.gmra.mxu0 %v1607
        %v1906 = vpop.f32.mrf.mxu0
        %v1907 = vadd.f32 0.0, %v1906
        %v1908 = vpop.f32.mrf.mxu0
        %v1909 = vadd.f32 0.0, %v1908
        %1910 = vmatmul.bf16.gmra.mxu0 %v1610
        %v1911 = vpop.f32.mrf.mxu0
        %v1912 = vadd.f32 0.0, %v1911
        %v1913 = vpop.f32.mrf.mxu0
        %v1914 = vadd.f32 0.0, %v1913
        %1915 = vmatmul.bf16.gmra.mxu0 %v1613
        %v1916 = vpop.f32.mrf.mxu0
        %v1917 = vadd.f32 0.0, %v1916
        %v1918 = vpop.f32.mrf.mxu0
        %v1919 = vadd.f32 0.0, %v1918
        %1920 = vmatmul.bf16.gmra.mxu0 %v1616
        %v1921 = vpop.f32.mrf.mxu0
        %v1922 = vadd.f32 0.0, %v1921
        %v1923 = vpop.f32.mrf.mxu0
        %v1924 = vadd.f32 0.0, %v1923
        %1925 = vmatmul.bf16.gmra.mxu0 %v1619
        %v1926 = vpop.f32.mrf.mxu0
        %v1927 = vadd.f32 0.0, %v1926
        %v1928 = vpop.f32.mrf.mxu0
        %v1929 = vadd.f32 0.0, %v1928
        %1930 = vmatmul.bf16.gmra.mxu0 %v1622
        %v1931 = vpop.f32.mrf.mxu0
        %v1932 = vpop.f32.mrf.mxu0
        %1933 = vdwg.mxu0
        %1934 = vmatpush.bf16.msra.mxu0 0
        %1935 = vmatpush.bf16.msra.mxu0 %v1844
        %1936 = vmatpush.bf16.msra.mxu0 %v1842
        %1937 = vmatpush.bf16.msra.mxu0 %v1840
        %1938 = vmatpush.bf16.msra.mxu0 %v1838
        %1939 = vmatpush.bf16.msra.mxu0 %v1836
        %1940 = vmatpush.bf16.msra.mxu0 %v1834
        %1941 = vmatpush.bf16.msra.mxu0 %v1832
        %1942 = vmatmul.bf16.gmra.mxu0 %v1583
        %v1943 = vpop.f32.mrf.mxu0
        %v1944 = vpop.f32.mrf.mxu0
        %1945 = vmatmul.bf16.gmra.mxu0 %v1586
        %v1946 = vpop.f32.mrf.mxu0
        %v1947 = vadd.f32 0.0, %v1946
        %v1948 = vpop.f32.mrf.mxu0
        %v1949 = vadd.f32 0.0, %v1948
        %1950 = vmatmul.bf16.gmra.mxu0 %v1589
        %v1951 = vpop.f32.mrf.mxu0
        %v1952 = vadd.f32 0.0, %v1951
        %v1953 = vpop.f32.mrf.mxu0
        %v1954 = vadd.f32 0.0, %v1953
        %1955 = vmatmul.bf16.gmra.mxu0 %v1592
        %v1956 = vpop.f32.mrf.mxu0
        %v1957 = vadd.f32 0.0, %v1956
        %v1958 = vpop.f32.mrf.mxu0
        %v1959 = vadd.f32 0.0, %v1958
        %1960 = vmatmul.bf16.gmra.mxu0 %v1595
        %v1961 = vpop.f32.mrf.mxu0
        %v1962 = vadd.f32 0.0, %v1961
        %v1963 = vpop.f32.mrf.mxu0
        %v1964 = vadd.f32 0.0, %v1963
        %1965 = vmatmul.bf16.gmra.mxu0 %v1598
        %v1966 = vpop.f32.mrf.mxu0
        %v1967 = vadd.f32 0.0, %v1966
        %v1968 = vpop.f32.mrf.mxu0
        %v1969 = vadd.f32 0.0, %v1968
        %1970 = vmatmul.bf16.gmra.mxu0 %v1601
        %v1971 = vpop.f32.mrf.mxu0
        %v1972 = vadd.f32 0.0, %v1971
        %v1973 = vpop.f32.mrf.mxu0
        %v1974 = vadd.f32 0.0, %v1973
        %1975 = vmatmul.bf16.gmra.mxu0 %v1604
        %v1976 = vpop.f32.mrf.mxu0
        %v1977 = vadd.f32 0.0, %v1976
        %v1978 = vpop.f32.mrf.mxu0
        %v1979 = vadd.f32 0.0, %v1978
        %1980 = vmatmul.bf16.gmra.mxu0 %v1607
        %v1981 = vpop.f32.mrf.mxu0
        %v1982 = vadd.f32 0.0, %v1981
        %v1983 = vpop.f32.mrf.mxu0
        %v1984 = vadd.f32 0.0, %v1983
        %1985 = vmatmul.bf16.gmra.mxu0 %v1610
        %v1986 = vpop.f32.mrf.mxu0
        %v1987 = vadd.f32 0.0, %v1986
        %v1988 = vpop.f32.mrf.mxu0
        %v1989 = vadd.f32 0.0, %v1988
        %1990 = vmatmul.bf16.gmra.mxu0 %v1613
        %v1991 = vpop.f32.mrf.mxu0
        %v1992 = vadd.f32 0.0, %v1991
        %v1993 = vpop.f32.mrf.mxu0
        %v1994 = vadd.f32 0.0, %v1993
        %1995 = vmatmul.bf16.gmra.mxu0 %v1616
        %v1996 = vpop.f32.mrf.mxu0
        %v1997 = vadd.f32 0.0, %v1996
        %v1998 = vpop.f32.mrf.mxu0
        %v1999 = vadd.f32 0.0, %v1998
        %2000 = vmatmul.bf16.gmra.mxu0 %v1619
        %v2001 = vpop.f32.mrf.mxu0
        %v2002 = vadd.f32 0.0, %v2001
        %v2003 = vpop.f32.mrf.mxu0
        %v2004 = vadd.f32 0.0, %v2003
        %2005 = vmatmul.bf16.gmra.mxu0 %v1622
        %v2006 = vpop.f32.mrf.mxu0
        %v2007 = vpop.f32.mrf.mxu0
        %2008 = vdwg.mxu0
        %s2009 = scalar_lea.vmem %s3, 224
        %v2010 = vld [vmem:[%s2009] sm:$0xff]
        %v2011 = vld [vmem:[%s2009 + $0x8] sm:$0xff]
        %v2012 = vld [vmem:[%s2009 + $0x10] sm:$0xff]
        %v2013 = vld [vmem:[%s2009 + $0x18] sm:$0xff]
        %v2014 = vld [vmem:[%s2009 + $0x20] sm:$0xff]
        %v2015 = vld [vmem:[%s2009 + $0x28] sm:$0xff]
        %v2016 = vld [vmem:[%s2009 + $0x30] sm:$0xff]
        %v2017 = vld [vmem:[%s2009 + $0x38] sm:$0xff]
        %v2018 = vld [vmem:[%s2009 + $0x40] sm:$0xff]
        %v2019 = vld [vmem:[%s2009 + $0x48] sm:$0xff]
        %v2020 = vld [vmem:[%s2009 + $0x50] sm:$0xff]
        %v2021 = vld [vmem:[%s2009 + $0x58] sm:$0xff]
        %v2022 = vld [vmem:[%s2009 + $0x60] sm:$0xff]
        %v2023 = vld [vmem:[%s2009 + $0x68] sm:$0xff]
        %v2038 = vunpack.c.l.b16 %v2010
        %v2039 = vunpack.c.h.b16 %v2010
        %v2040 = vunpack.c.l.b16 %v2011
        %v2041 = vunpack.c.h.b16 %v2011
        %v2042 = vunpack.c.l.b16 %v2012
        %v2043 = vunpack.c.h.b16 %v2012
        %v2044 = vunpack.c.l.b16 %v2013
        %v2045 = vunpack.c.h.b16 %v2013
        %v2046 = vunpack.c.l.b16 %v2014
        %v2047 = vunpack.c.h.b16 %v2014
        %v2048 = vunpack.c.l.b16 %v2015
        %v2049 = vunpack.c.h.b16 %v2015
        %v2050 = vunpack.c.l.b16 %v2016
        %v2051 = vunpack.c.h.b16 %v2016
        %v2052 = vunpack.c.l.b16 %v2017
        %v2053 = vunpack.c.h.b16 %v2017
        %v2054 = vunpack.c.l.b16 %v2018
        %v2055 = vunpack.c.h.b16 %v2018
        %v2056 = vunpack.c.l.b16 %v2019
        %v2057 = vunpack.c.h.b16 %v2019
        %v2058 = vunpack.c.l.b16 %v2020
        %v2059 = vunpack.c.h.b16 %v2020
        %v2060 = vunpack.c.l.b16 %v2021
        %v2061 = vunpack.c.h.b16 %v2021
        %v2062 = vunpack.c.l.b16 %v2022
        %v2063 = vunpack.c.h.b16 %v2022
        %v2064 = vunpack.c.l.b16 %v2023
        %v2065 = vunpack.c.h.b16 %v2023
        %v2066 = vpack.c.b16 %v2040, %v2038
        %v2067 = vpack.c.b16 %v2041, %v2039
        %v2068 = vpack.c.b16 %v2044, %v2042
        %v2069 = vpack.c.b16 %v2045, %v2043
        %v2070 = vpack.c.b16 %v2048, %v2046
        %v2071 = vpack.c.b16 %v2049, %v2047
        %v2072 = vpack.c.b16 %v2052, %v2050
        %v2073 = vpack.c.b16 %v2053, %v2051
        %v2074 = vpack.c.b16 %v2056, %v2054
        %v2075 = vpack.c.b16 %v2057, %v2055
        %v2076 = vpack.c.b16 %v2060, %v2058
        %v2077 = vpack.c.b16 %v2061, %v2059
        %v2078 = vpack.c.b16 %v2064, %v2062
        %v2079 = vpack.c.b16 %v2065, %v2063
        %2094 = vmatpush.bf16.msra.mxu0 0
        %2095 = vmatpush.bf16.msra.mxu0 %v2078
        %2096 = vmatpush.bf16.msra.mxu0 %v2076
        %2097 = vmatpush.bf16.msra.mxu0 %v2074
        %2098 = vmatpush.bf16.msra.mxu0 %v2072
        %2099 = vmatpush.bf16.msra.mxu0 %v2070
        %2100 = vmatpush.bf16.msra.mxu0 %v2068
        %2101 = vmatpush.bf16.msra.mxu0 %v2066
        %2102 = vmatmul.bf16.gmra.mxu0 %v1583
        %v2103 = vpop.f32.mrf.mxu0
        %v2104 = vpop.f32.mrf.mxu0
        %2105 = vmatmul.bf16.gmra.mxu0 %v1586
        %v2106 = vpop.f32.mrf.mxu0
        %v2107 = vpop.f32.mrf.mxu0
        %2108 = vmatmul.bf16.gmra.mxu0 %v1589
        %v2109 = vpop.f32.mrf.mxu0
        %v2110 = vadd.f32 0.0, %v2109
        %v2111 = vpop.f32.mrf.mxu0
        %v2112 = vadd.f32 0.0, %v2111
        %2113 = vmatmul.bf16.gmra.mxu0 %v1592
        %v2114 = vpop.f32.mrf.mxu0
        %v2115 = vadd.f32 0.0, %v2114
        %v2116 = vpop.f32.mrf.mxu0
        %v2117 = vadd.f32 0.0, %v2116
        %2118 = vmatmul.bf16.gmra.mxu0 %v1595
        %v2119 = vpop.f32.mrf.mxu0
        %v2120 = vadd.f32 0.0, %v2119
        %v2121 = vpop.f32.mrf.mxu0
        %v2122 = vadd.f32 0.0, %v2121
        %2123 = vmatmul.bf16.gmra.mxu0 %v1598
        %v2124 = vpop.f32.mrf.mxu0
        %v2125 = vadd.f32 0.0, %v2124
        %v2126 = vpop.f32.mrf.mxu0
        %v2127 = vadd.f32 0.0, %v2126
        %2128 = vmatmul.bf16.gmra.mxu0 %v1601
        %v2129 = vpop.f32.mrf.mxu0
        %v2130 = vadd.f32 0.0, %v2129
        %v2131 = vpop.f32.mrf.mxu0
        %v2132 = vadd.f32 0.0, %v2131
        %2133 = vmatmul.bf16.gmra.mxu0 %v1604
        %v2134 = vpop.f32.mrf.mxu0
        %v2135 = vadd.f32 0.0, %v2134
        %v2136 = vpop.f32.mrf.mxu0
        %v2137 = vadd.f32 0.0, %v2136
        %2138 = vmatmul.bf16.gmra.mxu0 %v1607
        %v2139 = vpop.f32.mrf.mxu0
        %v2140 = vadd.f32 0.0, %v2139
        %v2141 = vpop.f32.mrf.mxu0
        %v2142 = vadd.f32 0.0, %v2141
        %2143 = vmatmul.bf16.gmra.mxu0 %v1610
        %v2144 = vpop.f32.mrf.mxu0
        %v2145 = vadd.f32 0.0, %v2144
        %v2146 = vpop.f32.mrf.mxu0
        %v2147 = vadd.f32 0.0, %v2146
        %2148 = vmatmul.bf16.gmra.mxu0 %v1613
        %v2149 = vpop.f32.mrf.mxu0
        %v2150 = vadd.f32 0.0, %v2149
        %v2151 = vpop.f32.mrf.mxu0
        %v2152 = vadd.f32 0.0, %v2151
        %2153 = vmatmul.bf16.gmra.mxu0 %v1616
        %v2154 = vpop.f32.mrf.mxu0
        %v2155 = vadd.f32 0.0, %v2154
        %v2156 = vpop.f32.mrf.mxu0
        %v2157 = vadd.f32 0.0, %v2156
        %2158 = vmatmul.bf16.gmra.mxu0 %v1619
        %v2159 = vpop.f32.mrf.mxu0
        %v2160 = vadd.f32 0.0, %v2159
        %v2161 = vpop.f32.mrf.mxu0
        %v2162 = vadd.f32 0.0, %v2161
        %2163 = vmatmul.bf16.gmra.mxu0 %v1622
        %v2164 = vpop.f32.mrf.mxu0
        %v2165 = vadd.f32 0.0, %v2164
        %v2166 = vpop.f32.mrf.mxu0
        %v2167 = vadd.f32 0.0, %v2166
        %2168 = vdwg.mxu0
        %2169 = vmatpush.bf16.msra.mxu0 0
        %2170 = vmatpush.bf16.msra.mxu0 %v2079
        %2171 = vmatpush.bf16.msra.mxu0 %v2077
        %2172 = vmatpush.bf16.msra.mxu0 %v2075
        %2173 = vmatpush.bf16.msra.mxu0 %v2073
        %2174 = vmatpush.bf16.msra.mxu0 %v2071
        %2175 = vmatpush.bf16.msra.mxu0 %v2069
        %2176 = vmatpush.bf16.msra.mxu0 %v2067
        %2177 = vmatmul.bf16.gmra.mxu0 %v1583
        %v2178 = vpop.f32.mrf.mxu0
        %v2179 = vpop.f32.mrf.mxu0
        %2180 = vmatmul.bf16.gmra.mxu0 %v1586
        %v2181 = vpop.f32.mrf.mxu0
        %v2182 = vpop.f32.mrf.mxu0
        %2183 = vmatmul.bf16.gmra.mxu0 %v1589
        %v2184 = vpop.f32.mrf.mxu0
        %v2185 = vadd.f32 0.0, %v2184
        %v2186 = vpop.f32.mrf.mxu0
        %v2187 = vadd.f32 0.0, %v2186
        %2188 = vmatmul.bf16.gmra.mxu0 %v1592
        %v2189 = vpop.f32.mrf.mxu0
        %v2190 = vadd.f32 0.0, %v2189
        %v2191 = vpop.f32.mrf.mxu0
        %v2192 = vadd.f32 0.0, %v2191
        %2193 = vmatmul.bf16.gmra.mxu0 %v1595
        %v2194 = vpop.f32.mrf.mxu0
        %v2195 = vadd.f32 0.0, %v2194
        %v2196 = vpop.f32.mrf.mxu0
        %v2197 = vadd.f32 0.0, %v2196
        %2198 = vmatmul.bf16.gmra.mxu0 %v1598
        %v2199 = vpop.f32.mrf.mxu0
        %v2200 = vadd.f32 0.0, %v2199
        %v2201 = vpop.f32.mrf.mxu0
        %v2202 = vadd.f32 0.0, %v2201
        %2203 = vmatmul.bf16.gmra.mxu0 %v1601
        %v2204 = vpop.f32.mrf.mxu0
        %v2205 = vadd.f32 0.0, %v2204
        %v2206 = vpop.f32.mrf.mxu0
        %v2207 = vadd.f32 0.0, %v2206
        %2208 = vmatmul.bf16.gmra.mxu0 %v1604
        %v2209 = vpop.f32.mrf.mxu0
        %v2210 = vadd.f32 0.0, %v2209
        %v2211 = vpop.f32.mrf.mxu0
        %v2212 = vadd.f32 0.0, %v2211
        %2213 = vmatmul.bf16.gmra.mxu0 %v1607
        %v2214 = vpop.f32.mrf.mxu0
        %v2215 = vadd.f32 0.0, %v2214
        %v2216 = vpop.f32.mrf.mxu0
        %v2217 = vadd.f32 0.0, %v2216
        %2218 = vmatmul.bf16.gmra.mxu0 %v1610
        %v2219 = vpop.f32.mrf.mxu0
        %v2220 = vadd.f32 0.0, %v2219
        %v2221 = vpop.f32.mrf.mxu0
        %v2222 = vadd.f32 0.0, %v2221
        %2223 = vmatmul.bf16.gmra.mxu0 %v1613
        %v2224 = vpop.f32.mrf.mxu0
        %v2225 = vadd.f32 0.0, %v2224
        %v2226 = vpop.f32.mrf.mxu0
        %v2227 = vadd.f32 0.0, %v2226
        %2228 = vmatmul.bf16.gmra.mxu0 %v1616
        %v2229 = vpop.f32.mrf.mxu0
        %v2230 = vadd.f32 0.0, %v2229
        %v2231 = vpop.f32.mrf.mxu0
        %v2232 = vadd.f32 0.0, %v2231
        %2233 = vmatmul.bf16.gmra.mxu0 %v1619
        %v2234 = vpop.f32.mrf.mxu0
        %v2235 = vadd.f32 0.0, %v2234
        %v2236 = vpop.f32.mrf.mxu0
        %v2237 = vadd.f32 0.0, %v2236
        %2238 = vmatmul.bf16.gmra.mxu0 %v1622
        %v2239 = vpop.f32.mrf.mxu0
        %v2240 = vadd.f32 0.0, %v2239
        %v2241 = vpop.f32.mrf.mxu0
        %v2242 = vadd.f32 0.0, %v2241
        %2243 = vdwg.mxu0
        %v2244 = vadd.f32 %v1634, %v1872
        %v2245 = vadd.f32 %v1709, %v1947
        %v2246 = vadd.f32 %v1636, %v1874
        %v2247 = vadd.f32 %v1711, %v1949
        %v2248 = vadd.f32 %v1639, %v1877
        %v2249 = vadd.f32 %v1714, %v1952
        %v2250 = vadd.f32 %v1641, %v1879
        %v2251 = vadd.f32 %v1716, %v1954
        %v2252 = vadd.f32 %v1644, %v1882
        %v2253 = vadd.f32 %v1719, %v1957
        %v2254 = vadd.f32 %v1646, %v1884
        %v2255 = vadd.f32 %v1721, %v1959
        %v2256 = vadd.f32 %v1649, %v1887
        %v2257 = vadd.f32 %v1724, %v1962
        %v2258 = vadd.f32 %v1651, %v1889
        %v2259 = vadd.f32 %v1726, %v1964
        %v2260 = vadd.f32 %v1654, %v1892
        %v2261 = vadd.f32 %v1729, %v1967
        %v2262 = vadd.f32 %v1656, %v1894
        %v2263 = vadd.f32 %v1731, %v1969
        %v2264 = vadd.f32 %v1659, %v1897
        %v2265 = vadd.f32 %v1734, %v1972
        %v2266 = vadd.f32 %v1661, %v1899
        %v2267 = vadd.f32 %v1736, %v1974
        %v2268 = vadd.f32 %v1664, %v1902
        %v2269 = vadd.f32 %v1739, %v1977
        %v2270 = vadd.f32 %v1666, %v1904
        %v2271 = vadd.f32 %v1741, %v1979
        %v2272 = vadd.f32 %v1669, %v1907
        %v2273 = vadd.f32 %v1744, %v1982
        %v2274 = vadd.f32 %v1671, %v1909
        %v2275 = vadd.f32 %v1746, %v1984
        %v2276 = vadd.f32 %v1674, %v1912
        %v2277 = vadd.f32 %v1749, %v1987
        %v2278 = vadd.f32 %v1676, %v1914
        %v2279 = vadd.f32 %v1751, %v1989
        %v2280 = vadd.f32 %v1679, %v1917
        %v2281 = vadd.f32 %v1754, %v1992
        %v2282 = vadd.f32 %v1681, %v1919
        %v2283 = vadd.f32 %v1756, %v1994
        %v2284 = vadd.f32 %v1684, %v1922
        %v2285 = vadd.f32 %v1759, %v1997
        %v2286 = vadd.f32 %v1686, %v1924
        %v2287 = vadd.f32 %v1761, %v1999
        %v2288 = vadd.f32 %v1689, %v1927
        %v2289 = vadd.f32 %v1764, %v2002
        %v2290 = vadd.f32 %v1691, %v1929
        %v2291 = vadd.f32 %v1766, %v2004
        %v2292 = vadd.f32 %v2244, %v2110
        %v2293 = vadd.f32 %v2245, %v2185
        %v2294 = vadd.f32 %v2246, %v2112
        %v2295 = vadd.f32 %v2247, %v2187
        %v2296 = vadd.f32 %v2248, %v2115
        %v2297 = vadd.f32 %v2249, %v2190
        %v2298 = vadd.f32 %v2250, %v2117
        %v2299 = vadd.f32 %v2251, %v2192
        %v2300 = vadd.f32 %v2252, %v2120
        %v2301 = vadd.f32 %v2253, %v2195
        %v2302 = vadd.f32 %v2254, %v2122
        %v2303 = vadd.f32 %v2255, %v2197
        %v2304 = vadd.f32 %v2256, %v2125
        %v2305 = vadd.f32 %v2257, %v2200
        %v2306 = vadd.f32 %v2258, %v2127
        %v2307 = vadd.f32 %v2259, %v2202
        %v2308 = vadd.f32 %v2260, %v2130
        %v2309 = vadd.f32 %v2261, %v2205
        %v2310 = vadd.f32 %v2262, %v2132
        %v2311 = vadd.f32 %v2263, %v2207
        %v2312 = vadd.f32 %v2264, %v2135
        %v2313 = vadd.f32 %v2265, %v2210
        %v2314 = vadd.f32 %v2266, %v2137
        %v2315 = vadd.f32 %v2267, %v2212
        %v2316 = vadd.f32 %v2268, %v2140
        %v2317 = vadd.f32 %v2269, %v2215
        %v2318 = vadd.f32 %v2270, %v2142
        %v2319 = vadd.f32 %v2271, %v2217
        %v2320 = vadd.f32 %v2272, %v2145
        %v2321 = vadd.f32 %v2273, %v2220
        %v2322 = vadd.f32 %v2274, %v2147
        %v2323 = vadd.f32 %v2275, %v2222
        %v2324 = vadd.f32 %v2276, %v2150
        %v2325 = vadd.f32 %v2277, %v2225
        %v2326 = vadd.f32 %v2278, %v2152
        %v2327 = vadd.f32 %v2279, %v2227
        %v2328 = vadd.f32 %v2280, %v2155
        %v2329 = vadd.f32 %v2281, %v2230
        %v2330 = vadd.f32 %v2282, %v2157
        %v2331 = vadd.f32 %v2283, %v2232
        %v2332 = vadd.f32 %v2284, %v2160
        %v2333 = vadd.f32 %v2285, %v2235
        %v2334 = vadd.f32 %v2286, %v2162
        %v2335 = vadd.f32 %v2287, %v2237
        %v2336 = vadd.f32 %v2288, %v2165
        %v2337 = vadd.f32 %v2289, %v2240
        %v2338 = vadd.f32 %v2290, %v2167
        %v2339 = vadd.f32 %v2291, %v2242
        %v2340 = vld [vmem:[%s4] sm:$0x3]
        %v2342 = vperm.slane %v2340, 0
        %v2343 = vperm.slane %v2340, 1
        %v2346 = vadd.f32 %v2292, %v2342
        %v2347 = vadd.f32 %v2293, %v2343
        %v2348 = vadd.f32 %v2294, %v2342
        %v2349 = vadd.f32 %v2295, %v2343
        %v2350 = vadd.f32 %v2296, %v2342
        %v2351 = vadd.f32 %v2297, %v2343
        %v2352 = vadd.f32 %v2298, %v2342
        %v2353 = vadd.f32 %v2299, %v2343
        %v2354 = vadd.f32 %v2300, %v2342
        %v2355 = vadd.f32 %v2301, %v2343
        %v2356 = vadd.f32 %v2302, %v2342
        %v2357 = vadd.f32 %v2303, %v2343
        %v2358 = vadd.f32 %v2304, %v2342
        %v2359 = vadd.f32 %v2305, %v2343
        %v2360 = vadd.f32 %v2306, %v2342
        %v2361 = vadd.f32 %v2307, %v2343
        %v2362 = vadd.f32 %v2308, %v2342
        %v2363 = vadd.f32 %v2309, %v2343
        %v2364 = vadd.f32 %v2310, %v2342
        %v2365 = vadd.f32 %v2311, %v2343
        %v2366 = vadd.f32 %v2312, %v2342
        %v2367 = vadd.f32 %v2313, %v2343
        %v2368 = vadd.f32 %v2314, %v2342
        %v2369 = vadd.f32 %v2315, %v2343
        %v2370 = vadd.f32 %v2316, %v2342
        %v2371 = vadd.f32 %v2317, %v2343
        %v2372 = vadd.f32 %v2318, %v2342
        %v2373 = vadd.f32 %v2319, %v2343
        %v2374 = vadd.f32 %v2320, %v2342
        %v2375 = vadd.f32 %v2321, %v2343
        %v2376 = vadd.f32 %v2322, %v2342
        %v2377 = vadd.f32 %v2323, %v2343
        %v2378 = vadd.f32 %v2324, %v2342
        %v2379 = vadd.f32 %v2325, %v2343
        %v2380 = vadd.f32 %v2326, %v2342
        %v2381 = vadd.f32 %v2327, %v2343
        %v2382 = vadd.f32 %v2328, %v2342
        %v2383 = vadd.f32 %v2329, %v2343
        %v2384 = vadd.f32 %v2330, %v2342
        %v2385 = vadd.f32 %v2331, %v2343
        %v2386 = vadd.f32 %v2332, %v2342
        %v2387 = vadd.f32 %v2333, %v2343
        %v2388 = vadd.f32 %v2334, %v2342
        %v2389 = vadd.f32 %v2335, %v2343
        %v2390 = vadd.f32 %v2336, %v2342
        %v2391 = vadd.f32 %v2337, %v2343
        %v2392 = vadd.f32 %v2338, %v2342
        %v2393 = vadd.f32 %v2339, %v2343
        %v2394 = vmax.f32 %v2346, 0.0
        %v2395 = vmax.f32 %v2347, 0.0
        %v2396 = vmax.f32 %v2348, 0.0
        %v2397 = vmax.f32 %v2349, 0.0
        %v2398 = vmax.f32 %v2350, 0.0
        %v2399 = vmax.f32 %v2351, 0.0
        %v2400 = vmax.f32 %v2352, 0.0
        %v2401 = vmax.f32 %v2353, 0.0
        %v2402 = vmax.f32 %v2354, 0.0
        %v2403 = vmax.f32 %v2355, 0.0
        %v2404 = vmax.f32 %v2356, 0.0
        %v2405 = vmax.f32 %v2357, 0.0
        %v2406 = vmax.f32 %v2358, 0.0
        %v2407 = vmax.f32 %v2359, 0.0
        %v2408 = vmax.f32 %v2360, 0.0
        %v2409 = vmax.f32 %v2361, 0.0
        %v2410 = vmax.f32 %v2362, 0.0
        %v2411 = vmax.f32 %v2363, 0.0
        %v2412 = vmax.f32 %v2364, 0.0
        %v2413 = vmax.f32 %v2365, 0.0
        %v2414 = vmax.f32 %v2366, 0.0
        %v2415 = vmax.f32 %v2367, 0.0
        %v2416 = vmax.f32 %v2368, 0.0
        %v2417 = vmax.f32 %v2369, 0.0
        %v2418 = vmax.f32 %v2370, 0.0
        %v2419 = vmax.f32 %v2371, 0.0
        %v2420 = vmax.f32 %v2372, 0.0
        %v2421 = vmax.f32 %v2373, 0.0
        %v2422 = vmax.f32 %v2374, 0.0
        %v2423 = vmax.f32 %v2375, 0.0
        %v2424 = vmax.f32 %v2376, 0.0
        %v2425 = vmax.f32 %v2377, 0.0
        %v2426 = vmax.f32 %v2378, 0.0
        %v2427 = vmax.f32 %v2379, 0.0
        %v2428 = vmax.f32 %v2380, 0.0
        %v2429 = vmax.f32 %v2381, 0.0
        %v2430 = vmax.f32 %v2382, 0.0
        %v2431 = vmax.f32 %v2383, 0.0
        %v2432 = vmax.f32 %v2384, 0.0
        %v2433 = vmax.f32 %v2385, 0.0
        %v2434 = vmax.f32 %v2386, 0.0
        %v2435 = vmax.f32 %v2387, 0.0
        %v2436 = vmax.f32 %v2388, 0.0
        %v2437 = vmax.f32 %v2389, 0.0
        %v2438 = vmax.f32 %v2390, 0.0
        %v2439 = vmax.f32 %v2391, 0.0
        %v2440 = vmax.f32 %v2392, 0.0
        %v2441 = vmax.f32 %v2393, 0.0
        %2490 = vrot.lane.b32.xlu0 %v2394, 112
        %v2491 = vpop.permute.xlu0 %2490
        %2492 = vrot.lane.b32.xlu0 %v2395, 112
        %v2493 = vpop.permute.xlu0 %2492
        %2494 = vrot.lane.b32.xlu0 %v2396, 112
        %v2495 = vpop.permute.xlu0 %2494
        %2496 = vrot.lane.b32.xlu0 %v2397, 112
        %v2497 = vpop.permute.xlu0 %2496
        %2498 = vrot.lane.b32.xlu0 %v2398, 112
        %v2499 = vpop.permute.xlu0 %2498
        %2500 = vrot.lane.b32.xlu0 %v2399, 112
        %v2501 = vpop.permute.xlu0 %2500
        %2502 = vrot.lane.b32.xlu0 %v2400, 112
        %v2503 = vpop.permute.xlu0 %2502
        %2504 = vrot.lane.b32.xlu0 %v2401, 112
        %v2505 = vpop.permute.xlu0 %2504
        %2506 = vrot.lane.b32.xlu0 %v2402, 112
        %v2507 = vpop.permute.xlu0 %2506
        %2508 = vrot.lane.b32.xlu0 %v2403, 112
        %v2509 = vpop.permute.xlu0 %2508
        %2510 = vrot.lane.b32.xlu0 %v2404, 112
        %v2511 = vpop.permute.xlu0 %2510
        %2512 = vrot.lane.b32.xlu0 %v2405, 112
        %v2513 = vpop.permute.xlu0 %2512
        %2514 = vrot.lane.b32.xlu0 %v2406, 112
        %v2515 = vpop.permute.xlu0 %2514
        %2516 = vrot.lane.b32.xlu0 %v2407, 112
        %v2517 = vpop.permute.xlu0 %2516
        %2518 = vrot.lane.b32.xlu0 %v2408, 112
        %v2519 = vpop.permute.xlu0 %2518
        %2520 = vrot.lane.b32.xlu0 %v2409, 112
        %v2521 = vpop.permute.xlu0 %2520
        %2522 = vrot.lane.b32.xlu0 %v2410, 112
        %v2523 = vpop.permute.xlu0 %2522
        %2524 = vrot.lane.b32.xlu0 %v2411, 112
        %v2525 = vpop.permute.xlu0 %2524
        %2526 = vrot.lane.b32.xlu0 %v2412, 112
        %v2527 = vpop.permute.xlu0 %2526
        %2528 = vrot.lane.b32.xlu0 %v2413, 112
        %v2529 = vpop.permute.xlu0 %2528
        %2530 = vrot.lane.b32.xlu0 %v2414, 112
        %v2531 = vpop.permute.xlu0 %2530
        %2532 = vrot.lane.b32.xlu0 %v2415, 112
        %v2533 = vpop.permute.xlu0 %2532
        %2534 = vrot.lane.b32.xlu0 %v2416, 112
        %v2535 = vpop.permute.xlu0 %2534
        %2536 = vrot.lane.b32.xlu0 %v2417, 112
        %v2537 = vpop.permute.xlu0 %2536
        %2538 = vrot.lane.b32.xlu0 %v2418, 112
        %v2539 = vpop.permute.xlu0 %2538
        %2540 = vrot.lane.b32.xlu0 %v2419, 112
        %v2541 = vpop.permute.xlu0 %2540
        %2542 = vrot.lane.b32.xlu0 %v2420, 112
        %v2543 = vpop.permute.xlu0 %2542
        %2544 = vrot.lane.b32.xlu0 %v2421, 112
        %v2545 = vpop.permute.xlu0 %2544
        %2546 = vrot.lane.b32.xlu0 %v2422, 112
        %v2547 = vpop.permute.xlu0 %2546
        %2548 = vrot.lane.b32.xlu0 %v2423, 112
        %v2549 = vpop.permute.xlu0 %2548
        %2550 = vrot.lane.b32.xlu0 %v2424, 112
        %v2551 = vpop.permute.xlu0 %2550
        %2552 = vrot.lane.b32.xlu0 %v2425, 112
        %v2553 = vpop.permute.xlu0 %2552
        %2554 = vrot.lane.b32.xlu0 %v2426, 112
        %v2555 = vpop.permute.xlu0 %2554
        %2556 = vrot.lane.b32.xlu0 %v2427, 112
        %v2557 = vpop.permute.xlu0 %2556
        %2558 = vrot.lane.b32.xlu0 %v2428, 112
        %v2559 = vpop.permute.xlu0 %2558
        %2560 = vrot.lane.b32.xlu0 %v2429, 112
        %v2561 = vpop.permute.xlu0 %2560
        %2562 = vrot.lane.b32.xlu0 %v2430, 112
        %v2563 = vpop.permute.xlu0 %2562
        %2564 = vrot.lane.b32.xlu0 %v2431, 112
        %v2565 = vpop.permute.xlu0 %2564
        %2566 = vrot.lane.b32.xlu0 %v2432, 112
        %v2567 = vpop.permute.xlu0 %2566
        %2568 = vrot.lane.b32.xlu0 %v2433, 112
        %v2569 = vpop.permute.xlu0 %2568
        %2570 = vrot.lane.b32.xlu0 %v2434, 112
        %v2571 = vpop.permute.xlu0 %2570
        %2572 = vrot.lane.b32.xlu0 %v2435, 112
        %v2573 = vpop.permute.xlu0 %2572
        %2574 = vrot.lane.b32.xlu0 %v2436, 112
        %v2575 = vpop.permute.xlu0 %2574
        %2576 = vrot.lane.b32.xlu0 %v2437, 112
        %v2577 = vpop.permute.xlu0 %2576
        %2578 = vrot.lane.b32.xlu0 %v2438, 112
        %v2579 = vpop.permute.xlu0 %2578
        %2580 = vrot.lane.b32.xlu0 %v2439, 112
        %v2581 = vpop.permute.xlu0 %2580
        %2582 = vrot.lane.b32.xlu0 %v2440, 112
        %v2583 = vpop.permute.xlu0 %2582
        %2584 = vrot.lane.b32.xlu0 %v2441, 112
        %v2585 = vpop.permute.xlu0 %2584
        %v2586 = vsel %vm1581, %v2491, %v2493
        %v2587 = vsel %vm1581, %v2495, %v2497
        %v2588 = vsel %vm1581, %v2499, %v2501
        %v2589 = vsel %vm1581, %v2503, %v2505
        %v2590 = vsel %vm1581, %v2507, %v2509
        %v2591 = vsel %vm1581, %v2511, %v2513
        %v2592 = vsel %vm1581, %v2515, %v2517
        %v2593 = vsel %vm1581, %v2519, %v2521
        %v2594 = vsel %vm1581, %v2523, %v2525
        %v2595 = vsel %vm1581, %v2527, %v2529
        %v2596 = vsel %vm1581, %v2531, %v2533
        %v2597 = vsel %vm1581, %v2535, %v2537
        %v2598 = vsel %vm1581, %v2539, %v2541
        %v2599 = vsel %vm1581, %v2543, %v2545
        %v2600 = vsel %vm1581, %v2547, %v2549
        %v2601 = vsel %vm1581, %v2551, %v2553
        %v2602 = vsel %vm1581, %v2555, %v2557
        %v2603 = vsel %vm1581, %v2559, %v2561
        %v2604 = vsel %vm1581, %v2563, %v2565
        %v2605 = vsel %vm1581, %v2567, %v2569
        %v2606 = vsel %vm1581, %v2571, %v2573
        %v2607 = vsel %vm1581, %v2575, %v2577
        %v2608 = vsel %vm1581, %v2579, %v2581
        %v2609 = vsel %vm1581, %v2583, %v2585
        %v2658 = vmax.f32 %v2394, %v2586
        %v2659 = vmax.f32 %v2395, %v2493
        %v2660 = vmax.f32 %v2396, %v2587
        %v2661 = vmax.f32 %v2397, %v2497
        %v2662 = vmax.f32 %v2398, %v2588
        %v2663 = vmax.f32 %v2399, %v2501
        %v2664 = vmax.f32 %v2400, %v2589
        %v2665 = vmax.f32 %v2401, %v2505
        %v2666 = vmax.f32 %v2402, %v2590
        %v2667 = vmax.f32 %v2403, %v2509
        %v2668 = vmax.f32 %v2404, %v2591
        %v2669 = vmax.f32 %v2405, %v2513
        %v2670 = vmax.f32 %v2406, %v2592
        %v2671 = vmax.f32 %v2407, %v2517
        %v2672 = vmax.f32 %v2408, %v2593
        %v2673 = vmax.f32 %v2409, %v2521
        %v2674 = vmax.f32 %v2410, %v2594
        %v2675 = vmax.f32 %v2411, %v2525
        %v2676 = vmax.f32 %v2412, %v2595
        %v2677 = vmax.f32 %v2413, %v2529
        %v2678 = vmax.f32 %v2414, %v2596
        %v2679 = vmax.f32 %v2415, %v2533
        %v2680 = vmax.f32 %v2416, %v2597
        %v2681 = vmax.f32 %v2417, %v2537
        %v2682 = vmax.f32 %v2418, %v2598
        %v2683 = vmax.f32 %v2419, %v2541
        %v2684 = vmax.f32 %v2420, %v2599
        %v2685 = vmax.f32 %v2421, %v2545
        %v2686 = vmax.f32 %v2422, %v2600
        %v2687 = vmax.f32 %v2423, %v2549
        %v2688 = vmax.f32 %v2424, %v2601
        %v2689 = vmax.f32 %v2425, %v2553
        %v2690 = vmax.f32 %v2426, %v2602
        %v2691 = vmax.f32 %v2427, %v2557
        %v2692 = vmax.f32 %v2428, %v2603
        %v2693 = vmax.f32 %v2429, %v2561
        %v2694 = vmax.f32 %v2430, %v2604
        %v2695 = vmax.f32 %v2431, %v2565
        %v2696 = vmax.f32 %v2432, %v2605
        %v2697 = vmax.f32 %v2433, %v2569
        %v2698 = vmax.f32 %v2434, %v2606
        %v2699 = vmax.f32 %v2435, %v2573
        %v2700 = vmax.f32 %v2436, %v2607
        %v2701 = vmax.f32 %v2437, %v2577
        %v2702 = vmax.f32 %v2438, %v2608
        %v2703 = vmax.f32 %v2439, %v2581
        %v2704 = vmax.f32 %v2440, %v2609
        %v2705 = vmax.f32 %v2441, %v2585
        %v2706 = vmax.f32 %v2658, %v2662
        %v2707 = vmax.f32 %v2659, %v2663
        %v2708 = vmax.f32 %v2660, %v2664
        %v2709 = vmax.f32 %v2661, %v2665
        %v2710 = vmax.f32 %v2662, %v2666
        %v2711 = vmax.f32 %v2663, %v2667
        %v2712 = vmax.f32 %v2664, %v2668
        %v2713 = vmax.f32 %v2665, %v2669
        %v2714 = vmax.f32 %v2666, %v2670
        %v2715 = vmax.f32 %v2667, %v2671
        %v2716 = vmax.f32 %v2668, %v2672
        %v2717 = vmax.f32 %v2669, %v2673
        %v2718 = vmax.f32 %v2670, %v2674
        %v2719 = vmax.f32 %v2671, %v2675
        %v2720 = vmax.f32 %v2672, %v2676
        %v2721 = vmax.f32 %v2673, %v2677
        %v2722 = vmax.f32 %v2674, %v2678
        %v2723 = vmax.f32 %v2675, %v2679
        %v2724 = vmax.f32 %v2676, %v2680
        %v2725 = vmax.f32 %v2677, %v2681
        %v2726 = vmax.f32 %v2678, %v2682
        %v2727 = vmax.f32 %v2679, %v2683
        %v2728 = vmax.f32 %v2680, %v2684
        %v2729 = vmax.f32 %v2681, %v2685
        %v2730 = vmax.f32 %v2682, %v2686
        %v2731 = vmax.f32 %v2683, %v2687
        %v2732 = vmax.f32 %v2684, %v2688
        %v2733 = vmax.f32 %v2685, %v2689
        %v2734 = vmax.f32 %v2686, %v2690
        %v2735 = vmax.f32 %v2687, %v2691
        %v2736 = vmax.f32 %v2688, %v2692
        %v2737 = vmax.f32 %v2689, %v2693
        %v2738 = vmax.f32 %v2690, %v2694
        %v2739 = vmax.f32 %v2691, %v2695
        %v2740 = vmax.f32 %v2692, %v2696
        %v2741 = vmax.f32 %v2693, %v2697
        %v2742 = vmax.f32 %v2694, %v2698
        %v2743 = vmax.f32 %v2695, %v2699
        %v2744 = vmax.f32 %v2696, %v2700
        %v2745 = vmax.f32 %v2697, %v2701
        %v2746 = vmax.f32 %v2698, %v2702
        %v2747 = vmax.f32 %v2699, %v2703
        %v2748 = vmax.f32 %v2700, %v2704
        %v2749 = vmax.f32 %v2701, %v2705
        %v2750 = vpack.c.bf16 %v2707, %v2706
        %v2751 = vpack.c.bf16 %v2709, %v2708
        %v2752 = vpack.c.bf16 %v2711, %v2710
        %v2753 = vpack.c.bf16 %v2713, %v2712
        %v2754 = vpack.c.bf16 %v2715, %v2714
        %v2755 = vpack.c.bf16 %v2717, %v2716
        %v2756 = vpack.c.bf16 %v2719, %v2718
        %v2757 = vpack.c.bf16 %v2721, %v2720
        %v2758 = vpack.c.bf16 %v2723, %v2722
        %v2759 = vpack.c.bf16 %v2725, %v2724
        %v2760 = vpack.c.bf16 %v2727, %v2726
        %v2761 = vpack.c.bf16 %v2729, %v2728
        %v2762 = vpack.c.bf16 %v2731, %v2730
        %v2763 = vpack.c.bf16 %v2733, %v2732
        %v2764 = vpack.c.bf16 %v2735, %v2734
        %v2765 = vpack.c.bf16 %v2737, %v2736
        %v2766 = vpack.c.bf16 %v2739, %v2738
        %v2767 = vpack.c.bf16 %v2741, %v2740
        %v2768 = vpack.c.bf16 %v2743, %v2742
        %v2769 = vpack.c.bf16 %v2745, %v2744
        %v2770 = vpack.c.bf16 %v2747, %v2746
        %v2771 = vpack.c.bf16 %v2749, %v2748
        %v2772 = vld [vmem:[%s5] sm:$0xff]
        %v2773 = vld [vmem:[%s5 + $0x8] sm:$0xf]
        %v2774 = vld [vmem:[%s5 + $0xc] sm:$0xff]
        %v2775 = vld [vmem:[%s5 + $0x14] sm:$0xf]
        %v2776 = vld [vmem:[%s5 + $0x18] sm:$0xff]
        %v2777 = vld [vmem:[%s5 + $0x20] sm:$0xf]
        %v2778 = vld [vmem:[%s5 + $0x24] sm:$0xff]
        %v2779 = vld [vmem:[%s5 + $0x2c] sm:$0xf]
        %v2780 = vld [vmem:[%s5 + $0x30] sm:$0xff]
        %v2781 = vld [vmem:[%s5 + $0x38] sm:$0xf]
        %v2782 = vld [vmem:[%s5 + $0x3c] sm:$0xff]
        %v2783 = vld [vmem:[%s5 + $0x44] sm:$0xf]
        %v2784 = vld [vmem:[%s5 + $0x48] sm:$0xff]
        %v2785 = vld [vmem:[%s5 + $0x50] sm:$0xf]
        %v2786 = vld [vmem:[%s5 + $0x54] sm:$0xff]
        %v2787 = vld [vmem:[%s5 + $0x5c] sm:$0xf]
        %v2788 = vld [vmem:[%s5 + $0x60] sm:$0xff]
        %v2789 = vld [vmem:[%s5 + $0x68] sm:$0xf]
        %v2790 = vld [vmem:[%s5 + $0x6c] sm:$0xff]
        %v2791 = vld [vmem:[%s5 + $0x74] sm:$0xf]
        %v2792 = vld [vmem:[%s5 + $0x78] sm:$0xff]
        %v2793 = vld [vmem:[%s5 + $0x80] sm:$0xf]
        %v2794 = vld [vmem:[%s5 + $0x84] sm:$0xff]
        %v2795 = vld [vmem:[%s5 + $0x8c] sm:$0xf]
        %v2796 = vld [vmem:[%s5 + $0x90] sm:$0xff]
        %v2797 = vld [vmem:[%s5 + $0x98] sm:$0xf]
        %v2798 = vld [vmem:[%s5 + $0x9c] sm:$0xff]
        %v2799 = vld [vmem:[%s5 + $0xa4] sm:$0xf]
        %v2800 = vld [vmem:[%s5 + $0xa8] sm:$0xff]
        %v2801 = vld [vmem:[%s5 + $0xb0] sm:$0xf]
        %v2802 = vld [vmem:[%s5 + $0xb4] sm:$0xff]
        %v2803 = vld [vmem:[%s5 + $0xbc] sm:$0xf]
        %v2804 = vld [vmem:[%s5 + $0xc0] sm:$0xff]
        %v2805 = vld [vmem:[%s5 + $0xc8] sm:$0xf]
        %v2806 = vld [vmem:[%s5 + $0xcc] sm:$0xff]
        %v2807 = vld [vmem:[%s5 + $0xd4] sm:$0xf]
        %v2808 = vld [vmem:[%s5 + $0xd8] sm:$0xff]
        %v2809 = vld [vmem:[%s5 + $0xe0] sm:$0xf]
        %v2810 = vld [vmem:[%s5 + $0xe4] sm:$0xff]
        %v2811 = vld [vmem:[%s5 + $0xec] sm:$0xf]
        %v2812 = vld [vmem:[%s5 + $0xf0] sm:$0xff]
        %v2813 = vld [vmem:[%s5 + $0xf8] sm:$0xf]
        %v2814 = vld [vmem:[%s5 + $0xfc] sm:$0xff]
        %v2815 = vld [vmem:[%s5 + $0x104] sm:$0xf]
        %v2838 = vunpack.c.l.b16 %v2750
        %v2839 = vunpack.c.h.b16 %v2750
        %v2840 = vunpack.c.l.b16 %v2751
        %v2841 = vunpack.c.h.b16 %v2751
        %v2842 = vunpack.c.l.b16 %v2752
        %v2843 = vunpack.c.h.b16 %v2752
        %v2844 = vunpack.c.l.b16 %v2753
        %v2845 = vunpack.c.h.b16 %v2753
        %v2846 = vunpack.c.l.b16 %v2754
        %v2847 = vunpack.c.h.b16 %v2754
        %v2848 = vunpack.c.l.b16 %v2755
        %v2849 = vunpack.c.h.b16 %v2755
        %v2850 = vunpack.c.l.b16 %v2756
        %v2851 = vunpack.c.h.b16 %v2756
        %v2852 = vunpack.c.l.b16 %v2757
        %v2853 = vunpack.c.h.b16 %v2757
        %v2854 = vunpack.c.l.b16 %v2758
        %v2855 = vunpack.c.h.b16 %v2758
        %v2856 = vunpack.c.l.b16 %v2759
        %v2857 = vunpack.c.h.b16 %v2759
        %v2858 = vunpack.c.l.b16 %v2760
        %v2859 = vunpack.c.h.b16 %v2760
        %v2860 = vunpack.c.l.b16 %v2761
        %v2861 = vunpack.c.h.b16 %v2761
        %v2862 = vunpack.c.l.b16 %v2762
        %v2863 = vunpack.c.h.b16 %v2762
        %v2864 = vunpack.c.l.b16 %v2763
        %v2865 = vunpack.c.h.b16 %v2763
        %v2866 = vunpack.c.l.b16 %v2764
        %v2867 = vunpack.c.h.b16 %v2764
        %v2868 = vunpack.c.l.b16 %v2765
        %v2869 = vunpack.c.h.b16 %v2765
        %v2870 = vunpack.c.l.b16 %v2766
        %v2871 = vunpack.c.h.b16 %v2766
        %v2872 = vunpack.c.l.b16 %v2767
        %v2873 = vunpack.c.h.b16 %v2767
        %v2874 = vunpack.c.l.b16 %v2768
        %v2875 = vunpack.c.h.b16 %v2768
        %v2876 = vunpack.c.l.b16 %v2769
        %v2877 = vunpack.c.h.b16 %v2769
        %v2878 = vunpack.c.l.b16 %v2770
        %v2879 = vunpack.c.h.b16 %v2770
        %v2880 = vunpack.c.l.b16 %v2771
        %v2881 = vunpack.c.h.b16 %v2771
        %v2882 = vpack.c.b16 %v2840, %v2838
        %v2883 = vpack.c.b16 %v2841, %v2839
        %v2884 = vpack.c.b16 %v2844, %v2842
        %v2885 = vpack.c.b16 %v2845, %v2843
        %v2886 = vpack.c.b16 %v2848, %v2846
        %v2887 = vpack.c.b16 %v2849, %v2847
        %v2888 = vpack.c.b16 %v2852, %v2850
        %v2889 = vpack.c.b16 %v2853, %v2851
        %v2890 = vpack.c.b16 %v2856, %v2854
        %v2891 = vpack.c.b16 %v2857, %v2855
        %v2892 = vpack.c.b16 %v2860, %v2858
        %v2893 = vpack.c.b16 %v2861, %v2859
        %v2894 = vpack.c.b16 %v2864, %v2862
        %v2895 = vpack.c.b16 %v2865, %v2863
        %v2896 = vpack.c.b16 %v2868, %v2866
        %v2897 = vpack.c.b16 %v2869, %v2867
        %v2898 = vpack.c.b16 %v2872, %v2870
        %v2899 = vpack.c.b16 %v2873, %v2871
        %v2900 = vpack.c.b16 %v2876, %v2874
        %v2901 = vpack.c.b16 %v2877, %v2875
        %v2902 = vpack.c.b16 %v2880, %v2878
        %v2903 = vpack.c.b16 %v2881, %v2879
        %v2959 = vunpack.c.l.b16 %v2772
        %v2960 = vunpack.c.h.b16 %v2772
        %v2961 = vunpack.c.l.b16 %v2773
        %v2962 = vunpack.c.l.b16 %v2774
        %v2963 = vunpack.c.h.b16 %v2774
        %v2964 = vunpack.c.l.b16 %v2775
        %v2965 = vunpack.c.l.b16 %v2776
        %v2966 = vunpack.c.h.b16 %v2776
        %v2967 = vunpack.c.l.b16 %v2777
        %v2968 = vunpack.c.l.b16 %v2778
        %v2969 = vunpack.c.h.b16 %v2778
        %v2970 = vunpack.c.l.b16 %v2779
        %v2971 = vunpack.c.l.b16 %v2780
        %v2972 = vunpack.c.h.b16 %v2780
        %v2973 = vunpack.c.l.b16 %v2781
        %v2974 = vunpack.c.l.b16 %v2782
        %v2975 = vunpack.c.h.b16 %v2782
        %v2976 = vunpack.c.l.b16 %v2783
        %v2977 = vunpack.c.l.b16 %v2784
        %v2978 = vunpack.c.h.b16 %v2784
        %v2979 = vunpack.c.l.b16 %v2785
        %v2980 = vunpack.c.l.b16 %v2786
        %v2981 = vunpack.c.h.b16 %v2786
        %v2982 = vunpack.c.l.b16 %v2787
        %v2983 = vunpack.c.l.b16 %v2788
        %v2984 = vunpack.c.h.b16 %v2788
        %v2985 = vunpack.c.l.b16 %v2789
        %v2986 = vunpack.c.l.b16 %v2790
        %v2987 = vunpack.c.h.b16 %v2790
        %v2988 = vunpack.c.l.b16 %v2791
        %v2989 = vunpack.c.l.b16 %v2792
        %v2990 = vunpack.c.h.b16 %v2792
        %v2991 = vunpack.c.l.b16 %v2793
        %v2992 = vunpack.c.l.b16 %v2794
        %v2993 = vunpack.c.h.b16 %v2794
        %v2994 = vunpack.c.l.b16 %v2795
        %v2995 = vunpack.c.l.b16 %v2796
        %v2996 = vunpack.c.h.b16 %v2796
        %v2997 = vunpack.c.l.b16 %v2797
        %v2998 = vunpack.c.l.b16 %v2798
        %v2999 = vunpack.c.h.b16 %v2798
        %v3000 = vunpack.c.l.b16 %v2799
        %v3001 = vunpack.c.l.b16 %v2800
        %v3002 = vunpack.c.h.b16 %v2800
        %v3003 = vunpack.c.l.b16 %v2801
        %v3004 = vunpack.c.l.b16 %v2802
        %v3005 = vunpack.c.h.b16 %v2802
        %v3006 = vunpack.c.l.b16 %v2803
        %v3007 = vunpack.c.l.b16 %v2804
        %v3008 = vunpack.c.h.b16 %v2804
        %v3009 = vunpack.c.l.b16 %v2805
        %v3010 = vunpack.c.l.b16 %v2806
        %v3011 = vunpack.c.h.b16 %v2806
        %v3012 = vunpack.c.l.b16 %v2807
        %v3013 = vunpack.c.l.b16 %v2808
        %v3014 = vunpack.c.h.b16 %v2808
        %v3015 = vunpack.c.l.b16 %v2809
        %v3016 = vunpack.c.l.b16 %v2810
        %v3017 = vunpack.c.h.b16 %v2810
        %v3018 = vunpack.c.l.b16 %v2811
        %v3019 = vunpack.c.l.b16 %v2812
        %v3020 = vunpack.c.h.b16 %v2812
        %v3021 = vunpack.c.l.b16 %v2813
        %v3022 = vunpack.c.l.b16 %v2814
        %v3023 = vunpack.c.h.b16 %v2814
        %v3024 = vunpack.c.l.b16 %v2815
        %v3025 = vpack.c.b16 %v2962, %v2959
        %v3026 = vpack.c.b16 %v2963, %v2960
        %v3027 = vpack.c.b16 %v2964, %v2961
        %v3028 = vpack.c.b16 %v2968, %v2965
        %v3029 = vpack.c.b16 %v2969, %v2966
        %v3030 = vpack.c.b16 %v2970, %v2967
        %v3031 = vpack.c.b16 %v2974, %v2971
        %v3032 = vpack.c.b16 %v2975, %v2972
        %v3033 = vpack.c.b16 %v2976, %v2973
        %v3034 = vpack.c.b16 %v2980, %v2977
        %v3035 = vpack.c.b16 %v2981, %v2978
        %v3036 = vpack.c.b16 %v2982, %v2979
        %v3037 = vpack.c.b16 %v2986, %v2983
        %v3038 = vpack.c.b16 %v2987, %v2984
        %v3039 = vpack.c.b16 %v2988, %v2985
        %v3040 = vpack.c.b16 %v2992, %v2989
        %v3041 = vpack.c.b16 %v2993, %v2990
        %v3042 = vpack.c.b16 %v2994, %v2991
        %v3043 = vpack.c.b16 %v2998, %v2995
        %v3044 = vpack.c.b16 %v2999, %v2996
        %v3045 = vpack.c.b16 %v3000, %v2997
        %v3046 = vpack.c.b16 %v3004, %v3001
        %v3047 = vpack.c.b16 %v3005, %v3002
        %v3048 = vpack.c.b16 %v3006, %v3003
        %v3049 = vpack.c.b16 %v3010, %v3007
        %v3050 = vpack.c.b16 %v3011, %v3008
        %v3051 = vpack.c.b16 %v3012, %v3009
        %v3052 = vpack.c.b16 %v3016, %v3013
        %v3053 = vpack.c.b16 %v3017, %v3014
        %v3054 = vpack.c.b16 %v3018, %v3015
        %v3055 = vpack.c.b16 %v3022, %v3019
        %v3056 = vpack.c.b16 %v3023, %v3020
        %v3057 = vpack.c.b16 %v3024, %v3021
        %vm3091 = vcmask 392192
        %v3093 = vsel %vm3091, %v2883, 0
        %v3096 = vsel %vm3091, %v2885, 0
        %v3099 = vsel %vm3091, %v2887, 0
        %v3102 = vsel %vm3091, %v2889, 0
        %v3105 = vsel %vm3091, %v2891, 0
        %v3108 = vsel %vm3091, %v2893, 0
        %v3111 = vsel %vm3091, %v2895, 0
        %v3114 = vsel %vm3091, %v2897, 0
        %v3117 = vsel %vm3091, %v2899, 0
        %v3120 = vsel %vm3091, %v2901, 0
        %v3123 = vsel %vm3091, %v2903, 0
        %3125 = vmatpush.bf16.msra.mxu0 %v3046
        %3126 = vmatpush.bf16.msra.mxu0 %v3043
        %3127 = vmatpush.bf16.msra.mxu0 %v3040
        %3128 = vmatpush.bf16.msra.mxu0 %v3037
        %3129 = vmatpush.bf16.msra.mxu0 %v3034
        %3130 = vmatpush.bf16.msra.mxu0 %v3031
        %3131 = vmatpush.bf16.msra.mxu0 %v3028
        %3132 = vmatpush.bf16.msra.mxu0 %v3025
        %3133 = vmatmul.bf16.gmra.mxu0 %v2882
        %v3134 = vpop.f32.mrf.mxu0
        %v3135 = vadd.f32 0.0, %v3134
        %v3136 = vpop.f32.mrf.mxu0
        %v3137 = vadd.f32 0.0, %v3136
        %3138 = vmatmul.bf16.gmra.mxu0 %v2884
        %v3139 = vpop.f32.mrf.mxu0
        %v3140 = vadd.f32 0.0, %v3139
        %v3141 = vpop.f32.mrf.mxu0
        %v3142 = vadd.f32 0.0, %v3141
        %3143 = vmatmul.bf16.gmra.mxu0 %v2886
        %v3144 = vpop.f32.mrf.mxu0
        %v3145 = vadd.f32 0.0, %v3144
        %v3146 = vpop.f32.mrf.mxu0
        %v3147 = vadd.f32 0.0, %v3146
        %3148 = vmatmul.bf16.gmra.mxu0 %v2888
        %v3149 = vpop.f32.mrf.mxu0
        %v3150 = vadd.f32 0.0, %v3149
        %v3151 = vpop.f32.mrf.mxu0
        %v3152 = vadd.f32 0.0, %v3151
        %3153 = vmatmul.bf16.gmra.mxu0 %v2890
        %v3154 = vpop.f32.mrf.mxu0
        %v3155 = vadd.f32 0.0, %v3154
        %v3156 = vpop.f32.mrf.mxu0
        %v3157 = vadd.f32 0.0, %v3156
        %3158 = vmatmul.bf16.gmra.mxu0 %v2892
        %v3159 = vpop.f32.mrf.mxu0
        %v3160 = vadd.f32 0.0, %v3159
        %v3161 = vpop.f32.mrf.mxu0
        %v3162 = vadd.f32 0.0, %v3161
        %3163 = vmatmul.bf16.gmra.mxu0 %v2894
        %v3164 = vpop.f32.mrf.mxu0
        %v3165 = vadd.f32 0.0, %v3164
        %v3166 = vpop.f32.mrf.mxu0
        %v3167 = vadd.f32 0.0, %v3166
        %3168 = vmatmul.bf16.gmra.mxu0 %v2896
        %v3169 = vpop.f32.mrf.mxu0
        %v3170 = vadd.f32 0.0, %v3169
        %v3171 = vpop.f32.mrf.mxu0
        %v3172 = vadd.f32 0.0, %v3171
        %3173 = vmatmul.bf16.gmra.mxu0 %v2898
        %v3174 = vpop.f32.mrf.mxu0
        %v3175 = vadd.f32 0.0, %v3174
        %v3176 = vpop.f32.mrf.mxu0
        %v3177 = vadd.f32 0.0, %v3176
        %3178 = vmatmul.bf16.gmra.mxu0 %v2900
        %v3179 = vpop.f32.mrf.mxu0
        %v3180 = vpop.f32.mrf.mxu0
        %3181 = vmatmul.bf16.gmra.mxu0 %v2902
        %v3182 = vpop.f32.mrf.mxu0
        %v3183 = vpop.f32.mrf.mxu0
        %3184 = vdwg.mxu0
        %3185 = vmatpush.bf16.msra.mxu0 0
        %3186 = vmatpush.bf16.msra.mxu0 0
        %3187 = vmatpush.bf16.msra.mxu0 0
        %3188 = vmatpush.bf16.msra.mxu0 0
        %3189 = vmatpush.bf16.msra.mxu0 0
        %3190 = vmatpush.bf16.msra.mxu0 %v3055
        %3191 = vmatpush.bf16.msra.mxu0 %v3052
        %3192 = vmatpush.bf16.msra.mxu0 %v3049
        %3193 = vmatmul.bf16.gmra.mxu0 %v3093
        %v3194 = vpop.f32.mrf.mxu0
        %v3195 = vadd.f32 %v3135, %v3194
        %v3196 = vpop.f32.mrf.mxu0
        %v3197 = vadd.f32 %v3137, %v3196
        %3198 = vmatmul.bf16.gmra.mxu0 %v3096
        %v3199 = vpop.f32.mrf.mxu0
        %v3200 = vadd.f32 %v3140, %v3199
        %v3201 = vpop.f32.mrf.mxu0
        %v3202 = vadd.f32 %v3142, %v3201
        %3203 = vmatmul.bf16.gmra.mxu0 %v3099
        %v3204 = vpop.f32.mrf.mxu0
        %v3205 = vadd.f32 %v3145, %v3204
        %v3206 = vpop.f32.mrf.mxu0
        %v3207 = vadd.f32 %v3147, %v3206
        %3208 = vmatmul.bf16.gmra.mxu0 %v3102
        %v3209 = vpop.f32.mrf.mxu0
        %v3210 = vadd.f32 %v3150, %v3209
        %v3211 = vpop.f32.mrf.mxu0
        %v3212 = vadd.f32 %v3152, %v3211
        %3213 = vmatmul.bf16.gmra.mxu0 %v3105
        %v3214 = vpop.f32.mrf.mxu0
        %v3215 = vadd.f32 %v3155, %v3214
        %v3216 = vpop.f32.mrf.mxu0
        %v3217 = vadd.f32 %v3157, %v3216
        %3218 = vmatmul.bf16.gmra.mxu0 %v3108
        %v3219 = vpop.f32.mrf.mxu0
        %v3220 = vadd.f32 %v3160, %v3219
        %v3221 = vpop.f32.mrf.mxu0
        %v3222 = vadd.f32 %v3162, %v3221
        %3223 = vmatmul.bf16.gmra.mxu0 %v3111
        %v3224 = vpop.f32.mrf.mxu0
        %v3225 = vadd.f32 %v3165, %v3224
        %v3226 = vpop.f32.mrf.mxu0
        %v3227 = vadd.f32 %v3167, %v3226
        %3228 = vmatmul.bf16.gmra.mxu0 %v3114
        %v3229 = vpop.f32.mrf.mxu0
        %v3230 = vadd.f32 %v3170, %v3229
        %v3231 = vpop.f32.mrf.mxu0
        %v3232 = vadd.f32 %v3172, %v3231
        %3233 = vmatmul.bf16.gmra.mxu0 %v3117
        %v3234 = vpop.f32.mrf.mxu0
        %v3235 = vadd.f32 %v3175, %v3234
        %v3236 = vpop.f32.mrf.mxu0
        %v3237 = vadd.f32 %v3177, %v3236
        %3238 = vmatmul.bf16.gmra.mxu0 %v3120
        %v3239 = vpop.f32.mrf.mxu0
        %v3240 = vpop.f32.mrf.mxu0
        %3241 = vmatmul.bf16.gmra.mxu0 %v3123
        %v3242 = vpop.f32.mrf.mxu0
        %v3243 = vpop.f32.mrf.mxu0
        %3244 = vdwg.mxu0
        %3245 = vmatpush.bf16.msra.mxu0 %v3047
        %3246 = vmatpush.bf16.msra.mxu0 %v3044
        %3247 = vmatpush.bf16.msra.mxu0 %v3041
        %3248 = vmatpush.bf16.msra.mxu0 %v3038
        %3249 = vmatpush.bf16.msra.mxu0 %v3035
        %3250 = vmatpush.bf16.msra.mxu0 %v3032
        %3251 = vmatpush.bf16.msra.mxu0 %v3029
        %3252 = vmatpush.bf16.msra.mxu0 %v3026
        %3253 = vmatmul.bf16.gmra.mxu0 %v2882
        %v3254 = vpop.f32.mrf.mxu0
        %v3255 = vadd.f32 0.0, %v3254
        %v3256 = vpop.f32.mrf.mxu0
        %v3257 = vadd.f32 0.0, %v3256
        %3258 = vmatmul.bf16.gmra.mxu0 %v2884
        %v3259 = vpop.f32.mrf.mxu0
        %v3260 = vadd.f32 0.0, %v3259
        %v3261 = vpop.f32.mrf.mxu0
        %v3262 = vadd.f32 0.0, %v3261
        %3263 = vmatmul.bf16.gmra.mxu0 %v2886
        %v3264 = vpop.f32.mrf.mxu0
        %v3265 = vadd.f32 0.0, %v3264
        %v3266 = vpop.f32.mrf.mxu0
        %v3267 = vadd.f32 0.0, %v3266
        %3268 = vmatmul.bf16.gmra.mxu0 %v2888
        %v3269 = vpop.f32.mrf.mxu0
        %v3270 = vadd.f32 0.0, %v3269
        %v3271 = vpop.f32.mrf.mxu0
        %v3272 = vadd.f32 0.0, %v3271
        %3273 = vmatmul.bf16.gmra.mxu0 %v2890
        %v3274 = vpop.f32.mrf.mxu0
        %v3275 = vadd.f32 0.0, %v3274
        %v3276 = vpop.f32.mrf.mxu0
        %v3277 = vadd.f32 0.0, %v3276
        %3278 = vmatmul.bf16.gmra.mxu0 %v2892
        %v3279 = vpop.f32.mrf.mxu0
        %v3280 = vadd.f32 0.0, %v3279
        %v3281 = vpop.f32.mrf.mxu0
        %v3282 = vadd.f32 0.0, %v3281
        %3283 = vmatmul.bf16.gmra.mxu0 %v2894
        %v3284 = vpop.f32.mrf.mxu0
        %v3285 = vadd.f32 0.0, %v3284
        %v3286 = vpop.f32.mrf.mxu0
        %v3287 = vadd.f32 0.0, %v3286
        %3288 = vmatmul.bf16.gmra.mxu0 %v2896
        %v3289 = vpop.f32.mrf.mxu0
        %v3290 = vadd.f32 0.0, %v3289
        %v3291 = vpop.f32.mrf.mxu0
        %v3292 = vadd.f32 0.0, %v3291
        %3293 = vmatmul.bf16.gmra.mxu0 %v2898
        %v3294 = vpop.f32.mrf.mxu0
        %v3295 = vadd.f32 0.0, %v3294
        %v3296 = vpop.f32.mrf.mxu0
        %v3297 = vadd.f32 0.0, %v3296
        %3298 = vmatmul.bf16.gmra.mxu0 %v2900
        %v3299 = vpop.f32.mrf.mxu0
        %v3300 = vpop.f32.mrf.mxu0
        %3301 = vmatmul.bf16.gmra.mxu0 %v2902
        %v3302 = vpop.f32.mrf.mxu0
        %v3303 = vpop.f32.mrf.mxu0
        %3304 = vdwg.mxu0
        %3305 = vmatpush.bf16.msra.mxu0 0
        %3306 = vmatpush.bf16.msra.mxu0 0
        %3307 = vmatpush.bf16.msra.mxu0 0
        %3308 = vmatpush.bf16.msra.mxu0 0
        %3309 = vmatpush.bf16.msra.mxu0 0
        %3310 = vmatpush.bf16.msra.mxu0 %v3056
        %3311 = vmatpush.bf16.msra.mxu0 %v3053
        %3312 = vmatpush.bf16.msra.mxu0 %v3050
        %3313 = vmatmul.bf16.gmra.mxu0 %v3093
        %v3314 = vpop.f32.mrf.mxu0
        %v3315 = vadd.f32 %v3255, %v3314
        %v3316 = vpop.f32.mrf.mxu0
        %v3317 = vadd.f32 %v3257, %v3316
        %3318 = vmatmul.bf16.gmra.mxu0 %v3096
        %v3319 = vpop.f32.mrf.mxu0
        %v3320 = vadd.f32 %v3260, %v3319
        %v3321 = vpop.f32.mrf.mxu0
        %v3322 = vadd.f32 %v3262, %v3321
        %3323 = vmatmul.bf16.gmra.mxu0 %v3099
        %v3324 = vpop.f32.mrf.mxu0
        %v3325 = vadd.f32 %v3265, %v3324
        %v3326 = vpop.f32.mrf.mxu0
        %v3327 = vadd.f32 %v3267, %v3326
        %3328 = vmatmul.bf16.gmra.mxu0 %v3102
        %v3329 = vpop.f32.mrf.mxu0
        %v3330 = vadd.f32 %v3270, %v3329
        %v3331 = vpop.f32.mrf.mxu0
        %v3332 = vadd.f32 %v3272, %v3331
        %3333 = vmatmul.bf16.gmra.mxu0 %v3105
        %v3334 = vpop.f32.mrf.mxu0
        %v3335 = vadd.f32 %v3275, %v3334
        %v3336 = vpop.f32.mrf.mxu0
        %v3337 = vadd.f32 %v3277, %v3336
        %3338 = vmatmul.bf16.gmra.mxu0 %v3108
        %v3339 = vpop.f32.mrf.mxu0
        %v3340 = vadd.f32 %v3280, %v3339
        %v3341 = vpop.f32.mrf.mxu0
        %v3342 = vadd.f32 %v3282, %v3341
        %3343 = vmatmul.bf16.gmra.mxu0 %v3111
        %v3344 = vpop.f32.mrf.mxu0
        %v3345 = vadd.f32 %v3285, %v3344
        %v3346 = vpop.f32.mrf.mxu0
        %v3347 = vadd.f32 %v3287, %v3346
        %3348 = vmatmul.bf16.gmra.mxu0 %v3114
        %v3349 = vpop.f32.mrf.mxu0
        %v3350 = vadd.f32 %v3290, %v3349
        %v3351 = vpop.f32.mrf.mxu0
        %v3352 = vadd.f32 %v3292, %v3351
        %3353 = vmatmul.bf16.gmra.mxu0 %v3117
        %v3354 = vpop.f32.mrf.mxu0
        %v3355 = vadd.f32 %v3295, %v3354
        %v3356 = vpop.f32.mrf.mxu0
        %v3357 = vadd.f32 %v3297, %v3356
        %3358 = vmatmul.bf16.gmra.mxu0 %v3120
        %v3359 = vpop.f32.mrf.mxu0
        %v3360 = vpop.f32.mrf.mxu0
        %3361 = vmatmul.bf16.gmra.mxu0 %v3123
        %v3362 = vpop.f32.mrf.mxu0
        %v3363 = vpop.f32.mrf.mxu0
        %3364 = vdwg.mxu0
        %3365 = vmatpush.bf16.msra.mxu0 %v3048
        %3366 = vmatpush.bf16.msra.mxu0 %v3045
        %3367 = vmatpush.bf16.msra.mxu0 %v3042
        %3368 = vmatpush.bf16.msra.mxu0 %v3039
        %3369 = vmatpush.bf16.msra.mxu0 %v3036
        %3370 = vmatpush.bf16.msra.mxu0 %v3033
        %3371 = vmatpush.bf16.msra.mxu0 %v3030
        %3372 = vmatpush.bf16.msra.mxu0 %v3027
        %3373 = vmatmul.bf16.gmra.mxu0 %v2882
        %v3374 = vpop.f32.mrf.mxu0
        %v3375 = vadd.f32 0.0, %v3374
        %v3376 = vpop.f32.mrf.mxu0
        %v3377 = vadd.f32 0.0, %v3376
        %3378 = vmatmul.bf16.gmra.mxu0 %v2884
        %v3379 = vpop.f32.mrf.mxu0
        %v3380 = vadd.f32 0.0, %v3379
        %v3381 = vpop.f32.mrf.mxu0
        %v3382 = vadd.f32 0.0, %v3381
        %3383 = vmatmul.bf16.gmra.mxu0 %v2886
        %v3384 = vpop.f32.mrf.mxu0
        %v3385 = vadd.f32 0.0, %v3384
        %v3386 = vpop.f32.mrf.mxu0
        %v3387 = vadd.f32 0.0, %v3386
        %3388 = vmatmul.bf16.gmra.mxu0 %v2888
        %v3389 = vpop.f32.mrf.mxu0
        %v3390 = vadd.f32 0.0, %v3389
        %v3391 = vpop.f32.mrf.mxu0
        %v3392 = vadd.f32 0.0, %v3391
        %3393 = vmatmul.bf16.gmra.mxu0 %v2890
        %v3394 = vpop.f32.mrf.mxu0
        %v3395 = vadd.f32 0.0, %v3394
        %v3396 = vpop.f32.mrf.mxu0
        %v3397 = vadd.f32 0.0, %v3396
        %3398 = vmatmul.bf16.gmra.mxu0 %v2892
        %v3399 = vpop.f32.mrf.mxu0
        %v3400 = vadd.f32 0.0, %v3399
        %v3401 = vpop.f32.mrf.mxu0
        %v3402 = vadd.f32 0.0, %v3401
        %3403 = vmatmul.bf16.gmra.mxu0 %v2894
        %v3404 = vpop.f32.mrf.mxu0
        %v3405 = vadd.f32 0.0, %v3404
        %v3406 = vpop.f32.mrf.mxu0
        %v3407 = vadd.f32 0.0, %v3406
        %3408 = vmatmul.bf16.gmra.mxu0 %v2896
        %v3409 = vpop.f32.mrf.mxu0
        %v3410 = vadd.f32 0.0, %v3409
        %v3411 = vpop.f32.mrf.mxu0
        %v3412 = vadd.f32 0.0, %v3411
        %3413 = vmatmul.bf16.gmra.mxu0 %v2898
        %v3414 = vpop.f32.mrf.mxu0
        %v3415 = vadd.f32 0.0, %v3414
        %v3416 = vpop.f32.mrf.mxu0
        %v3417 = vadd.f32 0.0, %v3416
        %3418 = vmatmul.bf16.gmra.mxu0 %v2900
        %v3419 = vpop.f32.mrf.mxu0
        %v3420 = vpop.f32.mrf.mxu0
        %3421 = vmatmul.bf16.gmra.mxu0 %v2902
        %v3422 = vpop.f32.mrf.mxu0
        %v3423 = vpop.f32.mrf.mxu0
        %3424 = vdwg.mxu0
        %3425 = vmatpush.bf16.msra.mxu0 0
        %3426 = vmatpush.bf16.msra.mxu0 0
        %3427 = vmatpush.bf16.msra.mxu0 0
        %3428 = vmatpush.bf16.msra.mxu0 0
        %3429 = vmatpush.bf16.msra.mxu0 0
        %3430 = vmatpush.bf16.msra.mxu0 %v3057
        %3431 = vmatpush.bf16.msra.mxu0 %v3054
        %3432 = vmatpush.bf16.msra.mxu0 %v3051
        %3433 = vmatmul.bf16.gmra.mxu0 %v3093
        %v3434 = vpop.f32.mrf.mxu0
        %v3435 = vadd.f32 %v3375, %v3434
        %v3436 = vpop.f32.mrf.mxu0
        %v3437 = vadd.f32 %v3377, %v3436
        %3438 = vmatmul.bf16.gmra.mxu0 %v3096
        %v3439 = vpop.f32.mrf.mxu0
        %v3440 = vadd.f32 %v3380, %v3439
        %v3441 = vpop.f32.mrf.mxu0
        %v3442 = vadd.f32 %v3382, %v3441
        %3443 = vmatmul.bf16.gmra.mxu0 %v3099
        %v3444 = vpop.f32.mrf.mxu0
        %v3445 = vadd.f32 %v3385, %v3444
        %v3446 = vpop.f32.mrf.mxu0
        %v3447 = vadd.f32 %v3387, %v3446
        %3448 = vmatmul.bf16.gmra.mxu0 %v3102
        %v3449 = vpop.f32.mrf.mxu0
        %v3450 = vadd.f32 %v3390, %v3449
        %v3451 = vpop.f32.mrf.mxu0
        %v3452 = vadd.f32 %v3392, %v3451
        %3453 = vmatmul.bf16.gmra.mxu0 %v3105
        %v3454 = vpop.f32.mrf.mxu0
        %v3455 = vadd.f32 %v3395, %v3454
        %v3456 = vpop.f32.mrf.mxu0
        %v3457 = vadd.f32 %v3397, %v3456
        %3458 = vmatmul.bf16.gmra.mxu0 %v3108
        %v3459 = vpop.f32.mrf.mxu0
        %v3460 = vadd.f32 %v3400, %v3459
        %v3461 = vpop.f32.mrf.mxu0
        %v3462 = vadd.f32 %v3402, %v3461
        %3463 = vmatmul.bf16.gmra.mxu0 %v3111
        %v3464 = vpop.f32.mrf.mxu0
        %v3465 = vadd.f32 %v3405, %v3464
        %v3466 = vpop.f32.mrf.mxu0
        %v3467 = vadd.f32 %v3407, %v3466
        %3468 = vmatmul.bf16.gmra.mxu0 %v3114
        %v3469 = vpop.f32.mrf.mxu0
        %v3470 = vadd.f32 %v3410, %v3469
        %v3471 = vpop.f32.mrf.mxu0
        %v3472 = vadd.f32 %v3412, %v3471
        %3473 = vmatmul.bf16.gmra.mxu0 %v3117
        %v3474 = vpop.f32.mrf.mxu0
        %v3475 = vadd.f32 %v3415, %v3474
        %v3476 = vpop.f32.mrf.mxu0
        %v3477 = vadd.f32 %v3417, %v3476
        %3478 = vmatmul.bf16.gmra.mxu0 %v3120
        %v3479 = vpop.f32.mrf.mxu0
        %v3480 = vpop.f32.mrf.mxu0
        %3481 = vmatmul.bf16.gmra.mxu0 %v3123
        %v3482 = vpop.f32.mrf.mxu0
        %v3483 = vpop.f32.mrf.mxu0
        %3484 = vdwg.mxu0
        %s3485 = scalar_lea.vmem %s5, 264
        %v3486 = vld [vmem:[%s3485] sm:$0xff]
        %v3487 = vld [vmem:[%s3485 + $0x8] sm:$0xf]
        %v3488 = vld [vmem:[%s3485 + $0xc] sm:$0xff]
        %v3489 = vld [vmem:[%s3485 + $0x14] sm:$0xf]
        %v3490 = vld [vmem:[%s3485 + $0x18] sm:$0xff]
        %v3491 = vld [vmem:[%s3485 + $0x20] sm:$0xf]
        %v3492 = vld [vmem:[%s3485 + $0x24] sm:$0xff]
        %v3493 = vld [vmem:[%s3485 + $0x2c] sm:$0xf]
        %v3494 = vld [vmem:[%s3485 + $0x30] sm:$0xff]
        %v3495 = vld [vmem:[%s3485 + $0x38] sm:$0xf]
        %v3496 = vld [vmem:[%s3485 + $0x3c] sm:$0xff]
        %v3497 = vld [vmem:[%s3485 + $0x44] sm:$0xf]
        %v3498 = vld [vmem:[%s3485 + $0x48] sm:$0xff]
        %v3499 = vld [vmem:[%s3485 + $0x50] sm:$0xf]
        %v3500 = vld [vmem:[%s3485 + $0x54] sm:$0xff]
        %v3501 = vld [vmem:[%s3485 + $0x5c] sm:$0xf]
        %v3502 = vld [vmem:[%s3485 + $0x60] sm:$0xff]
        %v3503 = vld [vmem:[%s3485 + $0x68] sm:$0xf]
        %v3504 = vld [vmem:[%s3485 + $0x6c] sm:$0xff]
        %v3505 = vld [vmem:[%s3485 + $0x74] sm:$0xf]
        %v3506 = vld [vmem:[%s3485 + $0x78] sm:$0xff]
        %v3507 = vld [vmem:[%s3485 + $0x80] sm:$0xf]
        %v3508 = vld [vmem:[%s3485 + $0x84] sm:$0xff]
        %v3509 = vld [vmem:[%s3485 + $0x8c] sm:$0xf]
        %v3510 = vld [vmem:[%s3485 + $0x90] sm:$0xff]
        %v3511 = vld [vmem:[%s3485 + $0x98] sm:$0xf]
        %v3512 = vld [vmem:[%s3485 + $0x9c] sm:$0xff]
        %v3513 = vld [vmem:[%s3485 + $0xa4] sm:$0xf]
        %v3514 = vld [vmem:[%s3485 + $0xa8] sm:$0xff]
        %v3515 = vld [vmem:[%s3485 + $0xb0] sm:$0xf]
        %v3516 = vld [vmem:[%s3485 + $0xb4] sm:$0xff]
        %v3517 = vld [vmem:[%s3485 + $0xbc] sm:$0xf]
        %v3518 = vld [vmem:[%s3485 + $0xc0] sm:$0xff]
        %v3519 = vld [vmem:[%s3485 + $0xc8] sm:$0xf]
        %v3520 = vld [vmem:[%s3485 + $0xcc] sm:$0xff]
        %v3521 = vld [vmem:[%s3485 + $0xd4] sm:$0xf]
        %v3522 = vld [vmem:[%s3485 + $0xd8] sm:$0xff]
        %v3523 = vld [vmem:[%s3485 + $0xe0] sm:$0xf]
        %v3524 = vld [vmem:[%s3485 + $0xe4] sm:$0xff]
        %v3525 = vld [vmem:[%s3485 + $0xec] sm:$0xf]
        %v3526 = vld [vmem:[%s3485 + $0xf0] sm:$0xff]
        %v3527 = vld [vmem:[%s3485 + $0xf8] sm:$0xf]
        %v3528 = vld [vmem:[%s3485 + $0xfc] sm:$0xff]
        %v3529 = vld [vmem:[%s3485 + $0x104] sm:$0xf]
        %v3574 = vunpack.c.l.b16 %v3486
        %v3575 = vunpack.c.h.b16 %v3486
        %v3576 = vunpack.c.l.b16 %v3487
        %v3577 = vunpack.c.l.b16 %v3488
        %v3578 = vunpack.c.h.b16 %v3488
        %v3579 = vunpack.c.l.b16 %v3489
        %v3580 = vunpack.c.l.b16 %v3490
        %v3581 = vunpack.c.h.b16 %v3490
        %v3582 = vunpack.c.l.b16 %v3491
        %v3583 = vunpack.c.l.b16 %v3492
        %v3584 = vunpack.c.h.b16 %v3492
        %v3585 = vunpack.c.l.b16 %v3493
        %v3586 = vunpack.c.l.b16 %v3494
        %v3587 = vunpack.c.h.b16 %v3494
        %v3588 = vunpack.c.l.b16 %v3495
        %v3589 = vunpack.c.l.b16 %v3496
        %v3590 = vunpack.c.h.b16 %v3496
        %v3591 = vunpack.c.l.b16 %v3497
        %v3592 = vunpack.c.l.b16 %v3498
        %v3593 = vunpack.c.h.b16 %v3498
        %v3594 = vunpack.c.l.b16 %v3499
        %v3595 = vunpack.c.l.b16 %v3500
        %v3596 = vunpack.c.h.b16 %v3500
        %v3597 = vunpack.c.l.b16 %v3501
        %v3598 = vunpack.c.l.b16 %v3502
        %v3599 = vunpack.c.h.b16 %v3502
        %v3600 = vunpack.c.l.b16 %v3503
        %v3601 = vunpack.c.l.b16 %v3504
        %v3602 = vunpack.c.h.b16 %v3504
        %v3603 = vunpack.c.l.b16 %v3505
        %v3604 = vunpack.c.l.b16 %v3506
        %v3605 = vunpack.c.h.b16 %v3506
        %v3606 = vunpack.c.l.b16 %v3507
        %v3607 = vunpack.c.l.b16 %v3508
        %v3608 = vunpack.c.h.b16 %v3508
        %v3609 = vunpack.c.l.b16 %v3509
        %v3610 = vunpack.c.l.b16 %v3510
        %v3611 = vunpack.c.h.b16 %v3510
        %v3612 = vunpack.c.l.b16 %v3511
        %v3613 = vunpack.c.l.b16 %v3512
        %v3614 = vunpack.c.h.b16 %v3512
        %v3615 = vunpack.c.l.b16 %v3513
        %v3616 = vunpack.c.l.b16 %v3514
        %v3617 = vunpack.c.h.b16 %v3514
        %v3618 = vunpack.c.l.b16 %v3515
        %v3619 = vunpack.c.l.b16 %v3516
        %v3620 = vunpack.c.h.b16 %v3516
        %v3621 = vunpack.c.l.b16 %v3517
        %v3622 = vunpack.c.l.b16 %v3518
        %v3623 = vunpack.c.h.b16 %v3518
        %v3624 = vunpack.c.l.b16 %v3519
        %v3625 = vunpack.c.l.b16 %v3520
        %v3626 = vunpack.c.h.b16 %v3520
        %v3627 = vunpack.c.l.b16 %v3521
        %v3628 = vunpack.c.l.b16 %v3522
        %v3629 = vunpack.c.h.b16 %v3522
        %v3630 = vunpack.c.l.b16 %v3523
        %v3631 = vunpack.c.l.b16 %v3524
        %v3632 = vunpack.c.h.b16 %v3524
        %v3633 = vunpack.c.l.b16 %v3525
        %v3634 = vunpack.c.l.b16 %v3526
        %v3635 = vunpack.c.h.b16 %v3526
        %v3636 = vunpack.c.l.b16 %v3527
        %v3637 = vunpack.c.l.b16 %v3528
        %v3638 = vunpack.c.h.b16 %v3528
        %v3639 = vunpack.c.l.b16 %v3529
        %v3640 = vpack.c.b16 %v3577, %v3574
        %v3641 = vpack.c.b16 %v3578, %v3575
        %v3642 = vpack.c.b16 %v3579, %v3576
        %v3643 = vpack.c.b16 %v3583, %v3580
        %v3644 = vpack.c.b16 %v3584, %v3581
        %v3645 = vpack.c.b16 %v3585, %v3582
        %v3646 = vpack.c.b16 %v3589, %v3586
        %v3647 = vpack.c.b16 %v3590, %v3587
        %v3648 = vpack.c.b16 %v3591, %v3588
        %v3649 = vpack.c.b16 %v3595, %v3592
        %v3650 = vpack.c.b16 %v3596, %v3593
        %v3651 = vpack.c.b16 %v3597, %v3594
        %v3652 = vpack.c.b16 %v3601, %v3598
        %v3653 = vpack.c.b16 %v3602, %v3599
        %v3654 = vpack.c.b16 %v3603, %v3600
        %v3655 = vpack.c.b16 %v3607, %v3604
        %v3656 = vpack.c.b16 %v3608, %v3605
        %v3657 = vpack.c.b16 %v3609, %v3606
        %v3658 = vpack.c.b16 %v3613, %v3610
        %v3659 = vpack.c.b16 %v3614, %v3611
        %v3660 = vpack.c.b16 %v3615, %v3612
        %v3661 = vpack.c.b16 %v3619, %v3616
        %v3662 = vpack.c.b16 %v3620, %v3617
        %v3663 = vpack.c.b16 %v3621, %v3618
        %v3664 = vpack.c.b16 %v3625, %v3622
        %v3665 = vpack.c.b16 %v3626, %v3623
        %v3666 = vpack.c.b16 %v3627, %v3624
        %v3667 = vpack.c.b16 %v3631, %v3628
        %v3668 = vpack.c.b16 %v3632, %v3629
        %v3669 = vpack.c.b16 %v3633, %v3630
        %v3670 = vpack.c.b16 %v3637, %v3634
        %v3671 = vpack.c.b16 %v3638, %v3635
        %v3672 = vpack.c.b16 %v3639, %v3636
        %3706 = vmatpush.bf16.msra.mxu0 %v3661
        %3707 = vmatpush.bf16.msra.mxu0 %v3658
        %3708 = vmatpush.bf16.msra.mxu0 %v3655
        %3709 = vmatpush.bf16.msra.mxu0 %v3652
        %3710 = vmatpush.bf16.msra.mxu0 %v3649
        %3711 = vmatpush.bf16.msra.mxu0 %v3646
        %3712 = vmatpush.bf16.msra.mxu0 %v3643
        %3713 = vmatpush.bf16.msra.mxu0 %v3640
        %3714 = vmatmul.bf16.gmra.mxu0 %v2882
        %v3715 = vpop.f32.mrf.mxu0
        %v3716 = vpop.f32.mrf.mxu0
        %3717 = vmatmul.bf16.gmra.mxu0 %v2884
        %v3718 = vpop.f32.mrf.mxu0
        %v3719 = vadd.f32 0.0, %v3718
        %v3720 = vpop.f32.mrf.mxu0
        %v3721 = vadd.f32 0.0, %v3720
        %3722 = vmatmul.bf16.gmra.mxu0 %v2886
        %v3723 = vpop.f32.mrf.mxu0
        %v3724 = vadd.f32 0.0, %v3723
        %v3725 = vpop.f32.mrf.mxu0
        %v3726 = vadd.f32 0.0, %v3725
        %3727 = vmatmul.bf16.gmra.mxu0 %v2888
        %v3728 = vpop.f32.mrf.mxu0
        %v3729 = vadd.f32 0.0, %v3728
        %v3730 = vpop.f32.mrf.mxu0
        %v3731 = vadd.f32 0.0, %v3730
        %3732 = vmatmul.bf16.gmra.mxu0 %v2890
        %v3733 = vpop.f32.mrf.mxu0
        %v3734 = vadd.f32 0.0, %v3733
        %v3735 = vpop.f32.mrf.mxu0
        %v3736 = vadd.f32 0.0, %v3735
        %3737 = vmatmul.bf16.gmra.mxu0 %v2892
        %v3738 = vpop.f32.mrf.mxu0
        %v3739 = vadd.f32 0.0, %v3738
        %v3740 = vpop.f32.mrf.mxu0
        %v3741 = vadd.f32 0.0, %v3740
        %3742 = vmatmul.bf16.gmra.mxu0 %v2894
        %v3743 = vpop.f32.mrf.mxu0
        %v3744 = vadd.f32 0.0, %v3743
        %v3745 = vpop.f32.mrf.mxu0
        %v3746 = vadd.f32 0.0, %v3745
        %3747 = vmatmul.bf16.gmra.mxu0 %v2896
        %v3748 = vpop.f32.mrf.mxu0
        %v3749 = vadd.f32 0.0, %v3748
        %v3750 = vpop.f32.mrf.mxu0
        %v3751 = vadd.f32 0.0, %v3750
        %3752 = vmatmul.bf16.gmra.mxu0 %v2898
        %v3753 = vpop.f32.mrf.mxu0
        %v3754 = vadd.f32 0.0, %v3753
        %v3755 = vpop.f32.mrf.mxu0
        %v3756 = vadd.f32 0.0, %v3755
        %3757 = vmatmul.bf16.gmra.mxu0 %v2900
        %v3758 = vpop.f32.mrf.mxu0
        %v3759 = vadd.f32 0.0, %v3758
        %v3760 = vpop.f32.mrf.mxu0
        %v3761 = vadd.f32 0.0, %v3760
        %3762 = vmatmul.bf16.gmra.mxu0 %v2902
        %v3763 = vpop.f32.mrf.mxu0
        %v3764 = vpop.f32.mrf.mxu0
        %3765 = vdwg.mxu0
        %3766 = vmatpush.bf16.msra.mxu0 0
        %3767 = vmatpush.bf16.msra.mxu0 0
        %3768 = vmatpush.bf16.msra.mxu0 0
        %3769 = vmatpush.bf16.msra.mxu0 0
        %3770 = vmatpush.bf16.msra.mxu0 0
        %3771 = vmatpush.bf16.msra.mxu0 %v3670
        %3772 = vmatpush.bf16.msra.mxu0 %v3667
        %3773 = vmatpush.bf16.msra.mxu0 %v3664
        %3774 = vmatmul.bf16.gmra.mxu0 %v3093
        %v3775 = vpop.f32.mrf.mxu0
        %v3776 = vpop.f32.mrf.mxu0
        %3777 = vmatmul.bf16.gmra.mxu0 %v3096
        %v3778 = vpop.f32.mrf.mxu0
        %v3779 = vadd.f32 %v3719, %v3778
        %v3780 = vpop.f32.mrf.mxu0
        %v3781 = vadd.f32 %v3721, %v3780
        %3782 = vmatmul.bf16.gmra.mxu0 %v3099
        %v3783 = vpop.f32.mrf.mxu0
        %v3784 = vadd.f32 %v3724, %v3783
        %v3785 = vpop.f32.mrf.mxu0
        %v3786 = vadd.f32 %v3726, %v3785
        %3787 = vmatmul.bf16.gmra.mxu0 %v3102
        %v3788 = vpop.f32.mrf.mxu0
        %v3789 = vadd.f32 %v3729, %v3788
        %v3790 = vpop.f32.mrf.mxu0
        %v3791 = vadd.f32 %v3731, %v3790
        %3792 = vmatmul.bf16.gmra.mxu0 %v3105
        %v3793 = vpop.f32.mrf.mxu0
        %v3794 = vadd.f32 %v3734, %v3793
        %v3795 = vpop.f32.mrf.mxu0
        %v3796 = vadd.f32 %v3736, %v3795
        %3797 = vmatmul.bf16.gmra.mxu0 %v3108
        %v3798 = vpop.f32.mrf.mxu0
        %v3799 = vadd.f32 %v3739, %v3798
        %v3800 = vpop.f32.mrf.mxu0
        %v3801 = vadd.f32 %v3741, %v3800
        %3802 = vmatmul.bf16.gmra.mxu0 %v3111
        %v3803 = vpop.f32.mrf.mxu0
        %v3804 = vadd.f32 %v3744, %v3803
        %v3805 = vpop.f32.mrf.mxu0
        %v3806 = vadd.f32 %v3746, %v3805
        %3807 = vmatmul.bf16.gmra.mxu0 %v3114
        %v3808 = vpop.f32.mrf.mxu0
        %v3809 = vadd.f32 %v3749, %v3808
        %v3810 = vpop.f32.mrf.mxu0
        %v3811 = vadd.f32 %v3751, %v3810
        %3812 = vmatmul.bf16.gmra.mxu0 %v3117
        %v3813 = vpop.f32.mrf.mxu0
        %v3814 = vadd.f32 %v3754, %v3813
        %v3815 = vpop.f32.mrf.mxu0
        %v3816 = vadd.f32 %v3756, %v3815
        %3817 = vmatmul.bf16.gmra.mxu0 %v3120
        %v3818 = vpop.f32.mrf.mxu0
        %v3819 = vadd.f32 %v3759, %v3818
        %v3820 = vpop.f32.mrf.mxu0
        %v3821 = vadd.f32 %v3761, %v3820
        %3822 = vmatmul.bf16.gmra.mxu0 %v3123
        %v3823 = vpop.f32.mrf.mxu0
        %v3824 = vpop.f32.mrf.mxu0
        %3825 = vdwg.mxu0
        %3826 = vmatpush.bf16.msra.mxu0 %v3662
        %3827 = vmatpush.bf16.msra.mxu0 %v3659
        %3828 = vmatpush.bf16.msra.mxu0 %v3656
        %3829 = vmatpush.bf16.msra.mxu0 %v3653
        %3830 = vmatpush.bf16.msra.mxu0 %v3650
        %3831 = vmatpush.bf16.msra.mxu0 %v3647
        %3832 = vmatpush.bf16.msra.mxu0 %v3644
        %3833 = vmatpush.bf16.msra.mxu0 %v3641
        %3834 = vmatmul.bf16.gmra.mxu0 %v2882
        %v3835 = vpop.f32.mrf.mxu0
        %v3836 = vpop.f32.mrf.mxu0
        %3837 = vmatmul.bf16.gmra.mxu0 %v2884
        %v3838 = vpop.f32.mrf.mxu0
        %v3839 = vadd.f32 0.0, %v3838
        %v3840 = vpop.f32.mrf.mxu0
        %v3841 = vadd.f32 0.0, %v3840
        %3842 = vmatmul.bf16.gmra.mxu0 %v2886
        %v3843 = vpop.f32.mrf.mxu0
        %v3844 = vadd.f32 0.0, %v3843
        %v3845 = vpop.f32.mrf.mxu0
        %v3846 = vadd.f32 0.0, %v3845
        %3847 = vmatmul.bf16.gmra.mxu0 %v2888
        %v3848 = vpop.f32.mrf.mxu0
        %v3849 = vadd.f32 0.0, %v3848
        %v3850 = vpop.f32.mrf.mxu0
        %v3851 = vadd.f32 0.0, %v3850
        %3852 = vmatmul.bf16.gmra.mxu0 %v2890
        %v3853 = vpop.f32.mrf.mxu0
        %v3854 = vadd.f32 0.0, %v3853
        %v3855 = vpop.f32.mrf.mxu0
        %v3856 = vadd.f32 0.0, %v3855
        %3857 = vmatmul.bf16.gmra.mxu0 %v2892
        %v3858 = vpop.f32.mrf.mxu0
        %v3859 = vadd.f32 0.0, %v3858
        %v3860 = vpop.f32.mrf.mxu0
        %v3861 = vadd.f32 0.0, %v3860
        %3862 = vmatmul.bf16.gmra.mxu0 %v2894
        %v3863 = vpop.f32.mrf.mxu0
        %v3864 = vadd.f32 0.0, %v3863
        %v3865 = vpop.f32.mrf.mxu0
        %v3866 = vadd.f32 0.0, %v3865
        %3867 = vmatmul.bf16.gmra.mxu0 %v2896
        %v3868 = vpop.f32.mrf.mxu0
        %v3869 = vadd.f32 0.0, %v3868
        %v3870 = vpop.f32.mrf.mxu0
        %v3871 = vadd.f32 0.0, %v3870
        %3872 = vmatmul.bf16.gmra.mxu0 %v2898
        %v3873 = vpop.f32.mrf.mxu0
        %v3874 = vadd.f32 0.0, %v3873
        %v3875 = vpop.f32.mrf.mxu0
        %v3876 = vadd.f32 0.0, %v3875
        %3877 = vmatmul.bf16.gmra.mxu0 %v2900
        %v3878 = vpop.f32.mrf.mxu0
        %v3879 = vadd.f32 0.0, %v3878
        %v3880 = vpop.f32.mrf.mxu0
        %v3881 = vadd.f32 0.0, %v3880
        %3882 = vmatmul.bf16.gmra.mxu0 %v2902
        %v3883 = vpop.f32.mrf.mxu0
        %v3884 = vpop.f32.mrf.mxu0
        %3885 = vdwg.mxu0
        %3886 = vmatpush.bf16.msra.mxu0 0
        %3887 = vmatpush.bf16.msra.mxu0 0
        %3888 = vmatpush.bf16.msra.mxu0 0
        %3889 = vmatpush.bf16.msra.mxu0 0
        %3890 = vmatpush.bf16.msra.mxu0 0
        %3891 = vmatpush.bf16.msra.mxu0 %v3671
        %3892 = vmatpush.bf16.msra.mxu0 %v3668
        %3893 = vmatpush.bf16.msra.mxu0 %v3665
        %3894 = vmatmul.bf16.gmra.mxu0 %v3093
        %v3895 = vpop.f32.mrf.mxu0
        %v3896 = vpop.f32.mrf.mxu0
        %3897 = vmatmul.bf16.gmra.mxu0 %v3096
        %v3898 = vpop.f32.mrf.mxu0
        %v3899 = vadd.f32 %v3839, %v3898
        %v3900 = vpop.f32.mrf.mxu0
        %v3901 = vadd.f32 %v3841, %v3900
        %3902 = vmatmul.bf16.gmra.mxu0 %v3099
        %v3903 = vpop.f32.mrf.mxu0
        %v3904 = vadd.f32 %v3844, %v3903
        %v3905 = vpop.f32.mrf.mxu0
        %v3906 = vadd.f32 %v3846, %v3905
        %3907 = vmatmul.bf16.gmra.mxu0 %v3102
        %v3908 = vpop.f32.mrf.mxu0
        %v3909 = vadd.f32 %v3849, %v3908
        %v3910 = vpop.f32.mrf.mxu0
        %v3911 = vadd.f32 %v3851, %v3910
        %3912 = vmatmul.bf16.gmra.mxu0 %v3105
        %v3913 = vpop.f32.mrf.mxu0
        %v3914 = vadd.f32 %v3854, %v3913
        %v3915 = vpop.f32.mrf.mxu0
        %v3916 = vadd.f32 %v3856, %v3915
        %3917 = vmatmul.bf16.gmra.mxu0 %v3108
        %v3918 = vpop.f32.mrf.mxu0
        %v3919 = vadd.f32 %v3859, %v3918
        %v3920 = vpop.f32.mrf.mxu0
        %v3921 = vadd.f32 %v3861, %v3920
        %3922 = vmatmul.bf16.gmra.mxu0 %v3111
        %v3923 = vpop.f32.mrf.mxu0
        %v3924 = vadd.f32 %v3864, %v3923
        %v3925 = vpop.f32.mrf.mxu0
        %v3926 = vadd.f32 %v3866, %v3925
        %3927 = vmatmul.bf16.gmra.mxu0 %v3114
        %v3928 = vpop.f32.mrf.mxu0
        %v3929 = vadd.f32 %v3869, %v3928
        %v3930 = vpop.f32.mrf.mxu0
        %v3931 = vadd.f32 %v3871, %v3930
        %3932 = vmatmul.bf16.gmra.mxu0 %v3117
        %v3933 = vpop.f32.mrf.mxu0
        %v3934 = vadd.f32 %v3874, %v3933
        %v3935 = vpop.f32.mrf.mxu0
        %v3936 = vadd.f32 %v3876, %v3935
        %3937 = vmatmul.bf16.gmra.mxu0 %v3120
        %v3938 = vpop.f32.mrf.mxu0
        %v3939 = vadd.f32 %v3879, %v3938
        %v3940 = vpop.f32.mrf.mxu0
        %v3941 = vadd.f32 %v3881, %v3940
        %3942 = vmatmul.bf16.gmra.mxu0 %v3123
        %v3943 = vpop.f32.mrf.mxu0
        %v3944 = vpop.f32.mrf.mxu0
        %3945 = vdwg.mxu0
        %3946 = vmatpush.bf16.msra.mxu0 %v3663
        %3947 = vmatpush.bf16.msra.mxu0 %v3660
        %3948 = vmatpush.bf16.msra.mxu0 %v3657
        %3949 = vmatpush.bf16.msra.mxu0 %v3654
        %3950 = vmatpush.bf16.msra.mxu0 %v3651
        %3951 = vmatpush.bf16.msra.mxu0 %v3648
        %3952 = vmatpush.bf16.msra.mxu0 %v3645
        %3953 = vmatpush.bf16.msra.mxu0 %v3642
        %3954 = vmatmul.bf16.gmra.mxu0 %v2882
        %v3955 = vpop.f32.mrf.mxu0
        %v3956 = vpop.f32.mrf.mxu0
        %3957 = vmatmul.bf16.gmra.mxu0 %v2884
        %v3958 = vpop.f32.mrf.mxu0
        %v3959 = vadd.f32 0.0, %v3958
        %v3960 = vpop.f32.mrf.mxu0
        %v3961 = vadd.f32 0.0, %v3960
        %3962 = vmatmul.bf16.gmra.mxu0 %v2886
        %v3963 = vpop.f32.mrf.mxu0
        %v3964 = vadd.f32 0.0, %v3963
        %v3965 = vpop.f32.mrf.mxu0
        %v3966 = vadd.f32 0.0, %v3965
        %3967 = vmatmul.bf16.gmra.mxu0 %v2888
        %v3968 = vpop.f32.mrf.mxu0
        %v3969 = vadd.f32 0.0, %v3968
        %v3970 = vpop.f32.mrf.mxu0
        %v3971 = vadd.f32 0.0, %v3970
        %3972 = vmatmul.bf16.gmra.mxu0 %v2890
        %v3973 = vpop.f32.mrf.mxu0
        %v3974 = vadd.f32 0.0, %v3973
        %v3975 = vpop.f32.mrf.mxu0
        %v3976 = vadd.f32 0.0, %v3975
        %3977 = vmatmul.bf16.gmra.mxu0 %v2892
        %v3978 = vpop.f32.mrf.mxu0
        %v3979 = vadd.f32 0.0, %v3978
        %v3980 = vpop.f32.mrf.mxu0
        %v3981 = vadd.f32 0.0, %v3980
        %3982 = vmatmul.bf16.gmra.mxu0 %v2894
        %v3983 = vpop.f32.mrf.mxu0
        %v3984 = vadd.f32 0.0, %v3983
        %v3985 = vpop.f32.mrf.mxu0
        %v3986 = vadd.f32 0.0, %v3985
        %3987 = vmatmul.bf16.gmra.mxu0 %v2896
        %v3988 = vpop.f32.mrf.mxu0
        %v3989 = vadd.f32 0.0, %v3988
        %v3990 = vpop.f32.mrf.mxu0
        %v3991 = vadd.f32 0.0, %v3990
        %3992 = vmatmul.bf16.gmra.mxu0 %v2898
        %v3993 = vpop.f32.mrf.mxu0
        %v3994 = vadd.f32 0.0, %v3993
        %v3995 = vpop.f32.mrf.mxu0
        %v3996 = vadd.f32 0.0, %v3995
        %3997 = vmatmul.bf16.gmra.mxu0 %v2900
        %v3998 = vpop.f32.mrf.mxu0
        %v3999 = vadd.f32 0.0, %v3998
        %v4000 = vpop.f32.mrf.mxu0
        %v4001 = vadd.f32 0.0, %v4000
        %4002 = vmatmul.bf16.gmra.mxu0 %v2902
        %v4003 = vpop.f32.mrf.mxu0
        %v4004 = vpop.f32.mrf.mxu0
        %4005 = vdwg.mxu0
        %4006 = vmatpush.bf16.msra.mxu0 0
        %4007 = vmatpush.bf16.msra.mxu0 0
        %4008 = vmatpush.bf16.msra.mxu0 0
        %4009 = vmatpush.bf16.msra.mxu0 0
        %4010 = vmatpush.bf16.msra.mxu0 0
        %4011 = vmatpush.bf16.msra.mxu0 %v3672
        %4012 = vmatpush.bf16.msra.mxu0 %v3669
        %4013 = vmatpush.bf16.msra.mxu0 %v3666
        %4014 = vmatmul.bf16.gmra.mxu0 %v3093
        %v4015 = vpop.f32.mrf.mxu0
        %v4016 = vpop.f32.mrf.mxu0
        %4017 = vmatmul.bf16.gmra.mxu0 %v3096
        %v4018 = vpop.f32.mrf.mxu0
        %v4019 = vadd.f32 %v3959, %v4018
        %v4020 = vpop.f32.mrf.mxu0
        %v4021 = vadd.f32 %v3961, %v4020
        %4022 = vmatmul.bf16.gmra.mxu0 %v3099
        %v4023 = vpop.f32.mrf.mxu0
        %v4024 = vadd.f32 %v3964, %v4023
        %v4025 = vpop.f32.mrf.mxu0
        %v4026 = vadd.f32 %v3966, %v4025
        %4027 = vmatmul.bf16.gmra.mxu0 %v3102
        %v4028 = vpop.f32.mrf.mxu0
        %v4029 = vadd.f32 %v3969, %v4028
        %v4030 = vpop.f32.mrf.mxu0
        %v4031 = vadd.f32 %v3971, %v4030
        %4032 = vmatmul.bf16.gmra.mxu0 %v3105
        %v4033 = vpop.f32.mrf.mxu0
        %v4034 = vadd.f32 %v3974, %v4033
        %v4035 = vpop.f32.mrf.mxu0
        %v4036 = vadd.f32 %v3976, %v4035
        %4037 = vmatmul.bf16.gmra.mxu0 %v3108
        %v4038 = vpop.f32.mrf.mxu0
        %v4039 = vadd.f32 %v3979, %v4038
        %v4040 = vpop.f32.mrf.mxu0
        %v4041 = vadd.f32 %v3981, %v4040
        %4042 = vmatmul.bf16.gmra.mxu0 %v3111
        %v4043 = vpop.f32.mrf.mxu0
        %v4044 = vadd.f32 %v3984, %v4043
        %v4045 = vpop.f32.mrf.mxu0
        %v4046 = vadd.f32 %v3986, %v4045
        %4047 = vmatmul.bf16.gmra.mxu0 %v3114
        %v4048 = vpop.f32.mrf.mxu0
        %v4049 = vadd.f32 %v3989, %v4048
        %v4050 = vpop.f32.mrf.mxu0
        %v4051 = vadd.f32 %v3991, %v4050
        %4052 = vmatmul.bf16.gmra.mxu0 %v3117
        %v4053 = vpop.f32.mrf.mxu0
        %v4054 = vadd.f32 %v3994, %v4053
        %v4055 = vpop.f32.mrf.mxu0
        %v4056 = vadd.f32 %v3996, %v4055
        %4057 = vmatmul.bf16.gmra.mxu0 %v3120
        %v4058 = vpop.f32.mrf.mxu0
        %v4059 = vadd.f32 %v3999, %v4058
        %v4060 = vpop.f32.mrf.mxu0
        %v4061 = vadd.f32 %v4001, %v4060
        %4062 = vmatmul.bf16.gmra.mxu0 %v3123
        %v4063 = vpop.f32.mrf.mxu0
        %v4064 = vpop.f32.mrf.mxu0
        %4065 = vdwg.mxu0
        %s4066 = scalar_lea.vmem %s5, 528
        %v4067 = vld [vmem:[%s4066] sm:$0xff]
        %v4068 = vld [vmem:[%s4066 + $0x8] sm:$0xf]
        %v4069 = vld [vmem:[%s4066 + $0xc] sm:$0xff]
        %v4070 = vld [vmem:[%s4066 + $0x14] sm:$0xf]
        %v4071 = vld [vmem:[%s4066 + $0x18] sm:$0xff]
        %v4072 = vld [vmem:[%s4066 + $0x20] sm:$0xf]
        %v4073 = vld [vmem:[%s4066 + $0x24] sm:$0xff]
        %v4074 = vld [vmem:[%s4066 + $0x2c] sm:$0xf]
        %v4075 = vld [vmem:[%s4066 + $0x30] sm:$0xff]
        %v4076 = vld [vmem:[%s4066 + $0x38] sm:$0xf]
        %v4077 = vld [vmem:[%s4066 + $0x3c] sm:$0xff]
        %v4078 = vld [vmem:[%s4066 + $0x44] sm:$0xf]
        %v4079 = vld [vmem:[%s4066 + $0x48] sm:$0xff]
        %v4080 = vld [vmem:[%s4066 + $0x50] sm:$0xf]
        %v4081 = vld [vmem:[%s4066 + $0x54] sm:$0xff]
        %v4082 = vld [vmem:[%s4066 + $0x5c] sm:$0xf]
        %v4083 = vld [vmem:[%s4066 + $0x60] sm:$0xff]
        %v4084 = vld [vmem:[%s4066 + $0x68] sm:$0xf]
        %v4085 = vld [vmem:[%s4066 + $0x6c] sm:$0xff]
        %v4086 = vld [vmem:[%s4066 + $0x74] sm:$0xf]
        %v4087 = vld [vmem:[%s4066 + $0x78] sm:$0xff]
        %v4088 = vld [vmem:[%s4066 + $0x80] sm:$0xf]
        %v4089 = vld [vmem:[%s4066 + $0x84] sm:$0xff]
        %v4090 = vld [vmem:[%s4066 + $0x8c] sm:$0xf]
        %v4091 = vld [vmem:[%s4066 + $0x90] sm:$0xff]
        %v4092 = vld [vmem:[%s4066 + $0x98] sm:$0xf]
        %v4093 = vld [vmem:[%s4066 + $0x9c] sm:$0xff]
        %v4094 = vld [vmem:[%s4066 + $0xa4] sm:$0xf]
        %v4095 = vld [vmem:[%s4066 + $0xa8] sm:$0xff]
        %v4096 = vld [vmem:[%s4066 + $0xb0] sm:$0xf]
        %v4097 = vld [vmem:[%s4066 + $0xb4] sm:$0xff]
        %v4098 = vld [vmem:[%s4066 + $0xbc] sm:$0xf]
        %v4099 = vld [vmem:[%s4066 + $0xc0] sm:$0xff]
        %v4100 = vld [vmem:[%s4066 + $0xc8] sm:$0xf]
        %v4101 = vld [vmem:[%s4066 + $0xcc] sm:$0xff]
        %v4102 = vld [vmem:[%s4066 + $0xd4] sm:$0xf]
        %v4103 = vld [vmem:[%s4066 + $0xd8] sm:$0xff]
        %v4104 = vld [vmem:[%s4066 + $0xe0] sm:$0xf]
        %v4105 = vld [vmem:[%s4066 + $0xe4] sm:$0xff]
        %v4106 = vld [vmem:[%s4066 + $0xec] sm:$0xf]
        %v4107 = vld [vmem:[%s4066 + $0xf0] sm:$0xff]
        %v4108 = vld [vmem:[%s4066 + $0xf8] sm:$0xf]
        %v4109 = vld [vmem:[%s4066 + $0xfc] sm:$0xff]
        %v4110 = vld [vmem:[%s4066 + $0x104] sm:$0xf]
        %v4155 = vunpack.c.l.b16 %v4067
        %v4156 = vunpack.c.h.b16 %v4067
        %v4157 = vunpack.c.l.b16 %v4068
        %v4158 = vunpack.c.l.b16 %v4069
        %v4159 = vunpack.c.h.b16 %v4069
        %v4160 = vunpack.c.l.b16 %v4070
        %v4161 = vunpack.c.l.b16 %v4071
        %v4162 = vunpack.c.h.b16 %v4071
        %v4163 = vunpack.c.l.b16 %v4072
        %v4164 = vunpack.c.l.b16 %v4073
        %v4165 = vunpack.c.h.b16 %v4073
        %v4166 = vunpack.c.l.b16 %v4074
        %v4167 = vunpack.c.l.b16 %v4075
        %v4168 = vunpack.c.h.b16 %v4075
        %v4169 = vunpack.c.l.b16 %v4076
        %v4170 = vunpack.c.l.b16 %v4077
        %v4171 = vunpack.c.h.b16 %v4077
        %v4172 = vunpack.c.l.b16 %v4078
        %v4173 = vunpack.c.l.b16 %v4079
        %v4174 = vunpack.c.h.b16 %v4079
        %v4175 = vunpack.c.l.b16 %v4080
        %v4176 = vunpack.c.l.b16 %v4081
        %v4177 = vunpack.c.h.b16 %v4081
        %v4178 = vunpack.c.l.b16 %v4082
        %v4179 = vunpack.c.l.b16 %v4083
        %v4180 = vunpack.c.h.b16 %v4083
        %v4181 = vunpack.c.l.b16 %v4084
        %v4182 = vunpack.c.l.b16 %v4085
        %v4183 = vunpack.c.h.b16 %v4085
        %v4184 = vunpack.c.l.b16 %v4086
        %v4185 = vunpack.c.l.b16 %v4087
        %v4186 = vunpack.c.h.b16 %v4087
        %v4187 = vunpack.c.l.b16 %v4088
        %v4188 = vunpack.c.l.b16 %v4089
        %v4189 = vunpack.c.h.b16 %v4089
        %v4190 = vunpack.c.l.b16 %v4090
        %v4191 = vunpack.c.l.b16 %v4091
        %v4192 = vunpack.c.h.b16 %v4091
        %v4193 = vunpack.c.l.b16 %v4092
        %v4194 = vunpack.c.l.b16 %v4093
        %v4195 = vunpack.c.h.b16 %v4093
        %v4196 = vunpack.c.l.b16 %v4094
        %v4197 = vunpack.c.l.b16 %v4095
        %v4198 = vunpack.c.h.b16 %v4095
        %v4199 = vunpack.c.l.b16 %v4096
        %v4200 = vunpack.c.l.b16 %v4097
        %v4201 = vunpack.c.h.b16 %v4097
        %v4202 = vunpack.c.l.b16 %v4098
        %v4203 = vunpack.c.l.b16 %v4099
        %v4204 = vunpack.c.h.b16 %v4099
        %v4205 = vunpack.c.l.b16 %v4100
        %v4206 = vunpack.c.l.b16 %v4101
        %v4207 = vunpack.c.h.b16 %v4101
        %v4208 = vunpack.c.l.b16 %v4102
        %v4209 = vunpack.c.l.b16 %v4103
        %v4210 = vunpack.c.h.b16 %v4103
        %v4211 = vunpack.c.l.b16 %v4104
        %v4212 = vunpack.c.l.b16 %v4105
        %v4213 = vunpack.c.h.b16 %v4105
        %v4214 = vunpack.c.l.b16 %v4106
        %v4215 = vunpack.c.l.b16 %v4107
        %v4216 = vunpack.c.h.b16 %v4107
        %v4217 = vunpack.c.l.b16 %v4108
        %v4218 = vunpack.c.l.b16 %v4109
        %v4219 = vunpack.c.h.b16 %v4109
        %v4220 = vunpack.c.l.b16 %v4110
        %v4221 = vpack.c.b16 %v4158, %v4155
        %v4222 = vpack.c.b16 %v4159, %v4156
        %v4223 = vpack.c.b16 %v4160, %v4157
        %v4224 = vpack.c.b16 %v4164, %v4161
        %v4225 = vpack.c.b16 %v4165, %v4162
        %v4226 = vpack.c.b16 %v4166, %v4163
        %v4227 = vpack.c.b16 %v4170, %v4167
        %v4228 = vpack.c.b16 %v4171, %v4168
        %v4229 = vpack.c.b16 %v4172, %v4169
        %v4230 = vpack.c.b16 %v4176, %v4173
        %v4231 = vpack.c.b16 %v4177, %v4174
        %v4232 = vpack.c.b16 %v4178, %v4175
        %v4233 = vpack.c.b16 %v4182, %v4179
        %v4234 = vpack.c.b16 %v4183, %v4180
        %v4235 = vpack.c.b16 %v4184, %v4181
        %v4236 = vpack.c.b16 %v4188, %v4185
        %v4237 = vpack.c.b16 %v4189, %v4186
        %v4238 = vpack.c.b16 %v4190, %v4187
        %v4239 = vpack.c.b16 %v4194, %v4191
        %v4240 = vpack.c.b16 %v4195, %v4192
        %v4241 = vpack.c.b16 %v4196, %v4193
        %v4242 = vpack.c.b16 %v4200, %v4197
        %v4243 = vpack.c.b16 %v4201, %v4198
        %v4244 = vpack.c.b16 %v4202, %v4199
        %v4245 = vpack.c.b16 %v4206, %v4203
        %v4246 = vpack.c.b16 %v4207, %v4204
        %v4247 = vpack.c.b16 %v4208, %v4205
        %v4248 = vpack.c.b16 %v4212, %v4209
        %v4249 = vpack.c.b16 %v4213, %v4210
        %v4250 = vpack.c.b16 %v4214, %v4211
        %v4251 = vpack.c.b16 %v4218, %v4215
        %v4252 = vpack.c.b16 %v4219, %v4216
        %v4253 = vpack.c.b16 %v4220, %v4217
        %4287 = vmatpush.bf16.msra.mxu0 %v4242
        %4288 = vmatpush.bf16.msra.mxu0 %v4239
        %4289 = vmatpush.bf16.msra.mxu0 %v4236
        %4290 = vmatpush.bf16.msra.mxu0 %v4233
        %4291 = vmatpush.bf16.msra.mxu0 %v4230
        %4292 = vmatpush.bf16.msra.mxu0 %v4227
        %4293 = vmatpush.bf16.msra.mxu0 %v4224
        %4294 = vmatpush.bf16.msra.mxu0 %v4221
        %4295 = vmatmul.bf16.gmra.mxu0 %v2882
        %v4296 = vpop.f32.mrf.mxu0
        %v4297 = vpop.f32.mrf.mxu0
        %4298 = vmatmul.bf16.gmra.mxu0 %v2884
        %v4299 = vpop.f32.mrf.mxu0
        %v4300 = vpop.f32.mrf.mxu0
        %4301 = vmatmul.bf16.gmra.mxu0 %v2886
        %v4302 = vpop.f32.mrf.mxu0
        %v4303 = vadd.f32 0.0, %v4302
        %v4304 = vpop.f32.mrf.mxu0
        %v4305 = vadd.f32 0.0, %v4304
        %4306 = vmatmul.bf16.gmra.mxu0 %v2888
        %v4307 = vpop.f32.mrf.mxu0
        %v4308 = vadd.f32 0.0, %v4307
        %v4309 = vpop.f32.mrf.mxu0
        %v4310 = vadd.f32 0.0, %v4309
        %4311 = vmatmul.bf16.gmra.mxu0 %v2890
        %v4312 = vpop.f32.mrf.mxu0
        %v4313 = vadd.f32 0.0, %v4312
        %v4314 = vpop.f32.mrf.mxu0
        %v4315 = vadd.f32 0.0, %v4314
        %4316 = vmatmul.bf16.gmra.mxu0 %v2892
        %v4317 = vpop.f32.mrf.mxu0
        %v4318 = vadd.f32 0.0, %v4317
        %v4319 = vpop.f32.mrf.mxu0
        %v4320 = vadd.f32 0.0, %v4319
        %4321 = vmatmul.bf16.gmra.mxu0 %v2894
        %v4322 = vpop.f32.mrf.mxu0
        %v4323 = vadd.f32 0.0, %v4322
        %v4324 = vpop.f32.mrf.mxu0
        %v4325 = vadd.f32 0.0, %v4324
        %4326 = vmatmul.bf16.gmra.mxu0 %v2896
        %v4327 = vpop.f32.mrf.mxu0
        %v4328 = vadd.f32 0.0, %v4327
        %v4329 = vpop.f32.mrf.mxu0
        %v4330 = vadd.f32 0.0, %v4329
        %4331 = vmatmul.bf16.gmra.mxu0 %v2898
        %v4332 = vpop.f32.mrf.mxu0
        %v4333 = vadd.f32 0.0, %v4332
        %v4334 = vpop.f32.mrf.mxu0
        %v4335 = vadd.f32 0.0, %v4334
        %4336 = vmatmul.bf16.gmra.mxu0 %v2900
        %v4337 = vpop.f32.mrf.mxu0
        %v4338 = vadd.f32 0.0, %v4337
        %v4339 = vpop.f32.mrf.mxu0
        %v4340 = vadd.f32 0.0, %v4339
        %4341 = vmatmul.bf16.gmra.mxu0 %v2902
        %v4342 = vpop.f32.mrf.mxu0
        %v4343 = vadd.f32 0.0, %v4342
        %v4344 = vpop.f32.mrf.mxu0
        %v4345 = vadd.f32 0.0, %v4344
        %4346 = vdwg.mxu0
        %4347 = vmatpush.bf16.msra.mxu0 0
        %4348 = vmatpush.bf16.msra.mxu0 0
        %4349 = vmatpush.bf16.msra.mxu0 0
        %4350 = vmatpush.bf16.msra.mxu0 0
        %4351 = vmatpush.bf16.msra.mxu0 0
        %4352 = vmatpush.bf16.msra.mxu0 %v4251
        %4353 = vmatpush.bf16.msra.mxu0 %v4248
        %4354 = vmatpush.bf16.msra.mxu0 %v4245
        %4355 = vmatmul.bf16.gmra.mxu0 %v3093
        %v4356 = vpop.f32.mrf.mxu0
        %v4357 = vpop.f32.mrf.mxu0
        %4358 = vmatmul.bf16.gmra.mxu0 %v3096
        %v4359 = vpop.f32.mrf.mxu0
        %v4360 = vpop.f32.mrf.mxu0
        %4361 = vmatmul.bf16.gmra.mxu0 %v3099
        %v4362 = vpop.f32.mrf.mxu0
        %v4363 = vadd.f32 %v4303, %v4362
        %v4364 = vpop.f32.mrf.mxu0
        %v4365 = vadd.f32 %v4305, %v4364
        %4366 = vmatmul.bf16.gmra.mxu0 %v3102
        %v4367 = vpop.f32.mrf.mxu0
        %v4368 = vadd.f32 %v4308, %v4367
        %v4369 = vpop.f32.mrf.mxu0
        %v4370 = vadd.f32 %v4310, %v4369
        %4371 = vmatmul.bf16.gmra.mxu0 %v3105
        %v4372 = vpop.f32.mrf.mxu0
        %v4373 = vadd.f32 %v4313, %v4372
        %v4374 = vpop.f32.mrf.mxu0
        %v4375 = vadd.f32 %v4315, %v4374
        %4376 = vmatmul.bf16.gmra.mxu0 %v3108
        %v4377 = vpop.f32.mrf.mxu0
        %v4378 = vadd.f32 %v4318, %v4377
        %v4379 = vpop.f32.mrf.mxu0
        %v4380 = vadd.f32 %v4320, %v4379
        %4381 = vmatmul.bf16.gmra.mxu0 %v3111
        %v4382 = vpop.f32.mrf.mxu0
        %v4383 = vadd.f32 %v4323, %v4382
        %v4384 = vpop.f32.mrf.mxu0
        %v4385 = vadd.f32 %v4325, %v4384
        %4386 = vmatmul.bf16.gmra.mxu0 %v3114
        %v4387 = vpop.f32.mrf.mxu0
        %v4388 = vadd.f32 %v4328, %v4387
        %v4389 = vpop.f32.mrf.mxu0
        %v4390 = vadd.f32 %v4330, %v4389
        %4391 = vmatmul.bf16.gmra.mxu0 %v3117
        %v4392 = vpop.f32.mrf.mxu0
        %v4393 = vadd.f32 %v4333, %v4392
        %v4394 = vpop.f32.mrf.mxu0
        %v4395 = vadd.f32 %v4335, %v4394
        %4396 = vmatmul.bf16.gmra.mxu0 %v3120
        %v4397 = vpop.f32.mrf.mxu0
        %v4398 = vadd.f32 %v4338, %v4397
        %v4399 = vpop.f32.mrf.mxu0
        %v4400 = vadd.f32 %v4340, %v4399
        %4401 = vmatmul.bf16.gmra.mxu0 %v3123
        %v4402 = vpop.f32.mrf.mxu0
        %v4403 = vadd.f32 %v4343, %v4402
        %v4404 = vpop.f32.mrf.mxu0
        %v4405 = vadd.f32 %v4345, %v4404
        %4406 = vdwg.mxu0
        %4407 = vmatpush.bf16.msra.mxu0 %v4243
        %4408 = vmatpush.bf16.msra.mxu0 %v4240
        %4409 = vmatpush.bf16.msra.mxu0 %v4237
        %4410 = vmatpush.bf16.msra.mxu0 %v4234
        %4411 = vmatpush.bf16.msra.mxu0 %v4231
        %4412 = vmatpush.bf16.msra.mxu0 %v4228
        %4413 = vmatpush.bf16.msra.mxu0 %v4225
        %4414 = vmatpush.bf16.msra.mxu0 %v4222
        %4415 = vmatmul.bf16.gmra.mxu0 %v2882
        %v4416 = vpop.f32.mrf.mxu0
        %v4417 = vpop.f32.mrf.mxu0
        %4418 = vmatmul.bf16.gmra.mxu0 %v2884
        %v4419 = vpop.f32.mrf.mxu0
        %v4420 = vpop.f32.mrf.mxu0
        %4421 = vmatmul.bf16.gmra.mxu0 %v2886
        %v4422 = vpop.f32.mrf.mxu0
        %v4423 = vadd.f32 0.0, %v4422
        %v4424 = vpop.f32.mrf.mxu0
        %v4425 = vadd.f32 0.0, %v4424
        %4426 = vmatmul.bf16.gmra.mxu0 %v2888
        %v4427 = vpop.f32.mrf.mxu0
        %v4428 = vadd.f32 0.0, %v4427
        %v4429 = vpop.f32.mrf.mxu0
        %v4430 = vadd.f32 0.0, %v4429
        %4431 = vmatmul.bf16.gmra.mxu0 %v2890
        %v4432 = vpop.f32.mrf.mxu0
        %v4433 = vadd.f32 0.0, %v4432
        %v4434 = vpop.f32.mrf.mxu0
        %v4435 = vadd.f32 0.0, %v4434
        %4436 = vmatmul.bf16.gmra.mxu0 %v2892
        %v4437 = vpop.f32.mrf.mxu0
        %v4438 = vadd.f32 0.0, %v4437
        %v4439 = vpop.f32.mrf.mxu0
        %v4440 = vadd.f32 0.0, %v4439
        %4441 = vmatmul.bf16.gmra.mxu0 %v2894
        %v4442 = vpop.f32.mrf.mxu0
        %v4443 = vadd.f32 0.0, %v4442
        %v4444 = vpop.f32.mrf.mxu0
        %v4445 = vadd.f32 0.0, %v4444
        %4446 = vmatmul.bf16.gmra.mxu0 %v2896
        %v4447 = vpop.f32.mrf.mxu0
        %v4448 = vadd.f32 0.0, %v4447
        %v4449 = vpop.f32.mrf.mxu0
        %v4450 = vadd.f32 0.0, %v4449
        %4451 = vmatmul.bf16.gmra.mxu0 %v2898
        %v4452 = vpop.f32.mrf.mxu0
        %v4453 = vadd.f32 0.0, %v4452
        %v4454 = vpop.f32.mrf.mxu0
        %v4455 = vadd.f32 0.0, %v4454
        %4456 = vmatmul.bf16.gmra.mxu0 %v2900
        %v4457 = vpop.f32.mrf.mxu0
        %v4458 = vadd.f32 0.0, %v4457
        %v4459 = vpop.f32.mrf.mxu0
        %v4460 = vadd.f32 0.0, %v4459
        %4461 = vmatmul.bf16.gmra.mxu0 %v2902
        %v4462 = vpop.f32.mrf.mxu0
        %v4463 = vadd.f32 0.0, %v4462
        %v4464 = vpop.f32.mrf.mxu0
        %v4465 = vadd.f32 0.0, %v4464
        %4466 = vdwg.mxu0
        %4467 = vmatpush.bf16.msra.mxu0 0
        %4468 = vmatpush.bf16.msra.mxu0 0
        %4469 = vmatpush.bf16.msra.mxu0 0
        %4470 = vmatpush.bf16.msra.mxu0 0
        %4471 = vmatpush.bf16.msra.mxu0 0
        %4472 = vmatpush.bf16.msra.mxu0 %v4252
        %4473 = vmatpush.bf16.msra.mxu0 %v4249
        %4474 = vmatpush.bf16.msra.mxu0 %v4246
        %4475 = vmatmul.bf16.gmra.mxu0 %v3093
        %v4476 = vpop.f32.mrf.mxu0
        %v4477 = vpop.f32.mrf.mxu0
        %4478 = vmatmul.bf16.gmra.mxu0 %v3096
        %v4479 = vpop.f32.mrf.mxu0
        %v4480 = vpop.f32.mrf.mxu0
        %4481 = vmatmul.bf16.gmra.mxu0 %v3099
        %v4482 = vpop.f32.mrf.mxu0
        %v4483 = vadd.f32 %v4423, %v4482
        %v4484 = vpop.f32.mrf.mxu0
        %v4485 = vadd.f32 %v4425, %v4484
        %4486 = vmatmul.bf16.gmra.mxu0 %v3102
        %v4487 = vpop.f32.mrf.mxu0
        %v4488 = vadd.f32 %v4428, %v4487
        %v4489 = vpop.f32.mrf.mxu0
        %v4490 = vadd.f32 %v4430, %v4489
        %4491 = vmatmul.bf16.gmra.mxu0 %v3105
        %v4492 = vpop.f32.mrf.mxu0
        %v4493 = vadd.f32 %v4433, %v4492
        %v4494 = vpop.f32.mrf.mxu0
        %v4495 = vadd.f32 %v4435, %v4494
        %4496 = vmatmul.bf16.gmra.mxu0 %v3108
        %v4497 = vpop.f32.mrf.mxu0
        %v4498 = vadd.f32 %v4438, %v4497
        %v4499 = vpop.f32.mrf.mxu0
        %v4500 = vadd.f32 %v4440, %v4499
        %4501 = vmatmul.bf16.gmra.mxu0 %v3111
        %v4502 = vpop.f32.mrf.mxu0
        %v4503 = vadd.f32 %v4443, %v4502
        %v4504 = vpop.f32.mrf.mxu0
        %v4505 = vadd.f32 %v4445, %v4504
        %4506 = vmatmul.bf16.gmra.mxu0 %v3114
        %v4507 = vpop.f32.mrf.mxu0
        %v4508 = vadd.f32 %v4448, %v4507
        %v4509 = vpop.f32.mrf.mxu0
        %v4510 = vadd.f32 %v4450, %v4509
        %4511 = vmatmul.bf16.gmra.mxu0 %v3117
        %v4512 = vpop.f32.mrf.mxu0
        %v4513 = vadd.f32 %v4453, %v4512
        %v4514 = vpop.f32.mrf.mxu0
        %v4515 = vadd.f32 %v4455, %v4514
        %4516 = vmatmul.bf16.gmra.mxu0 %v3120
        %v4517 = vpop.f32.mrf.mxu0
        %v4518 = vadd.f32 %v4458, %v4517
        %v4519 = vpop.f32.mrf.mxu0
        %v4520 = vadd.f32 %v4460, %v4519
        %4521 = vmatmul.bf16.gmra.mxu0 %v3123
        %v4522 = vpop.f32.mrf.mxu0
        %v4523 = vadd.f32 %v4463, %v4522
        %v4524 = vpop.f32.mrf.mxu0
        %v4525 = vadd.f32 %v4465, %v4524
        %4526 = vdwg.mxu0
        %4527 = vmatpush.bf16.msra.mxu0 %v4244
        %4528 = vmatpush.bf16.msra.mxu0 %v4241
        %4529 = vmatpush.bf16.msra.mxu0 %v4238
        %4530 = vmatpush.bf16.msra.mxu0 %v4235
        %4531 = vmatpush.bf16.msra.mxu0 %v4232
        %4532 = vmatpush.bf16.msra.mxu0 %v4229
        %4533 = vmatpush.bf16.msra.mxu0 %v4226
        %4534 = vmatpush.bf16.msra.mxu0 %v4223
        %4535 = vmatmul.bf16.gmra.mxu0 %v2882
        %v4536 = vpop.f32.mrf.mxu0
        %v4537 = vpop.f32.mrf.mxu0
        %4538 = vmatmul.bf16.gmra.mxu0 %v2884
        %v4539 = vpop.f32.mrf.mxu0
        %v4540 = vpop.f32.mrf.mxu0
        %4541 = vmatmul.bf16.gmra.mxu0 %v2886
        %v4542 = vpop.f32.mrf.mxu0
        %v4543 = vadd.f32 0.0, %v4542
        %v4544 = vpop.f32.mrf.mxu0
        %v4545 = vadd.f32 0.0, %v4544
        %4546 = vmatmul.bf16.gmra.mxu0 %v2888
        %v4547 = vpop.f32.mrf.mxu0
        %v4548 = vadd.f32 0.0, %v4547
        %v4549 = vpop.f32.mrf.mxu0
        %v4550 = vadd.f32 0.0, %v4549
        %4551 = vmatmul.bf16.gmra.mxu0 %v2890
        %v4552 = vpop.f32.mrf.mxu0
        %v4553 = vadd.f32 0.0, %v4552
        %v4554 = vpop.f32.mrf.mxu0
        %v4555 = vadd.f32 0.0, %v4554
        %4556 = vmatmul.bf16.gmra.mxu0 %v2892
        %v4557 = vpop.f32.mrf.mxu0
        %v4558 = vadd.f32 0.0, %v4557
        %v4559 = vpop.f32.mrf.mxu0
        %v4560 = vadd.f32 0.0, %v4559
        %4561 = vmatmul.bf16.gmra.mxu0 %v2894
        %v4562 = vpop.f32.mrf.mxu0
        %v4563 = vadd.f32 0.0, %v4562
        %v4564 = vpop.f32.mrf.mxu0
        %v4565 = vadd.f32 0.0, %v4564
        %4566 = vmatmul.bf16.gmra.mxu0 %v2896
        %v4567 = vpop.f32.mrf.mxu0
        %v4568 = vadd.f32 0.0, %v4567
        %v4569 = vpop.f32.mrf.mxu0
        %v4570 = vadd.f32 0.0, %v4569
        %4571 = vmatmul.bf16.gmra.mxu0 %v2898
        %v4572 = vpop.f32.mrf.mxu0
        %v4573 = vadd.f32 0.0, %v4572
        %v4574 = vpop.f32.mrf.mxu0
        %v4575 = vadd.f32 0.0, %v4574
        %4576 = vmatmul.bf16.gmra.mxu0 %v2900
        %v4577 = vpop.f32.mrf.mxu0
        %v4578 = vadd.f32 0.0, %v4577
        %v4579 = vpop.f32.mrf.mxu0
        %v4580 = vadd.f32 0.0, %v4579
        %4581 = vmatmul.bf16.gmra.mxu0 %v2902
        %v4582 = vpop.f32.mrf.mxu0
        %v4583 = vadd.f32 0.0, %v4582
        %v4584 = vpop.f32.mrf.mxu0
        %v4585 = vadd.f32 0.0, %v4584
        %4586 = vdwg.mxu0
        %4587 = vmatpush.bf16.msra.mxu0 0
        %4588 = vmatpush.bf16.msra.mxu0 0
        %4589 = vmatpush.bf16.msra.mxu0 0
        %4590 = vmatpush.bf16.msra.mxu0 0
        %4591 = vmatpush.bf16.msra.mxu0 0
        %4592 = vmatpush.bf16.msra.mxu0 %v4253
        %4593 = vmatpush.bf16.msra.mxu0 %v4250
        %4594 = vmatpush.bf16.msra.mxu0 %v4247
        %4595 = vmatmul.bf16.gmra.mxu0 %v3093
        %v4596 = vpop.f32.mrf.mxu0
        %v4597 = vpop.f32.mrf.mxu0
        %4598 = vmatmul.bf16.gmra.mxu0 %v3096
        %v4599 = vpop.f32.mrf.mxu0
        %v4600 = vpop.f32.mrf.mxu0
        %4601 = vmatmul.bf16.gmra.mxu0 %v3099
        %v4602 = vpop.f32.mrf.mxu0
        %v4603 = vadd.f32 %v4543, %v4602
        %v4604 = vpop.f32.mrf.mxu0
        %v4605 = vadd.f32 %v4545, %v4604
        %4606 = vmatmul.bf16.gmra.mxu0 %v3102
        %v4607 = vpop.f32.mrf.mxu0
        %v4608 = vadd.f32 %v4548, %v4607
        %v4609 = vpop.f32.mrf.mxu0
        %v4610 = vadd.f32 %v4550, %v4609
        %4611 = vmatmul.bf16.gmra.mxu0 %v3105
        %v4612 = vpop.f32.mrf.mxu0
        %v4613 = vadd.f32 %v4553, %v4612
        %v4614 = vpop.f32.mrf.mxu0
        %v4615 = vadd.f32 %v4555, %v4614
        %4616 = vmatmul.bf16.gmra.mxu0 %v3108
        %v4617 = vpop.f32.mrf.mxu0
        %v4618 = vadd.f32 %v4558, %v4617
        %v4619 = vpop.f32.mrf.mxu0
        %v4620 = vadd.f32 %v4560, %v4619
        %4621 = vmatmul.bf16.gmra.mxu0 %v3111
        %v4622 = vpop.f32.mrf.mxu0
        %v4623 = vadd.f32 %v4563, %v4622
        %v4624 = vpop.f32.mrf.mxu0
        %v4625 = vadd.f32 %v4565, %v4624
        %4626 = vmatmul.bf16.gmra.mxu0 %v3114
        %v4627 = vpop.f32.mrf.mxu0
        %v4628 = vadd.f32 %v4568, %v4627
        %v4629 = vpop.f32.mrf.mxu0
        %v4630 = vadd.f32 %v4570, %v4629
        %4631 = vmatmul.bf16.gmra.mxu0 %v3117
        %v4632 = vpop.f32.mrf.mxu0
        %v4633 = vadd.f32 %v4573, %v4632
        %v4634 = vpop.f32.mrf.mxu0
        %v4635 = vadd.f32 %v4575, %v4634
        %4636 = vmatmul.bf16.gmra.mxu0 %v3120
        %v4637 = vpop.f32.mrf.mxu0
        %v4638 = vadd.f32 %v4578, %v4637
        %v4639 = vpop.f32.mrf.mxu0
        %v4640 = vadd.f32 %v4580, %v4639
        %4641 = vmatmul.bf16.gmra.mxu0 %v3123
        %v4642 = vpop.f32.mrf.mxu0
        %v4643 = vadd.f32 %v4583, %v4642
        %v4644 = vpop.f32.mrf.mxu0
        %v4645 = vadd.f32 %v4585, %v4644
        %4646 = vdwg.mxu0
        %v4647 = vadd.f32 %v3195, %v3779
        %v4648 = vadd.f32 %v3315, %v3899
        %v4649 = vadd.f32 %v3435, %v4019
        %v4650 = vadd.f32 %v3197, %v3781
        %v4651 = vadd.f32 %v3317, %v3901
        %v4652 = vadd.f32 %v3437, %v4021
        %v4653 = vadd.f32 %v3200, %v3784
        %v4654 = vadd.f32 %v3320, %v3904
        %v4655 = vadd.f32 %v3440, %v4024
        %v4656 = vadd.f32 %v3202, %v3786
        %v4657 = vadd.f32 %v3322, %v3906
        %v4658 = vadd.f32 %v3442, %v4026
        %v4659 = vadd.f32 %v3205, %v3789
        %v4660 = vadd.f32 %v3325, %v3909
        %v4661 = vadd.f32 %v3445, %v4029
        %v4662 = vadd.f32 %v3207, %v3791
        %v4663 = vadd.f32 %v3327, %v3911
        %v4664 = vadd.f32 %v3447, %v4031
        %v4665 = vadd.f32 %v3210, %v3794
        %v4666 = vadd.f32 %v3330, %v3914
        %v4667 = vadd.f32 %v3450, %v4034
        %v4668 = vadd.f32 %v3212, %v3796
        %v4669 = vadd.f32 %v3332, %v3916
        %v4670 = vadd.f32 %v3452, %v4036
        %v4671 = vadd.f32 %v3215, %v3799
        %v4672 = vadd.f32 %v3335, %v3919
        %v4673 = vadd.f32 %v3455, %v4039
        %v4674 = vadd.f32 %v3217, %v3801
        %v4675 = vadd.f32 %v3337, %v3921
        %v4676 = vadd.f32 %v3457, %v4041
        %v4677 = vadd.f32 %v3220, %v3804
        %v4678 = vadd.f32 %v3340, %v3924
        %v4679 = vadd.f32 %v3460, %v4044
        %v4680 = vadd.f32 %v3222, %v3806
        %v4681 = vadd.f32 %v3342, %v3926
        %v4682 = vadd.f32 %v3462, %v4046
        %v4683 = vadd.f32 %v3225, %v3809
        %v4684 = vadd.f32 %v3345, %v3929
        %v4685 = vadd.f32 %v3465, %v4049
        %v4686 = vadd.f32 %v3227, %v3811
        %v4687 = vadd.f32 %v3347, %v3931
        %v4688 = vadd.f32 %v3467, %v4051
        %v4689 = vadd.f32 %v3230, %v3814
        %v4690 = vadd.f32 %v3350, %v3934
        %v4691 = vadd.f32 %v3470, %v4054
        %v4692 = vadd.f32 %v3232, %v3816
        %v4693 = vadd.f32 %v3352, %v3936
        %v4694 = vadd.f32 %v3472, %v4056
        %v4695 = vadd.f32 %v3235, %v3819
        %v4696 = vadd.f32 %v3355, %v3939
        %v4697 = vadd.f32 %v3475, %v4059
        %v4698 = vadd.f32 %v3237, %v3821
        %v4699 = vadd.f32 %v3357, %v3941
        %v4700 = vadd.f32 %v3477, %v4061
        %v4701 = vadd.f32 %v4647, %v4363
        %v4702 = vadd.f32 %v4648, %v4483
        %v4703 = vadd.f32 %v4649, %v4603
        %v4704 = vadd.f32 %v4650, %v4365
        %v4705 = vadd.f32 %v4651, %v4485
        %v4706 = vadd.f32 %v4652, %v4605
        %v4707 = vadd.f32 %v4653, %v4368
        %v4708 = vadd.f32 %v4654, %v4488
        %v4709 = vadd.f32 %v4655, %v4608
        %v4710 = vadd.f32 %v4656, %v4370
        %v4711 = vadd.f32 %v4657, %v4490
        %v4712 = vadd.f32 %v4658, %v4610
        %v4713 = vadd.f32 %v4659, %v4373
        %v4714 = vadd.f32 %v4660, %v4493
        %v4715 = vadd.f32 %v4661, %v4613
        %v4716 = vadd.f32 %v4662, %v4375
        %v4717 = vadd.f32 %v4663, %v4495
        %v4718 = vadd.f32 %v4664, %v4615
        %v4719 = vadd.f32 %v4665, %v4378
        %v4720 = vadd.f32 %v4666, %v4498
        %v4721 = vadd.f32 %v4667, %v4618
        %v4722 = vadd.f32 %v4668, %v4380
        %v4723 = vadd.f32 %v4669, %v4500
        %v4724 = vadd.f32 %v4670, %v4620
        %v4725 = vadd.f32 %v4671, %v4383
        %v4726 = vadd.f32 %v4672, %v4503
        %v4727 = vadd.f32 %v4673, %v4623
        %v4728 = vadd.f32 %v4674, %v4385
        %v4729 = vadd.f32 %v4675, %v4505
        %v4730 = vadd.f32 %v4676, %v4625
        %v4731 = vadd.f32 %v4677, %v4388
        %v4732 = vadd.f32 %v4678, %v4508
        %v4733 = vadd.f32 %v4679, %v4628
        %v4734 = vadd.f32 %v4680, %v4390
        %v4735 = vadd.f32 %v4681, %v4510
        %v4736 = vadd.f32 %v4682, %v4630
        %v4737 = vadd.f32 %v4683, %v4393
        %v4738 = vadd.f32 %v4684, %v4513
        %v4739 = vadd.f32 %v4685, %v4633
        %v4740 = vadd.f32 %v4686, %v4395
        %v4741 = vadd.f32 %v4687, %v4515
        %v4742 = vadd.f32 %v4688, %v4635
        %v4743 = vadd.f32 %v4689, %v4398
        %v4744 = vadd.f32 %v4690, %v4518
        %v4745 = vadd.f32 %v4691, %v4638
        %v4746 = vadd.f32 %v4692, %v4400
        %v4747 = vadd.f32 %v4693, %v4520
        %v4748 = vadd.f32 %v4694, %v4640
        %v4749 = vadd.f32 %v4695, %v4403
        %v4750 = vadd.f32 %v4696, %v4523
        %v4751 = vadd.f32 %v4697, %v4643
        %v4752 = vadd.f32 %v4698, %v4405
        %v4753 = vadd.f32 %v4699, %v4525
        %v4754 = vadd.f32 %v4700, %v4645
        %v4755 = vld [vmem:[%s6] sm:$0x7]
        %v4757 = vperm.slane %v4755, 0
        %v4758 = vperm.slane %v4755, 1
        %v4759 = vperm.slane %v4755, 2
        %v4763 = vadd.f32 %v4701, %v4757
        %v4764 = vadd.f32 %v4702, %v4758
        %v4765 = vadd.f32 %v4703, %v4759
        %v4766 = vadd.f32 %v4704, %v4757
        %v4767 = vadd.f32 %v4705, %v4758
        %v4768 = vadd.f32 %v4706, %v4759
        %v4769 = vadd.f32 %v4707, %v4757
        %v4770 = vadd.f32 %v4708, %v4758
        %v4771 = vadd.f32 %v4709, %v4759
        %v4772 = vadd.f32 %v4710, %v4757
        %v4773 = vadd.f32 %v4711, %v4758
        %v4774 = vadd.f32 %v4712, %v4759
        %v4775 = vadd.f32 %v4713, %v4757
        %v4776 = vadd.f32 %v4714, %v4758
        %v4777 = vadd.f32 %v4715, %v4759
        %v4778 = vadd.f32 %v4716, %v4757
        %v4779 = vadd.f32 %v4717, %v4758
        %v4780 = vadd.f32 %v4718, %v4759
        %v4781 = vadd.f32 %v4719, %v4757
        %v4782 = vadd.f32 %v4720, %v4758
        %v4783 = vadd.f32 %v4721, %v4759
        %v4784 = vadd.f32 %v4722, %v4757
        %v4785 = vadd.f32 %v4723, %v4758
        %v4786 = vadd.f32 %v4724, %v4759
        %v4787 = vadd.f32 %v4725, %v4757
        %v4788 = vadd.f32 %v4726, %v4758
        %v4789 = vadd.f32 %v4727, %v4759
        %v4790 = vadd.f32 %v4728, %v4757
        %v4791 = vadd.f32 %v4729, %v4758
        %v4792 = vadd.f32 %v4730, %v4759
        %v4793 = vadd.f32 %v4731, %v4757
        %v4794 = vadd.f32 %v4732, %v4758
        %v4795 = vadd.f32 %v4733, %v4759
        %v4796 = vadd.f32 %v4734, %v4757
        %v4797 = vadd.f32 %v4735, %v4758
        %v4798 = vadd.f32 %v4736, %v4759
        %v4799 = vadd.f32 %v4737, %v4757
        %v4800 = vadd.f32 %v4738, %v4758
        %v4801 = vadd.f32 %v4739, %v4759
        %v4802 = vadd.f32 %v4740, %v4757
        %v4803 = vadd.f32 %v4741, %v4758
        %v4804 = vadd.f32 %v4742, %v4759
        %v4805 = vadd.f32 %v4743, %v4757
        %v4806 = vadd.f32 %v4744, %v4758
        %v4807 = vadd.f32 %v4745, %v4759
        %v4808 = vadd.f32 %v4746, %v4757
        %v4809 = vadd.f32 %v4747, %v4758
        %v4810 = vadd.f32 %v4748, %v4759
        %v4811 = vadd.f32 %v4749, %v4757
        %v4812 = vadd.f32 %v4750, %v4758
        %v4813 = vadd.f32 %v4751, %v4759
        %v4814 = vadd.f32 %v4752, %v4757
        %v4815 = vadd.f32 %v4753, %v4758
        %v4816 = vadd.f32 %v4754, %v4759
        %v4817 = vmax.f32 %v4763, 0.0
        %v4818 = vmax.f32 %v4764, 0.0
        %v4819 = vmax.f32 %v4765, 0.0
        %v4820 = vmax.f32 %v4766, 0.0
        %v4821 = vmax.f32 %v4767, 0.0
        %v4822 = vmax.f32 %v4768, 0.0
        %v4823 = vmax.f32 %v4769, 0.0
        %v4824 = vmax.f32 %v4770, 0.0
        %v4825 = vmax.f32 %v4771, 0.0
        %v4826 = vmax.f32 %v4772, 0.0
        %v4827 = vmax.f32 %v4773, 0.0
        %v4828 = vmax.f32 %v4774, 0.0
        %v4829 = vmax.f32 %v4775, 0.0
        %v4830 = vmax.f32 %v4776, 0.0
        %v4831 = vmax.f32 %v4777, 0.0
        %v4832 = vmax.f32 %v4778, 0.0
        %v4833 = vmax.f32 %v4779, 0.0
        %v4834 = vmax.f32 %v4780, 0.0
        %v4835 = vmax.f32 %v4781, 0.0
        %v4836 = vmax.f32 %v4782, 0.0
        %v4837 = vmax.f32 %v4783, 0.0
        %v4838 = vmax.f32 %v4784, 0.0
        %v4839 = vmax.f32 %v4785, 0.0
        %v4840 = vmax.f32 %v4786, 0.0
        %v4841 = vmax.f32 %v4787, 0.0
        %v4842 = vmax.f32 %v4788, 0.0
        %v4843 = vmax.f32 %v4789, 0.0
        %v4844 = vmax.f32 %v4790, 0.0
        %v4845 = vmax.f32 %v4791, 0.0
        %v4846 = vmax.f32 %v4792, 0.0
        %v4847 = vmax.f32 %v4793, 0.0
        %v4848 = vmax.f32 %v4794, 0.0
        %v4849 = vmax.f32 %v4795, 0.0
        %v4850 = vmax.f32 %v4796, 0.0
        %v4851 = vmax.f32 %v4797, 0.0
        %v4852 = vmax.f32 %v4798, 0.0
        %v4853 = vmax.f32 %v4799, 0.0
        %v4854 = vmax.f32 %v4800, 0.0
        %v4855 = vmax.f32 %v4801, 0.0
        %v4856 = vmax.f32 %v4802, 0.0
        %v4857 = vmax.f32 %v4803, 0.0
        %v4858 = vmax.f32 %v4804, 0.0
        %v4859 = vmax.f32 %v4805, 0.0
        %v4860 = vmax.f32 %v4806, 0.0
        %v4861 = vmax.f32 %v4807, 0.0
        %v4862 = vmax.f32 %v4808, 0.0
        %v4863 = vmax.f32 %v4809, 0.0
        %v4864 = vmax.f32 %v4810, 0.0
        %v4865 = vmax.f32 %v4811, 0.0
        %v4866 = vmax.f32 %v4812, 0.0
        %v4867 = vmax.f32 %v4813, 0.0
        %v4868 = vmax.f32 %v4814, 0.0
        %v4869 = vmax.f32 %v4815, 0.0
        %v4870 = vmax.f32 %v4816, 0.0
        %4925 = vrot.lane.b32.xlu0 %v4817, 96
        %v4926 = vpop.permute.xlu0 %4925
        %4927 = vrot.lane.b32.xlu0 %v4818, 96
        %v4928 = vpop.permute.xlu0 %4927
        %4929 = vrot.lane.b32.xlu0 %v4819, 96
        %v4930 = vpop.permute.xlu0 %4929
        %4931 = vrot.lane.b32.xlu0 %v4820, 96
        %v4932 = vpop.permute.xlu0 %4931
        %4933 = vrot.lane.b32.xlu0 %v4821, 96
        %v4934 = vpop.permute.xlu0 %4933
        %4935 = vrot.lane.b32.xlu0 %v4822, 96
        %v4936 = vpop.permute.xlu0 %4935
        %4937 = vrot.lane.b32.xlu0 %v4823, 96
        %v4938 = vpop.permute.xlu0 %4937
        %4939 = vrot.lane.b32.xlu0 %v4824, 96
        %v4940 = vpop.permute.xlu0 %4939
        %4941 = vrot.lane.b32.xlu0 %v4825, 96
        %v4942 = vpop.permute.xlu0 %4941
        %4943 = vrot.lane.b32.xlu0 %v4826, 96
        %v4944 = vpop.permute.xlu0 %4943
        %4945 = vrot.lane.b32.xlu0 %v4827, 96
        %v4946 = vpop.permute.xlu0 %4945
        %4947 = vrot.lane.b32.xlu0 %v4828, 96
        %v4948 = vpop.permute.xlu0 %4947
        %4949 = vrot.lane.b32.xlu0 %v4829, 96
        %v4950 = vpop.permute.xlu0 %4949
        %4951 = vrot.lane.b32.xlu0 %v4830, 96
        %v4952 = vpop.permute.xlu0 %4951
        %4953 = vrot.lane.b32.xlu0 %v4831, 96
        %v4954 = vpop.permute.xlu0 %4953
        %4955 = vrot.lane.b32.xlu0 %v4832, 96
        %v4956 = vpop.permute.xlu0 %4955
        %4957 = vrot.lane.b32.xlu0 %v4833, 96
        %v4958 = vpop.permute.xlu0 %4957
        %4959 = vrot.lane.b32.xlu0 %v4834, 96
        %v4960 = vpop.permute.xlu0 %4959
        %4961 = vrot.lane.b32.xlu0 %v4835, 96
        %v4962 = vpop.permute.xlu0 %4961
        %4963 = vrot.lane.b32.xlu0 %v4836, 96
        %v4964 = vpop.permute.xlu0 %4963
        %4965 = vrot.lane.b32.xlu0 %v4837, 96
        %v4966 = vpop.permute.xlu0 %4965
        %4967 = vrot.lane.b32.xlu0 %v4838, 96
        %v4968 = vpop.permute.xlu0 %4967
        %4969 = vrot.lane.b32.xlu0 %v4839, 96
        %v4970 = vpop.permute.xlu0 %4969
        %4971 = vrot.lane.b32.xlu0 %v4840, 96
        %v4972 = vpop.permute.xlu0 %4971
        %4973 = vrot.lane.b32.xlu0 %v4841, 96
        %v4974 = vpop.permute.xlu0 %4973
        %4975 = vrot.lane.b32.xlu0 %v4842, 96
        %v4976 = vpop.permute.xlu0 %4975
        %4977 = vrot.lane.b32.xlu0 %v4843, 96
        %v4978 = vpop.permute.xlu0 %4977
        %4979 = vrot.lane.b32.xlu0 %v4844, 96
        %v4980 = vpop.permute.xlu0 %4979
        %4981 = vrot.lane.b32.xlu0 %v4845, 96
        %v4982 = vpop.permute.xlu0 %4981
        %4983 = vrot.lane.b32.xlu0 %v4846, 96
        %v4984 = vpop.permute.xlu0 %4983
        %4985 = vrot.lane.b32.xlu0 %v4847, 96
        %v4986 = vpop.permute.xlu0 %4985
        %4987 = vrot.lane.b32.xlu0 %v4848, 96
        %v4988 = vpop.permute.xlu0 %4987
        %4989 = vrot.lane.b32.xlu0 %v4849, 96
        %v4990 = vpop.permute.xlu0 %4989
        %4991 = vrot.lane.b32.xlu0 %v4850, 96
        %v4992 = vpop.permute.xlu0 %4991
        %4993 = vrot.lane.b32.xlu0 %v4851, 96
        %v4994 = vpop.permute.xlu0 %4993
        %4995 = vrot.lane.b32.xlu0 %v4852, 96
        %v4996 = vpop.permute.xlu0 %4995
        %4997 = vrot.lane.b32.xlu0 %v4853, 96
        %v4998 = vpop.permute.xlu0 %4997
        %4999 = vrot.lane.b32.xlu0 %v4854, 96
        %v5000 = vpop.permute.xlu0 %4999
        %5001 = vrot.lane.b32.xlu0 %v4855, 96
        %v5002 = vpop.permute.xlu0 %5001
        %5003 = vrot.lane.b32.xlu0 %v4856, 96
        %v5004 = vpop.permute.xlu0 %5003
        %5005 = vrot.lane.b32.xlu0 %v4857, 96
        %v5006 = vpop.permute.xlu0 %5005
        %5007 = vrot.lane.b32.xlu0 %v4858, 96
        %v5008 = vpop.permute.xlu0 %5007
        %5009 = vrot.lane.b32.xlu0 %v4859, 96
        %v5010 = vpop.permute.xlu0 %5009
        %5011 = vrot.lane.b32.xlu0 %v4860, 96
        %v5012 = vpop.permute.xlu0 %5011
        %5013 = vrot.lane.b32.xlu0 %v4861, 96
        %v5014 = vpop.permute.xlu0 %5013
        %5015 = vrot.lane.b32.xlu0 %v4862, 96
        %v5016 = vpop.permute.xlu0 %5015
        %5017 = vrot.lane.b32.xlu0 %v4863, 96
        %v5018 = vpop.permute.xlu0 %5017
        %5019 = vrot.lane.b32.xlu0 %v4864, 96
        %v5020 = vpop.permute.xlu0 %5019
        %5021 = vrot.lane.b32.xlu0 %v4865, 96
        %v5022 = vpop.permute.xlu0 %5021
        %5023 = vrot.lane.b32.xlu0 %v4866, 96
        %v5024 = vpop.permute.xlu0 %5023
        %5025 = vrot.lane.b32.xlu0 %v4867, 96
        %v5026 = vpop.permute.xlu0 %5025
        %5027 = vrot.lane.b32.xlu0 %v4868, 96
        %v5028 = vpop.permute.xlu0 %5027
        %5029 = vrot.lane.b32.xlu0 %v4869, 96
        %v5030 = vpop.permute.xlu0 %5029
        %5031 = vrot.lane.b32.xlu0 %v4870, 96
        %v5032 = vpop.permute.xlu0 %5031
        %vm5033 = vcmask 785408
        %v5034 = vsel %vm5033, %v4926, %v4928
        %v5035 = vsel %vm5033, %v4928, %v4930
        %v5036 = vsel %vm5033, %v4932, %v4934
        %v5037 = vsel %vm5033, %v4934, %v4936
        %v5038 = vsel %vm5033, %v4938, %v4940
        %v5039 = vsel %vm5033, %v4940, %v4942
        %v5040 = vsel %vm5033, %v4944, %v4946
        %v5041 = vsel %vm5033, %v4946, %v4948
        %v5042 = vsel %vm5033, %v4950, %v4952
        %v5043 = vsel %vm5033, %v4952, %v4954
        %v5044 = vsel %vm5033, %v4956, %v4958
        %v5045 = vsel %vm5033, %v4958, %v4960
        %v5046 = vsel %vm5033, %v4962, %v4964
        %v5047 = vsel %vm5033, %v4964, %v4966
        %v5048 = vsel %vm5033, %v4968, %v4970
        %v5049 = vsel %vm5033, %v4970, %v4972
        %v5050 = vsel %vm5033, %v4974, %v4976
        %v5051 = vsel %vm5033, %v4976, %v4978
        %v5052 = vsel %vm5033, %v4980, %v4982
        %v5053 = vsel %vm5033, %v4982, %v4984
        %v5054 = vsel %vm5033, %v4986, %v4988
        %v5055 = vsel %vm5033, %v4988, %v4990
        %v5056 = vsel %vm5033, %v4992, %v4994
        %v5057 = vsel %vm5033, %v4994, %v4996
        %v5058 = vsel %vm5033, %v4998, %v5000
        %v5059 = vsel %vm5033, %v5000, %v5002
        %v5060 = vsel %vm5033, %v5004, %v5006
        %v5061 = vsel %vm5033, %v5006, %v5008
        %v5062 = vsel %vm5033, %v5010, %v5012
        %v5063 = vsel %vm5033, %v5012, %v5014
        %v5064 = vsel %vm5033, %v5016, %v5018
        %v5065 = vsel %vm5033, %v5018, %v5020
        %v5066 = vsel %vm5033, %v5022, %v5024
        %v5067 = vsel %vm5033, %v5024, %v5026
        %v5068 = vsel %vm5033, %v5028, %v5030
        %v5069 = vsel %vm5033, %v5030, %v5032
        %v5106 = vmax.f32 %v4817, %v5034
        %v5107 = vmax.f32 %v4818, %v5035
        %v5108 = vmax.f32 %v4820, %v5036
        %v5109 = vmax.f32 %v4821, %v5037
        %v5110 = vmax.f32 %v4823, %v5038
        %v5111 = vmax.f32 %v4824, %v5039
        %v5112 = vmax.f32 %v4826, %v5040
        %v5113 = vmax.f32 %v4827, %v5041
        %v5114 = vmax.f32 %v4829, %v5042
        %v5115 = vmax.f32 %v4830, %v5043
        %v5116 = vmax.f32 %v4832, %v5044
        %v5117 = vmax.f32 %v4833, %v5045
        %v5118 = vmax.f32 %v4835, %v5046
        %v5119 = vmax.f32 %v4836, %v5047
        %v5120 = vmax.f32 %v4838, %v5048
        %v5121 = vmax.f32 %v4839, %v5049
        %v5122 = vmax.f32 %v4841, %v5050
        %v5123 = vmax.f32 %v4842, %v5051
        %v5124 = vmax.f32 %v4844, %v5052
        %v5125 = vmax.f32 %v4845, %v5053
        %v5126 = vmax.f32 %v4847, %v5054
        %v5127 = vmax.f32 %v4848, %v5055
        %v5128 = vmax.f32 %v4850, %v5056
        %v5129 = vmax.f32 %v4851, %v5057
        %v5130 = vmax.f32 %v4853, %v5058
        %v5131 = vmax.f32 %v4854, %v5059
        %v5132 = vmax.f32 %v4856, %v5060
        %v5133 = vmax.f32 %v4857, %v5061
        %v5134 = vmax.f32 %v4859, %v5062
        %v5135 = vmax.f32 %v4860, %v5063
        %v5136 = vmax.f32 %v4862, %v5064
        %v5137 = vmax.f32 %v4863, %v5065
        %v5138 = vmax.f32 %v4865, %v5066
        %v5139 = vmax.f32 %v4866, %v5067
        %v5140 = vmax.f32 %v4868, %v5068
        %v5141 = vmax.f32 %v4869, %v5069
        %v5142 = vmax.f32 %v5106, %v5110
        %v5143 = vmax.f32 %v5107, %v5111
        %v5144 = vmax.f32 %v5108, %v5112
        %v5145 = vmax.f32 %v5109, %v5113
        %v5146 = vmax.f32 %v5110, %v5114
        %v5147 = vmax.f32 %v5111, %v5115
        %v5148 = vmax.f32 %v5112, %v5116
        %v5149 = vmax.f32 %v5113, %v5117
        %v5150 = vmax.f32 %v5114, %v5118
        %v5151 = vmax.f32 %v5115, %v5119
        %v5152 = vmax.f32 %v5116, %v5120
        %v5153 = vmax.f32 %v5117, %v5121
        %v5154 = vmax.f32 %v5118, %v5122
        %v5155 = vmax.f32 %v5119, %v5123
        %v5156 = vmax.f32 %v5120, %v5124
        %v5157 = vmax.f32 %v5121, %v5125
        %v5158 = vmax.f32 %v5122, %v5126
        %v5159 = vmax.f32 %v5123, %v5127
        %v5160 = vmax.f32 %v5124, %v5128
        %v5161 = vmax.f32 %v5125, %v5129
        %v5162 = vmax.f32 %v5126, %v5130
        %v5163 = vmax.f32 %v5127, %v5131
        %v5164 = vmax.f32 %v5128, %v5132
        %v5165 = vmax.f32 %v5129, %v5133
        %v5166 = vmax.f32 %v5130, %v5134
        %v5167 = vmax.f32 %v5131, %v5135
        %v5168 = vmax.f32 %v5132, %v5136
        %v5169 = vmax.f32 %v5133, %v5137
        %v5170 = vmax.f32 %v5134, %v5138
        %v5171 = vmax.f32 %v5135, %v5139
        %v5172 = vmax.f32 %v5136, %v5140
        %v5173 = vmax.f32 %v5137, %v5141
        %v5174 = vpack.c.bf16 %v5143, %v5142
        %v5175 = vpack.c.bf16 %v5145, %v5144
        %v5176 = vpack.c.bf16 %v5147, %v5146
        %v5177 = vpack.c.bf16 %v5149, %v5148
        %v5178 = vpack.c.bf16 %v5151, %v5150
        %v5179 = vpack.c.bf16 %v5153, %v5152
        %v5180 = vpack.c.bf16 %v5155, %v5154
        %v5181 = vpack.c.bf16 %v5157, %v5156
        %v5182 = vpack.c.bf16 %v5159, %v5158
        %v5183 = vpack.c.bf16 %v5161, %v5160
        %v5184 = vpack.c.bf16 %v5163, %v5162
        %v5185 = vpack.c.bf16 %v5165, %v5164
        %v5186 = vpack.c.bf16 %v5167, %v5166
        %v5187 = vpack.c.bf16 %v5169, %v5168
        %v5188 = vpack.c.bf16 %v5171, %v5170
        %v5189 = vpack.c.bf16 %v5173, %v5172
        %v5190 = vld [vmem:[%s7] sm:$0xff]
        %v5191 = vld [vmem:[%s7 + $0x8] sm:$0xff]
        %v5192 = vld [vmem:[%s7 + $0x10] sm:$0xff]
        %v5193 = vld [vmem:[%s7 + $0x18] sm:$0xff]
        %v5194 = vld [vmem:[%s7 + $0x20] sm:$0xff]
        %v5195 = vld [vmem:[%s7 + $0x28] sm:$0xff]
        %v5196 = vld [vmem:[%s7 + $0x30] sm:$0xff]
        %v5197 = vld [vmem:[%s7 + $0x38] sm:$0xff]
        %v5198 = vld [vmem:[%s7 + $0x40] sm:$0xff]
        %v5199 = vld [vmem:[%s7 + $0x48] sm:$0xff]
        %v5200 = vld [vmem:[%s7 + $0x50] sm:$0xff]
        %v5201 = vld [vmem:[%s7 + $0x58] sm:$0xff]
        %v5202 = vld [vmem:[%s7 + $0x60] sm:$0xff]
        %v5203 = vld [vmem:[%s7 + $0x68] sm:$0xff]
        %v5204 = vld [vmem:[%s7 + $0x70] sm:$0xff]
        %v5205 = vld [vmem:[%s7 + $0x78] sm:$0xff]
        %v5206 = vld [vmem:[%s7 + $0x80] sm:$0xff]
        %v5207 = vld [vmem:[%s7 + $0x88] sm:$0xff]
        %v5208 = vld [vmem:[%s7 + $0x90] sm:$0xff]
        %v5209 = vld [vmem:[%s7 + $0x98] sm:$0xff]
        %v5210 = vld [vmem:[%s7 + $0xa0] sm:$0xff]
        %v5211 = vld [vmem:[%s7 + $0xa8] sm:$0xff]
        %v5212 = vld [vmem:[%s7 + $0xb0] sm:$0xff]
        %v5213 = vld [vmem:[%s7 + $0xb8] sm:$0xff]
        %v5214 = vld [vmem:[%s7 + $0xc0] sm:$0xff]
        %v5215 = vld [vmem:[%s7 + $0xc8] sm:$0xff]
        %v5216 = vld [vmem:[%s7 + $0xd0] sm:$0xff]
        %v5217 = vld [vmem:[%s7 + $0xd8] sm:$0xff]
        %v5218 = vld [vmem:[%s7 + $0xe0] sm:$0xff]
        %v5219 = vld [vmem:[%s7 + $0xe8] sm:$0xff]
        %v5220 = vld [vmem:[%s7 + $0xf0] sm:$0xff]
        %v5221 = vld [vmem:[%s7 + $0xf8] sm:$0xff]
        %s5222 = scalar_lea.vmem %s7, 256
        %v5223 = vld [vmem:[%s5222] sm:$0xff]
        %v5224 = vld [vmem:[%s5222 + $0x8] sm:$0xff]
        %v5225 = vld [vmem:[%s5222 + $0x10] sm:$0xff]
        %v5226 = vld [vmem:[%s5222 + $0x18] sm:$0xff]
        %v5227 = vld [vmem:[%s5222 + $0x20] sm:$0xff]
        %v5228 = vld [vmem:[%s5222 + $0x28] sm:$0xff]
        %v5229 = vld [vmem:[%s5222 + $0x30] sm:$0xff]
        %v5230 = vld [vmem:[%s5222 + $0x38] sm:$0xff]
        %v5231 = vld [vmem:[%s5222 + $0x40] sm:$0xff]
        %v5232 = vld [vmem:[%s5222 + $0x48] sm:$0xff]
        %v5233 = vld [vmem:[%s5222 + $0x50] sm:$0xff]
        %v5234 = vld [vmem:[%s5222 + $0x58] sm:$0xff]
        %v5235 = vld [vmem:[%s5222 + $0x60] sm:$0xff]
        %v5236 = vld [vmem:[%s5222 + $0x68] sm:$0xff]
        %v5237 = vld [vmem:[%s5222 + $0x70] sm:$0xff]
        %v5238 = vld [vmem:[%s5222 + $0x78] sm:$0xff]
        %v5239 = vld [vmem:[%s5222 + $0x80] sm:$0xff]
        %v5240 = vld [vmem:[%s5222 + $0x88] sm:$0xff]
        %v5241 = vld [vmem:[%s5222 + $0x90] sm:$0xff]
        %v5242 = vld [vmem:[%s5222 + $0x98] sm:$0xff]
        %v5243 = vld [vmem:[%s5222 + $0xa0] sm:$0xff]
        %v5244 = vld [vmem:[%s5222 + $0xa8] sm:$0xff]
        %v5245 = vld [vmem:[%s5222 + $0xb0] sm:$0xff]
        %v5246 = vld [vmem:[%s5222 + $0xb8] sm:$0xff]
        %v5247 = vld [vmem:[%s5222 + $0xc0] sm:$0xff]
        %v5248 = vld [vmem:[%s5222 + $0xc8] sm:$0xff]
        %v5249 = vld [vmem:[%s5222 + $0xd0] sm:$0xff]
        %v5250 = vld [vmem:[%s5222 + $0xd8] sm:$0xff]
        %v5251 = vld [vmem:[%s5222 + $0xe0] sm:$0xff]
        %v5252 = vld [vmem:[%s5222 + $0xe8] sm:$0xff]
        %v5253 = vld [vmem:[%s5222 + $0xf0] sm:$0xff]
        %v5254 = vld [vmem:[%s5222 + $0xf8] sm:$0xff]
        %v5257 = vunpack.c.l.b16 %v5176
        %v5258 = vunpack.c.h.b16 %v5176
        %v5259 = vunpack.c.l.b16 %v5177
        %v5260 = vunpack.c.h.b16 %v5177
        %v5261 = vpack.c.b16 %v5259, %v5257
        %v5262 = vpack.c.b16 %v5260, %v5258
        %v5297 = vunpack.c.l.b16 %v5223
        %v5298 = vunpack.c.h.b16 %v5223
        %v5299 = vunpack.c.l.b16 %v5224
        %v5300 = vunpack.c.h.b16 %v5224
        %v5301 = vunpack.c.l.b16 %v5225
        %v5302 = vunpack.c.h.b16 %v5225
        %v5303 = vunpack.c.l.b16 %v5226
        %v5304 = vunpack.c.h.b16 %v5226
        %v5305 = vunpack.c.l.b16 %v5227
        %v5306 = vunpack.c.h.b16 %v5227
        %v5307 = vunpack.c.l.b16 %v5228
        %v5308 = vunpack.c.h.b16 %v5228
        %v5309 = vunpack.c.l.b16 %v5229
        %v5310 = vunpack.c.h.b16 %v5229
        %v5311 = vunpack.c.l.b16 %v5230
        %v5312 = vunpack.c.h.b16 %v5230
        %v5313 = vunpack.c.l.b16 %v5231
        %v5314 = vunpack.c.h.b16 %v5231
        %v5315 = vunpack.c.l.b16 %v5232
        %v5316 = vunpack.c.h.b16 %v5232
        %v5317 = vunpack.c.l.b16 %v5233
        %v5318 = vunpack.c.h.b16 %v5233
        %v5319 = vunpack.c.l.b16 %v5234
        %v5320 = vunpack.c.h.b16 %v5234
        %v5321 = vunpack.c.l.b16 %v5235
        %v5322 = vunpack.c.h.b16 %v5235
        %v5323 = vunpack.c.l.b16 %v5236
        %v5324 = vunpack.c.h.b16 %v5236
        %v5325 = vunpack.c.l.b16 %v5237
        %v5326 = vunpack.c.h.b16 %v5237
        %v5327 = vunpack.c.l.b16 %v5238
        %v5328 = vunpack.c.h.b16 %v5238
        %v5329 = vunpack.c.l.b16 %v5239
        %v5330 = vunpack.c.h.b16 %v5239
        %v5331 = vunpack.c.l.b16 %v5240
        %v5332 = vunpack.c.h.b16 %v5240
        %v5333 = vunpack.c.l.b16 %v5241
        %v5334 = vunpack.c.h.b16 %v5241
        %v5335 = vunpack.c.l.b16 %v5242
        %v5336 = vunpack.c.h.b16 %v5242
        %v5337 = vunpack.c.l.b16 %v5243
        %v5338 = vunpack.c.h.b16 %v5243
        %v5339 = vunpack.c.l.b16 %v5244
        %v5340 = vunpack.c.h.b16 %v5244
        %v5341 = vunpack.c.l.b16 %v5245
        %v5342 = vunpack.c.h.b16 %v5245
        %v5343 = vunpack.c.l.b16 %v5246
        %v5344 = vunpack.c.h.b16 %v5246
        %v5345 = vunpack.c.l.b16 %v5247
        %v5346 = vunpack.c.h.b16 %v5247
        %v5347 = vunpack.c.l.b16 %v5248
        %v5348 = vunpack.c.h.b16 %v5248
        %v5349 = vunpack.c.l.b16 %v5249
        %v5350 = vunpack.c.h.b16 %v5249
        %v5351 = vunpack.c.l.b16 %v5250
        %v5352 = vunpack.c.h.b16 %v5250
        %v5353 = vunpack.c.l.b16 %v5251
        %v5354 = vunpack.c.h.b16 %v5251
        %v5355 = vunpack.c.l.b16 %v5252
        %v5356 = vunpack.c.h.b16 %v5252
        %v5357 = vunpack.c.l.b16 %v5253
        %v5358 = vunpack.c.h.b16 %v5253
        %v5359 = vunpack.c.l.b16 %v5254
        %v5360 = vunpack.c.h.b16 %v5254
        %v5361 = vpack.c.b16 %v5299, %v5297
        %v5362 = vpack.c.b16 %v5300, %v5298
        %v5363 = vpack.c.b16 %v5303, %v5301
        %v5364 = vpack.c.b16 %v5304, %v5302
        %v5365 = vpack.c.b16 %v5307, %v5305
        %v5366 = vpack.c.b16 %v5308, %v5306
        %v5367 = vpack.c.b16 %v5311, %v5309
        %v5368 = vpack.c.b16 %v5312, %v5310
        %v5369 = vpack.c.b16 %v5315, %v5313
        %v5370 = vpack.c.b16 %v5316, %v5314
        %v5371 = vpack.c.b16 %v5319, %v5317
        %v5372 = vpack.c.b16 %v5320, %v5318
        %v5373 = vpack.c.b16 %v5323, %v5321
        %v5374 = vpack.c.b16 %v5324, %v5322
        %v5375 = vpack.c.b16 %v5327, %v5325
        %v5376 = vpack.c.b16 %v5328, %v5326
        %v5377 = vpack.c.b16 %v5331, %v5329
        %v5378 = vpack.c.b16 %v5332, %v5330
        %v5379 = vpack.c.b16 %v5335, %v5333
        %v5380 = vpack.c.b16 %v5336, %v5334
        %v5381 = vpack.c.b16 %v5339, %v5337
        %v5382 = vpack.c.b16 %v5340, %v5338
        %v5383 = vpack.c.b16 %v5343, %v5341
        %v5384 = vpack.c.b16 %v5344, %v5342
        %v5385 = vpack.c.b16 %v5347, %v5345
        %v5386 = vpack.c.b16 %v5348, %v5346
        %v5387 = vpack.c.b16 %v5351, %v5349
        %v5388 = vpack.c.b16 %v5352, %v5350
        %v5389 = vpack.c.b16 %v5355, %v5353
        %v5390 = vpack.c.b16 %v5356, %v5354
        %v5391 = vpack.c.b16 %v5359, %v5357
        %v5392 = vpack.c.b16 %v5360, %v5358
        %5425 = vmatpush.bf16.msra.mxu0 %v5375
        %5426 = vmatpush.bf16.msra.mxu0 %v5373
        %5427 = vmatpush.bf16.msra.mxu0 %v5371
        %5428 = vmatpush.bf16.msra.mxu0 %v5369
        %5429 = vmatpush.bf16.msra.mxu0 %v5367
        %5430 = vmatpush.bf16.msra.mxu0 %v5365
        %5431 = vmatpush.bf16.msra.mxu0 %v5363
        %5432 = vmatpush.bf16.msra.mxu0 %v5361
        %5433 = vmatmul.bf16.gmra.mxu0 %v5261
        %v5434 = vpop.f32.mrf.mxu0
        %v5435 = vadd.f32 0.0, %v5434
        %v5436 = vpop.f32.mrf.mxu0
        %v5437 = vadd.f32 0.0, %v5436
        %5438 = vdwg.mxu0
        %5439 = vmatpush.bf16.msra.mxu0 %v5391
        %5440 = vmatpush.bf16.msra.mxu0 %v5389
        %5441 = vmatpush.bf16.msra.mxu0 %v5387
        %5442 = vmatpush.bf16.msra.mxu0 %v5385
        %5443 = vmatpush.bf16.msra.mxu0 %v5383
        %5444 = vmatpush.bf16.msra.mxu0 %v5381
        %5445 = vmatpush.bf16.msra.mxu0 %v5379
        %5446 = vmatpush.bf16.msra.mxu0 %v5377
        %5447 = vmatmul.bf16.gmra.mxu0 %v5262
        %v5448 = vpop.f32.mrf.mxu0
        %v5449 = vadd.f32 %v5435, %v5448
        %v5450 = vpop.f32.mrf.mxu0
        %v5451 = vadd.f32 %v5437, %v5450
        %5452 = vdwg.mxu0
        %5453 = vmatpush.bf16.msra.mxu0 %v5376
        %5454 = vmatpush.bf16.msra.mxu0 %v5374
        %5455 = vmatpush.bf16.msra.mxu0 %v5372
        %5456 = vmatpush.bf16.msra.mxu0 %v5370
        %5457 = vmatpush.bf16.msra.mxu0 %v5368
        %5458 = vmatpush.bf16.msra.mxu0 %v5366
        %5459 = vmatpush.bf16.msra.mxu0 %v5364
        %5460 = vmatpush.bf16.msra.mxu0 %v5362
        %5461 = vmatmul.bf16.gmra.mxu0 %v5261
        %v5462 = vpop.f32.mrf.mxu0
        %v5463 = vadd.f32 0.0, %v5462
        %v5464 = vpop.f32.mrf.mxu0
        %v5465 = vadd.f32 0.0, %v5464
        %5466 = vdwg.mxu0
        %5467 = vmatpush.bf16.msra.mxu0 %v5392
        %5468 = vmatpush.bf16.msra.mxu0 %v5390
        %5469 = vmatpush.bf16.msra.mxu0 %v5388
        %5470 = vmatpush.bf16.msra.mxu0 %v5386
        %5471 = vmatpush.bf16.msra.mxu0 %v5384
        %5472 = vmatpush.bf16.msra.mxu0 %v5382
        %5473 = vmatpush.bf16.msra.mxu0 %v5380
        %5474 = vmatpush.bf16.msra.mxu0 %v5378
        %5475 = vmatmul.bf16.gmra.mxu0 %v5262
        %v5476 = vpop.f32.mrf.mxu0
        %v5477 = vadd.f32 %v5463, %v5476
        %v5478 = vpop.f32.mrf.mxu0
        %v5479 = vadd.f32 %v5465, %v5478
        %5480 = vdwg.mxu0
        %v5483 = vunpack.c.l.b16 %v5174
        %v5484 = vunpack.c.h.b16 %v5174
        %v5485 = vunpack.c.l.b16 %v5175
        %v5486 = vunpack.c.h.b16 %v5175
        %v5487 = vpack.c.b16 %v5485, %v5483
        %v5488 = vpack.c.b16 %v5486, %v5484
        %v5523 = vunpack.c.l.b16 %v5190
        %v5524 = vunpack.c.h.b16 %v5190
        %v5525 = vunpack.c.l.b16 %v5191
        %v5526 = vunpack.c.h.b16 %v5191
        %v5527 = vunpack.c.l.b16 %v5192
        %v5528 = vunpack.c.h.b16 %v5192
        %v5529 = vunpack.c.l.b16 %v5193
        %v5530 = vunpack.c.h.b16 %v5193
        %v5531 = vunpack.c.l.b16 %v5194
        %v5532 = vunpack.c.h.b16 %v5194
        %v5533 = vunpack.c.l.b16 %v5195
        %v5534 = vunpack.c.h.b16 %v5195
        %v5535 = vunpack.c.l.b16 %v5196
        %v5536 = vunpack.c.h.b16 %v5196
        %v5537 = vunpack.c.l.b16 %v5197
        %v5538 = vunpack.c.h.b16 %v5197
        %v5539 = vunpack.c.l.b16 %v5198
        %v5540 = vunpack.c.h.b16 %v5198
        %v5541 = vunpack.c.l.b16 %v5199
        %v5542 = vunpack.c.h.b16 %v5199
        %v5543 = vunpack.c.l.b16 %v5200
        %v5544 = vunpack.c.h.b16 %v5200
        %v5545 = vunpack.c.l.b16 %v5201
        %v5546 = vunpack.c.h.b16 %v5201
        %v5547 = vunpack.c.l.b16 %v5202
        %v5548 = vunpack.c.h.b16 %v5202
        %v5549 = vunpack.c.l.b16 %v5203
        %v5550 = vunpack.c.h.b16 %v5203
        %v5551 = vunpack.c.l.b16 %v5204
        %v5552 = vunpack.c.h.b16 %v5204
        %v5553 = vunpack.c.l.b16 %v5205
        %v5554 = vunpack.c.h.b16 %v5205
        %v5555 = vunpack.c.l.b16 %v5206
        %v5556 = vunpack.c.h.b16 %v5206
        %v5557 = vunpack.c.l.b16 %v5207
        %v5558 = vunpack.c.h.b16 %v5207
        %v5559 = vunpack.c.l.b16 %v5208
        %v5560 = vunpack.c.h.b16 %v5208
        %v5561 = vunpack.c.l.b16 %v5209
        %v5562 = vunpack.c.h.b16 %v5209
        %v5563 = vunpack.c.l.b16 %v5210
        %v5564 = vunpack.c.h.b16 %v5210
        %v5565 = vunpack.c.l.b16 %v5211
        %v5566 = vunpack.c.h.b16 %v5211
        %v5567 = vunpack.c.l.b16 %v5212
        %v5568 = vunpack.c.h.b16 %v5212
        %v5569 = vunpack.c.l.b16 %v5213
        %v5570 = vunpack.c.h.b16 %v5213
        %v5571 = vunpack.c.l.b16 %v5214
        %v5572 = vunpack.c.h.b16 %v5214
        %v5573 = vunpack.c.l.b16 %v5215
        %v5574 = vunpack.c.h.b16 %v5215
        %v5575 = vunpack.c.l.b16 %v5216
        %v5576 = vunpack.c.h.b16 %v5216
        %v5577 = vunpack.c.l.b16 %v5217
        %v5578 = vunpack.c.h.b16 %v5217
        %v5579 = vunpack.c.l.b16 %v5218
        %v5580 = vunpack.c.h.b16 %v5218
        %v5581 = vunpack.c.l.b16 %v5219
        %v5582 = vunpack.c.h.b16 %v5219
        %v5583 = vunpack.c.l.b16 %v5220
        %v5584 = vunpack.c.h.b16 %v5220
        %v5585 = vunpack.c.l.b16 %v5221
        %v5586 = vunpack.c.h.b16 %v5221
        %v5587 = vpack.c.b16 %v5525, %v5523
        %v5588 = vpack.c.b16 %v5526, %v5524
        %v5589 = vpack.c.b16 %v5529, %v5527
        %v5590 = vpack.c.b16 %v5530, %v5528
        %v5591 = vpack.c.b16 %v5533, %v5531
        %v5592 = vpack.c.b16 %v5534, %v5532
        %v5593 = vpack.c.b16 %v5537, %v5535
        %v5594 = vpack.c.b16 %v5538, %v5536
        %v5595 = vpack.c.b16 %v5541, %v5539
        %v5596 = vpack.c.b16 %v5542, %v5540
        %v5597 = vpack.c.b16 %v5545, %v5543
        %v5598 = vpack.c.b16 %v5546, %v5544
        %v5599 = vpack.c.b16 %v5549, %v5547
        %v5600 = vpack.c.b16 %v5550, %v5548
        %v5601 = vpack.c.b16 %v5553, %v5551
        %v5602 = vpack.c.b16 %v5554, %v5552
        %v5603 = vpack.c.b16 %v5557, %v5555
        %v5604 = vpack.c.b16 %v5558, %v5556
        %v5605 = vpack.c.b16 %v5561, %v5559
        %v5606 = vpack.c.b16 %v5562, %v5560
        %v5607 = vpack.c.b16 %v5565, %v5563
        %v5608 = vpack.c.b16 %v5566, %v5564
        %v5609 = vpack.c.b16 %v5569, %v5567
        %v5610 = vpack.c.b16 %v5570, %v5568
        %v5611 = vpack.c.b16 %v5573, %v5571
        %v5612 = vpack.c.b16 %v5574, %v5572
        %v5613 = vpack.c.b16 %v5577, %v5575
        %v5614 = vpack.c.b16 %v5578, %v5576
        %v5615 = vpack.c.b16 %v5581, %v5579
        %v5616 = vpack.c.b16 %v5582, %v5580
        %v5617 = vpack.c.b16 %v5585, %v5583
        %v5618 = vpack.c.b16 %v5586, %v5584
        %5651 = vmatpush.bf16.msra.mxu0 %v5601
        %5652 = vmatpush.bf16.msra.mxu0 %v5599
        %5653 = vmatpush.bf16.msra.mxu0 %v5597
        %5654 = vmatpush.bf16.msra.mxu0 %v5595
        %5655 = vmatpush.bf16.msra.mxu0 %v5593
        %5656 = vmatpush.bf16.msra.mxu0 %v5591
        %5657 = vmatpush.bf16.msra.mxu0 %v5589
        %5658 = vmatpush.bf16.msra.mxu0 %v5587
        %5659 = vmatmul.bf16.gmra.mxu0 %v5487
        %v5660 = vpop.f32.mrf.mxu0
        %v5661 = vadd.f32 %v5449, %v5660
        %v5662 = vpop.f32.mrf.mxu0
        %v5663 = vadd.f32 %v5451, %v5662
        %5664 = vdwg.mxu0
        %5665 = vmatpush.bf16.msra.mxu0 %v5617
        %5666 = vmatpush.bf16.msra.mxu0 %v5615
        %5667 = vmatpush.bf16.msra.mxu0 %v5613
        %5668 = vmatpush.bf16.msra.mxu0 %v5611
        %5669 = vmatpush.bf16.msra.mxu0 %v5609
        %5670 = vmatpush.bf16.msra.mxu0 %v5607
        %5671 = vmatpush.bf16.msra.mxu0 %v5605
        %5672 = vmatpush.bf16.msra.mxu0 %v5603
        %5673 = vmatmul.bf16.gmra.mxu0 %v5488
        %v5674 = vpop.f32.mrf.mxu0
        %v5675 = vadd.f32 %v5661, %v5674
        %v5676 = vpop.f32.mrf.mxu0
        %v5677 = vadd.f32 %v5663, %v5676
        %5678 = vdwg.mxu0
        %5679 = vmatpush.bf16.msra.mxu0 %v5602
        %5680 = vmatpush.bf16.msra.mxu0 %v5600
        %5681 = vmatpush.bf16.msra.mxu0 %v5598
        %5682 = vmatpush.bf16.msra.mxu0 %v5596
        %5683 = vmatpush.bf16.msra.mxu0 %v5594
        %5684 = vmatpush.bf16.msra.mxu0 %v5592
        %5685 = vmatpush.bf16.msra.mxu0 %v5590
        %5686 = vmatpush.bf16.msra.mxu0 %v5588
        %5687 = vmatmul.bf16.gmra.mxu0 %v5487
        %v5688 = vpop.f32.mrf.mxu0
        %v5689 = vadd.f32 %v5477, %v5688
        %v5690 = vpop.f32.mrf.mxu0
        %v5691 = vadd.f32 %v5479, %v5690
        %5692 = vdwg.mxu0
        %5693 = vmatpush.bf16.msra.mxu0 %v5618
        %5694 = vmatpush.bf16.msra.mxu0 %v5616
        %5695 = vmatpush.bf16.msra.mxu0 %v5614
        %5696 = vmatpush.bf16.msra.mxu0 %v5612
        %5697 = vmatpush.bf16.msra.mxu0 %v5610
        %5698 = vmatpush.bf16.msra.mxu0 %v5608
        %5699 = vmatpush.bf16.msra.mxu0 %v5606
        %5700 = vmatpush.bf16.msra.mxu0 %v5604
        %5701 = vmatmul.bf16.gmra.mxu0 %v5488
        %v5702 = vpop.f32.mrf.mxu0
        %v5703 = vadd.f32 %v5689, %v5702
        %v5704 = vpop.f32.mrf.mxu0
        %v5705 = vadd.f32 %v5691, %v5704
        %5706 = vdwg.mxu0
        %s5707 = scalar_lea.vmem %s7, 512
        %v5708 = vld [vmem:[%s5707] sm:$0xff]
        %v5709 = vld [vmem:[%s5707 + $0x8] sm:$0xff]
        %v5710 = vld [vmem:[%s5707 + $0x10] sm:$0xff]
        %v5711 = vld [vmem:[%s5707 + $0x18] sm:$0xff]
        %v5712 = vld [vmem:[%s5707 + $0x20] sm:$0xff]
        %v5713 = vld [vmem:[%s5707 + $0x28] sm:$0xff]
        %v5714 = vld [vmem:[%s5707 + $0x30] sm:$0xff]
        %v5715 = vld [vmem:[%s5707 + $0x38] sm:$0xff]
        %v5716 = vld [vmem:[%s5707 + $0x40] sm:$0xff]
        %v5717 = vld [vmem:[%s5707 + $0x48] sm:$0xff]
        %v5718 = vld [vmem:[%s5707 + $0x50] sm:$0xff]
        %v5719 = vld [vmem:[%s5707 + $0x58] sm:$0xff]
        %v5720 = vld [vmem:[%s5707 + $0x60] sm:$0xff]
        %v5721 = vld [vmem:[%s5707 + $0x68] sm:$0xff]
        %v5722 = vld [vmem:[%s5707 + $0x70] sm:$0xff]
        %v5723 = vld [vmem:[%s5707 + $0x78] sm:$0xff]
        %v5724 = vld [vmem:[%s5707 + $0x80] sm:$0xff]
        %v5725 = vld [vmem:[%s5707 + $0x88] sm:$0xff]
        %v5726 = vld [vmem:[%s5707 + $0x90] sm:$0xff]
        %v5727 = vld [vmem:[%s5707 + $0x98] sm:$0xff]
        %v5728 = vld [vmem:[%s5707 + $0xa0] sm:$0xff]
        %v5729 = vld [vmem:[%s5707 + $0xa8] sm:$0xff]
        %v5730 = vld [vmem:[%s5707 + $0xb0] sm:$0xff]
        %v5731 = vld [vmem:[%s5707 + $0xb8] sm:$0xff]
        %v5732 = vld [vmem:[%s5707 + $0xc0] sm:$0xff]
        %v5733 = vld [vmem:[%s5707 + $0xc8] sm:$0xff]
        %v5734 = vld [vmem:[%s5707 + $0xd0] sm:$0xff]
        %v5735 = vld [vmem:[%s5707 + $0xd8] sm:$0xff]
        %v5736 = vld [vmem:[%s5707 + $0xe0] sm:$0xff]
        %v5737 = vld [vmem:[%s5707 + $0xe8] sm:$0xff]
        %v5738 = vld [vmem:[%s5707 + $0xf0] sm:$0xff]
        %v5739 = vld [vmem:[%s5707 + $0xf8] sm:$0xff]
        %v5742 = vunpack.c.l.b16 %v5178
        %v5743 = vunpack.c.h.b16 %v5178
        %v5744 = vunpack.c.l.b16 %v5179
        %v5745 = vunpack.c.h.b16 %v5179
        %v5746 = vpack.c.b16 %v5744, %v5742
        %v5747 = vpack.c.b16 %v5745, %v5743
        %v5782 = vunpack.c.l.b16 %v5708
        %v5783 = vunpack.c.h.b16 %v5708
        %v5784 = vunpack.c.l.b16 %v5709
        %v5785 = vunpack.c.h.b16 %v5709
        %v5786 = vunpack.c.l.b16 %v5710
        %v5787 = vunpack.c.h.b16 %v5710
        %v5788 = vunpack.c.l.b16 %v5711
        %v5789 = vunpack.c.h.b16 %v5711
        %v5790 = vunpack.c.l.b16 %v5712
        %v5791 = vunpack.c.h.b16 %v5712
        %v5792 = vunpack.c.l.b16 %v5713
        %v5793 = vunpack.c.h.b16 %v5713
        %v5794 = vunpack.c.l.b16 %v5714
        %v5795 = vunpack.c.h.b16 %v5714
        %v5796 = vunpack.c.l.b16 %v5715
        %v5797 = vunpack.c.h.b16 %v5715
        %v5798 = vunpack.c.l.b16 %v5716
        %v5799 = vunpack.c.h.b16 %v5716
        %v5800 = vunpack.c.l.b16 %v5717
        %v5801 = vunpack.c.h.b16 %v5717
        %v5802 = vunpack.c.l.b16 %v5718
        %v5803 = vunpack.c.h.b16 %v5718
        %v5804 = vunpack.c.l.b16 %v5719
        %v5805 = vunpack.c.h.b16 %v5719
        %v5806 = vunpack.c.l.b16 %v5720
        %v5807 = vunpack.c.h.b16 %v5720
        %v5808 = vunpack.c.l.b16 %v5721
        %v5809 = vunpack.c.h.b16 %v5721
        %v5810 = vunpack.c.l.b16 %v5722
        %v5811 = vunpack.c.h.b16 %v5722
        %v5812 = vunpack.c.l.b16 %v5723
        %v5813 = vunpack.c.h.b16 %v5723
        %v5814 = vunpack.c.l.b16 %v5724
        %v5815 = vunpack.c.h.b16 %v5724
        %v5816 = vunpack.c.l.b16 %v5725
        %v5817 = vunpack.c.h.b16 %v5725
        %v5818 = vunpack.c.l.b16 %v5726
        %v5819 = vunpack.c.h.b16 %v5726
        %v5820 = vunpack.c.l.b16 %v5727
        %v5821 = vunpack.c.h.b16 %v5727
        %v5822 = vunpack.c.l.b16 %v5728
        %v5823 = vunpack.c.h.b16 %v5728
        %v5824 = vunpack.c.l.b16 %v5729
        %v5825 = vunpack.c.h.b16 %v5729
        %v5826 = vunpack.c.l.b16 %v5730
        %v5827 = vunpack.c.h.b16 %v5730
        %v5828 = vunpack.c.l.b16 %v5731
        %v5829 = vunpack.c.h.b16 %v5731
        %v5830 = vunpack.c.l.b16 %v5732
        %v5831 = vunpack.c.h.b16 %v5732
        %v5832 = vunpack.c.l.b16 %v5733
        %v5833 = vunpack.c.h.b16 %v5733
        %v5834 = vunpack.c.l.b16 %v5734
        %v5835 = vunpack.c.h.b16 %v5734
        %v5836 = vunpack.c.l.b16 %v5735
        %v5837 = vunpack.c.h.b16 %v5735
        %v5838 = vunpack.c.l.b16 %v5736
        %v5839 = vunpack.c.h.b16 %v5736
        %v5840 = vunpack.c.l.b16 %v5737
        %v5841 = vunpack.c.h.b16 %v5737
        %v5842 = vunpack.c.l.b16 %v5738
        %v5843 = vunpack.c.h.b16 %v5738
        %v5844 = vunpack.c.l.b16 %v5739
        %v5845 = vunpack.c.h.b16 %v5739
        %v5846 = vpack.c.b16 %v5784, %v5782
        %v5847 = vpack.c.b16 %v5785, %v5783
        %v5848 = vpack.c.b16 %v5788, %v5786
        %v5849 = vpack.c.b16 %v5789, %v5787
        %v5850 = vpack.c.b16 %v5792, %v5790
        %v5851 = vpack.c.b16 %v5793, %v5791
        %v5852 = vpack.c.b16 %v5796, %v5794
        %v5853 = vpack.c.b16 %v5797, %v5795
        %v5854 = vpack.c.b16 %v5800, %v5798
        %v5855 = vpack.c.b16 %v5801, %v5799
        %v5856 = vpack.c.b16 %v5804, %v5802
        %v5857 = vpack.c.b16 %v5805, %v5803
        %v5858 = vpack.c.b16 %v5808, %v5806
        %v5859 = vpack.c.b16 %v5809, %v5807
        %v5860 = vpack.c.b16 %v5812, %v5810
        %v5861 = vpack.c.b16 %v5813, %v5811
        %v5862 = vpack.c.b16 %v5816, %v5814
        %v5863 = vpack.c.b16 %v5817, %v5815
        %v5864 = vpack.c.b16 %v5820, %v5818
        %v5865 = vpack.c.b16 %v5821, %v5819
        %v5866 = vpack.c.b16 %v5824, %v5822
        %v5867 = vpack.c.b16 %v5825, %v5823
        %v5868 = vpack.c.b16 %v5828, %v5826
        %v5869 = vpack.c.b16 %v5829, %v5827
        %v5870 = vpack.c.b16 %v5832, %v5830
        %v5871 = vpack.c.b16 %v5833, %v5831
        %v5872 = vpack.c.b16 %v5836, %v5834
        %v5873 = vpack.c.b16 %v5837, %v5835
        %v5874 = vpack.c.b16 %v5840, %v5838
        %v5875 = vpack.c.b16 %v5841, %v5839
        %v5876 = vpack.c.b16 %v5844, %v5842
        %v5877 = vpack.c.b16 %v5845, %v5843
        %5910 = vmatpush.bf16.msra.mxu0 %v5860
        %5911 = vmatpush.bf16.msra.mxu0 %v5858
        %5912 = vmatpush.bf16.msra.mxu0 %v5856
        %5913 = vmatpush.bf16.msra.mxu0 %v5854
        %5914 = vmatpush.bf16.msra.mxu0 %v5852
        %5915 = vmatpush.bf16.msra.mxu0 %v5850
        %5916 = vmatpush.bf16.msra.mxu0 %v5848
        %5917 = vmatpush.bf16.msra.mxu0 %v5846
        %5918 = vmatmul.bf16.gmra.mxu0 %v5746
        %v5919 = vpop.f32.mrf.mxu0
        %v5920 = vadd.f32 0.0, %v5919
        %v5921 = vpop.f32.mrf.mxu0
        %v5922 = vadd.f32 0.0, %v5921
        %5923 = vdwg.mxu0
        %5924 = vmatpush.bf16.msra.mxu0 %v5876
        %5925 = vmatpush.bf16.msra.mxu0 %v5874
        %5926 = vmatpush.bf16.msra.mxu0 %v5872
        %5927 = vmatpush.bf16.msra.mxu0 %v5870
        %5928 = vmatpush.bf16.msra.mxu0 %v5868
        %5929 = vmatpush.bf16.msra.mxu0 %v5866
        %5930 = vmatpush.bf16.msra.mxu0 %v5864
        %5931 = vmatpush.bf16.msra.mxu0 %v5862
        %5932 = vmatmul.bf16.gmra.mxu0 %v5747
        %v5933 = vpop.f32.mrf.mxu0
        %v5934 = vadd.f32 %v5920, %v5933
        %v5935 = vpop.f32.mrf.mxu0
        %v5936 = vadd.f32 %v5922, %v5935
        %5937 = vdwg.mxu0
        %5938 = vmatpush.bf16.msra.mxu0 %v5861
        %5939 = vmatpush.bf16.msra.mxu0 %v5859
        %5940 = vmatpush.bf16.msra.mxu0 %v5857
        %5941 = vmatpush.bf16.msra.mxu0 %v5855
        %5942 = vmatpush.bf16.msra.mxu0 %v5853
        %5943 = vmatpush.bf16.msra.mxu0 %v5851
        %5944 = vmatpush.bf16.msra.mxu0 %v5849
        %5945 = vmatpush.bf16.msra.mxu0 %v5847
        %5946 = vmatmul.bf16.gmra.mxu0 %v5746
        %v5947 = vpop.f32.mrf.mxu0
        %v5948 = vadd.f32 0.0, %v5947
        %v5949 = vpop.f32.mrf.mxu0
        %v5950 = vadd.f32 0.0, %v5949
        %5951 = vdwg.mxu0
        %5952 = vmatpush.bf16.msra.mxu0 %v5877
        %5953 = vmatpush.bf16.msra.mxu0 %v5875
        %5954 = vmatpush.bf16.msra.mxu0 %v5873
        %5955 = vmatpush.bf16.msra.mxu0 %v5871
        %5956 = vmatpush.bf16.msra.mxu0 %v5869
        %5957 = vmatpush.bf16.msra.mxu0 %v5867
        %5958 = vmatpush.bf16.msra.mxu0 %v5865
        %5959 = vmatpush.bf16.msra.mxu0 %v5863
        %5960 = vmatmul.bf16.gmra.mxu0 %v5747
        %v5961 = vpop.f32.mrf.mxu0
        %v5962 = vadd.f32 %v5948, %v5961
        %v5963 = vpop.f32.mrf.mxu0
        %v5964 = vadd.f32 %v5950, %v5963
        %5965 = vdwg.mxu0
        %v5966 = vadd.f32 %v5675, %v5934
        %v5967 = vadd.f32 %v5703, %v5962
        %v5968 = vadd.f32 %v5677, %v5936
        %v5969 = vadd.f32 %v5705, %v5964
        %s5970 = scalar_lea.vmem %s7, 768
        %v5971 = vld [vmem:[%s5970] sm:$0xff]
        %v5972 = vld [vmem:[%s5970 + $0x8] sm:$0xff]
        %v5973 = vld [vmem:[%s5970 + $0x10] sm:$0xff]
        %v5974 = vld [vmem:[%s5970 + $0x18] sm:$0xff]
        %v5975 = vld [vmem:[%s5970 + $0x20] sm:$0xff]
        %v5976 = vld [vmem:[%s5970 + $0x28] sm:$0xff]
        %v5977 = vld [vmem:[%s5970 + $0x30] sm:$0xff]
        %v5978 = vld [vmem:[%s5970 + $0x38] sm:$0xff]
        %v5979 = vld [vmem:[%s5970 + $0x40] sm:$0xff]
        %v5980 = vld [vmem:[%s5970 + $0x48] sm:$0xff]
        %v5981 = vld [vmem:[%s5970 + $0x50] sm:$0xff]
        %v5982 = vld [vmem:[%s5970 + $0x58] sm:$0xff]
        %v5983 = vld [vmem:[%s5970 + $0x60] sm:$0xff]
        %v5984 = vld [vmem:[%s5970 + $0x68] sm:$0xff]
        %v5985 = vld [vmem:[%s5970 + $0x70] sm:$0xff]
        %v5986 = vld [vmem:[%s5970 + $0x78] sm:$0xff]
        %v5987 = vld [vmem:[%s5970 + $0x80] sm:$0xff]
        %v5988 = vld [vmem:[%s5970 + $0x88] sm:$0xff]
        %v5989 = vld [vmem:[%s5970 + $0x90] sm:$0xff]
        %v5990 = vld [vmem:[%s5970 + $0x98] sm:$0xff]
        %v5991 = vld [vmem:[%s5970 + $0xa0] sm:$0xff]
        %v5992 = vld [vmem:[%s5970 + $0xa8] sm:$0xff]
        %v5993 = vld [vmem:[%s5970 + $0xb0] sm:$0xff]
        %v5994 = vld [vmem:[%s5970 + $0xb8] sm:$0xff]
        %v5995 = vld [vmem:[%s5970 + $0xc0] sm:$0xff]
        %v5996 = vld [vmem:[%s5970 + $0xc8] sm:$0xff]
        %v5997 = vld [vmem:[%s5970 + $0xd0] sm:$0xff]
        %v5998 = vld [vmem:[%s5970 + $0xd8] sm:$0xff]
        %v5999 = vld [vmem:[%s5970 + $0xe0] sm:$0xff]
        %v6000 = vld [vmem:[%s5970 + $0xe8] sm:$0xff]
        %v6001 = vld [vmem:[%s5970 + $0xf0] sm:$0xff]
        %v6002 = vld [vmem:[%s5970 + $0xf8] sm:$0xff]
        %v6005 = vunpack.c.l.b16 %v5180
        %v6006 = vunpack.c.h.b16 %v5180
        %v6007 = vunpack.c.l.b16 %v5181
        %v6008 = vunpack.c.h.b16 %v5181
        %v6009 = vpack.c.b16 %v6007, %v6005
        %v6010 = vpack.c.b16 %v6008, %v6006
        %v6045 = vunpack.c.l.b16 %v5971
        %v6046 = vunpack.c.h.b16 %v5971
        %v6047 = vunpack.c.l.b16 %v5972
        %v6048 = vunpack.c.h.b16 %v5972
        %v6049 = vunpack.c.l.b16 %v5973
        %v6050 = vunpack.c.h.b16 %v5973
        %v6051 = vunpack.c.l.b16 %v5974
        %v6052 = vunpack.c.h.b16 %v5974
        %v6053 = vunpack.c.l.b16 %v5975
        %v6054 = vunpack.c.h.b16 %v5975
        %v6055 = vunpack.c.l.b16 %v5976
        %v6056 = vunpack.c.h.b16 %v5976
        %v6057 = vunpack.c.l.b16 %v5977
        %v6058 = vunpack.c.h.b16 %v5977
        %v6059 = vunpack.c.l.b16 %v5978
        %v6060 = vunpack.c.h.b16 %v5978
        %v6061 = vunpack.c.l.b16 %v5979
        %v6062 = vunpack.c.h.b16 %v5979
        %v6063 = vunpack.c.l.b16 %v5980
        %v6064 = vunpack.c.h.b16 %v5980
        %v6065 = vunpack.c.l.b16 %v5981
        %v6066 = vunpack.c.h.b16 %v5981
        %v6067 = vunpack.c.l.b16 %v5982
        %v6068 = vunpack.c.h.b16 %v5982
        %v6069 = vunpack.c.l.b16 %v5983
        %v6070 = vunpack.c.h.b16 %v5983
        %v6071 = vunpack.c.l.b16 %v5984
        %v6072 = vunpack.c.h.b16 %v5984
        %v6073 = vunpack.c.l.b16 %v5985
        %v6074 = vunpack.c.h.b16 %v5985
        %v6075 = vunpack.c.l.b16 %v5986
        %v6076 = vunpack.c.h.b16 %v5986
        %v6077 = vunpack.c.l.b16 %v5987
        %v6078 = vunpack.c.h.b16 %v5987
        %v6079 = vunpack.c.l.b16 %v5988
        %v6080 = vunpack.c.h.b16 %v5988
        %v6081 = vunpack.c.l.b16 %v5989
        %v6082 = vunpack.c.h.b16 %v5989
        %v6083 = vunpack.c.l.b16 %v5990
        %v6084 = vunpack.c.h.b16 %v5990
        %v6085 = vunpack.c.l.b16 %v5991
        %v6086 = vunpack.c.h.b16 %v5991
        %v6087 = vunpack.c.l.b16 %v5992
        %v6088 = vunpack.c.h.b16 %v5992
        %v6089 = vunpack.c.l.b16 %v5993
        %v6090 = vunpack.c.h.b16 %v5993
        %v6091 = vunpack.c.l.b16 %v5994
        %v6092 = vunpack.c.h.b16 %v5994
        %v6093 = vunpack.c.l.b16 %v5995
        %v6094 = vunpack.c.h.b16 %v5995
        %v6095 = vunpack.c.l.b16 %v5996
        %v6096 = vunpack.c.h.b16 %v5996
        %v6097 = vunpack.c.l.b16 %v5997
        %v6098 = vunpack.c.h.b16 %v5997
        %v6099 = vunpack.c.l.b16 %v5998
        %v6100 = vunpack.c.h.b16 %v5998
        %v6101 = vunpack.c.l.b16 %v5999
        %v6102 = vunpack.c.h.b16 %v5999
        %v6103 = vunpack.c.l.b16 %v6000
        %v6104 = vunpack.c.h.b16 %v6000
        %v6105 = vunpack.c.l.b16 %v6001
        %v6106 = vunpack.c.h.b16 %v6001
        %v6107 = vunpack.c.l.b16 %v6002
        %v6108 = vunpack.c.h.b16 %v6002
        %v6109 = vpack.c.b16 %v6047, %v6045
        %v6110 = vpack.c.b16 %v6048, %v6046
        %v6111 = vpack.c.b16 %v6051, %v6049
        %v6112 = vpack.c.b16 %v6052, %v6050
        %v6113 = vpack.c.b16 %v6055, %v6053
        %v6114 = vpack.c.b16 %v6056, %v6054
        %v6115 = vpack.c.b16 %v6059, %v6057
        %v6116 = vpack.c.b16 %v6060, %v6058
        %v6117 = vpack.c.b16 %v6063, %v6061
        %v6118 = vpack.c.b16 %v6064, %v6062
        %v6119 = vpack.c.b16 %v6067, %v6065
        %v6120 = vpack.c.b16 %v6068, %v6066
        %v6121 = vpack.c.b16 %v6071, %v6069
        %v6122 = vpack.c.b16 %v6072, %v6070
        %v6123 = vpack.c.b16 %v6075, %v6073
        %v6124 = vpack.c.b16 %v6076, %v6074
        %v6125 = vpack.c.b16 %v6079, %v6077
        %v6126 = vpack.c.b16 %v6080, %v6078
        %v6127 = vpack.c.b16 %v6083, %v6081
        %v6128 = vpack.c.b16 %v6084, %v6082
        %v6129 = vpack.c.b16 %v6087, %v6085
        %v6130 = vpack.c.b16 %v6088, %v6086
        %v6131 = vpack.c.b16 %v6091, %v6089
        %v6132 = vpack.c.b16 %v6092, %v6090
        %v6133 = vpack.c.b16 %v6095, %v6093
        %v6134 = vpack.c.b16 %v6096, %v6094
        %v6135 = vpack.c.b16 %v6099, %v6097
        %v6136 = vpack.c.b16 %v6100, %v6098
        %v6137 = vpack.c.b16 %v6103, %v6101
        %v6138 = vpack.c.b16 %v6104, %v6102
        %v6139 = vpack.c.b16 %v6107, %v6105
        %v6140 = vpack.c.b16 %v6108, %v6106
        %6173 = vmatpush.bf16.msra.mxu0 %v6123
        %6174 = vmatpush.bf16.msra.mxu0 %v6121
        %6175 = vmatpush.bf16.msra.mxu0 %v6119
        %6176 = vmatpush.bf16.msra.mxu0 %v6117
        %6177 = vmatpush.bf16.msra.mxu0 %v6115
        %6178 = vmatpush.bf16.msra.mxu0 %v6113
        %6179 = vmatpush.bf16.msra.mxu0 %v6111
        %6180 = vmatpush.bf16.msra.mxu0 %v6109
        %6181 = vmatmul.bf16.gmra.mxu0 %v6009
        %v6182 = vpop.f32.mrf.mxu0
        %v6183 = vadd.f32 0.0, %v6182
        %v6184 = vpop.f32.mrf.mxu0
        %v6185 = vadd.f32 0.0, %v6184
        %6186 = vdwg.mxu0
        %6187 = vmatpush.bf16.msra.mxu0 %v6139
        %6188 = vmatpush.bf16.msra.mxu0 %v6137
        %6189 = vmatpush.bf16.msra.mxu0 %v6135
        %6190 = vmatpush.bf16.msra.mxu0 %v6133
        %6191 = vmatpush.bf16.msra.mxu0 %v6131
        %6192 = vmatpush.bf16.msra.mxu0 %v6129
        %6193 = vmatpush.bf16.msra.mxu0 %v6127
        %6194 = vmatpush.bf16.msra.mxu0 %v6125
        %6195 = vmatmul.bf16.gmra.mxu0 %v6010
        %v6196 = vpop.f32.mrf.mxu0
        %v6197 = vadd.f32 %v6183, %v6196
        %v6198 = vpop.f32.mrf.mxu0
        %v6199 = vadd.f32 %v6185, %v6198
        %6200 = vdwg.mxu0
        %6201 = vmatpush.bf16.msra.mxu0 %v6124
        %6202 = vmatpush.bf16.msra.mxu0 %v6122
        %6203 = vmatpush.bf16.msra.mxu0 %v6120
        %6204 = vmatpush.bf16.msra.mxu0 %v6118
        %6205 = vmatpush.bf16.msra.mxu0 %v6116
        %6206 = vmatpush.bf16.msra.mxu0 %v6114
        %6207 = vmatpush.bf16.msra.mxu0 %v6112
        %6208 = vmatpush.bf16.msra.mxu0 %v6110
        %6209 = vmatmul.bf16.gmra.mxu0 %v6009
        %v6210 = vpop.f32.mrf.mxu0
        %v6211 = vadd.f32 0.0, %v6210
        %v6212 = vpop.f32.mrf.mxu0
        %v6213 = vadd.f32 0.0, %v6212
        %6214 = vdwg.mxu0
        %6215 = vmatpush.bf16.msra.mxu0 %v6140
        %6216 = vmatpush.bf16.msra.mxu0 %v6138
        %6217 = vmatpush.bf16.msra.mxu0 %v6136
        %6218 = vmatpush.bf16.msra.mxu0 %v6134
        %6219 = vmatpush.bf16.msra.mxu0 %v6132
        %6220 = vmatpush.bf16.msra.mxu0 %v6130
        %6221 = vmatpush.bf16.msra.mxu0 %v6128
        %6222 = vmatpush.bf16.msra.mxu0 %v6126
        %6223 = vmatmul.bf16.gmra.mxu0 %v6010
        %v6224 = vpop.f32.mrf.mxu0
        %v6225 = vadd.f32 %v6211, %v6224
        %v6226 = vpop.f32.mrf.mxu0
        %v6227 = vadd.f32 %v6213, %v6226
        %6228 = vdwg.mxu0
        %v6229 = vadd.f32 %v5966, %v6197
        %v6230 = vadd.f32 %v5967, %v6225
        %v6231 = vadd.f32 %v5968, %v6199
        %v6232 = vadd.f32 %v5969, %v6227
        %s6233 = scalar_lea.vmem %s7, 1024
        %v6234 = vld [vmem:[%s6233] sm:$0xff]
        %v6235 = vld [vmem:[%s6233 + $0x8] sm:$0xff]
        %v6236 = vld [vmem:[%s6233 + $0x10] sm:$0xff]
        %v6237 = vld [vmem:[%s6233 + $0x18] sm:$0xff]
        %v6238 = vld [vmem:[%s6233 + $0x20] sm:$0xff]
        %v6239 = vld [vmem:[%s6233 + $0x28] sm:$0xff]
        %v6240 = vld [vmem:[%s6233 + $0x30] sm:$0xff]
        %v6241 = vld [vmem:[%s6233 + $0x38] sm:$0xff]
        %v6242 = vld [vmem:[%s6233 + $0x40] sm:$0xff]
        %v6243 = vld [vmem:[%s6233 + $0x48] sm:$0xff]
        %v6244 = vld [vmem:[%s6233 + $0x50] sm:$0xff]
        %v6245 = vld [vmem:[%s6233 + $0x58] sm:$0xff]
        %v6246 = vld [vmem:[%s6233 + $0x60] sm:$0xff]
        %v6247 = vld [vmem:[%s6233 + $0x68] sm:$0xff]
        %v6248 = vld [vmem:[%s6233 + $0x70] sm:$0xff]
        %v6249 = vld [vmem:[%s6233 + $0x78] sm:$0xff]
        %v6250 = vld [vmem:[%s6233 + $0x80] sm:$0xff]
        %v6251 = vld [vmem:[%s6233 + $0x88] sm:$0xff]
        %v6252 = vld [vmem:[%s6233 + $0x90] sm:$0xff]
        %v6253 = vld [vmem:[%s6233 + $0x98] sm:$0xff]
        %v6254 = vld [vmem:[%s6233 + $0xa0] sm:$0xff]
        %v6255 = vld [vmem:[%s6233 + $0xa8] sm:$0xff]
        %v6256 = vld [vmem:[%s6233 + $0xb0] sm:$0xff]
        %v6257 = vld [vmem:[%s6233 + $0xb8] sm:$0xff]
        %v6258 = vld [vmem:[%s6233 + $0xc0] sm:$0xff]
        %v6259 = vld [vmem:[%s6233 + $0xc8] sm:$0xff]
        %v6260 = vld [vmem:[%s6233 + $0xd0] sm:$0xff]
        %v6261 = vld [vmem:[%s6233 + $0xd8] sm:$0xff]
        %v6262 = vld [vmem:[%s6233 + $0xe0] sm:$0xff]
        %v6263 = vld [vmem:[%s6233 + $0xe8] sm:$0xff]
        %v6264 = vld [vmem:[%s6233 + $0xf0] sm:$0xff]
        %v6265 = vld [vmem:[%s6233 + $0xf8] sm:$0xff]
        %v6268 = vunpack.c.l.b16 %v5182
        %v6269 = vunpack.c.h.b16 %v5182
        %v6270 = vunpack.c.l.b16 %v5183
        %v6271 = vunpack.c.h.b16 %v5183
        %v6272 = vpack.c.b16 %v6270, %v6268
        %v6273 = vpack.c.b16 %v6271, %v6269
        %v6308 = vunpack.c.l.b16 %v6234
        %v6309 = vunpack.c.h.b16 %v6234
        %v6310 = vunpack.c.l.b16 %v6235
        %v6311 = vunpack.c.h.b16 %v6235
        %v6312 = vunpack.c.l.b16 %v6236
        %v6313 = vunpack.c.h.b16 %v6236
        %v6314 = vunpack.c.l.b16 %v6237
        %v6315 = vunpack.c.h.b16 %v6237
        %v6316 = vunpack.c.l.b16 %v6238
        %v6317 = vunpack.c.h.b16 %v6238
        %v6318 = vunpack.c.l.b16 %v6239
        %v6319 = vunpack.c.h.b16 %v6239
        %v6320 = vunpack.c.l.b16 %v6240
        %v6321 = vunpack.c.h.b16 %v6240
        %v6322 = vunpack.c.l.b16 %v6241
        %v6323 = vunpack.c.h.b16 %v6241
        %v6324 = vunpack.c.l.b16 %v6242
        %v6325 = vunpack.c.h.b16 %v6242
        %v6326 = vunpack.c.l.b16 %v6243
        %v6327 = vunpack.c.h.b16 %v6243
        %v6328 = vunpack.c.l.b16 %v6244
        %v6329 = vunpack.c.h.b16 %v6244
        %v6330 = vunpack.c.l.b16 %v6245
        %v6331 = vunpack.c.h.b16 %v6245
        %v6332 = vunpack.c.l.b16 %v6246
        %v6333 = vunpack.c.h.b16 %v6246
        %v6334 = vunpack.c.l.b16 %v6247
        %v6335 = vunpack.c.h.b16 %v6247
        %v6336 = vunpack.c.l.b16 %v6248
        %v6337 = vunpack.c.h.b16 %v6248
        %v6338 = vunpack.c.l.b16 %v6249
        %v6339 = vunpack.c.h.b16 %v6249
        %v6340 = vunpack.c.l.b16 %v6250
        %v6341 = vunpack.c.h.b16 %v6250
        %v6342 = vunpack.c.l.b16 %v6251
        %v6343 = vunpack.c.h.b16 %v6251
        %v6344 = vunpack.c.l.b16 %v6252
        %v6345 = vunpack.c.h.b16 %v6252
        %v6346 = vunpack.c.l.b16 %v6253
        %v6347 = vunpack.c.h.b16 %v6253
        %v6348 = vunpack.c.l.b16 %v6254
        %v6349 = vunpack.c.h.b16 %v6254
        %v6350 = vunpack.c.l.b16 %v6255
        %v6351 = vunpack.c.h.b16 %v6255
        %v6352 = vunpack.c.l.b16 %v6256
        %v6353 = vunpack.c.h.b16 %v6256
        %v6354 = vunpack.c.l.b16 %v6257
        %v6355 = vunpack.c.h.b16 %v6257
        %v6356 = vunpack.c.l.b16 %v6258
        %v6357 = vunpack.c.h.b16 %v6258
        %v6358 = vunpack.c.l.b16 %v6259
        %v6359 = vunpack.c.h.b16 %v6259
        %v6360 = vunpack.c.l.b16 %v6260
        %v6361 = vunpack.c.h.b16 %v6260
        %v6362 = vunpack.c.l.b16 %v6261
        %v6363 = vunpack.c.h.b16 %v6261
        %v6364 = vunpack.c.l.b16 %v6262
        %v6365 = vunpack.c.h.b16 %v6262
        %v6366 = vunpack.c.l.b16 %v6263
        %v6367 = vunpack.c.h.b16 %v6263
        %v6368 = vunpack.c.l.b16 %v6264
        %v6369 = vunpack.c.h.b16 %v6264
        %v6370 = vunpack.c.l.b16 %v6265
        %v6371 = vunpack.c.h.b16 %v6265
        %v6372 = vpack.c.b16 %v6310, %v6308
        %v6373 = vpack.c.b16 %v6311, %v6309
        %v6374 = vpack.c.b16 %v6314, %v6312
        %v6375 = vpack.c.b16 %v6315, %v6313
        %v6376 = vpack.c.b16 %v6318, %v6316
        %v6377 = vpack.c.b16 %v6319, %v6317
        %v6378 = vpack.c.b16 %v6322, %v6320
        %v6379 = vpack.c.b16 %v6323, %v6321
        %v6380 = vpack.c.b16 %v6326, %v6324
        %v6381 = vpack.c.b16 %v6327, %v6325
        %v6382 = vpack.c.b16 %v6330, %v6328
        %v6383 = vpack.c.b16 %v6331, %v6329
        %v6384 = vpack.c.b16 %v6334, %v6332
        %v6385 = vpack.c.b16 %v6335, %v6333
        %v6386 = vpack.c.b16 %v6338, %v6336
        %v6387 = vpack.c.b16 %v6339, %v6337
        %v6388 = vpack.c.b16 %v6342, %v6340
        %v6389 = vpack.c.b16 %v6343, %v6341
        %v6390 = vpack.c.b16 %v6346, %v6344
        %v6391 = vpack.c.b16 %v6347, %v6345
        %v6392 = vpack.c.b16 %v6350, %v6348
        %v6393 = vpack.c.b16 %v6351, %v6349
        %v6394 = vpack.c.b16 %v6354, %v6352
        %v6395 = vpack.c.b16 %v6355, %v6353
        %v6396 = vpack.c.b16 %v6358, %v6356
        %v6397 = vpack.c.b16 %v6359, %v6357
        %v6398 = vpack.c.b16 %v6362, %v6360
        %v6399 = vpack.c.b16 %v6363, %v6361
        %v6400 = vpack.c.b16 %v6366, %v6364
        %v6401 = vpack.c.b16 %v6367, %v6365
        %v6402 = vpack.c.b16 %v6370, %v6368
        %v6403 = vpack.c.b16 %v6371, %v6369
        %6436 = vmatpush.bf16.msra.mxu0 %v6386
        %6437 = vmatpush.bf16.msra.mxu0 %v6384
        %6438 = vmatpush.bf16.msra.mxu0 %v6382
        %6439 = vmatpush.bf16.msra.mxu0 %v6380
        %6440 = vmatpush.bf16.msra.mxu0 %v6378
        %6441 = vmatpush.bf16.msra.mxu0 %v6376
        %6442 = vmatpush.bf16.msra.mxu0 %v6374
        %6443 = vmatpush.bf16.msra.mxu0 %v6372
        %6444 = vmatmul.bf16.gmra.mxu0 %v6272
        %v6445 = vpop.f32.mrf.mxu0
        %v6446 = vadd.f32 0.0, %v6445
        %v6447 = vpop.f32.mrf.mxu0
        %v6448 = vadd.f32 0.0, %v6447
        %6449 = vdwg.mxu0
        %6450 = vmatpush.bf16.msra.mxu0 %v6402
        %6451 = vmatpush.bf16.msra.mxu0 %v6400
        %6452 = vmatpush.bf16.msra.mxu0 %v6398
        %6453 = vmatpush.bf16.msra.mxu0 %v6396
        %6454 = vmatpush.bf16.msra.mxu0 %v6394
        %6455 = vmatpush.bf16.msra.mxu0 %v6392
        %6456 = vmatpush.bf16.msra.mxu0 %v6390
        %6457 = vmatpush.bf16.msra.mxu0 %v6388
        %6458 = vmatmul.bf16.gmra.mxu0 %v6273
        %v6459 = vpop.f32.mrf.mxu0
        %v6460 = vadd.f32 %v6446, %v6459
        %v6461 = vpop.f32.mrf.mxu0
        %v6462 = vadd.f32 %v6448, %v6461
        %6463 = vdwg.mxu0
        %6464 = vmatpush.bf16.msra.mxu0 %v6387
        %6465 = vmatpush.bf16.msra.mxu0 %v6385
        %6466 = vmatpush.bf16.msra.mxu0 %v6383
        %6467 = vmatpush.bf16.msra.mxu0 %v6381
        %6468 = vmatpush.bf16.msra.mxu0 %v6379
        %6469 = vmatpush.bf16.msra.mxu0 %v6377
        %6470 = vmatpush.bf16.msra.mxu0 %v6375
        %6471 = vmatpush.bf16.msra.mxu0 %v6373
        %6472 = vmatmul.bf16.gmra.mxu0 %v6272
        %v6473 = vpop.f32.mrf.mxu0
        %v6474 = vadd.f32 0.0, %v6473
        %v6475 = vpop.f32.mrf.mxu0
        %v6476 = vadd.f32 0.0, %v6475
        %6477 = vdwg.mxu0
        %6478 = vmatpush.bf16.msra.mxu0 %v6403
        %6479 = vmatpush.bf16.msra.mxu0 %v6401
        %6480 = vmatpush.bf16.msra.mxu0 %v6399
        %6481 = vmatpush.bf16.msra.mxu0 %v6397
        %6482 = vmatpush.bf16.msra.mxu0 %v6395
        %6483 = vmatpush.bf16.msra.mxu0 %v6393
        %6484 = vmatpush.bf16.msra.mxu0 %v6391
        %6485 = vmatpush.bf16.msra.mxu0 %v6389
        %6486 = vmatmul.bf16.gmra.mxu0 %v6273
        %v6487 = vpop.f32.mrf.mxu0
        %v6488 = vadd.f32 %v6474, %v6487
        %v6489 = vpop.f32.mrf.mxu0
        %v6490 = vadd.f32 %v6476, %v6489
        %6491 = vdwg.mxu0
        %v6492 = vadd.f32 %v6229, %v6460
        %v6493 = vadd.f32 %v6230, %v6488
        %v6494 = vadd.f32 %v6231, %v6462
        %v6495 = vadd.f32 %v6232, %v6490
        %s6496 = scalar_lea.vmem %s7, 1280
        %v6497 = vld [vmem:[%s6496] sm:$0xff]
        %v6498 = vld [vmem:[%s6496 + $0x8] sm:$0xff]
        %v6499 = vld [vmem:[%s6496 + $0x10] sm:$0xff]
        %v6500 = vld [vmem:[%s6496 + $0x18] sm:$0xff]
        %v6501 = vld [vmem:[%s6496 + $0x20] sm:$0xff]
        %v6502 = vld [vmem:[%s6496 + $0x28] sm:$0xff]
        %v6503 = vld [vmem:[%s6496 + $0x30] sm:$0xff]
        %v6504 = vld [vmem:[%s6496 + $0x38] sm:$0xff]
        %v6505 = vld [vmem:[%s6496 + $0x40] sm:$0xff]
        %v6506 = vld [vmem:[%s6496 + $0x48] sm:$0xff]
        %v6507 = vld [vmem:[%s6496 + $0x50] sm:$0xff]
        %v6508 = vld [vmem:[%s6496 + $0x58] sm:$0xff]
        %v6509 = vld [vmem:[%s6496 + $0x60] sm:$0xff]
        %v6510 = vld [vmem:[%s6496 + $0x68] sm:$0xff]
        %v6511 = vld [vmem:[%s6496 + $0x70] sm:$0xff]
        %v6512 = vld [vmem:[%s6496 + $0x78] sm:$0xff]
        %v6513 = vld [vmem:[%s6496 + $0x80] sm:$0xff]
        %v6514 = vld [vmem:[%s6496 + $0x88] sm:$0xff]
        %v6515 = vld [vmem:[%s6496 + $0x90] sm:$0xff]
        %v6516 = vld [vmem:[%s6496 + $0x98] sm:$0xff]
        %v6517 = vld [vmem:[%s6496 + $0xa0] sm:$0xff]
        %v6518 = vld [vmem:[%s6496 + $0xa8] sm:$0xff]
        %v6519 = vld [vmem:[%s6496 + $0xb0] sm:$0xff]
        %v6520 = vld [vmem:[%s6496 + $0xb8] sm:$0xff]
        %v6521 = vld [vmem:[%s6496 + $0xc0] sm:$0xff]
        %v6522 = vld [vmem:[%s6496 + $0xc8] sm:$0xff]
        %v6523 = vld [vmem:[%s6496 + $0xd0] sm:$0xff]
        %v6524 = vld [vmem:[%s6496 + $0xd8] sm:$0xff]
        %v6525 = vld [vmem:[%s6496 + $0xe0] sm:$0xff]
        %v6526 = vld [vmem:[%s6496 + $0xe8] sm:$0xff]
        %v6527 = vld [vmem:[%s6496 + $0xf0] sm:$0xff]
        %v6528 = vld [vmem:[%s6496 + $0xf8] sm:$0xff]
        %v6531 = vunpack.c.l.b16 %v5184
        %v6532 = vunpack.c.h.b16 %v5184
        %v6533 = vunpack.c.l.b16 %v5185
        %v6534 = vunpack.c.h.b16 %v5185
        %v6535 = vpack.c.b16 %v6533, %v6531
        %v6536 = vpack.c.b16 %v6534, %v6532
        %v6571 = vunpack.c.l.b16 %v6497
        %v6572 = vunpack.c.h.b16 %v6497
        %v6573 = vunpack.c.l.b16 %v6498
        %v6574 = vunpack.c.h.b16 %v6498
        %v6575 = vunpack.c.l.b16 %v6499
        %v6576 = vunpack.c.h.b16 %v6499
        %v6577 = vunpack.c.l.b16 %v6500
        %v6578 = vunpack.c.h.b16 %v6500
        %v6579 = vunpack.c.l.b16 %v6501
        %v6580 = vunpack.c.h.b16 %v6501
        %v6581 = vunpack.c.l.b16 %v6502
        %v6582 = vunpack.c.h.b16 %v6502
        %v6583 = vunpack.c.l.b16 %v6503
        %v6584 = vunpack.c.h.b16 %v6503
        %v6585 = vunpack.c.l.b16 %v6504
        %v6586 = vunpack.c.h.b16 %v6504
        %v6587 = vunpack.c.l.b16 %v6505
        %v6588 = vunpack.c.h.b16 %v6505
        %v6589 = vunpack.c.l.b16 %v6506
        %v6590 = vunpack.c.h.b16 %v6506
        %v6591 = vunpack.c.l.b16 %v6507
        %v6592 = vunpack.c.h.b16 %v6507
        %v6593 = vunpack.c.l.b16 %v6508
        %v6594 = vunpack.c.h.b16 %v6508
        %v6595 = vunpack.c.l.b16 %v6509
        %v6596 = vunpack.c.h.b16 %v6509
        %v6597 = vunpack.c.l.b16 %v6510
        %v6598 = vunpack.c.h.b16 %v6510
        %v6599 = vunpack.c.l.b16 %v6511
        %v6600 = vunpack.c.h.b16 %v6511
        %v6601 = vunpack.c.l.b16 %v6512
        %v6602 = vunpack.c.h.b16 %v6512
        %v6603 = vunpack.c.l.b16 %v6513
        %v6604 = vunpack.c.h.b16 %v6513
        %v6605 = vunpack.c.l.b16 %v6514
        %v6606 = vunpack.c.h.b16 %v6514
        %v6607 = vunpack.c.l.b16 %v6515
        %v6608 = vunpack.c.h.b16 %v6515
        %v6609 = vunpack.c.l.b16 %v6516
        %v6610 = vunpack.c.h.b16 %v6516
        %v6611 = vunpack.c.l.b16 %v6517
        %v6612 = vunpack.c.h.b16 %v6517
        %v6613 = vunpack.c.l.b16 %v6518
        %v6614 = vunpack.c.h.b16 %v6518
        %v6615 = vunpack.c.l.b16 %v6519
        %v6616 = vunpack.c.h.b16 %v6519
        %v6617 = vunpack.c.l.b16 %v6520
        %v6618 = vunpack.c.h.b16 %v6520
        %v6619 = vunpack.c.l.b16 %v6521
        %v6620 = vunpack.c.h.b16 %v6521
        %v6621 = vunpack.c.l.b16 %v6522
        %v6622 = vunpack.c.h.b16 %v6522
        %v6623 = vunpack.c.l.b16 %v6523
        %v6624 = vunpack.c.h.b16 %v6523
        %v6625 = vunpack.c.l.b16 %v6524
        %v6626 = vunpack.c.h.b16 %v6524
        %v6627 = vunpack.c.l.b16 %v6525
        %v6628 = vunpack.c.h.b16 %v6525
        %v6629 = vunpack.c.l.b16 %v6526
        %v6630 = vunpack.c.h.b16 %v6526
        %v6631 = vunpack.c.l.b16 %v6527
        %v6632 = vunpack.c.h.b16 %v6527
        %v6633 = vunpack.c.l.b16 %v6528
        %v6634 = vunpack.c.h.b16 %v6528
        %v6635 = vpack.c.b16 %v6573, %v6571
        %v6636 = vpack.c.b16 %v6574, %v6572
        %v6637 = vpack.c.b16 %v6577, %v6575
        %v6638 = vpack.c.b16 %v6578, %v6576
        %v6639 = vpack.c.b16 %v6581, %v6579
        %v6640 = vpack.c.b16 %v6582, %v6580
        %v6641 = vpack.c.b16 %v6585, %v6583
        %v6642 = vpack.c.b16 %v6586, %v6584
        %v6643 = vpack.c.b16 %v6589, %v6587
        %v6644 = vpack.c.b16 %v6590, %v6588
        %v6645 = vpack.c.b16 %v6593, %v6591
        %v6646 = vpack.c.b16 %v6594, %v6592
        %v6647 = vpack.c.b16 %v6597, %v6595
        %v6648 = vpack.c.b16 %v6598, %v6596
        %v6649 = vpack.c.b16 %v6601, %v6599
        %v6650 = vpack.c.b16 %v6602, %v6600
        %v6651 = vpack.c.b16 %v6605, %v6603
        %v6652 = vpack.c.b16 %v6606, %v6604
        %v6653 = vpack.c.b16 %v6609, %v6607
        %v6654 = vpack.c.b16 %v6610, %v6608
        %v6655 = vpack.c.b16 %v6613, %v6611
        %v6656 = vpack.c.b16 %v6614, %v6612
        %v6657 = vpack.c.b16 %v6617, %v6615
        %v6658 = vpack.c.b16 %v6618, %v6616
        %v6659 = vpack.c.b16 %v6621, %v6619
        %v6660 = vpack.c.b16 %v6622, %v6620
        %v6661 = vpack.c.b16 %v6625, %v6623
        %v6662 = vpack.c.b16 %v6626, %v6624
        %v6663 = vpack.c.b16 %v6629, %v6627
        %v6664 = vpack.c.b16 %v6630, %v6628
        %v6665 = vpack.c.b16 %v6633, %v6631
        %v6666 = vpack.c.b16 %v6634, %v6632
        %6699 = vmatpush.bf16.msra.mxu0 %v6649
        %6700 = vmatpush.bf16.msra.mxu0 %v6647
        %6701 = vmatpush.bf16.msra.mxu0 %v6645
        %6702 = vmatpush.bf16.msra.mxu0 %v6643
        %6703 = vmatpush.bf16.msra.mxu0 %v6641
        %6704 = vmatpush.bf16.msra.mxu0 %v6639
        %6705 = vmatpush.bf16.msra.mxu0 %v6637
        %6706 = vmatpush.bf16.msra.mxu0 %v6635
        %6707 = vmatmul.bf16.gmra.mxu0 %v6535
        %v6708 = vpop.f32.mrf.mxu0
        %v6709 = vadd.f32 0.0, %v6708
        %v6710 = vpop.f32.mrf.mxu0
        %v6711 = vadd.f32 0.0, %v6710
        %6712 = vdwg.mxu0
        %6713 = vmatpush.bf16.msra.mxu0 %v6665
        %6714 = vmatpush.bf16.msra.mxu0 %v6663
        %6715 = vmatpush.bf16.msra.mxu0 %v6661
        %6716 = vmatpush.bf16.msra.mxu0 %v6659
        %6717 = vmatpush.bf16.msra.mxu0 %v6657
        %6718 = vmatpush.bf16.msra.mxu0 %v6655
        %6719 = vmatpush.bf16.msra.mxu0 %v6653
        %6720 = vmatpush.bf16.msra.mxu0 %v6651
        %6721 = vmatmul.bf16.gmra.mxu0 %v6536
        %v6722 = vpop.f32.mrf.mxu0
        %v6723 = vadd.f32 %v6709, %v6722
        %v6724 = vpop.f32.mrf.mxu0
        %v6725 = vadd.f32 %v6711, %v6724
        %6726 = vdwg.mxu0
        %6727 = vmatpush.bf16.msra.mxu0 %v6650
        %6728 = vmatpush.bf16.msra.mxu0 %v6648
        %6729 = vmatpush.bf16.msra.mxu0 %v6646
        %6730 = vmatpush.bf16.msra.mxu0 %v6644
        %6731 = vmatpush.bf16.msra.mxu0 %v6642
        %6732 = vmatpush.bf16.msra.mxu0 %v6640
        %6733 = vmatpush.bf16.msra.mxu0 %v6638
        %6734 = vmatpush.bf16.msra.mxu0 %v6636
        %6735 = vmatmul.bf16.gmra.mxu0 %v6535
        %v6736 = vpop.f32.mrf.mxu0
        %v6737 = vadd.f32 0.0, %v6736
        %v6738 = vpop.f32.mrf.mxu0
        %v6739 = vadd.f32 0.0, %v6738
        %6740 = vdwg.mxu0
        %6741 = vmatpush.bf16.msra.mxu0 %v6666
        %6742 = vmatpush.bf16.msra.mxu0 %v6664
        %6743 = vmatpush.bf16.msra.mxu0 %v6662
        %6744 = vmatpush.bf16.msra.mxu0 %v6660
        %6745 = vmatpush.bf16.msra.mxu0 %v6658
        %6746 = vmatpush.bf16.msra.mxu0 %v6656
        %6747 = vmatpush.bf16.msra.mxu0 %v6654
        %6748 = vmatpush.bf16.msra.mxu0 %v6652
        %6749 = vmatmul.bf16.gmra.mxu0 %v6536
        %v6750 = vpop.f32.mrf.mxu0
        %v6751 = vadd.f32 %v6737, %v6750
        %v6752 = vpop.f32.mrf.mxu0
        %v6753 = vadd.f32 %v6739, %v6752
        %6754 = vdwg.mxu0
        %v6755 = vadd.f32 %v6492, %v6723
        %v6756 = vadd.f32 %v6493, %v6751
        %v6757 = vadd.f32 %v6494, %v6725
        %v6758 = vadd.f32 %v6495, %v6753
        %s6759 = scalar_lea.vmem %s7, 1536
        %v6760 = vld [vmem:[%s6759] sm:$0xff]
        %v6761 = vld [vmem:[%s6759 + $0x8] sm:$0xff]
        %v6762 = vld [vmem:[%s6759 + $0x10] sm:$0xff]
        %v6763 = vld [vmem:[%s6759 + $0x18] sm:$0xff]
        %v6764 = vld [vmem:[%s6759 + $0x20] sm:$0xff]
        %v6765 = vld [vmem:[%s6759 + $0x28] sm:$0xff]
        %v6766 = vld [vmem:[%s6759 + $0x30] sm:$0xff]
        %v6767 = vld [vmem:[%s6759 + $0x38] sm:$0xff]
        %v6768 = vld [vmem:[%s6759 + $0x40] sm:$0xff]
        %v6769 = vld [vmem:[%s6759 + $0x48] sm:$0xff]
        %v6770 = vld [vmem:[%s6759 + $0x50] sm:$0xff]
        %v6771 = vld [vmem:[%s6759 + $0x58] sm:$0xff]
        %v6772 = vld [vmem:[%s6759 + $0x60] sm:$0xff]
        %v6773 = vld [vmem:[%s6759 + $0x68] sm:$0xff]
        %v6774 = vld [vmem:[%s6759 + $0x70] sm:$0xff]
        %v6775 = vld [vmem:[%s6759 + $0x78] sm:$0xff]
        %v6776 = vld [vmem:[%s6759 + $0x80] sm:$0xff]
        %v6777 = vld [vmem:[%s6759 + $0x88] sm:$0xff]
        %v6778 = vld [vmem:[%s6759 + $0x90] sm:$0xff]
        %v6779 = vld [vmem:[%s6759 + $0x98] sm:$0xff]
        %v6780 = vld [vmem:[%s6759 + $0xa0] sm:$0xff]
        %v6781 = vld [vmem:[%s6759 + $0xa8] sm:$0xff]
        %v6782 = vld [vmem:[%s6759 + $0xb0] sm:$0xff]
        %v6783 = vld [vmem:[%s6759 + $0xb8] sm:$0xff]
        %v6784 = vld [vmem:[%s6759 + $0xc0] sm:$0xff]
        %v6785 = vld [vmem:[%s6759 + $0xc8] sm:$0xff]
        %v6786 = vld [vmem:[%s6759 + $0xd0] sm:$0xff]
        %v6787 = vld [vmem:[%s6759 + $0xd8] sm:$0xff]
        %v6788 = vld [vmem:[%s6759 + $0xe0] sm:$0xff]
        %v6789 = vld [vmem:[%s6759 + $0xe8] sm:$0xff]
        %v6790 = vld [vmem:[%s6759 + $0xf0] sm:$0xff]
        %v6791 = vld [vmem:[%s6759 + $0xf8] sm:$0xff]
        %v6794 = vunpack.c.l.b16 %v5186
        %v6795 = vunpack.c.h.b16 %v5186
        %v6796 = vunpack.c.l.b16 %v5187
        %v6797 = vunpack.c.h.b16 %v5187
        %v6798 = vpack.c.b16 %v6796, %v6794
        %v6799 = vpack.c.b16 %v6797, %v6795
        %v6834 = vunpack.c.l.b16 %v6760
        %v6835 = vunpack.c.h.b16 %v6760
        %v6836 = vunpack.c.l.b16 %v6761
        %v6837 = vunpack.c.h.b16 %v6761
        %v6838 = vunpack.c.l.b16 %v6762
        %v6839 = vunpack.c.h.b16 %v6762
        %v6840 = vunpack.c.l.b16 %v6763
        %v6841 = vunpack.c.h.b16 %v6763
        %v6842 = vunpack.c.l.b16 %v6764
        %v6843 = vunpack.c.h.b16 %v6764
        %v6844 = vunpack.c.l.b16 %v6765
        %v6845 = vunpack.c.h.b16 %v6765
        %v6846 = vunpack.c.l.b16 %v6766
        %v6847 = vunpack.c.h.b16 %v6766
        %v6848 = vunpack.c.l.b16 %v6767
        %v6849 = vunpack.c.h.b16 %v6767
        %v6850 = vunpack.c.l.b16 %v6768
        %v6851 = vunpack.c.h.b16 %v6768
        %v6852 = vunpack.c.l.b16 %v6769
        %v6853 = vunpack.c.h.b16 %v6769
        %v6854 = vunpack.c.l.b16 %v6770
        %v6855 = vunpack.c.h.b16 %v6770
        %v6856 = vunpack.c.l.b16 %v6771
        %v6857 = vunpack.c.h.b16 %v6771
        %v6858 = vunpack.c.l.b16 %v6772
        %v6859 = vunpack.c.h.b16 %v6772
        %v6860 = vunpack.c.l.b16 %v6773
        %v6861 = vunpack.c.h.b16 %v6773
        %v6862 = vunpack.c.l.b16 %v6774
        %v6863 = vunpack.c.h.b16 %v6774
        %v6864 = vunpack.c.l.b16 %v6775
        %v6865 = vunpack.c.h.b16 %v6775
        %v6866 = vunpack.c.l.b16 %v6776
        %v6867 = vunpack.c.h.b16 %v6776
        %v6868 = vunpack.c.l.b16 %v6777
        %v6869 = vunpack.c.h.b16 %v6777
        %v6870 = vunpack.c.l.b16 %v6778
        %v6871 = vunpack.c.h.b16 %v6778
        %v6872 = vunpack.c.l.b16 %v6779
        %v6873 = vunpack.c.h.b16 %v6779
        %v6874 = vunpack.c.l.b16 %v6780
        %v6875 = vunpack.c.h.b16 %v6780
        %v6876 = vunpack.c.l.b16 %v6781
        %v6877 = vunpack.c.h.b16 %v6781
        %v6878 = vunpack.c.l.b16 %v6782
        %v6879 = vunpack.c.h.b16 %v6782
        %v6880 = vunpack.c.l.b16 %v6783
        %v6881 = vunpack.c.h.b16 %v6783
        %v6882 = vunpack.c.l.b16 %v6784
        %v6883 = vunpack.c.h.b16 %v6784
        %v6884 = vunpack.c.l.b16 %v6785
        %v6885 = vunpack.c.h.b16 %v6785
        %v6886 = vunpack.c.l.b16 %v6786
        %v6887 = vunpack.c.h.b16 %v6786
        %v6888 = vunpack.c.l.b16 %v6787
        %v6889 = vunpack.c.h.b16 %v6787
        %v6890 = vunpack.c.l.b16 %v6788
        %v6891 = vunpack.c.h.b16 %v6788
        %v6892 = vunpack.c.l.b16 %v6789
        %v6893 = vunpack.c.h.b16 %v6789
        %v6894 = vunpack.c.l.b16 %v6790
        %v6895 = vunpack.c.h.b16 %v6790
        %v6896 = vunpack.c.l.b16 %v6791
        %v6897 = vunpack.c.h.b16 %v6791
        %v6898 = vpack.c.b16 %v6836, %v6834
        %v6899 = vpack.c.b16 %v6837, %v6835
        %v6900 = vpack.c.b16 %v6840, %v6838
        %v6901 = vpack.c.b16 %v6841, %v6839
        %v6902 = vpack.c.b16 %v6844, %v6842
        %v6903 = vpack.c.b16 %v6845, %v6843
        %v6904 = vpack.c.b16 %v6848, %v6846
        %v6905 = vpack.c.b16 %v6849, %v6847
        %v6906 = vpack.c.b16 %v6852, %v6850
        %v6907 = vpack.c.b16 %v6853, %v6851
        %v6908 = vpack.c.b16 %v6856, %v6854
        %v6909 = vpack.c.b16 %v6857, %v6855
        %v6910 = vpack.c.b16 %v6860, %v6858
        %v6911 = vpack.c.b16 %v6861, %v6859
        %v6912 = vpack.c.b16 %v6864, %v6862
        %v6913 = vpack.c.b16 %v6865, %v6863
        %v6914 = vpack.c.b16 %v6868, %v6866
        %v6915 = vpack.c.b16 %v6869, %v6867
        %v6916 = vpack.c.b16 %v6872, %v6870
        %v6917 = vpack.c.b16 %v6873, %v6871
        %v6918 = vpack.c.b16 %v6876, %v6874
        %v6919 = vpack.c.b16 %v6877, %v6875
        %v6920 = vpack.c.b16 %v6880, %v6878
        %v6921 = vpack.c.b16 %v6881, %v6879
        %v6922 = vpack.c.b16 %v6884, %v6882
        %v6923 = vpack.c.b16 %v6885, %v6883
        %v6924 = vpack.c.b16 %v6888, %v6886
        %v6925 = vpack.c.b16 %v6889, %v6887
        %v6926 = vpack.c.b16 %v6892, %v6890
        %v6927 = vpack.c.b16 %v6893, %v6891
        %v6928 = vpack.c.b16 %v6896, %v6894
        %v6929 = vpack.c.b16 %v6897, %v6895
        %6962 = vmatpush.bf16.msra.mxu0 %v6912
        %6963 = vmatpush.bf16.msra.mxu0 %v6910
        %6964 = vmatpush.bf16.msra.mxu0 %v6908
        %6965 = vmatpush.bf16.msra.mxu0 %v6906
        %6966 = vmatpush.bf16.msra.mxu0 %v6904
        %6967 = vmatpush.bf16.msra.mxu0 %v6902
        %6968 = vmatpush.bf16.msra.mxu0 %v6900
        %6969 = vmatpush.bf16.msra.mxu0 %v6898
        %6970 = vmatmul.bf16.gmra.mxu0 %v6798
        %v6971 = vpop.f32.mrf.mxu0
        %v6972 = vadd.f32 0.0, %v6971
        %v6973 = vpop.f32.mrf.mxu0
        %v6974 = vadd.f32 0.0, %v6973
        %6975 = vdwg.mxu0
        %6976 = vmatpush.bf16.msra.mxu0 %v6928
        %6977 = vmatpush.bf16.msra.mxu0 %v6926
        %6978 = vmatpush.bf16.msra.mxu0 %v6924
        %6979 = vmatpush.bf16.msra.mxu0 %v6922
        %6980 = vmatpush.bf16.msra.mxu0 %v6920
        %6981 = vmatpush.bf16.msra.mxu0 %v6918
        %6982 = vmatpush.bf16.msra.mxu0 %v6916
        %6983 = vmatpush.bf16.msra.mxu0 %v6914
        %6984 = vmatmul.bf16.gmra.mxu0 %v6799
        %v6985 = vpop.f32.mrf.mxu0
        %v6986 = vadd.f32 %v6972, %v6985
        %v6987 = vpop.f32.mrf.mxu0
        %v6988 = vadd.f32 %v6974, %v6987
        %6989 = vdwg.mxu0
        %6990 = vmatpush.bf16.msra.mxu0 %v6913
        %6991 = vmatpush.bf16.msra.mxu0 %v6911
        %6992 = vmatpush.bf16.msra.mxu0 %v6909
        %6993 = vmatpush.bf16.msra.mxu0 %v6907
        %6994 = vmatpush.bf16.msra.mxu0 %v6905
        %6995 = vmatpush.bf16.msra.mxu0 %v6903
        %6996 = vmatpush.bf16.msra.mxu0 %v6901
        %6997 = vmatpush.bf16.msra.mxu0 %v6899
        %6998 = vmatmul.bf16.gmra.mxu0 %v6798
        %v6999 = vpop.f32.mrf.mxu0
        %v7000 = vadd.f32 0.0, %v6999
        %v7001 = vpop.f32.mrf.mxu0
        %v7002 = vadd.f32 0.0, %v7001
        %7003 = vdwg.mxu0
        %7004 = vmatpush.bf16.msra.mxu0 %v6929
        %7005 = vmatpush.bf16.msra.mxu0 %v6927
        %7006 = vmatpush.bf16.msra.mxu0 %v6925
        %7007 = vmatpush.bf16.msra.mxu0 %v6923
        %7008 = vmatpush.bf16.msra.mxu0 %v6921
        %7009 = vmatpush.bf16.msra.mxu0 %v6919
        %7010 = vmatpush.bf16.msra.mxu0 %v6917
        %7011 = vmatpush.bf16.msra.mxu0 %v6915
        %7012 = vmatmul.bf16.gmra.mxu0 %v6799
        %v7013 = vpop.f32.mrf.mxu0
        %v7014 = vadd.f32 %v7000, %v7013
        %v7015 = vpop.f32.mrf.mxu0
        %v7016 = vadd.f32 %v7002, %v7015
        %7017 = vdwg.mxu0
        %v7018 = vadd.f32 %v6755, %v6986
        %v7019 = vadd.f32 %v6756, %v7014
        %v7020 = vadd.f32 %v6757, %v6988
        %v7021 = vadd.f32 %v6758, %v7016
        %s7022 = scalar_lea.vmem %s7, 1792
        %v7023 = vld [vmem:[%s7022] sm:$0xff]
        %v7024 = vld [vmem:[%s7022 + $0x8] sm:$0xff]
        %v7025 = vld [vmem:[%s7022 + $0x10] sm:$0xff]
        %v7026 = vld [vmem:[%s7022 + $0x18] sm:$0xff]
        %v7027 = vld [vmem:[%s7022 + $0x20] sm:$0xff]
        %v7028 = vld [vmem:[%s7022 + $0x28] sm:$0xff]
        %v7029 = vld [vmem:[%s7022 + $0x30] sm:$0xff]
        %v7030 = vld [vmem:[%s7022 + $0x38] sm:$0xff]
        %v7031 = vld [vmem:[%s7022 + $0x40] sm:$0xff]
        %v7032 = vld [vmem:[%s7022 + $0x48] sm:$0xff]
        %v7033 = vld [vmem:[%s7022 + $0x50] sm:$0xff]
        %v7034 = vld [vmem:[%s7022 + $0x58] sm:$0xff]
        %v7035 = vld [vmem:[%s7022 + $0x60] sm:$0xff]
        %v7036 = vld [vmem:[%s7022 + $0x68] sm:$0xff]
        %v7037 = vld [vmem:[%s7022 + $0x70] sm:$0xff]
        %v7038 = vld [vmem:[%s7022 + $0x78] sm:$0xff]
        %v7039 = vld [vmem:[%s7022 + $0x80] sm:$0xff]
        %v7040 = vld [vmem:[%s7022 + $0x88] sm:$0xff]
        %v7041 = vld [vmem:[%s7022 + $0x90] sm:$0xff]
        %v7042 = vld [vmem:[%s7022 + $0x98] sm:$0xff]
        %v7043 = vld [vmem:[%s7022 + $0xa0] sm:$0xff]
        %v7044 = vld [vmem:[%s7022 + $0xa8] sm:$0xff]
        %v7045 = vld [vmem:[%s7022 + $0xb0] sm:$0xff]
        %v7046 = vld [vmem:[%s7022 + $0xb8] sm:$0xff]
        %v7047 = vld [vmem:[%s7022 + $0xc0] sm:$0xff]
        %v7048 = vld [vmem:[%s7022 + $0xc8] sm:$0xff]
        %v7049 = vld [vmem:[%s7022 + $0xd0] sm:$0xff]
        %v7050 = vld [vmem:[%s7022 + $0xd8] sm:$0xff]
        %v7051 = vld [vmem:[%s7022 + $0xe0] sm:$0xff]
        %v7052 = vld [vmem:[%s7022 + $0xe8] sm:$0xff]
        %v7053 = vld [vmem:[%s7022 + $0xf0] sm:$0xff]
        %v7054 = vld [vmem:[%s7022 + $0xf8] sm:$0xff]
        %v7057 = vunpack.c.l.b16 %v5188
        %v7058 = vunpack.c.h.b16 %v5188
        %v7059 = vunpack.c.l.b16 %v5189
        %v7060 = vunpack.c.h.b16 %v5189
        %v7061 = vpack.c.b16 %v7059, %v7057
        %v7062 = vpack.c.b16 %v7060, %v7058
        %v7097 = vunpack.c.l.b16 %v7023
        %v7098 = vunpack.c.h.b16 %v7023
        %v7099 = vunpack.c.l.b16 %v7024
        %v7100 = vunpack.c.h.b16 %v7024
        %v7101 = vunpack.c.l.b16 %v7025
        %v7102 = vunpack.c.h.b16 %v7025
        %v7103 = vunpack.c.l.b16 %v7026
        %v7104 = vunpack.c.h.b16 %v7026
        %v7105 = vunpack.c.l.b16 %v7027
        %v7106 = vunpack.c.h.b16 %v7027
        %v7107 = vunpack.c.l.b16 %v7028
        %v7108 = vunpack.c.h.b16 %v7028
        %v7109 = vunpack.c.l.b16 %v7029
        %v7110 = vunpack.c.h.b16 %v7029
        %v7111 = vunpack.c.l.b16 %v7030
        %v7112 = vunpack.c.h.b16 %v7030
        %v7113 = vunpack.c.l.b16 %v7031
        %v7114 = vunpack.c.h.b16 %v7031
        %v7115 = vunpack.c.l.b16 %v7032
        %v7116 = vunpack.c.h.b16 %v7032
        %v7117 = vunpack.c.l.b16 %v7033
        %v7118 = vunpack.c.h.b16 %v7033
        %v7119 = vunpack.c.l.b16 %v7034
        %v7120 = vunpack.c.h.b16 %v7034
        %v7121 = vunpack.c.l.b16 %v7035
        %v7122 = vunpack.c.h.b16 %v7035
        %v7123 = vunpack.c.l.b16 %v7036
        %v7124 = vunpack.c.h.b16 %v7036
        %v7125 = vunpack.c.l.b16 %v7037
        %v7126 = vunpack.c.h.b16 %v7037
        %v7127 = vunpack.c.l.b16 %v7038
        %v7128 = vunpack.c.h.b16 %v7038
        %v7129 = vunpack.c.l.b16 %v7039
        %v7130 = vunpack.c.h.b16 %v7039
        %v7131 = vunpack.c.l.b16 %v7040
        %v7132 = vunpack.c.h.b16 %v7040
        %v7133 = vunpack.c.l.b16 %v7041
        %v7134 = vunpack.c.h.b16 %v7041
        %v7135 = vunpack.c.l.b16 %v7042
        %v7136 = vunpack.c.h.b16 %v7042
        %v7137 = vunpack.c.l.b16 %v7043
        %v7138 = vunpack.c.h.b16 %v7043
        %v7139 = vunpack.c.l.b16 %v7044
        %v7140 = vunpack.c.h.b16 %v7044
        %v7141 = vunpack.c.l.b16 %v7045
        %v7142 = vunpack.c.h.b16 %v7045
        %v7143 = vunpack.c.l.b16 %v7046
        %v7144 = vunpack.c.h.b16 %v7046
        %v7145 = vunpack.c.l.b16 %v7047
        %v7146 = vunpack.c.h.b16 %v7047
        %v7147 = vunpack.c.l.b16 %v7048
        %v7148 = vunpack.c.h.b16 %v7048
        %v7149 = vunpack.c.l.b16 %v7049
        %v7150 = vunpack.c.h.b16 %v7049
        %v7151 = vunpack.c.l.b16 %v7050
        %v7152 = vunpack.c.h.b16 %v7050
        %v7153 = vunpack.c.l.b16 %v7051
        %v7154 = vunpack.c.h.b16 %v7051
        %v7155 = vunpack.c.l.b16 %v7052
        %v7156 = vunpack.c.h.b16 %v7052
        %v7157 = vunpack.c.l.b16 %v7053
        %v7158 = vunpack.c.h.b16 %v7053
        %v7159 = vunpack.c.l.b16 %v7054
        %v7160 = vunpack.c.h.b16 %v7054
        %v7161 = vpack.c.b16 %v7099, %v7097
        %v7162 = vpack.c.b16 %v7100, %v7098
        %v7163 = vpack.c.b16 %v7103, %v7101
        %v7164 = vpack.c.b16 %v7104, %v7102
        %v7165 = vpack.c.b16 %v7107, %v7105
        %v7166 = vpack.c.b16 %v7108, %v7106
        %v7167 = vpack.c.b16 %v7111, %v7109
        %v7168 = vpack.c.b16 %v7112, %v7110
        %v7169 = vpack.c.b16 %v7115, %v7113
        %v7170 = vpack.c.b16 %v7116, %v7114
        %v7171 = vpack.c.b16 %v7119, %v7117
        %v7172 = vpack.c.b16 %v7120, %v7118
        %v7173 = vpack.c.b16 %v7123, %v7121
        %v7174 = vpack.c.b16 %v7124, %v7122
        %v7175 = vpack.c.b16 %v7127, %v7125
        %v7176 = vpack.c.b16 %v7128, %v7126
        %v7177 = vpack.c.b16 %v7131, %v7129
        %v7178 = vpack.c.b16 %v7132, %v7130
        %v7179 = vpack.c.b16 %v7135, %v7133
        %v7180 = vpack.c.b16 %v7136, %v7134
        %v7181 = vpack.c.b16 %v7139, %v7137
        %v7182 = vpack.c.b16 %v7140, %v7138
        %v7183 = vpack.c.b16 %v7143, %v7141
        %v7184 = vpack.c.b16 %v7144, %v7142
        %v7185 = vpack.c.b16 %v7147, %v7145
        %v7186 = vpack.c.b16 %v7148, %v7146
        %v7187 = vpack.c.b16 %v7151, %v7149
        %v7188 = vpack.c.b16 %v7152, %v7150
        %v7189 = vpack.c.b16 %v7155, %v7153
        %v7190 = vpack.c.b16 %v7156, %v7154
        %v7191 = vpack.c.b16 %v7159, %v7157
        %v7192 = vpack.c.b16 %v7160, %v7158
        %7225 = vmatpush.bf16.msra.mxu0 %v7175
        %7226 = vmatpush.bf16.msra.mxu0 %v7173
        %7227 = vmatpush.bf16.msra.mxu0 %v7171
        %7228 = vmatpush.bf16.msra.mxu0 %v7169
        %7229 = vmatpush.bf16.msra.mxu0 %v7167
        %7230 = vmatpush.bf16.msra.mxu0 %v7165
        %7231 = vmatpush.bf16.msra.mxu0 %v7163
        %7232 = vmatpush.bf16.msra.mxu0 %v7161
        %7233 = vmatmul.bf16.gmra.mxu0 %v7061
        %v7234 = vpop.f32.mrf.mxu0
        %v7235 = vadd.f32 0.0, %v7234
        %v7236 = vpop.f32.mrf.mxu0
        %v7237 = vadd.f32 0.0, %v7236
        %7238 = vdwg.mxu0
        %7239 = vmatpush.bf16.msra.mxu0 %v7191
        %7240 = vmatpush.bf16.msra.mxu0 %v7189
        %7241 = vmatpush.bf16.msra.mxu0 %v7187
        %7242 = vmatpush.bf16.msra.mxu0 %v7185
        %7243 = vmatpush.bf16.msra.mxu0 %v7183
        %7244 = vmatpush.bf16.msra.mxu0 %v7181
        %7245 = vmatpush.bf16.msra.mxu0 %v7179
        %7246 = vmatpush.bf16.msra.mxu0 %v7177
        %7247 = vmatmul.bf16.gmra.mxu0 %v7062
        %v7248 = vpop.f32.mrf.mxu0
        %v7249 = vadd.f32 %v7235, %v7248
        %v7250 = vpop.f32.mrf.mxu0
        %v7251 = vadd.f32 %v7237, %v7250
        %7252 = vdwg.mxu0
        %7253 = vmatpush.bf16.msra.mxu0 %v7176
        %7254 = vmatpush.bf16.msra.mxu0 %v7174
        %7255 = vmatpush.bf16.msra.mxu0 %v7172
        %7256 = vmatpush.bf16.msra.mxu0 %v7170
        %7257 = vmatpush.bf16.msra.mxu0 %v7168
        %7258 = vmatpush.bf16.msra.mxu0 %v7166
        %7259 = vmatpush.bf16.msra.mxu0 %v7164
        %7260 = vmatpush.bf16.msra.mxu0 %v7162
        %7261 = vmatmul.bf16.gmra.mxu0 %v7061
        %v7262 = vpop.f32.mrf.mxu0
        %v7263 = vadd.f32 0.0, %v7262
        %v7264 = vpop.f32.mrf.mxu0
        %v7265 = vadd.f32 0.0, %v7264
        %7266 = vdwg.mxu0
        %7267 = vmatpush.bf16.msra.mxu0 %v7192
        %7268 = vmatpush.bf16.msra.mxu0 %v7190
        %7269 = vmatpush.bf16.msra.mxu0 %v7188
        %7270 = vmatpush.bf16.msra.mxu0 %v7186
        %7271 = vmatpush.bf16.msra.mxu0 %v7184
        %7272 = vmatpush.bf16.msra.mxu0 %v7182
        %7273 = vmatpush.bf16.msra.mxu0 %v7180
        %7274 = vmatpush.bf16.msra.mxu0 %v7178
        %7275 = vmatmul.bf16.gmra.mxu0 %v7062
        %v7276 = vpop.f32.mrf.mxu0
        %v7277 = vadd.f32 %v7263, %v7276
        %v7278 = vpop.f32.mrf.mxu0
        %v7279 = vadd.f32 %v7265, %v7278
        %7280 = vdwg.mxu0
        %v7281 = vadd.f32 %v7018, %v7249
        %v7282 = vadd.f32 %v7019, %v7277
        %v7283 = vadd.f32 %v7020, %v7251
        %v7284 = vadd.f32 %v7021, %v7279
        %v7285 = vld [vmem:[%s8] sm:$0x3]
        %v7287 = vperm.slane %v7285, 0
        %v7288 = vperm.slane %v7285, 1
        %v7291 = vadd.f32 %v7281, %v7287
        %v7292 = vadd.f32 %v7282, %v7288
        %v7293 = vadd.f32 %v7283, %v7287
        %v7294 = vadd.f32 %v7284, %v7288
        %7295 = vst [vmem:[%s498] sm:$0xff] %v7291
        %7296 = vst [vmem:[%s498 + $0x8] sm:$0xff] %v7292
        %7297 = vst [vmem:[%s498 + $0x10] sm:$0xff] %v7293
        %7298 = vst [vmem:[%s498 + $0x18] sm:$0xff] %v7294
        %s7299 = sand.u32 %s225, 1
        %s7300 = scalar_lea.sflag [#allocation4], %s7299
        %s7301 = sand.u32 %s225, 1
        %s7302 = smul.addr %s7301, 32
        %s7303 = scalar_lea.vmem [#allocation3], %s7302
        // Predicated region
        $region95: #{feature_extractor_elevation.1} parent=89 // pred_check
          %p7304 = pneg %p235
        $region96: #{feature_extractor_elevation.1} parent=89 // pred_check_branch
          %7306 = sbr.rel (%p7304) target = $region98
        $region97: #{feature_extractor_elevation.1} parent=89 // pred_region
          %s7307 = smul.u32 2, %s23
          %7309 = vsyncadd %s7300, 0
          %s7310 = smul.addr %s7307, 2
          %s7311 = smul.addr %s7310, 8
          %s7312 = scalar_lea.hbm %s9, %s7311
          %s7313 = sshll.u32 %s7303, 4
          %s7314 = int_to_ptr.vmem [resolvable:$true] %s7313
          %s7315 = sshll.u32 %s7312, 4
          %s7316 = int_to_ptr.hbm [resolvable:$true] %s7315
          %7321 = dma.vmem_to_hbm [thread:$0]  %s7314, 512, %s7316, %s7300, 256, 256, 16
        $region98: #{feature_extractor_elevation.1} parent=89 // pred_fallthru
          _
      $region90: #{feature_extractor_elevation.1} parent=5 // pred_fallthru
        _
      %p7322 = scmp.le.s32.totalorder 2, %s18
      // Predicated region
      $region99: #{feature_extractor_elevation.1} parent=5 // pred_check
        %p7323 = pneg %p7322
      $region100: #{feature_extractor_elevation.1} parent=5 // pred_check_branch
        %7325 = sbr.rel (%p7323) target = $region102
      $region101: #{feature_extractor_elevation.1} parent=5 // pred_region
        %s7326 = ssub.s32 %s18, 2
        // Predicated region
        $region103: #{feature_extractor_elevation.1} parent=101 // pred_check
          %p7327 = pneg %p241
        $region104: #{feature_extractor_elevation.1} parent=101 // pred_check_branch
          %7329 = sbr.rel (%p7327) target = $region106
        $region105: #{feature_extractor_elevation.1} parent=101 // pred_region
          %s7330 = sand.u32 %s226, 1
          %s7331 = scalar_lea.sflag [#allocation4], %s7330
          %s7332 = sand.u32 %s226, 1
          %s7333 = smul.addr %s7332, 32
          %s7334 = scalar_lea.vmem [#allocation3], %s7333
          %7336 = dma.done %s7331, 512
        $region106: #{feature_extractor_elevation.1} parent=101 // pred_fallthru
          _
      $region102: #{feature_extractor_elevation.1} parent=5 // pred_fallthru
        _
    $region6: #{feature_extractor_elevation.1} parent=1 // loop_footer
      %s22 = sadd.s32 1, %s18
    $region7: #{feature_extractor_elevation.1} parent=1 // loop_footer_branch
      %17 = sbr.rel target = $region3
    $region8: #{feature_extractor_elevation.1} parent=1 // loop_exit
      _
    %7337 = vsyncpa [#allocation4], 1
    %s7338 = scalar_lea.sflag [#allocation4], 1
    %7339 = vsyncpa %s7338, 1

</llo_original>
